<compile_context>
chip_gen: v6e
topology: v6e:2x2x1
jax: 0.10.0
libtpu: 0.0.40
codegen_flags: <defaults>
</compile_context>

<pallas_src>
import functools
import numpy as np
import jax
import jax.numpy as jnp
from jax.experimental import pallas as pl
from jax.experimental.pallas import tpu as pltpu

# ----------------------------------------------------------------------------
# Configuration (structurally faithful, small)
# ----------------------------------------------------------------------------
VOCAB = 22            # len(ACIDS) assumed   TODO(synk): ACIDS not given
EMB = 16              # emb_size
PEP_PAD = 3
MHC_LEN = 34
PEP_LEN = 21          # 15 core residues + 2*3 flanking pad
CORE_LEN = PEP_LEN - 2 * PEP_PAD            # 15
CONV_NUM = (8, 8)
CONV_SIZE = (5, 9)
CONV_OFF = (2, 0)
H = PEP_LEN - 2 * CONV_OFF[0] - CONV_SIZE[0] + 1      # 13
for _c, _o in zip(CONV_SIZE, CONV_OFF):
    assert PEP_LEN - 2 * _o - _c + 1 == H, "all IConvs must give the same output length"
CSUM = sum(CONV_NUM)  # 16 conv channels per branch
CLIN = 16             # linear_size = [16]
BN_EPS = 1e-5

# Unified conv window / padded geometry used by the fused kernel
KU = max(o + k for k, o in zip(CONV_SIZE, CONV_OFF))  # 9
HP = 16                                               # H=13 padded to a sublane multiple
PPOS = HP - 1 + KU                                    # 24 peptide positions per sample
CT2 = 2 * CSUM                                        # 32 conv channels (forward ++ reversed)
HEAD = 4                                              # 2 logits x 2 branches


# ----------------------------------------------------------------------------
# Parameter initialization (deterministic, mirrors reset_parameters())
# ----------------------------------------------------------------------------
def _trunc_normal(key, shape, std):
    return (std * jax.random.truncated_normal(key, -2.0, 2.0, shape)).astype(jnp.float32)


def init_params(key):
    ks = iter(jax.random.split(key, 64))
    p = {}
    p["pep_emb"] = jax.random.uniform(next(ks), (VOCAB, EMB), jnp.float32, -0.1, 0.1)
    p["mhc_emb"] = jax.random.uniform(next(ks), (VOCAB, EMB), jnp.float32, -0.1, 0.1)

    def iconv(kw, kg, C, K):
        w = _trunc_normal(kw, (C, K, MHC_LEN), 0.02)          # IConv weight (O, K, mhc_len)
        b = jnp.zeros((C,), jnp.float32)
        gamma = 1.0 + 0.002 * jax.random.normal(kg, (C,), jnp.float32)
        beta = jnp.zeros((C,), jnp.float32)
        return w, b, gamma, beta

    p["conv"] = [iconv(next(ks), next(ks), C, K) for C, K in zip(CONV_NUM, CONV_SIZE)]
    p["conv_R"] = [iconv(next(ks), next(ks), C, K) for C, K in zip(CONV_NUM, CONV_SIZE)]

    def lin(kw, kg, cin, cout):
        w = _trunc_normal(kw, (cout, cin), 0.02)
        b = jnp.zeros((cout,), jnp.float32)
        gamma = 1.0 + 0.002 * jax.random.normal(kg, (cout,), jnp.float32)
        beta = jnp.zeros((cout,), jnp.float32)
        return w, b, gamma, beta

    p["linear"] = lin(next(ks), next(ks), CSUM, CLIN)
    p["linear_R"] = lin(next(ks), next(ks), CSUM, CLIN)
    p["out_w"] = _trunc_normal(next(ks), (2, CLIN), 0.1)
    p["out_b"] = jnp.zeros((2,), jnp.float32)
    return p


def sinusoidal_pe(max_len, d):
    pos = np.arange(max_len, dtype=np.float32)[:, None]
    div = np.exp(np.arange(0, d, 2, dtype=np.float32) * (-np.log(10000.0) / d))
    pe = np.zeros((max_len, d), np.float32)
    pe[:, 0::2] = np.sin(pos * div)
    pe[:, 1::2] = np.cos(pos * div)
    return jnp.asarray(pe)


# ----------------------------------------------------------------------------
# Embeddings + positional encodings + validity mask (host-side, tiny)
# ----------------------------------------------------------------------------
def embed_inputs(pep_tok, mhc_tok, params):
    pep = params["pep_emb"][pep_tok]                              # (B, 21, E)
    mhc = params["mhc_emb"][mhc_tok]                              # (B, 34, E)
    mhc = mhc + sinusoidal_pe(MHC_LEN, EMB)[None]                 # mhc_pos
    pep = pep.at[:, PEP_PAD:PEP_LEN - PEP_PAD].add(               # pep_pos on the core only
        sinusoidal_pe(100, EMB)[:CORE_LEN][None])
    mask_h = (pep_tok[:, PEP_PAD:PEP_LEN - PEP_PAD] != 0)[:, -H:].astype(jnp.float32)  # (B, 13)
    return pep, mhc, mask_h


# ----------------------------------------------------------------------------
# Fold BN (mean=0, var=1) + biases + branch/group concat into static weight slabs
# ----------------------------------------------------------------------------
def fold_params(params):
    """Build the fused weight slabs used by the kernel.

    w_conv[k, l, c]: channels 0..15 = forward branch (group0 cols 0..7, group1 cols
    8..15), channels 16..31 = reversed branch.  The peptide flip of the reversed
    branch and the IConv(inversion=True) kernel flip cancel after re-indexing the
    conv output along H (which the subsequent max-pool ignores), so both branches
    use the same forward interaction map and the forward validity mask; group g's
    weight occupies unified window offsets k = off_g .. off_g + K_g - 1 (zero
    elsewhere).  BN scale is folded into the weights, bias' = scale*bias + beta.
    """
    inv_std = 1.0 / jnp.sqrt(1.0 + BN_EPS)

    w_conv = jnp.zeros((KU, MHC_LEN, CT2), jnp.float32)
    b_conv = jnp.zeros((CT2,), jnp.float32)
    for br, plist in enumerate((params["conv"], params["conv_R"])):
        c0 = br * CSUM
        for (w, b, g, beta), K, off in zip(plist, CONV_SIZE, CONV_OFF):
            C = w.shape[0]
            s = g * inv_std
            wk = jnp.transpose(w * s[:, None, None], (1, 2, 0))    # (K, MHC_LEN, C)
            w_conv = w_conv.at[off:off + K, :, c0:c0 + C].set(wk)
            b_conv = b_conv.at[c0:c0 + C].set(s * b + beta)
            c0 += C

    # block-diagonal 1x1 linear over the two branches
    w_lin = jnp.zeros((CT2, 2 * CLIN), jnp.float32)
    b_lin = jnp.zeros((2 * CLIN,), jnp.float32)
    for br, (w, b, g, beta) in enumerate((params["linear"], params["linear_R"])):
        s = g * inv_std
        w_lin = w_lin.at[br * CSUM:(br + 1) * CSUM, br * CLIN:(br + 1) * CLIN].set(
            jnp.transpose(w) * s[None, :])
        b_lin = b_lin.at[br * CLIN:(br + 1) * CLIN].set(s * b + beta)

    # fused output head (2 logits per branch)
    ow = jnp.transpose(params["out_w"])                           # (CLIN, 2)
    w_head = jnp.zeros((2 * CLIN, HEAD), jnp.float32)
    w_head = w_head.at[:CLIN, 0:2].set(ow).at[CLIN:, 2:4].set(ow)
    b_head = jnp.concatenate([params["out_b"], params["out_b"]])  # (4,)

    return (w_conv.astype(jnp.bfloat16), w_lin.astype(jnp.bfloat16),
            w_head.astype(jnp.bfloat16),
            b_conv[None, :], b_lin[None, :], b_head[None, :])     # f32 (1, N) rows


# ----------------------------------------------------------------------------
# Pallas kernel: tb samples per grid step
# ----------------------------------------------------------------------------
def _kernel(tb, pep_ref, mhct_ref, mask_ref, wc_ref, wl_ref, wh_ref,
            bc_ref, bl_ref, bh_ref, out_ref):
    # per-sample peptide x MHC interaction map: one batched MXU matmul, f32 accumulate.
    # MHC arrives pre-transposed as (tb, EMB, MHC_LEN) so no in-kernel transpose.
    inter = jnp.einsum("bpe,bel->bpl", pep_ref[...], mhct_ref[...],
                       preferred_element_type=jnp.float32)           # (tb, PPOS, 34) f32

    # conv over the unified KU=9 window as 9 accumulated shared-weight matmuls
    # (sublane-shifted views of `inter`; no lane-direction im2col packing).
    wc = wc_ref[...]                                                  # (KU, 34, CT2) bf16
    conv = jnp.zeros((tb * HP, CT2), jnp.float32)
    for k in range(KU):
        xk = inter[:, k:k + HP, :].reshape(tb * HP, MHC_LEN).astype(jnp.bfloat16)
        conv = conv + jnp.dot(xk, wc[k], preferred_element_type=jnp.float32)
    conv = jnp.maximum(conv + bc_ref[...], 0.0).astype(jnp.bfloat16)  # (tb*HP, 32)

    # 1x1 linear (block-diagonal over the two branches), BN/bias folded, ReLU
    lin = jnp.dot(conv, wl_ref[...], preferred_element_type=jnp.float32) + bl_ref[...]
    lin = jnp.maximum(lin, 0.0)                                       # (tb*HP, 32) f32

    # masked max-pool over positions: multiply is exact post-ReLU (lin >= 0) and keeps
    # padded rows finite; reshape pool replaces the old per-sample Python loop.
    pooled = (lin * mask_ref[...]).reshape(tb, HP, CT2).max(axis=1)   # (tb, 32)

    # fused head: cols 0:2 = forward-branch logits, cols 2:4 = reversed-branch logits
    logits = jnp.dot(pooled.astype(jnp.bfloat16), wh_ref[...],
                     preferred_element_type=jnp.float32) + bh_ref[...]  # (tb, 4)
    sig = jax.nn.sigmoid(logits)
    out_ref[...] = jnp.clip(0.25 * (sig[:, 0:2] + sig[:, 2:4]), 0.0, 1.0)  # (tb, 2)


# ----------------------------------------------------------------------------
# Wrapper
# ----------------------------------------------------------------------------
def _pick_tb(batch, tb):
    # Biggest tb (multiple of 8) that keeps nb >= 2, so the ("parallel",) grid axis
    # can shard across v7x's two TensorCores; v5e/v6e are unaffected by the cap.
    cap = max(8, (((batch + 1) // 2) + 7) // 8 * 8)
    return max(8, (min(tb, cap) // 8) * 8)


def deepmhcii_forward(pep_tok, mhc_tok, params, tb=128,
                      bags_size=None, peptide_esm_x=None, context_x=None):
    # bags_size / peptide_esm_x / context_x feed code paths that are dead for
    # (pooling=True, inverse=False, rank_pred=False, context=False).
    del bags_size, peptide_esm_x, context_x
    B = pep_tok.shape[0]
    tb = _pick_tb(B, tb)
    nb = int(pl.cdiv(B, tb))
    b_pad = nb * tb

    pep, mhc, mask_h = embed_inputs(pep_tok, mhc_tok, params)

    # bf16 inputs padded with jnp.pad (no full-size f32 zeros + scatter); MHC is
    # passed pre-transposed to (B, EMB, MHC_LEN).
    pep_p = jnp.pad(pep.astype(jnp.bfloat16),
                    ((0, b_pad - B), (0, PPOS - PEP_LEN), (0, 0)))
    mhct_p = jnp.pad(jnp.swapaxes(mhc, 1, 2).astype(jnp.bfloat16),
                     ((0, b_pad - B), (0, 0), (0, 0)))
    mask_p = jnp.pad(mask_h, ((0, b_pad - B), (0, HP - H))).reshape(b_pad * HP, 1)

    w_conv, w_lin, w_head, b_conv, b_lin, b_head = fold_params(params)
    kernel = functools.partial(_kernel, tb)

    def shared(x):
        nd = x.ndim
        return pl.BlockSpec(x.shape, lambda i: (0,) * nd)

    out = pl.pallas_call(
        kernel,
        out_shape=jax.ShapeDtypeStruct((b_pad, 2), jnp.float32),
        grid=(nb,),
        in_specs=[
            pl.BlockSpec((tb, PPOS, EMB), lambda i: (i, 0, 0)),
            pl.BlockSpec((tb, EMB, MHC_LEN), lambda i: (i, 0, 0)),
            pl.BlockSpec((tb * HP, 1), lambda i: (i, 0)),
            shared(w_conv), shared(w_lin), shared(w_head),
            shared(b_conv), shared(b_lin), shared(b_head),
        ],
        out_specs=pl.BlockSpec((tb, 2), lambda i: (i, 0)),
        compiler_params=pltpu.CompilerParams(
            dimension_semantics=("parallel",),
            vmem_limit_bytes=32 * 1024 * 1024),
    )(pep_p, mhct_p, mask_p, w_conv, w_lin, w_head, b_conv, b_lin, b_head)
    return out[:B]                                                 # (B, 2)


# ----------------------------------------------------------------------------
# Pure-JAX reference of the same math (independent of the fused weight folding)
# ----------------------------------------------------------------------------
def forward_reference(pep_tok, mhc_tok, params):
    pep, mhc, mask_h = embed_inputs(pep_tok, mhc_tok, params)
    pep_rev = pep[:, ::-1, :]
    mhc_t = jnp.swapaxes(mhc, 1, 2)                               # (B, E, 34)
    inv_std = 1.0 / jnp.sqrt(1.0 + BN_EPS)

    def iconv_stack(src, plist, invert):
        chunks = []
        for (w, b, g, beta), K, off in zip(plist, CONV_SIZE, CONV_OFF):
            wt = jnp.transpose(w, (1, 2, 0))                      # (K, 34, C)
            if invert:
                wt = wt[::-1]                                     # IConv(inversion=True)
            kerT = jnp.einsum("bel,klc->bkec", mhc_t, wt)
            acc = sum(jnp.einsum("bhe,bec->bhc",
                                 src[:, off + k: off + k + H, :], kerT[:, k])
                      for k in range(K))
            acc = acc + b[None, None, :]
            chunks.append(jnp.maximum((g * inv_std)[None, None, :] * acc
                                      + beta[None, None, :], 0.0))
        return jnp.concatenate(chunks, axis=-1)

    def linear(x, lp):
        w, b, g, beta = lp
        y = jnp.einsum("bhc,dc->bhd", x, w) + b[None, None, :]
        return jnp.maximum((g * inv_std)[None, None, :] * y + beta[None, None, :], 0.0)

    lin_f = linear(iconv_stack(pep, params["conv"], False), params["linear"])
    lin_r0 = linear(iconv_stack(pep_rev, params["conv_R"], True), params["linear_R"])
    neg = float("-inf")
    p_f = jnp.max(jnp.where(mask_h[..., None] > 0.5, lin_f, neg), axis=1)
    p_r0 = jnp.max(jnp.where(mask_h[:, ::-1][..., None] > 0.5, lin_r0, neg), axis=1)
    ow = jnp.transpose(params["out_w"])
    s0 = jax.nn.sigmoid(p_f @ ow + params["out_b"][None])
    s1 = jax.nn.sigmoid(p_r0 @ ow + params["out_b"][None])
    return jnp.clip(0.25 * (s0 + s1), 0.0, 1.0)


# ----------------------------------------------------------------------------
if __name__ == "__main__":
    key = jax.random.PRNGKey(0)
    kp, kpep, kmhc = jax.random.split(key, 3)
    params = init_params(kp)

    B = 40
    pep_tok = jnp.zeros((B, PEP_LEN), jnp.int32)
    core = jax.random.randint(kpep, (B, CORE_LEN), 1, VOCAB, dtype=jnp.int32)
    pep_tok = pep_tok.at[:, PEP_PAD:PEP_LEN - PEP_PAD].set(core)
    # zero a couple of core positions so the valid-position mask is exercised
    pep_tok = pep_tok.at[0, 16].set(0).at[2, 17].set(0)
    mhc_tok = jax.random.randint(kmhc, (B, MHC_LEN), 1, VOCAB, dtype=jnp.int32)

    out = deepmhcii_forward(pep_tok, mhc_tok, params)             # tb auto-capped -> grid=(2,)
    out = jax.block_until_ready(out)
    assert out.shape == (B, 2)

    ref = forward_reference(pep_tok, mhc_tok, params)
    np.testing.assert_allclose(np.asarray(out), np.asarray(ref), atol=2e-2, rtol=2e-2)
    print("KERNEL_OK")
</pallas_src>

<mosaic_0001>
module attributes {stable_mosaic.version = 11 : i64} {
  func.func @_kernel(%arg0: i32, %arg1: memref<24x24x16xbf16, #tpu.memory_space<vmem>>, %arg2: memref<24x16x34xbf16, #tpu.memory_space<vmem>>, %arg3: memref<384x1xf32, #tpu.memory_space<vmem>>, %arg4: memref<9x34x32xbf16, #tpu.memory_space<vmem>>, %arg5: memref<32x32xbf16, #tpu.memory_space<vmem>>, %arg6: memref<32x4xbf16, #tpu.memory_space<vmem>>, %arg7: memref<1x32xf32, #tpu.memory_space<vmem>>, %arg8: memref<1x32xf32, #tpu.memory_space<vmem>>, %arg9: memref<1x4xf32, #tpu.memory_space<vmem>>, %arg10: memref<24x2xf32, #tpu.memory_space<vmem>>) attributes {dimension_semantics = [#tpu.dimension_semantics<parallel>], iteration_bounds = array<i64: 2>, scalar_prefetch = 0 : i64, scratch_operands = 0 : i64, tpu.core_type = #tpu.core_type<tc>, window_params = [{transform_indices = @transform_0, window_bounds = array<i64: 24, 24, 16>}, {transform_indices = @transform_1, window_bounds = array<i64: 24, 16, 34>}, {transform_indices = @transform_2, window_bounds = array<i64: 384, 1>}, {pipeline_mode = #tpu.pipeline_mode<synchronous>, transform_indices = @transform_3, window_bounds = array<i64: 9, 34, 32>}, {pipeline_mode = #tpu.pipeline_mode<synchronous>, transform_indices = @transform_4, window_bounds = array<i64: 32, 32>}, {pipeline_mode = #tpu.pipeline_mode<synchronous>, transform_indices = @transform_5, window_bounds = array<i64: 32, 4>}, {pipeline_mode = #tpu.pipeline_mode<synchronous>, transform_indices = @transform_6, window_bounds = array<i64: 1, 32>}, {pipeline_mode = #tpu.pipeline_mode<synchronous>, transform_indices = @transform_7, window_bounds = array<i64: 1, 32>}, {pipeline_mode = #tpu.pipeline_mode<synchronous>, transform_indices = @transform_8, window_bounds = array<i64: 1, 4>}, {transform_indices = @transform_9, window_bounds = array<i64: 24, 2>}]} {
    %c0 = arith.constant 0 : index
    %c0_0 = arith.constant 0 : index
    %c0_1 = arith.constant 0 : index
    %0 = vector.load %arg1[%c0, %c0_0, %c0_1] : memref<24x24x16xbf16, #tpu.memory_space<vmem>>, vector<24x24x16xbf16>
    %c0_2 = arith.constant 0 : index
    %c0_3 = arith.constant 0 : index
    %c0_4 = arith.constant 0 : index
    %1 = vector.load %arg2[%c0_2, %c0_3, %c0_4] : memref<24x16x34xbf16, #tpu.memory_space<vmem>>, vector<24x16x34xbf16>
    "tpu.trace_start"() <{level = 10 : i32, message = "bpe,bel->bpl"}> : () -> ()
    %cst = arith.constant dense<0.000000e+00> : vector<24x24x34xf32>
    %2 = tpu.matmul %0, %1, %cst {dimension_numbers = #tpu.dot_dimension_numbers<[2], [1], [1], [2], [0, 0, 0, 1, 1, 2], [0], [0]>} : vector<24x24x16xbf16>, vector<24x16x34xbf16>, vector<24x24x34xf32> -> vector<24x24x34xf32>
    "tpu.trace_stop"() : () -> ()
    %c0_5 = arith.constant 0 : index
    %c0_6 = arith.constant 0 : index
    %c0_7 = arith.constant 0 : index
    %3 = vector.load %arg4[%c0_5, %c0_6, %c0_7] : memref<9x34x32xbf16, #tpu.memory_space<vmem>>, vector<9x34x32xbf16>
    %cst_8 = arith.constant 0.000000e+00 : f32
    %4 = vector.broadcast %cst_8 : f32 to vector<384x32xf32>
    %5 = vector.extract_strided_slice %2 {offsets = [0, 0, 0], sizes = [24, 16, 34], strides = [1, 1, 1]} : vector<24x24x34xf32> to vector<24x16x34xf32>
    %6 = vector.shape_cast %5 : vector<24x16x34xf32> to vector<384x34xf32>
    %7 = arith.truncf %6 : vector<384x34xf32> to vector<384x34xbf16>
    %8 = vector.extract_strided_slice %3 {offsets = [0, 0, 0], sizes = [1, 34, 32], strides = [1, 1, 1]} : vector<9x34x32xbf16> to vector<1x34x32xbf16>
    %9 = vector.shape_cast %8 : vector<1x34x32xbf16> to vector<34x32xbf16>
    %cst_9 = arith.constant dense<0.000000e+00> : vector<384x32xf32>
    %10 = tpu.matmul %7, %9, %cst_9 {dimension_numbers = #tpu.dot_dimension_numbers<[1], [0], [0], [1], [0, 0, 1, 1], [], []>} : vector<384x34xbf16>, vector<34x32xbf16>, vector<384x32xf32> -> vector<384x32xf32>
    %11 = arith.addf %4, %10 : vector<384x32xf32>
    %12 = vector.extract_strided_slice %2 {offsets = [0, 1, 0], sizes = [24, 16, 34], strides = [1, 1, 1]} : vector<24x24x34xf32> to vector<24x16x34xf32>
    %13 = vector.shape_cast %12 : vector<24x16x34xf32> to vector<384x34xf32>
    %14 = arith.truncf %13 : vector<384x34xf32> to vector<384x34xbf16>
    %15 = vector.extract_strided_slice %3 {offsets = [1, 0, 0], sizes = [1, 34, 32], strides = [1, 1, 1]} : vector<9x34x32xbf16> to vector<1x34x32xbf16>
    %16 = vector.shape_cast %15 : vector<1x34x32xbf16> to vector<34x32xbf16>
    %cst_10 = arith.constant dense<0.000000e+00> : vector<384x32xf32>
    %17 = tpu.matmul %14, %16, %cst_10 {dimension_numbers = #tpu.dot_dimension_numbers<[1], [0], [0], [1], [0, 0, 1, 1], [], []>} : vector<384x34xbf16>, vector<34x32xbf16>, vector<384x32xf32> -> vector<384x32xf32>
    %18 = arith.addf %11, %17 : vector<384x32xf32>
    %19 = vector.extract_strided_slice %2 {offsets = [0, 2, 0], sizes = [24, 16, 34], strides = [1, 1, 1]} : vector<24x24x34xf32> to vector<24x16x34xf32>
    %20 = vector.shape_cast %19 : vector<24x16x34xf32> to vector<384x34xf32>
    %21 = arith.truncf %20 : vector<384x34xf32> to vector<384x34xbf16>
    %22 = vector.extract_strided_slice %3 {offsets = [2, 0, 0], sizes = [1, 34, 32], strides = [1, 1, 1]} : vector<9x34x32xbf16> to vector<1x34x32xbf16>
    %23 = vector.shape_cast %22 : vector<1x34x32xbf16> to vector<34x32xbf16>
    %cst_11 = arith.constant dense<0.000000e+00> : vector<384x32xf32>
    %24 = tpu.matmul %21, %23, %cst_11 {dimension_numbers = #tpu.dot_dimension_numbers<[1], [0], [0], [1], [0, 0, 1, 1], [], []>} : vector<384x34xbf16>, vector<34x32xbf16>, vector<384x32xf32> -> vector<384x32xf32>
    %25 = arith.addf %18, %24 : vector<384x32xf32>
    %26 = vector.extract_strided_slice %2 {offsets = [0, 3, 0], sizes = [24, 16, 34], strides = [1, 1, 1]} : vector<24x24x34xf32> to vector<24x16x34xf32>
    %27 = vector.shape_cast %26 : vector<24x16x34xf32> to vector<384x34xf32>
    %28 = arith.truncf %27 : vector<384x34xf32> to vector<384x34xbf16>
    %29 = vector.extract_strided_slice %3 {offsets = [3, 0, 0], sizes = [1, 34, 32], strides = [1, 1, 1]} : vector<9x34x32xbf16> to vector<1x34x32xbf16>
    %30 = vector.shape_cast %29 : vector<1x34x32xbf16> to vector<34x32xbf16>
    %cst_12 = arith.constant dense<0.000000e+00> : vector<384x32xf32>
    %31 = tpu.matmul %28, %30, %cst_12 {dimension_numbers = #tpu.dot_dimension_numbers<[1], [0], [0], [1], [0, 0, 1, 1], [], []>} : vector<384x34xbf16>, vector<34x32xbf16>, vector<384x32xf32> -> vector<384x32xf32>
    %32 = arith.addf %25, %31 : vector<384x32xf32>
    %33 = vector.extract_strided_slice %2 {offsets = [0, 4, 0], sizes = [24, 16, 34], strides = [1, 1, 1]} : vector<24x24x34xf32> to vector<24x16x34xf32>
    %34 = vector.shape_cast %33 : vector<24x16x34xf32> to vector<384x34xf32>
    %35 = arith.truncf %34 : vector<384x34xf32> to vector<384x34xbf16>
    %36 = vector.extract_strided_slice %3 {offsets = [4, 0, 0], sizes = [1, 34, 32], strides = [1, 1, 1]} : vector<9x34x32xbf16> to vector<1x34x32xbf16>
    %37 = vector.shape_cast %36 : vector<1x34x32xbf16> to vector<34x32xbf16>
    %cst_13 = arith.constant dense<0.000000e+00> : vector<384x32xf32>
    %38 = tpu.matmul %35, %37, %cst_13 {dimension_numbers = #tpu.dot_dimension_numbers<[1], [0], [0], [1], [0, 0, 1, 1], [], []>} : vector<384x34xbf16>, vector<34x32xbf16>, vector<384x32xf32> -> vector<384x32xf32>
    %39 = arith.addf %32, %38 : vector<384x32xf32>
    %40 = vector.extract_strided_slice %2 {offsets = [0, 5, 0], sizes = [24, 16, 34], strides = [1, 1, 1]} : vector<24x24x34xf32> to vector<24x16x34xf32>
    %41 = vector.shape_cast %40 : vector<24x16x34xf32> to vector<384x34xf32>
    %42 = arith.truncf %41 : vector<384x34xf32> to vector<384x34xbf16>
    %43 = vector.extract_strided_slice %3 {offsets = [5, 0, 0], sizes = [1, 34, 32], strides = [1, 1, 1]} : vector<9x34x32xbf16> to vector<1x34x32xbf16>
    %44 = vector.shape_cast %43 : vector<1x34x32xbf16> to vector<34x32xbf16>
    %cst_14 = arith.constant dense<0.000000e+00> : vector<384x32xf32>
    %45 = tpu.matmul %42, %44, %cst_14 {dimension_numbers = #tpu.dot_dimension_numbers<[1], [0], [0], [1], [0, 0, 1, 1], [], []>} : vector<384x34xbf16>, vector<34x32xbf16>, vector<384x32xf32> -> vector<384x32xf32>
    %46 = arith.addf %39, %45 : vector<384x32xf32>
    %47 = vector.extract_strided_slice %2 {offsets = [0, 6, 0], sizes = [24, 16, 34], strides = [1, 1, 1]} : vector<24x24x34xf32> to vector<24x16x34xf32>
    %48 = vector.shape_cast %47 : vector<24x16x34xf32> to vector<384x34xf32>
    %49 = arith.truncf %48 : vector<384x34xf32> to vector<384x34xbf16>
    %50 = vector.extract_strided_slice %3 {offsets = [6, 0, 0], sizes = [1, 34, 32], strides = [1, 1, 1]} : vector<9x34x32xbf16> to vector<1x34x32xbf16>
    %51 = vector.shape_cast %50 : vector<1x34x32xbf16> to vector<34x32xbf16>
    %cst_15 = arith.constant dense<0.000000e+00> : vector<384x32xf32>
    %52 = tpu.matmul %49, %51, %cst_15 {dimension_numbers = #tpu.dot_dimension_numbers<[1], [0], [0], [1], [0, 0, 1, 1], [], []>} : vector<384x34xbf16>, vector<34x32xbf16>, vector<384x32xf32> -> vector<384x32xf32>
    %53 = arith.addf %46, %52 : vector<384x32xf32>
    %54 = vector.extract_strided_slice %2 {offsets = [0, 7, 0], sizes = [24, 16, 34], strides = [1, 1, 1]} : vector<24x24x34xf32> to vector<24x16x34xf32>
    %55 = vector.shape_cast %54 : vector<24x16x34xf32> to vector<384x34xf32>
    %56 = arith.truncf %55 : vector<384x34xf32> to vector<384x34xbf16>
    %57 = vector.extract_strided_slice %3 {offsets = [7, 0, 0], sizes = [1, 34, 32], strides = [1, 1, 1]} : vector<9x34x32xbf16> to vector<1x34x32xbf16>
    %58 = vector.shape_cast %57 : vector<1x34x32xbf16> to vector<34x32xbf16>
    %cst_16 = arith.constant dense<0.000000e+00> : vector<384x32xf32>
    %59 = tpu.matmul %56, %58, %cst_16 {dimension_numbers = #tpu.dot_dimension_numbers<[1], [0], [0], [1], [0, 0, 1, 1], [], []>} : vector<384x34xbf16>, vector<34x32xbf16>, vector<384x32xf32> -> vector<384x32xf32>
    %60 = arith.addf %53, %59 : vector<384x32xf32>
    %61 = vector.extract_strided_slice %2 {offsets = [0, 8, 0], sizes = [24, 16, 34], strides = [1, 1, 1]} : vector<24x24x34xf32> to vector<24x16x34xf32>
    %62 = vector.shape_cast %61 : vector<24x16x34xf32> to vector<384x34xf32>
    %63 = arith.truncf %62 : vector<384x34xf32> to vector<384x34xbf16>
    %64 = vector.extract_strided_slice %3 {offsets = [8, 0, 0], sizes = [1, 34, 32], strides = [1, 1, 1]} : vector<9x34x32xbf16> to vector<1x34x32xbf16>
    %65 = vector.shape_cast %64 : vector<1x34x32xbf16> to vector<34x32xbf16>
    %cst_17 = arith.constant dense<0.000000e+00> : vector<384x32xf32>
    %66 = tpu.matmul %63, %65, %cst_17 {dimension_numbers = #tpu.dot_dimension_numbers<[1], [0], [0], [1], [0, 0, 1, 1], [], []>} : vector<384x34xbf16>, vector<34x32xbf16>, vector<384x32xf32> -> vector<384x32xf32>
    %67 = arith.addf %60, %66 : vector<384x32xf32>
    %c0_18 = arith.constant 0 : index
    %c0_19 = arith.constant 0 : index
    %68 = vector.load %arg7[%c0_18, %c0_19] : memref<1x32xf32, #tpu.memory_space<vmem>>, vector<1x32xf32>
    %69 = vector.broadcast %68 : vector<1x32xf32> to vector<384x32xf32>
    %70 = arith.addf %67, %69 : vector<384x32xf32>
    %cst_20 = arith.constant 0.000000e+00 : f32
    %71 = vector.broadcast %cst_20 : f32 to vector<384x32xf32>
    %72 = arith.maximumf %70, %71 : vector<384x32xf32>
    %73 = arith.truncf %72 : vector<384x32xf32> to vector<384x32xbf16>
    %c0_21 = arith.constant 0 : index
    %c0_22 = arith.constant 0 : index
    %74 = vector.load %arg5[%c0_21, %c0_22] : memref<32x32xbf16, #tpu.memory_space<vmem>>, vector<32x32xbf16>
    %cst_23 = arith.constant dense<0.000000e+00> : vector<384x32xf32>
    %75 = tpu.matmul %73, %74, %cst_23 {dimension_numbers = #tpu.dot_dimension_numbers<[1], [0], [0], [1], [0, 0, 1, 1], [], []>} : vector<384x32xbf16>, vector<32x32xbf16>, vector<384x32xf32> -> vector<384x32xf32>
    %c0_24 = arith.constant 0 : index
    %c0_25 = arith.constant 0 : index
    %76 = vector.load %arg8[%c0_24, %c0_25] : memref<1x32xf32, #tpu.memory_space<vmem>>, vector<1x32xf32>
    %77 = vector.broadcast %76 : vector<1x32xf32> to vector<384x32xf32>
    %78 = arith.addf %75, %77 : vector<384x32xf32>
    %cst_26 = arith.constant 0.000000e+00 : f32
    %79 = vector.broadcast %cst_26 : f32 to vector<384x32xf32>
    %80 = arith.maximumf %78, %79 : vector<384x32xf32>
    %c0_27 = arith.constant 0 : index
    %c0_28 = arith.constant 0 : index
    %81 = vector.load %arg3[%c0_27, %c0_28] : memref<384x1xf32, #tpu.memory_space<vmem>>, vector<384x1xf32>
    %82 = vector.broadcast %81 : vector<384x1xf32> to vector<384x32xf32>
    %83 = arith.mulf %80, %82 : vector<384x32xf32>
    %84 = vector.shape_cast %83 : vector<384x32xf32> to vector<24x16x32xf32>
    %cst_29 = arith.constant dense<0xFF800000> : vector<24x32xf32>
    %85 = vector.multi_reduction <maximumf>, %84, %cst_29 [1] : vector<24x16x32xf32> to vector<24x32xf32>
    %86 = arith.truncf %85 : vector<24x32xf32> to vector<24x32xbf16>
    %c0_30 = arith.constant 0 : index
    %c0_31 = arith.constant 0 : index
    %87 = vector.load %arg6[%c0_30, %c0_31] : memref<32x4xbf16, #tpu.memory_space<vmem>>, vector<32x4xbf16>
    %cst_32 = arith.constant dense<0.000000e+00> : vector<24x4xf32>
    %88 = tpu.matmul %86, %87, %cst_32 {dimension_numbers = #tpu.dot_dimension_numbers<[1], [0], [0], [1], [0, 0, 1, 1], [], []>} : vector<24x32xbf16>, vector<32x4xbf16>, vector<24x4xf32> -> vector<24x4xf32>
    %c0_33 = arith.constant 0 : index
    %c0_34 = arith.constant 0 : index
    %89 = vector.load %arg9[%c0_33, %c0_34] : memref<1x4xf32, #tpu.memory_space<vmem>>, vector<1x4xf32>
    %90 = vector.broadcast %89 : vector<1x4xf32> to vector<24x4xf32>
    %91 = arith.addf %88, %90 : vector<24x4xf32>
    %92 = arith.negf %91 : vector<24x4xf32>
    %93 = math.exp %92 : vector<24x4xf32>
    %cst_35 = arith.constant 1.000000e+00 : f32
    %94 = vector.broadcast %cst_35 : f32 to vector<24x4xf32>
    %95 = arith.addf %94, %93 : vector<24x4xf32>
    %96 = arith.divf %94, %95 : vector<24x4xf32>
    %97 = vector.extract_strided_slice %96 {offsets = [0, 0], sizes = [24, 2], strides = [1, 1]} : vector<24x4xf32> to vector<24x2xf32>
    %98 = vector.extract_strided_slice %96 {offsets = [0, 2], sizes = [24, 2], strides = [1, 1]} : vector<24x4xf32> to vector<24x2xf32>
    %99 = arith.addf %97, %98 : vector<24x2xf32>
    %cst_36 = arith.constant 2.500000e-01 : f32
    %100 = vector.broadcast %cst_36 : f32 to vector<24x2xf32>
    %101 = arith.mulf %100, %99 : vector<24x2xf32>
    %cst_37 = arith.constant 0.000000e+00 : f32
    %cst_38 = arith.constant 1.000000e+00 : f32
    %102 = vector.broadcast %cst_37 : f32 to vector<24x2xf32>
    %103 = arith.maximumf %102, %101 : vector<24x2xf32>
    %104 = vector.broadcast %cst_38 : f32 to vector<24x2xf32>
    %105 = arith.minimumf %104, %103 : vector<24x2xf32>
    %c0_39 = arith.constant 0 : index
    %c0_40 = arith.constant 0 : index
    %106 = vector.load %arg10[%c0_39, %c0_40] : memref<24x2xf32, #tpu.memory_space<vmem>>, vector<24x2xf32>
    tpu.vector_store %arg10[%c0_39, %c0_40], %105 {strides = array<i32>} : memref<24x2xf32, #tpu.memory_space<vmem>>, vector<24x2xf32>,
    return
  }
  func.func @transform_0(%arg0: i32) -> (i32, i32, i32) {
    %c0_i32 = arith.constant 0 : i32
    %c0_i32_0 = arith.constant 0 : i32
    %c0_i32_1 = arith.constant 0 : i32
    return %arg0, %c0_i32, %c0_i32_0 : i32, i32, i32
  }
  func.func @transform_1(%arg0: i32) -> (i32, i32, i32) {
    %c0_i32 = arith.constant 0 : i32
    %c0_i32_0 = arith.constant 0 : i32
    %c0_i32_1 = arith.constant 0 : i32
    return %arg0, %c0_i32, %c0_i32_0 : i32, i32, i32
  }
  func.func @transform_2(%arg0: i32) -> (i32, i32) {
    %c0_i32 = arith.constant 0 : i32
    %c0_i32_0 = arith.constant 0 : i32
    return %arg0, %c0_i32 : i32, i32
  }
  func.func @transform_3(%arg0: i32) -> (i32, i32, i32) {
    %c0_i32 = arith.constant 0 : i32
    %c0_i32_0 = arith.constant 0 : i32
    %c0_i32_1 = arith.constant 0 : i32
    %c0_i32_2 = arith.constant 0 : i32
    return %c0_i32, %c0_i32_0, %c0_i32_1 : i32, i32, i32
  }
  func.func @transform_4(%arg0: i32) -> (i32, i32) {
    %c0_i32 = arith.constant 0 : i32
    %c0_i32_0 = arith.constant 0 : i32
    %c0_i32_1 = arith.constant 0 : i32
    return %c0_i32, %c0_i32_0 : i32, i32
  }
  func.func @transform_5(%arg0: i32) -> (i32, i32) {
    %c0_i32 = arith.constant 0 : i32
    %c0_i32_0 = arith.constant 0 : i32
    %c0_i32_1 = arith.constant 0 : i32
    return %c0_i32, %c0_i32_0 : i32, i32
  }
  func.func @transform_6(%arg0: i32) -> (i32, i32) {
    %c0_i32 = arith.constant 0 : i32
    %c0_i32_0 = arith.constant 0 : i32
    %c0_i32_1 = arith.constant 0 : i32
    return %c0_i32, %c0_i32_0 : i32, i32
  }
  func.func @transform_7(%arg0: i32) -> (i32, i32) {
    %c0_i32 = arith.constant 0 : i32
    %c0_i32_0 = arith.constant 0 : i32
    %c0_i32_1 = arith.constant 0 : i32
    return %c0_i32, %c0_i32_0 : i32, i32
  }
  func.func @transform_8(%arg0: i32) -> (i32, i32) {
    %c0_i32 = arith.constant 0 : i32
    %c0_i32_0 = arith.constant 0 : i32
    %c0_i32_1 = arith.constant 0 : i32
    return %c0_i32, %c0_i32_0 : i32, i32
  }
  func.func @transform_9(%arg0: i32) -> (i32, i32) {
    %c0_i32 = arith.constant 0 : i32
    %c0_i32_0 = arith.constant 0 : i32
    return %arg0, %c0_i32 : i32, i32
  }
}

</mosaic_0001>

<llo_original>
// kernel: tpu_custom_call.1
$region0: #{tpu_custom_call.1}
  #allocation0 [shape = 'u32[]', space=smem, size = 0x4, offset = 0x4, fixed_abs, tag = 'smem constant byte address 0x4 - core index']
  #allocation1 [shape = 'u32[144,128]{1,0:T(1,128)}', space=vmem, size = 0x12000, scoped, tag = 'internal scratch']
  %s0 = inlined_call_operand.vmem [shape: bf16[48,24,16], index: 0, kind: input, shape index: {}]
  %s1 = inlined_call_operand.vmem [shape: bf16[48,16,34], index: 1, kind: input, shape index: {}]
  %s2 = inlined_call_operand.vmem [shape: f32[768,1], index: 2, kind: input, shape index: {}]
  %s3 = inlined_call_operand.vmem [shape: bf16[9,34,32], index: 3, kind: input, shape index: {}]
  %s4 = inlined_call_operand.vmem [shape: bf16[32,32], index: 4, kind: input, shape index: {}]
  %s5 = inlined_call_operand.vmem [shape: bf16[32,4], index: 5, kind: input, shape index: {}]
  %s6 = inlined_call_operand.vmem [shape: f32[1,32], index: 6, kind: input, shape index: {}]
  %s7 = inlined_call_operand.vmem [shape: f32[1,32], index: 7, kind: input, shape index: {}]
  %s8 = inlined_call_operand.vmem [shape: f32[1,4], index: 8, kind: input, shape index: {}]
  %s9 = inlined_call_operand.vmem [shape: f32[48,2], index: 9, kind: output, shape index: {}]
  %s10 = sld [smem:[#allocation0]]
  $region69: #{tpu_custom_call.1} parent=0
    _
  %s12 = ssub.s32 1, %s10
  %s13 = scalar_select 0, %s12, %s10
  loop: start=0, step=1, limit=4
  $region2: #{tpu_custom_call.1} parent=0 // loop_pre_header
    _
  $region3: #{tpu_custom_call.1} parent=0 // loop_header
    %s15 = sphi 0, %s19
    %p16 = scmp.ge.s32.totalorder %s15, 4
    %s25 = sphi 0, %s27
    %s28 = sphi 0, %s25
    %s29 = sphi 0, %s28
    %s45 = sphi 0, %s29
    %s51 = sphi 0, %s53
    %s54 = sphi 0, %s51
    %s55 = sphi 0, %s54
    %s71 = sphi 0, %s55
    %s77 = sphi 0, %s79
    %s80 = sphi 0, %s77
    %s81 = sphi 0, %s80
    %s97 = sphi 0, %s81
    %s101 = sphi 0, %s101
    %s103 = sphi 0, %s101
    %s104 = sphi 0, %s103
    %s118 = sphi 0, %s104
    %s122 = sphi 0, %s122
    %s124 = sphi 0, %s122
    %s125 = sphi 0, %s124
    %s139 = sphi 0, %s125
    %s143 = sphi 0, %s143
    %s145 = sphi 0, %s143
    %s146 = sphi 0, %s145
    %s160 = sphi 0, %s146
    %s164 = sphi 0, %s164
    %s166 = sphi 0, %s164
    %s167 = sphi 0, %s166
    %s181 = sphi 0, %s167
    %s185 = sphi 0, %s185
    %s187 = sphi 0, %s185
    %s188 = sphi 0, %s187
    %s202 = sphi 0, %s188
    %s206 = sphi 0, %s206
    %s208 = sphi 0, %s206
    %s209 = sphi 0, %s208
    %s223 = sphi 0, %s209
    %s229 = sphi 0, %s231
    %s232 = sphi 0, %s229
    %s233 = sphi 0, %s232
    %s249 = sphi 0, %s233
  $region4: #{tpu_custom_call.1} parent=0 // loop_header_branch
    %18 = sbr.rel (%p16) target = $region8
  $region5: #{tpu_custom_call.1} parent=0 // loop_body
    %s20 = ssub.s32 %s15, 1
    %s21 = ssub.s32 %s15, 2
    %s22 = sadd.s32 %s15, 1
    %s23 = ssub.s32 %s15, %s22
    %p24 = scmp.eq.s32.totalorder %s23, 0
    %s26 = sadd.s32 %s25, 1
    %s27 = scalar_select %p24, %s25, %s26
    %p30 = pneg %p24
    %p31 = scmp.eq.s32.totalorder %s15, 1
    %p32 = por %p30, %p31
    %p33 = scmp.ne.s32.totalorder %s25, %s28
    %p34 = scmp.eq.s32.totalorder %s15, 0
    %p35 = por %p33, %p34
    %p36 = scmp.ne.s32.totalorder %s25, %s28
    %p37 = scmp.eq.s32.totalorder %s20, 1
    %p38 = por %p36, %p37
    %p39 = scmp.ne.s32.totalorder %s28, %s29
    %p40 = scmp.eq.s32.totalorder %s20, 0
    %p41 = por %p39, %p40
    %p42 = scmp.ne.s32.totalorder %s28, %s29
    %p43 = scmp.eq.s32.totalorder %s21, 1
    %p44 = por %p42, %p43
    %p46 = scmp.ne.s32.totalorder %s29, %s45
    %p47 = scmp.eq.s32.totalorder %s21, 0
    %p48 = por %p46, %p47
    %s49 = ssub.s32 %s15, %s22
    %p50 = scmp.eq.s32.totalorder %s49, 0
    %s52 = sadd.s32 %s51, 1
    %s53 = scalar_select %p50, %s51, %s52
    %p56 = pneg %p50
    %p57 = scmp.eq.s32.totalorder %s15, 1
    %p58 = por %p56, %p57
    %p59 = scmp.ne.s32.totalorder %s51, %s54
    %p60 = scmp.eq.s32.totalorder %s15, 0
    %p61 = por %p59, %p60
    %p62 = scmp.ne.s32.totalorder %s51, %s54
    %p63 = scmp.eq.s32.totalorder %s20, 1
    %p64 = por %p62, %p63
    %p65 = scmp.ne.s32.totalorder %s54, %s55
    %p66 = scmp.eq.s32.totalorder %s20, 0
    %p67 = por %p65, %p66
    %p68 = scmp.ne.s32.totalorder %s54, %s55
    %p69 = scmp.eq.s32.totalorder %s21, 1
    %p70 = por %p68, %p69
    %p72 = scmp.ne.s32.totalorder %s55, %s71
    %p73 = scmp.eq.s32.totalorder %s21, 0
    %p74 = por %p72, %p73
    %s75 = ssub.s32 %s15, %s22
    %p76 = scmp.eq.s32.totalorder %s75, 0
    %s78 = sadd.s32 %s77, 1
    %s79 = scalar_select %p76, %s77, %s78
    %p82 = pneg %p76
    %p83 = scmp.eq.s32.totalorder %s15, 1
    %p84 = por %p82, %p83
    %p85 = scmp.ne.s32.totalorder %s77, %s80
    %p86 = scmp.eq.s32.totalorder %s15, 0
    %p87 = por %p85, %p86
    %p88 = scmp.ne.s32.totalorder %s77, %s80
    %p89 = scmp.eq.s32.totalorder %s20, 1
    %p90 = por %p88, %p89
    %p91 = scmp.ne.s32.totalorder %s80, %s81
    %p92 = scmp.eq.s32.totalorder %s20, 0
    %p93 = por %p91, %p92
    %p94 = scmp.ne.s32.totalorder %s80, %s81
    %p95 = scmp.eq.s32.totalorder %s21, 1
    %p96 = por %p94, %p95
    %p98 = scmp.ne.s32.totalorder %s81, %s97
    %p99 = scmp.eq.s32.totalorder %s21, 0
    %p100 = por %p98, %p99
    %s102 = sadd.s32 %s101, 1
    %p105 = scmp.eq.s32.totalorder %s15, 1
    %p106 = scmp.ne.s32.totalorder %s101, %s103
    %p107 = scmp.eq.s32.totalorder %s15, 0
    %p108 = por %p106, %p107
    %p109 = scmp.ne.s32.totalorder %s101, %s103
    %p110 = scmp.eq.s32.totalorder %s20, 1
    %p111 = por %p109, %p110
    %p112 = scmp.ne.s32.totalorder %s103, %s104
    %p113 = scmp.eq.s32.totalorder %s20, 0
    %p114 = por %p112, %p113
    %p115 = scmp.ne.s32.totalorder %s103, %s104
    %p116 = scmp.eq.s32.totalorder %s21, 1
    %p117 = por %p115, %p116
    %p119 = scmp.ne.s32.totalorder %s104, %s118
    %p120 = scmp.eq.s32.totalorder %s21, 0
    %p121 = por %p119, %p120
    %s123 = sadd.s32 %s122, 1
    %p126 = scmp.eq.s32.totalorder %s15, 1
    %p127 = scmp.ne.s32.totalorder %s122, %s124
    %p128 = scmp.eq.s32.totalorder %s15, 0
    %p129 = por %p127, %p128
    %p130 = scmp.ne.s32.totalorder %s122, %s124
    %p131 = scmp.eq.s32.totalorder %s20, 1
    %p132 = por %p130, %p131
    %p133 = scmp.ne.s32.totalorder %s124, %s125
    %p134 = scmp.eq.s32.totalorder %s20, 0
    %p135 = por %p133, %p134
    %p136 = scmp.ne.s32.totalorder %s124, %s125
    %p137 = scmp.eq.s32.totalorder %s21, 1
    %p138 = por %p136, %p137
    %p140 = scmp.ne.s32.totalorder %s125, %s139
    %p141 = scmp.eq.s32.totalorder %s21, 0
    %p142 = por %p140, %p141
    %s144 = sadd.s32 %s143, 1
    %p147 = scmp.eq.s32.totalorder %s15, 1
    %p148 = scmp.ne.s32.totalorder %s143, %s145
    %p149 = scmp.eq.s32.totalorder %s15, 0
    %p150 = por %p148, %p149
    %p151 = scmp.ne.s32.totalorder %s143, %s145
    %p152 = scmp.eq.s32.totalorder %s20, 1
    %p153 = por %p151, %p152
    %p154 = scmp.ne.s32.totalorder %s145, %s146
    %p155 = scmp.eq.s32.totalorder %s20, 0
    %p156 = por %p154, %p155
    %p157 = scmp.ne.s32.totalorder %s145, %s146
    %p158 = scmp.eq.s32.totalorder %s21, 1
    %p159 = por %p157, %p158
    %p161 = scmp.ne.s32.totalorder %s146, %s160
    %p162 = scmp.eq.s32.totalorder %s21, 0
    %p163 = por %p161, %p162
    %s165 = sadd.s32 %s164, 1
    %p168 = scmp.eq.s32.totalorder %s15, 1
    %p169 = scmp.ne.s32.totalorder %s164, %s166
    %p170 = scmp.eq.s32.totalorder %s15, 0
    %p171 = por %p169, %p170
    %p172 = scmp.ne.s32.totalorder %s164, %s166
    %p173 = scmp.eq.s32.totalorder %s20, 1
    %p174 = por %p172, %p173
    %p175 = scmp.ne.s32.totalorder %s166, %s167
    %p176 = scmp.eq.s32.totalorder %s20, 0
    %p177 = por %p175, %p176
    %p178 = scmp.ne.s32.totalorder %s166, %s167
    %p179 = scmp.eq.s32.totalorder %s21, 1
    %p180 = por %p178, %p179
    %p182 = scmp.ne.s32.totalorder %s167, %s181
    %p183 = scmp.eq.s32.totalorder %s21, 0
    %p184 = por %p182, %p183
    %s186 = sadd.s32 %s185, 1
    %p189 = scmp.eq.s32.totalorder %s15, 1
    %p190 = scmp.ne.s32.totalorder %s185, %s187
    %p191 = scmp.eq.s32.totalorder %s15, 0
    %p192 = por %p190, %p191
    %p193 = scmp.ne.s32.totalorder %s185, %s187
    %p194 = scmp.eq.s32.totalorder %s20, 1
    %p195 = por %p193, %p194
    %p196 = scmp.ne.s32.totalorder %s187, %s188
    %p197 = scmp.eq.s32.totalorder %s20, 0
    %p198 = por %p196, %p197
    %p199 = scmp.ne.s32.totalorder %s187, %s188
    %p200 = scmp.eq.s32.totalorder %s21, 1
    %p201 = por %p199, %p200
    %p203 = scmp.ne.s32.totalorder %s188, %s202
    %p204 = scmp.eq.s32.totalorder %s21, 0
    %p205 = por %p203, %p204
    %s207 = sadd.s32 %s206, 1
    %p210 = scmp.eq.s32.totalorder %s15, 1
    %p211 = scmp.ne.s32.totalorder %s206, %s208
    %p212 = scmp.eq.s32.totalorder %s15, 0
    %p213 = por %p211, %p212
    %p214 = scmp.ne.s32.totalorder %s206, %s208
    %p215 = scmp.eq.s32.totalorder %s20, 1
    %p216 = por %p214, %p215
    %p217 = scmp.ne.s32.totalorder %s208, %s209
    %p218 = scmp.eq.s32.totalorder %s20, 0
    %p219 = por %p217, %p218
    %p220 = scmp.ne.s32.totalorder %s208, %s209
    %p221 = scmp.eq.s32.totalorder %s21, 1
    %p222 = por %p220, %p221
    %p224 = scmp.ne.s32.totalorder %s209, %s223
    %p225 = scmp.eq.s32.totalorder %s21, 0
    %p226 = por %p224, %p225
    %s227 = ssub.s32 %s15, %s22
    %p228 = scmp.eq.s32.totalorder %s227, 0
    %s230 = sadd.s32 %s229, 1
    %s231 = scalar_select %p228, %s229, %s230
    %p234 = pneg %p228
    %p235 = scmp.eq.s32.totalorder %s15, 1
    %p236 = por %p234, %p235
    %p237 = scmp.ne.s32.totalorder %s229, %s232
    %p238 = scmp.eq.s32.totalorder %s15, 0
    %p239 = por %p237, %p238
    %p240 = scmp.ne.s32.totalorder %s229, %s232
    %p241 = scmp.eq.s32.totalorder %s20, 1
    %p242 = por %p240, %p241
    %p243 = scmp.ne.s32.totalorder %s232, %s233
    %p244 = scmp.eq.s32.totalorder %s20, 0
    %p245 = por %p243, %p244
    %p246 = scmp.ne.s32.totalorder %s232, %s233
    %p247 = scmp.eq.s32.totalorder %s21, 1
    %p248 = por %p246, %p247
    %p250 = scmp.ne.s32.totalorder %s233, %s249
    %p251 = scmp.eq.s32.totalorder %s21, 0
    %p252 = por %p250, %p251
    %p253 = scmp.le.s32.totalorder 1, %s15
    %p254 = scmp.lt.s32.totalorder %s15, 3
    %p255 = pnand %p253, %p254
    %p256 = pneg %p255
    // Predicated region
    $region9: #{tpu_custom_call.1} parent=5 // pred_check
      _
    $region10: #{tpu_custom_call.1} parent=5 // pred_check_branch
      %258 = sbr.rel (%p255) target = $region12
    $region11: #{tpu_custom_call.1} parent=5 // pred_region
      %s259 = ssub.s32 %s15, 1
      // Predicated region
      $region13: #{tpu_custom_call.1} parent=11 // pred_check
        %p260 = pneg %p114
      $region14: #{tpu_custom_call.1} parent=11 // pred_check_branch
        %262 = sbr.rel (%p260) target = $region16
      $region15: #{tpu_custom_call.1} parent=11 // pred_region
        _
      $region16: #{tpu_custom_call.1} parent=11 // pred_fallthru
        _
      // Predicated region
      $region17: #{tpu_custom_call.1} parent=11 // pred_check
        %p263 = pneg %p135
      $region18: #{tpu_custom_call.1} parent=11 // pred_check_branch
        %265 = sbr.rel (%p263) target = $region20
      $region19: #{tpu_custom_call.1} parent=11 // pred_region
        _
      $region20: #{tpu_custom_call.1} parent=11 // pred_fallthru
        _
      // Predicated region
      $region21: #{tpu_custom_call.1} parent=11 // pred_check
        %p266 = pneg %p156
      $region22: #{tpu_custom_call.1} parent=11 // pred_check_branch
        %268 = sbr.rel (%p266) target = $region24
      $region23: #{tpu_custom_call.1} parent=11 // pred_region
        _
      $region24: #{tpu_custom_call.1} parent=11 // pred_fallthru
        _
      // Predicated region
      $region25: #{tpu_custom_call.1} parent=11 // pred_check
        %p269 = pneg %p177
      $region26: #{tpu_custom_call.1} parent=11 // pred_check_branch
        %271 = sbr.rel (%p269) target = $region28
      $region27: #{tpu_custom_call.1} parent=11 // pred_region
        _
      $region28: #{tpu_custom_call.1} parent=11 // pred_fallthru
        _
      // Predicated region
      $region29: #{tpu_custom_call.1} parent=11 // pred_check
        %p272 = pneg %p198
      $region30: #{tpu_custom_call.1} parent=11 // pred_check_branch
        %274 = sbr.rel (%p272) target = $region32
      $region31: #{tpu_custom_call.1} parent=11 // pred_region
        _
      $region32: #{tpu_custom_call.1} parent=11 // pred_fallthru
        _
      // Predicated region
      $region33: #{tpu_custom_call.1} parent=11 // pred_check
        %p275 = pneg %p219
      $region34: #{tpu_custom_call.1} parent=11 // pred_check_branch
        %277 = sbr.rel (%p275) target = $region36
      $region35: #{tpu_custom_call.1} parent=11 // pred_region
        _
      $region36: #{tpu_custom_call.1} parent=11 // pred_fallthru
        _
    $region12: #{tpu_custom_call.1} parent=5 // pred_fallthru
      _
    %p278 = scmp.lt.s32.totalorder %s15, 2
    // Predicated region
    $region37: #{tpu_custom_call.1} parent=5 // pred_check
      %p279 = pneg %p278
    $region38: #{tpu_custom_call.1} parent=5 // pred_check_branch
      %281 = sbr.rel (%p279) target = $region40
    $region39: #{tpu_custom_call.1} parent=5 // pred_region
      // Predicated region
      $region41: #{tpu_custom_call.1} parent=39 // pred_check
        %p282 = pneg %p35
      $region42: #{tpu_custom_call.1} parent=39 // pred_check_branch
        %284 = sbr.rel (%p282) target = $region44
      $region43: #{tpu_custom_call.1} parent=39 // pred_region
        %s285 = smul.u32 24, %s15
        %p286 = scmp.lt.s32.totalorder %s285, 47
        %s287 = scalar_select %p286, %s285, 47
        %s288 = smul.addr %s287, 3
        %s289 = smul.addr %s288, 4
        %s290 = scalar_lea.vmem %s0, %s289
        %s291 = smul.u32 24, %s15
      $region44: #{tpu_custom_call.1} parent=39 // pred_fallthru
        _
      // Predicated region
      $region45: #{tpu_custom_call.1} parent=39 // pred_check
        %p292 = pneg %p61
      $region46: #{tpu_custom_call.1} parent=39 // pred_check_branch
        %294 = sbr.rel (%p292) target = $region48
      $region47: #{tpu_custom_call.1} parent=39 // pred_region
        %s295 = smul.u32 24, %s15
        %p296 = scmp.lt.s32.totalorder %s295, 47
        %s297 = scalar_select %p296, %s295, 47
        %s298 = smul.addr %s297, 2
        %s299 = smul.addr %s298, 4
        %s300 = scalar_lea.vmem %s1, %s299
        %s301 = smul.u32 24, %s15
      $region48: #{tpu_custom_call.1} parent=39 // pred_fallthru
        _
      // Predicated region
      $region49: #{tpu_custom_call.1} parent=39 // pred_check
        %p302 = pneg %p87
      $region50: #{tpu_custom_call.1} parent=39 // pred_check_branch
        %304 = sbr.rel (%p302) target = $region52
      $region51: #{tpu_custom_call.1} parent=39 // pred_region
        %s305 = smul.u32 48, %s15
        %p306 = scmp.lt.s32.totalorder %s305, 95
        %s307 = scalar_select %p306, %s305, 95
        %s308 = smul.addr %s307, 8
        %s309 = scalar_lea.vmem %s2, %s308
        %s310 = smul.u32 48, %s15
      $region52: #{tpu_custom_call.1} parent=39 // pred_fallthru
        _
    $region40: #{tpu_custom_call.1} parent=5 // pred_fallthru
      _
    %p311 = scmp.le.s32.totalorder 1, %s15
    %p312 = scmp.lt.s32.totalorder %s15, 3
    %p313 = pnand %p311, %p312
    %p314 = pneg %p313
    // Predicated region
    $region53: #{tpu_custom_call.1} parent=5 // pred_check
      _
    $region54: #{tpu_custom_call.1} parent=5 // pred_check_branch
      %316 = sbr.rel (%p313) target = $region56
    $region55: #{tpu_custom_call.1} parent=5 // pred_region
      %s317 = ssub.s32 %s15, 1
      %s318 = smul.u32 24, %s20
      %p319 = scmp.lt.s32.totalorder %s318, 47
      %s320 = scalar_select %p319, %s318, 47
      %s321 = smul.addr %s320, 3
      %s322 = smul.addr %s321, 4
      %s323 = scalar_lea.vmem %s0, %s322
      %p324 = pneg %p41
      %p325 = pneg %p38
      %s326 = smul.u32 24, %s20
      %p327 = scmp.lt.s32.totalorder %s326, 47
      %s328 = scalar_select %p327, %s326, 47
      %s329 = smul.addr %s328, 2
      %s330 = smul.addr %s329, 4
      %s331 = scalar_lea.vmem %s1, %s330
      %p332 = pneg %p67
      %p333 = pneg %p64
      %s334 = smul.u32 48, %s20
      %p335 = scmp.lt.s32.totalorder %s334, 95
      %s336 = scalar_select %p335, %s334, 95
      %s337 = smul.addr %s336, 8
      %s338 = scalar_lea.vmem %s2, %s337
      %p339 = pneg %p93
      %p340 = pneg %p90
      %p341 = pneg %p114
      %p342 = pneg %p111
      %p343 = pneg %p135
      %p344 = pneg %p132
      %p345 = pneg %p156
      %p346 = pneg %p153
      %p347 = pneg %p177
      %p348 = pneg %p174
      %p349 = pneg %p198
      %p350 = pneg %p195
      %p351 = pneg %p219
      %p352 = pneg %p216
      %p353 = pneg %p245
      %p354 = pneg %p242
      %s355 = smul.u32 3, %s20
      %p356 = scmp.lt.s32.totalorder %s355, 5
      %s357 = scalar_select %p356, %s355, 5
      %s358 = smul.addr %s357, 8
      %s359 = scalar_lea.vmem %s9, %s358
      %s360 = smul.u32 24, %s20
      %p361 = scmp.lt.s32.totalorder %s360, 47
      %s362 = scalar_select %p361, %s360, 47
      %s363 = smul.addr %s362, 3
      %s364 = smul.addr %s363, 4
      %s365 = scalar_lea.vmem %s0, %s364
      %s366 = smul.u32 24, %s20
      %s367 = smul.u32 24, %s20
      %p368 = scmp.lt.s32.totalorder %s367, 47
      %s369 = scalar_select %p368, %s367, 47
      %s370 = smul.addr %s369, 2
      %s371 = smul.addr %s370, 4
      %s372 = scalar_lea.vmem %s1, %s371
      %s373 = smul.u32 24, %s20
      %s374 = smul.u32 48, %s20
      %p375 = scmp.lt.s32.totalorder %s374, 95
      %s376 = scalar_select %p375, %s374, 95
      %s377 = smul.addr %s376, 8
      %s378 = scalar_lea.vmem %s2, %s377
      %s379 = smul.u32 48, %s20
      %s380 = smul.u32 3, %s20
      %p381 = scmp.lt.s32.totalorder %s380, 5
      %s382 = scalar_select %p381, %s380, 5
      %s383 = smul.addr %s382, 8
      %s384 = scalar_lea.vmem %s9, %s383
      %s385 = smul.u32 3, %s20
      %v387 = vld [vmem:[%s365] sm:$0xf]
      %v388 = vld [vmem:[%s365 + $0x4] sm:$0xf]
      %v389 = vld [vmem:[%s365 + $0x8] sm:$0xf]
      %v390 = vld [vmem:[%s365 + $0xc] sm:$0xf]
      %v391 = vld [vmem:[%s365 + $0x10] sm:$0xf]
      %v392 = vld [vmem:[%s365 + $0x14] sm:$0xf]
      %v393 = vld [vmem:[%s365 + $0x18] sm:$0xf]
      %v394 = vld [vmem:[%s365 + $0x1c] sm:$0xf]
      %v395 = vld [vmem:[%s365 + $0x20] sm:$0xf]
      %v396 = vld [vmem:[%s365 + $0x24] sm:$0xf]
      %v397 = vld [vmem:[%s365 + $0x28] sm:$0xf]
      %v398 = vld [vmem:[%s365 + $0x2c] sm:$0xf]
      %v399 = vld [vmem:[%s365 + $0x30] sm:$0xf]
      %v400 = vld [vmem:[%s365 + $0x34] sm:$0xf]
      %v401 = vld [vmem:[%s365 + $0x38] sm:$0xf]
      %v402 = vld [vmem:[%s365 + $0x3c] sm:$0xf]
      %v403 = vld [vmem:[%s365 + $0x40] sm:$0xf]
      %v404 = vld [vmem:[%s365 + $0x44] sm:$0xf]
      %v405 = vld [vmem:[%s365 + $0x48] sm:$0xf]
      %v406 = vld [vmem:[%s365 + $0x4c] sm:$0xf]
      %v407 = vld [vmem:[%s365 + $0x50] sm:$0xf]
      %v408 = vld [vmem:[%s365 + $0x54] sm:$0xf]
      %v409 = vld [vmem:[%s365 + $0x58] sm:$0xf]
      %v410 = vld [vmem:[%s365 + $0x5c] sm:$0xf]
      %v411 = vld [vmem:[%s365 + $0x60] sm:$0xf]
      %v412 = vld [vmem:[%s365 + $0x64] sm:$0xf]
      %v413 = vld [vmem:[%s365 + $0x68] sm:$0xf]
      %v414 = vld [vmem:[%s365 + $0x6c] sm:$0xf]
      %v415 = vld [vmem:[%s365 + $0x70] sm:$0xf]
      %v416 = vld [vmem:[%s365 + $0x74] sm:$0xf]
      %v417 = vld [vmem:[%s365 + $0x78] sm:$0xf]
      %v418 = vld [vmem:[%s365 + $0x7c] sm:$0xf]
      %v419 = vld [vmem:[%s365 + $0x80] sm:$0xf]
      %v420 = vld [vmem:[%s365 + $0x84] sm:$0xf]
      %v421 = vld [vmem:[%s365 + $0x88] sm:$0xf]
      %v422 = vld [vmem:[%s365 + $0x8c] sm:$0xf]
      %v423 = vld [vmem:[%s365 + $0x90] sm:$0xf]
      %v424 = vld [vmem:[%s365 + $0x94] sm:$0xf]
      %v425 = vld [vmem:[%s365 + $0x98] sm:$0xf]
      %v426 = vld [vmem:[%s365 + $0x9c] sm:$0xf]
      %v427 = vld [vmem:[%s365 + $0xa0] sm:$0xf]
      %v428 = vld [vmem:[%s365 + $0xa4] sm:$0xf]
      %v429 = vld [vmem:[%s365 + $0xa8] sm:$0xf]
      %v430 = vld [vmem:[%s365 + $0xac] sm:$0xf]
      %v431 = vld [vmem:[%s365 + $0xb0] sm:$0xf]
      %v432 = vld [vmem:[%s365 + $0xb4] sm:$0xf]
      %v433 = vld [vmem:[%s365 + $0xb8] sm:$0xf]
      %v434 = vld [vmem:[%s365 + $0xbc] sm:$0xf]
      %v435 = vld [vmem:[%s365 + $0xc0] sm:$0xf]
      %v436 = vld [vmem:[%s365 + $0xc4] sm:$0xf]
      %v437 = vld [vmem:[%s365 + $0xc8] sm:$0xf]
      %v438 = vld [vmem:[%s365 + $0xcc] sm:$0xf]
      %v439 = vld [vmem:[%s365 + $0xd0] sm:$0xf]
      %v440 = vld [vmem:[%s365 + $0xd4] sm:$0xf]
      %v441 = vld [vmem:[%s365 + $0xd8] sm:$0xf]
      %v442 = vld [vmem:[%s365 + $0xdc] sm:$0xf]
      %v443 = vld [vmem:[%s365 + $0xe0] sm:$0xf]
      %v444 = vld [vmem:[%s365 + $0xe4] sm:$0xf]
      %v445 = vld [vmem:[%s365 + $0xe8] sm:$0xf]
      %v446 = vld [vmem:[%s365 + $0xec] sm:$0xf]
      %v447 = vld [vmem:[%s365 + $0xf0] sm:$0xf]
      %v448 = vld [vmem:[%s365 + $0xf4] sm:$0xf]
      %v449 = vld [vmem:[%s365 + $0xf8] sm:$0xf]
      %v450 = vld [vmem:[%s365 + $0xfc] sm:$0xf]
      %v451 = vld [vmem:[%s365 + $0x100] sm:$0xf]
      %v452 = vld [vmem:[%s365 + $0x104] sm:$0xf]
      %v453 = vld [vmem:[%s365 + $0x108] sm:$0xf]
      %v454 = vld [vmem:[%s365 + $0x10c] sm:$0xf]
      %v455 = vld [vmem:[%s365 + $0x110] sm:$0xf]
      %v456 = vld [vmem:[%s365 + $0x114] sm:$0xf]
      %v457 = vld [vmem:[%s365 + $0x118] sm:$0xf]
      %v458 = vld [vmem:[%s365 + $0x11c] sm:$0xf]
      %v459 = vld [vmem:[%s372] sm:$0xf]
      %v460 = vld [vmem:[%s372 + $0x4] sm:$0xf]
      %v461 = vld [vmem:[%s372 + $0x8] sm:$0xf]
      %v462 = vld [vmem:[%s372 + $0xc] sm:$0xf]
      %v463 = vld [vmem:[%s372 + $0x10] sm:$0xf]
      %v464 = vld [vmem:[%s372 + $0x14] sm:$0xf]
      %v465 = vld [vmem:[%s372 + $0x18] sm:$0xf]
      %v466 = vld [vmem:[%s372 + $0x1c] sm:$0xf]
      %v467 = vld [vmem:[%s372 + $0x20] sm:$0xf]
      %v468 = vld [vmem:[%s372 + $0x24] sm:$0xf]
      %v469 = vld [vmem:[%s372 + $0x28] sm:$0xf]
      %v470 = vld [vmem:[%s372 + $0x2c] sm:$0xf]
      %v471 = vld [vmem:[%s372 + $0x30] sm:$0xf]
      %v472 = vld [vmem:[%s372 + $0x34] sm:$0xf]
      %v473 = vld [vmem:[%s372 + $0x38] sm:$0xf]
      %v474 = vld [vmem:[%s372 + $0x3c] sm:$0xf]
      %v475 = vld [vmem:[%s372 + $0x40] sm:$0xf]
      %v476 = vld [vmem:[%s372 + $0x44] sm:$0xf]
      %v477 = vld [vmem:[%s372 + $0x48] sm:$0xf]
      %v478 = vld [vmem:[%s372 + $0x4c] sm:$0xf]
      %v479 = vld [vmem:[%s372 + $0x50] sm:$0xf]
      %v480 = vld [vmem:[%s372 + $0x54] sm:$0xf]
      %v481 = vld [vmem:[%s372 + $0x58] sm:$0xf]
      %v482 = vld [vmem:[%s372 + $0x5c] sm:$0xf]
      %v483 = vld [vmem:[%s372 + $0x60] sm:$0xf]
      %v484 = vld [vmem:[%s372 + $0x64] sm:$0xf]
      %v485 = vld [vmem:[%s372 + $0x68] sm:$0xf]
      %v486 = vld [vmem:[%s372 + $0x6c] sm:$0xf]
      %v487 = vld [vmem:[%s372 + $0x70] sm:$0xf]
      %v488 = vld [vmem:[%s372 + $0x74] sm:$0xf]
      %v489 = vld [vmem:[%s372 + $0x78] sm:$0xf]
      %v490 = vld [vmem:[%s372 + $0x7c] sm:$0xf]
      %v491 = vld [vmem:[%s372 + $0x80] sm:$0xf]
      %v492 = vld [vmem:[%s372 + $0x84] sm:$0xf]
      %v493 = vld [vmem:[%s372 + $0x88] sm:$0xf]
      %v494 = vld [vmem:[%s372 + $0x8c] sm:$0xf]
      %v495 = vld [vmem:[%s372 + $0x90] sm:$0xf]
      %v496 = vld [vmem:[%s372 + $0x94] sm:$0xf]
      %v497 = vld [vmem:[%s372 + $0x98] sm:$0xf]
      %v498 = vld [vmem:[%s372 + $0x9c] sm:$0xf]
      %v499 = vld [vmem:[%s372 + $0xa0] sm:$0xf]
      %v500 = vld [vmem:[%s372 + $0xa4] sm:$0xf]
      %v501 = vld [vmem:[%s372 + $0xa8] sm:$0xf]
      %v502 = vld [vmem:[%s372 + $0xac] sm:$0xf]
      %v503 = vld [vmem:[%s372 + $0xb0] sm:$0xf]
      %v504 = vld [vmem:[%s372 + $0xb4] sm:$0xf]
      %v505 = vld [vmem:[%s372 + $0xb8] sm:$0xf]
      %v506 = vld [vmem:[%s372 + $0xbc] sm:$0xf]
      %v510 = vunpack.c.l.b16 %v387
      %v511 = vunpack.c.l.b16 %v388
      %v512 = vunpack.c.l.b16 %v389
      %v513 = vpack.c.b16 %v511, %v510
      %v514 = vpack.c.b16 %v512, %v512
      %v517 = vunpack.c.l.b16 %v459
      %v518 = vunpack.c.l.b16 %v460
      %v519 = vpack.c.b16 %v518, %v517
      %vm521 = vcmask 130048
      %v523 = vsel %vm521, %v513, 0
      %v526 = vsel %vm521, %v514, 0
      %528 = vmatprep.subr.bf16.mxu0 0
      %529 = vmatpush1.bf16.msra.mxu0 0
      %530 = vmatprep.subr.bf16.mxu0 0
      %531 = vmatpush1.bf16.msra.mxu0 0
      %532 = vmatprep.subr.bf16.mxu0 0
      %533 = vmatpush1.bf16.msra.mxu0 0
      %534 = vmatprep.subr.bf16.mxu0 0
      %535 = vmatpush1.bf16.msra.mxu0 0
      %536 = vmatprep.subr.bf16.mxu0 0
      %537 = vmatpush1.bf16.msra.mxu0 0
      %538 = vmatprep.subr.bf16.mxu0 0
      %539 = vmatpush1.bf16.msra.mxu0 0
      %540 = vmatprep.subr.bf16.mxu0 0
      %541 = vmatpush1.bf16.msra.mxu0 0
      %542 = vmatprep.subr.bf16.mxu0 0
      %543 = vmatpush1.bf16.msra.mxu0 %v519
      %544 = vmatprep.subr.bf16.mxu0 0
      %545 = vmatpush2.bf16.msra.mxu0 0
      %546 = vmatprep.subr.bf16.mxu0 0
      %547 = vmatpush2.bf16.msra.mxu0 0
      %548 = vmatprep.subr.bf16.mxu0 0
      %549 = vmatpush2.bf16.msra.mxu0 0
      %550 = vmatprep.subr.bf16.mxu0 0
      %551 = vmatpush2.bf16.msra.mxu0 0
      %552 = vmatprep.subr.bf16.mxu0 0
      %553 = vmatpush2.bf16.msra.mxu0 0
      %554 = vmatprep.subr.bf16.mxu0 0
      %555 = vmatpush2.bf16.msra.mxu0 0
      %556 = vmatprep.subr.bf16.mxu0 0
      %557 = vmatpush2.bf16.msra.mxu0 0
      %558 = vmatprep.subr.bf16.mxu0 0
      %559 = vmatpush2.bf16.msra.mxu0 0
      %560 = vmatprep.mubr.bf16.mxu0 0
      %561 = vmatmul.mubr.bf16.gmra.mxu0 %v523
      %v562 = vpop.f32.mrf.mxu0
      %v563 = vadd.f32 0.0, %v562
      %v564 = vpop.f32.mrf.mxu0
      %v565 = vpop.f32.mrf.mxu0
      %v566 = vadd.f32 0.0, %v565
      %v567 = vpop.f32.mrf.mxu0
      %568 = vmatprep.mubr.bf16.mxu0 0
      %569 = vmatmul.mubr.bf16.gmra.mxu0 %v526
      %v570 = vpop.f32.mrf.mxu0
      %v571 = vadd.f32 0.0, %v570
      %v572 = vpop.f32.mrf.mxu0
      %v573 = vpop.f32.mrf.mxu0
      %v574 = vpop.f32.mrf.mxu0
      %575 = vdwg.mxu0
      %v579 = vunpack.c.l.b16 %v390
      %v580 = vunpack.c.l.b16 %v391
      %v581 = vunpack.c.l.b16 %v392
      %v582 = vpack.c.b16 %v580, %v579
      %v583 = vpack.c.b16 %v581, %v581
      %v586 = vunpack.c.l.b16 %v461
      %v587 = vunpack.c.l.b16 %v462
      %v588 = vpack.c.b16 %v587, %v586
      %v591 = vsel %vm521, %v582, 0
      %v594 = vsel %vm521, %v583, 0
      %596 = vmatprep.subr.bf16.mxu0 0
      %597 = vmatpush1.bf16.msra.mxu0 0
      %598 = vmatprep.subr.bf16.mxu0 0
      %599 = vmatpush1.bf16.msra.mxu0 0
      %600 = vmatprep.subr.bf16.mxu0 0
      %601 = vmatpush1.bf16.msra.mxu0 0
      %602 = vmatprep.subr.bf16.mxu0 0
      %603 = vmatpush1.bf16.msra.mxu0 0
      %604 = vmatprep.subr.bf16.mxu0 0
      %605 = vmatpush1.bf16.msra.mxu0 0
      %606 = vmatprep.subr.bf16.mxu0 0
      %607 = vmatpush1.bf16.msra.mxu0 0
      %608 = vmatprep.subr.bf16.mxu0 0
      %609 = vmatpush1.bf16.msra.mxu0 0
      %610 = vmatprep.subr.bf16.mxu0 0
      %611 = vmatpush1.bf16.msra.mxu0 %v588
      %612 = vmatprep.subr.bf16.mxu0 0
      %613 = vmatpush2.bf16.msra.mxu0 0
      %614 = vmatprep.subr.bf16.mxu0 0
      %615 = vmatpush2.bf16.msra.mxu0 0
      %616 = vmatprep.subr.bf16.mxu0 0
      %617 = vmatpush2.bf16.msra.mxu0 0
      %618 = vmatprep.subr.bf16.mxu0 0
      %619 = vmatpush2.bf16.msra.mxu0 0
      %620 = vmatprep.subr.bf16.mxu0 0
      %621 = vmatpush2.bf16.msra.mxu0 0
      %622 = vmatprep.subr.bf16.mxu0 0
      %623 = vmatpush2.bf16.msra.mxu0 0
      %624 = vmatprep.subr.bf16.mxu0 0
      %625 = vmatpush2.bf16.msra.mxu0 0
      %626 = vmatprep.subr.bf16.mxu0 0
      %627 = vmatpush2.bf16.msra.mxu0 0
      %628 = vmatprep.mubr.bf16.mxu0 0
      %629 = vmatmul.mubr.bf16.gmra.mxu0 %v591
      %v630 = vpop.f32.mrf.mxu0
      %v631 = vadd.f32 0.0, %v630
      %v632 = vpop.f32.mrf.mxu0
      %v633 = vpop.f32.mrf.mxu0
      %v634 = vadd.f32 0.0, %v633
      %v635 = vpop.f32.mrf.mxu0
      %636 = vmatprep.mubr.bf16.mxu0 0
      %637 = vmatmul.mubr.bf16.gmra.mxu0 %v594
      %v638 = vpop.f32.mrf.mxu0
      %v639 = vadd.f32 0.0, %v638
      %v640 = vpop.f32.mrf.mxu0
      %v641 = vpop.f32.mrf.mxu0
      %v642 = vpop.f32.mrf.mxu0
      %643 = vdwg.mxu0
      %v647 = vunpack.c.l.b16 %v393
      %v648 = vunpack.c.l.b16 %v394
      %v649 = vunpack.c.l.b16 %v395
      %v650 = vpack.c.b16 %v648, %v647
      %v651 = vpack.c.b16 %v649, %v649
      %v654 = vunpack.c.l.b16 %v463
      %v655 = vunpack.c.l.b16 %v464
      %v656 = vpack.c.b16 %v655, %v654
      %v659 = vsel %vm521, %v650, 0
      %v662 = vsel %vm521, %v651, 0
      %664 = vmatprep.subr.bf16.mxu0 0
      %665 = vmatpush1.bf16.msra.mxu0 0
      %666 = vmatprep.subr.bf16.mxu0 0
      %667 = vmatpush1.bf16.msra.mxu0 0
      %668 = vmatprep.subr.bf16.mxu0 0
      %669 = vmatpush1.bf16.msra.mxu0 0
      %670 = vmatprep.subr.bf16.mxu0 0
      %671 = vmatpush1.bf16.msra.mxu0 0
      %672 = vmatprep.subr.bf16.mxu0 0
      %673 = vmatpush1.bf16.msra.mxu0 0
      %674 = vmatprep.subr.bf16.mxu0 0
      %675 = vmatpush1.bf16.msra.mxu0 0
      %676 = vmatprep.subr.bf16.mxu0 0
      %677 = vmatpush1.bf16.msra.mxu0 0
      %678 = vmatprep.subr.bf16.mxu0 0
      %679 = vmatpush1.bf16.msra.mxu0 %v656
      %680 = vmatprep.subr.bf16.mxu0 0
      %681 = vmatpush2.bf16.msra.mxu0 0
      %682 = vmatprep.subr.bf16.mxu0 0
      %683 = vmatpush2.bf16.msra.mxu0 0
      %684 = vmatprep.subr.bf16.mxu0 0
      %685 = vmatpush2.bf16.msra.mxu0 0
      %686 = vmatprep.subr.bf16.mxu0 0
      %687 = vmatpush2.bf16.msra.mxu0 0
      %688 = vmatprep.subr.bf16.mxu0 0
      %689 = vmatpush2.bf16.msra.mxu0 0
      %690 = vmatprep.subr.bf16.mxu0 0
      %691 = vmatpush2.bf16.msra.mxu0 0
      %692 = vmatprep.subr.bf16.mxu0 0
      %693 = vmatpush2.bf16.msra.mxu0 0
      %694 = vmatprep.subr.bf16.mxu0 0
      %695 = vmatpush2.bf16.msra.mxu0 0
      %696 = vmatprep.mubr.bf16.mxu0 0
      %697 = vmatmul.mubr.bf16.gmra.mxu0 %v659
      %v698 = vpop.f32.mrf.mxu0
      %v699 = vadd.f32 0.0, %v698
      %v700 = vpop.f32.mrf.mxu0
      %v701 = vpop.f32.mrf.mxu0
      %v702 = vadd.f32 0.0, %v701
      %v703 = vpop.f32.mrf.mxu0
      %704 = vmatprep.mubr.bf16.mxu0 0
      %705 = vmatmul.mubr.bf16.gmra.mxu0 %v662
      %v706 = vpop.f32.mrf.mxu0
      %v707 = vadd.f32 0.0, %v706
      %v708 = vpop.f32.mrf.mxu0
      %v709 = vpop.f32.mrf.mxu0
      %v710 = vpop.f32.mrf.mxu0
      %711 = vdwg.mxu0
      %v715 = vunpack.c.l.b16 %v396
      %v716 = vunpack.c.l.b16 %v397
      %v717 = vunpack.c.l.b16 %v398
      %v718 = vpack.c.b16 %v716, %v715
      %v719 = vpack.c.b16 %v717, %v717
      %v722 = vunpack.c.l.b16 %v465
      %v723 = vunpack.c.l.b16 %v466
      %v724 = vpack.c.b16 %v723, %v722
      %v727 = vsel %vm521, %v718, 0
      %v730 = vsel %vm521, %v719, 0
      %732 = vmatprep.subr.bf16.mxu0 0
      %733 = vmatpush1.bf16.msra.mxu0 0
      %734 = vmatprep.subr.bf16.mxu0 0
      %735 = vmatpush1.bf16.msra.mxu0 0
      %736 = vmatprep.subr.bf16.mxu0 0
      %737 = vmatpush1.bf16.msra.mxu0 0
      %738 = vmatprep.subr.bf16.mxu0 0
      %739 = vmatpush1.bf16.msra.mxu0 0
      %740 = vmatprep.subr.bf16.mxu0 0
      %741 = vmatpush1.bf16.msra.mxu0 0
      %742 = vmatprep.subr.bf16.mxu0 0
      %743 = vmatpush1.bf16.msra.mxu0 0
      %744 = vmatprep.subr.bf16.mxu0 0
      %745 = vmatpush1.bf16.msra.mxu0 0
      %746 = vmatprep.subr.bf16.mxu0 0
      %747 = vmatpush1.bf16.msra.mxu0 %v724
      %748 = vmatprep.subr.bf16.mxu0 0
      %749 = vmatpush2.bf16.msra.mxu0 0
      %750 = vmatprep.subr.bf16.mxu0 0
      %751 = vmatpush2.bf16.msra.mxu0 0
      %752 = vmatprep.subr.bf16.mxu0 0
      %753 = vmatpush2.bf16.msra.mxu0 0
      %754 = vmatprep.subr.bf16.mxu0 0
      %755 = vmatpush2.bf16.msra.mxu0 0
      %756 = vmatprep.subr.bf16.mxu0 0
      %757 = vmatpush2.bf16.msra.mxu0 0
      %758 = vmatprep.subr.bf16.mxu0 0
      %759 = vmatpush2.bf16.msra.mxu0 0
      %760 = vmatprep.subr.bf16.mxu0 0
      %761 = vmatpush2.bf16.msra.mxu0 0
      %762 = vmatprep.subr.bf16.mxu0 0
      %763 = vmatpush2.bf16.msra.mxu0 0
      %764 = vmatprep.mubr.bf16.mxu0 0
      %765 = vmatmul.mubr.bf16.gmra.mxu0 %v727
      %v766 = vpop.f32.mrf.mxu0
      %v767 = vadd.f32 0.0, %v766
      %v768 = vpop.f32.mrf.mxu0
      %v769 = vpop.f32.mrf.mxu0
      %v770 = vadd.f32 0.0, %v769
      %v771 = vpop.f32.mrf.mxu0
      %772 = vmatprep.mubr.bf16.mxu0 0
      %773 = vmatmul.mubr.bf16.gmra.mxu0 %v730
      %v774 = vpop.f32.mrf.mxu0
      %v775 = vadd.f32 0.0, %v774
      %v776 = vpop.f32.mrf.mxu0
      %v777 = vpop.f32.mrf.mxu0
      %v778 = vpop.f32.mrf.mxu0
      %779 = vdwg.mxu0
      %v783 = vunpack.c.l.b16 %v399
      %v784 = vunpack.c.l.b16 %v400
      %v785 = vunpack.c.l.b16 %v401
      %v786 = vpack.c.b16 %v784, %v783
      %v787 = vpack.c.b16 %v785, %v785
      %v790 = vunpack.c.l.b16 %v467
      %v791 = vunpack.c.l.b16 %v468
      %v792 = vpack.c.b16 %v791, %v790
      %v795 = vsel %vm521, %v786, 0
      %v798 = vsel %vm521, %v787, 0
      %800 = vmatprep.subr.bf16.mxu0 0
      %801 = vmatpush1.bf16.msra.mxu0 0
      %802 = vmatprep.subr.bf16.mxu0 0
      %803 = vmatpush1.bf16.msra.mxu0 0
      %804 = vmatprep.subr.bf16.mxu0 0
      %805 = vmatpush1.bf16.msra.mxu0 0
      %806 = vmatprep.subr.bf16.mxu0 0
      %807 = vmatpush1.bf16.msra.mxu0 0
      %808 = vmatprep.subr.bf16.mxu0 0
      %809 = vmatpush1.bf16.msra.mxu0 0
      %810 = vmatprep.subr.bf16.mxu0 0
      %811 = vmatpush1.bf16.msra.mxu0 0
      %812 = vmatprep.subr.bf16.mxu0 0
      %813 = vmatpush1.bf16.msra.mxu0 0
      %814 = vmatprep.subr.bf16.mxu0 0
      %815 = vmatpush1.bf16.msra.mxu0 %v792
      %816 = vmatprep.subr.bf16.mxu0 0
      %817 = vmatpush2.bf16.msra.mxu0 0
      %818 = vmatprep.subr.bf16.mxu0 0
      %819 = vmatpush2.bf16.msra.mxu0 0
      %820 = vmatprep.subr.bf16.mxu0 0
      %821 = vmatpush2.bf16.msra.mxu0 0
      %822 = vmatprep.subr.bf16.mxu0 0
      %823 = vmatpush2.bf16.msra.mxu0 0
      %824 = vmatprep.subr.bf16.mxu0 0
      %825 = vmatpush2.bf16.msra.mxu0 0
      %826 = vmatprep.subr.bf16.mxu0 0
      %827 = vmatpush2.bf16.msra.mxu0 0
      %828 = vmatprep.subr.bf16.mxu0 0
      %829 = vmatpush2.bf16.msra.mxu0 0
      %830 = vmatprep.subr.bf16.mxu0 0
      %831 = vmatpush2.bf16.msra.mxu0 0
      %832 = vmatprep.mubr.bf16.mxu0 0
      %833 = vmatmul.mubr.bf16.gmra.mxu0 %v795
      %v834 = vpop.f32.mrf.mxu0
      %v835 = vadd.f32 0.0, %v834
      %v836 = vpop.f32.mrf.mxu0
      %v837 = vpop.f32.mrf.mxu0
      %v838 = vadd.f32 0.0, %v837
      %v839 = vpop.f32.mrf.mxu0
      %840 = vmatprep.mubr.bf16.mxu0 0
      %841 = vmatmul.mubr.bf16.gmra.mxu0 %v798
      %v842 = vpop.f32.mrf.mxu0
      %v843 = vadd.f32 0.0, %v842
      %v844 = vpop.f32.mrf.mxu0
      %v845 = vpop.f32.mrf.mxu0
      %v846 = vpop.f32.mrf.mxu0
      %847 = vdwg.mxu0
      %v851 = vunpack.c.l.b16 %v402
      %v852 = vunpack.c.l.b16 %v403
      %v853 = vunpack.c.l.b16 %v404
      %v854 = vpack.c.b16 %v852, %v851
      %v855 = vpack.c.b16 %v853, %v853
      %v858 = vunpack.c.l.b16 %v469
      %v859 = vunpack.c.l.b16 %v470
      %v860 = vpack.c.b16 %v859, %v858
      %v863 = vsel %vm521, %v854, 0
      %v866 = vsel %vm521, %v855, 0
      %868 = vmatprep.subr.bf16.mxu0 0
      %869 = vmatpush1.bf16.msra.mxu0 0
      %870 = vmatprep.subr.bf16.mxu0 0
      %871 = vmatpush1.bf16.msra.mxu0 0
      %872 = vmatprep.subr.bf16.mxu0 0
      %873 = vmatpush1.bf16.msra.mxu0 0
      %874 = vmatprep.subr.bf16.mxu0 0
      %875 = vmatpush1.bf16.msra.mxu0 0
      %876 = vmatprep.subr.bf16.mxu0 0
      %877 = vmatpush1.bf16.msra.mxu0 0
      %878 = vmatprep.subr.bf16.mxu0 0
      %879 = vmatpush1.bf16.msra.mxu0 0
      %880 = vmatprep.subr.bf16.mxu0 0
      %881 = vmatpush1.bf16.msra.mxu0 0
      %882 = vmatprep.subr.bf16.mxu0 0
      %883 = vmatpush1.bf16.msra.mxu0 %v860
      %884 = vmatprep.subr.bf16.mxu0 0
      %885 = vmatpush2.bf16.msra.mxu0 0
      %886 = vmatprep.subr.bf16.mxu0 0
      %887 = vmatpush2.bf16.msra.mxu0 0
      %888 = vmatprep.subr.bf16.mxu0 0
      %889 = vmatpush2.bf16.msra.mxu0 0
      %890 = vmatprep.subr.bf16.mxu0 0
      %891 = vmatpush2.bf16.msra.mxu0 0
      %892 = vmatprep.subr.bf16.mxu0 0
      %893 = vmatpush2.bf16.msra.mxu0 0
      %894 = vmatprep.subr.bf16.mxu0 0
      %895 = vmatpush2.bf16.msra.mxu0 0
      %896 = vmatprep.subr.bf16.mxu0 0
      %897 = vmatpush2.bf16.msra.mxu0 0
      %898 = vmatprep.subr.bf16.mxu0 0
      %899 = vmatpush2.bf16.msra.mxu0 0
      %900 = vmatprep.mubr.bf16.mxu0 0
      %901 = vmatmul.mubr.bf16.gmra.mxu0 %v863
      %v902 = vpop.f32.mrf.mxu0
      %v903 = vadd.f32 0.0, %v902
      %v904 = vpop.f32.mrf.mxu0
      %v905 = vpop.f32.mrf.mxu0
      %v906 = vadd.f32 0.0, %v905
      %v907 = vpop.f32.mrf.mxu0
      %908 = vmatprep.mubr.bf16.mxu0 0
      %909 = vmatmul.mubr.bf16.gmra.mxu0 %v866
      %v910 = vpop.f32.mrf.mxu0
      %v911 = vadd.f32 0.0, %v910
      %v912 = vpop.f32.mrf.mxu0
      %v913 = vpop.f32.mrf.mxu0
      %v914 = vpop.f32.mrf.mxu0
      %915 = vdwg.mxu0
      %v919 = vunpack.c.l.b16 %v405
      %v920 = vunpack.c.l.b16 %v406
      %v921 = vunpack.c.l.b16 %v407
      %v922 = vpack.c.b16 %v920, %v919
      %v923 = vpack.c.b16 %v921, %v921
      %v926 = vunpack.c.l.b16 %v471
      %v927 = vunpack.c.l.b16 %v472
      %v928 = vpack.c.b16 %v927, %v926
      %v931 = vsel %vm521, %v922, 0
      %v934 = vsel %vm521, %v923, 0
      %936 = vmatprep.subr.bf16.mxu0 0
      %937 = vmatpush1.bf16.msra.mxu0 0
      %938 = vmatprep.subr.bf16.mxu0 0
      %939 = vmatpush1.bf16.msra.mxu0 0
      %940 = vmatprep.subr.bf16.mxu0 0
      %941 = vmatpush1.bf16.msra.mxu0 0
      %942 = vmatprep.subr.bf16.mxu0 0
      %943 = vmatpush1.bf16.msra.mxu0 0
      %944 = vmatprep.subr.bf16.mxu0 0
      %945 = vmatpush1.bf16.msra.mxu0 0
      %946 = vmatprep.subr.bf16.mxu0 0
      %947 = vmatpush1.bf16.msra.mxu0 0
      %948 = vmatprep.subr.bf16.mxu0 0
      %949 = vmatpush1.bf16.msra.mxu0 0
      %950 = vmatprep.subr.bf16.mxu0 0
      %951 = vmatpush1.bf16.msra.mxu0 %v928
      %952 = vmatprep.subr.bf16.mxu0 0
      %953 = vmatpush2.bf16.msra.mxu0 0
      %954 = vmatprep.subr.bf16.mxu0 0
      %955 = vmatpush2.bf16.msra.mxu0 0
      %956 = vmatprep.subr.bf16.mxu0 0
      %957 = vmatpush2.bf16.msra.mxu0 0
      %958 = vmatprep.subr.bf16.mxu0 0
      %959 = vmatpush2.bf16.msra.mxu0 0
      %960 = vmatprep.subr.bf16.mxu0 0
      %961 = vmatpush2.bf16.msra.mxu0 0
      %962 = vmatprep.subr.bf16.mxu0 0
      %963 = vmatpush2.bf16.msra.mxu0 0
      %964 = vmatprep.subr.bf16.mxu0 0
      %965 = vmatpush2.bf16.msra.mxu0 0
      %966 = vmatprep.subr.bf16.mxu0 0
      %967 = vmatpush2.bf16.msra.mxu0 0
      %968 = vmatprep.mubr.bf16.mxu0 0
      %969 = vmatmul.mubr.bf16.gmra.mxu0 %v931
      %v970 = vpop.f32.mrf.mxu0
      %v971 = vadd.f32 0.0, %v970
      %v972 = vpop.f32.mrf.mxu0
      %v973 = vpop.f32.mrf.mxu0
      %v974 = vadd.f32 0.0, %v973
      %v975 = vpop.f32.mrf.mxu0
      %976 = vmatprep.mubr.bf16.mxu0 0
      %977 = vmatmul.mubr.bf16.gmra.mxu0 %v934
      %v978 = vpop.f32.mrf.mxu0
      %v979 = vadd.f32 0.0, %v978
      %v980 = vpop.f32.mrf.mxu0
      %v981 = vpop.f32.mrf.mxu0
      %v982 = vpop.f32.mrf.mxu0
      %983 = vdwg.mxu0
      %v987 = vunpack.c.l.b16 %v408
      %v988 = vunpack.c.l.b16 %v409
      %v989 = vunpack.c.l.b16 %v410
      %v990 = vpack.c.b16 %v988, %v987
      %v991 = vpack.c.b16 %v989, %v989
      %v994 = vunpack.c.l.b16 %v473
      %v995 = vunpack.c.l.b16 %v474
      %v996 = vpack.c.b16 %v995, %v994
      %v999 = vsel %vm521, %v990, 0
      %v1002 = vsel %vm521, %v991, 0
      %1004 = vmatprep.subr.bf16.mxu0 0
      %1005 = vmatpush1.bf16.msra.mxu0 0
      %1006 = vmatprep.subr.bf16.mxu0 0
      %1007 = vmatpush1.bf16.msra.mxu0 0
      %1008 = vmatprep.subr.bf16.mxu0 0
      %1009 = vmatpush1.bf16.msra.mxu0 0
      %1010 = vmatprep.subr.bf16.mxu0 0
      %1011 = vmatpush1.bf16.msra.mxu0 0
      %1012 = vmatprep.subr.bf16.mxu0 0
      %1013 = vmatpush1.bf16.msra.mxu0 0
      %1014 = vmatprep.subr.bf16.mxu0 0
      %1015 = vmatpush1.bf16.msra.mxu0 0
      %1016 = vmatprep.subr.bf16.mxu0 0
      %1017 = vmatpush1.bf16.msra.mxu0 0
      %1018 = vmatprep.subr.bf16.mxu0 0
      %1019 = vmatpush1.bf16.msra.mxu0 %v996
      %1020 = vmatprep.subr.bf16.mxu0 0
      %1021 = vmatpush2.bf16.msra.mxu0 0
      %1022 = vmatprep.subr.bf16.mxu0 0
      %1023 = vmatpush2.bf16.msra.mxu0 0
      %1024 = vmatprep.subr.bf16.mxu0 0
      %1025 = vmatpush2.bf16.msra.mxu0 0
      %1026 = vmatprep.subr.bf16.mxu0 0
      %1027 = vmatpush2.bf16.msra.mxu0 0
      %1028 = vmatprep.subr.bf16.mxu0 0
      %1029 = vmatpush2.bf16.msra.mxu0 0
      %1030 = vmatprep.subr.bf16.mxu0 0
      %1031 = vmatpush2.bf16.msra.mxu0 0
      %1032 = vmatprep.subr.bf16.mxu0 0
      %1033 = vmatpush2.bf16.msra.mxu0 0
      %1034 = vmatprep.subr.bf16.mxu0 0
      %1035 = vmatpush2.bf16.msra.mxu0 0
      %1036 = vmatprep.mubr.bf16.mxu0 0
      %1037 = vmatmul.mubr.bf16.gmra.mxu0 %v999
      %v1038 = vpop.f32.mrf.mxu0
      %v1039 = vadd.f32 0.0, %v1038
      %v1040 = vpop.f32.mrf.mxu0
      %v1041 = vpop.f32.mrf.mxu0
      %v1042 = vadd.f32 0.0, %v1041
      %v1043 = vpop.f32.mrf.mxu0
      %1044 = vmatprep.mubr.bf16.mxu0 0
      %1045 = vmatmul.mubr.bf16.gmra.mxu0 %v1002
      %v1046 = vpop.f32.mrf.mxu0
      %v1047 = vadd.f32 0.0, %v1046
      %v1048 = vpop.f32.mrf.mxu0
      %v1049 = vpop.f32.mrf.mxu0
      %v1050 = vpop.f32.mrf.mxu0
      %1051 = vdwg.mxu0
      %v1055 = vunpack.c.l.b16 %v411
      %v1056 = vunpack.c.l.b16 %v412
      %v1057 = vunpack.c.l.b16 %v413
      %v1058 = vpack.c.b16 %v1056, %v1055
      %v1059 = vpack.c.b16 %v1057, %v1057
      %v1062 = vunpack.c.l.b16 %v475
      %v1063 = vunpack.c.l.b16 %v476
      %v1064 = vpack.c.b16 %v1063, %v1062
      %v1067 = vsel %vm521, %v1058, 0
      %v1070 = vsel %vm521, %v1059, 0
      %1072 = vmatprep.subr.bf16.mxu0 0
      %1073 = vmatpush1.bf16.msra.mxu0 0
      %1074 = vmatprep.subr.bf16.mxu0 0
      %1075 = vmatpush1.bf16.msra.mxu0 0
      %1076 = vmatprep.subr.bf16.mxu0 0
      %1077 = vmatpush1.bf16.msra.mxu0 0
      %1078 = vmatprep.subr.bf16.mxu0 0
      %1079 = vmatpush1.bf16.msra.mxu0 0
      %1080 = vmatprep.subr.bf16.mxu0 0
      %1081 = vmatpush1.bf16.msra.mxu0 0
      %1082 = vmatprep.subr.bf16.mxu0 0
      %1083 = vmatpush1.bf16.msra.mxu0 0
      %1084 = vmatprep.subr.bf16.mxu0 0
      %1085 = vmatpush1.bf16.msra.mxu0 0
      %1086 = vmatprep.subr.bf16.mxu0 0
      %1087 = vmatpush1.bf16.msra.mxu0 %v1064
      %1088 = vmatprep.subr.bf16.mxu0 0
      %1089 = vmatpush2.bf16.msra.mxu0 0
      %1090 = vmatprep.subr.bf16.mxu0 0
      %1091 = vmatpush2.bf16.msra.mxu0 0
      %1092 = vmatprep.subr.bf16.mxu0 0
      %1093 = vmatpush2.bf16.msra.mxu0 0
      %1094 = vmatprep.subr.bf16.mxu0 0
      %1095 = vmatpush2.bf16.msra.mxu0 0
      %1096 = vmatprep.subr.bf16.mxu0 0
      %1097 = vmatpush2.bf16.msra.mxu0 0
      %1098 = vmatprep.subr.bf16.mxu0 0
      %1099 = vmatpush2.bf16.msra.mxu0 0
      %1100 = vmatprep.subr.bf16.mxu0 0
      %1101 = vmatpush2.bf16.msra.mxu0 0
      %1102 = vmatprep.subr.bf16.mxu0 0
      %1103 = vmatpush2.bf16.msra.mxu0 0
      %1104 = vmatprep.mubr.bf16.mxu0 0
      %1105 = vmatmul.mubr.bf16.gmra.mxu0 %v1067
      %v1106 = vpop.f32.mrf.mxu0
      %v1107 = vadd.f32 0.0, %v1106
      %v1108 = vpop.f32.mrf.mxu0
      %v1109 = vpop.f32.mrf.mxu0
      %v1110 = vadd.f32 0.0, %v1109
      %v1111 = vpop.f32.mrf.mxu0
      %1112 = vmatprep.mubr.bf16.mxu0 0
      %1113 = vmatmul.mubr.bf16.gmra.mxu0 %v1070
      %v1114 = vpop.f32.mrf.mxu0
      %v1115 = vadd.f32 0.0, %v1114
      %v1116 = vpop.f32.mrf.mxu0
      %v1117 = vpop.f32.mrf.mxu0
      %v1118 = vpop.f32.mrf.mxu0
      %1119 = vdwg.mxu0
      %v1123 = vunpack.c.l.b16 %v414
      %v1124 = vunpack.c.l.b16 %v415
      %v1125 = vunpack.c.l.b16 %v416
      %v1126 = vpack.c.b16 %v1124, %v1123
      %v1127 = vpack.c.b16 %v1125, %v1125
      %v1130 = vunpack.c.l.b16 %v477
      %v1131 = vunpack.c.l.b16 %v478
      %v1132 = vpack.c.b16 %v1131, %v1130
      %v1135 = vsel %vm521, %v1126, 0
      %v1138 = vsel %vm521, %v1127, 0
      %1140 = vmatprep.subr.bf16.mxu0 0
      %1141 = vmatpush1.bf16.msra.mxu0 0
      %1142 = vmatprep.subr.bf16.mxu0 0
      %1143 = vmatpush1.bf16.msra.mxu0 0
      %1144 = vmatprep.subr.bf16.mxu0 0
      %1145 = vmatpush1.bf16.msra.mxu0 0
      %1146 = vmatprep.subr.bf16.mxu0 0
      %1147 = vmatpush1.bf16.msra.mxu0 0
      %1148 = vmatprep.subr.bf16.mxu0 0
      %1149 = vmatpush1.bf16.msra.mxu0 0
      %1150 = vmatprep.subr.bf16.mxu0 0
      %1151 = vmatpush1.bf16.msra.mxu0 0
      %1152 = vmatprep.subr.bf16.mxu0 0
      %1153 = vmatpush1.bf16.msra.mxu0 0
      %1154 = vmatprep.subr.bf16.mxu0 0
      %1155 = vmatpush1.bf16.msra.mxu0 %v1132
      %1156 = vmatprep.subr.bf16.mxu0 0
      %1157 = vmatpush2.bf16.msra.mxu0 0
      %1158 = vmatprep.subr.bf16.mxu0 0
      %1159 = vmatpush2.bf16.msra.mxu0 0
      %1160 = vmatprep.subr.bf16.mxu0 0
      %1161 = vmatpush2.bf16.msra.mxu0 0
      %1162 = vmatprep.subr.bf16.mxu0 0
      %1163 = vmatpush2.bf16.msra.mxu0 0
      %1164 = vmatprep.subr.bf16.mxu0 0
      %1165 = vmatpush2.bf16.msra.mxu0 0
      %1166 = vmatprep.subr.bf16.mxu0 0
      %1167 = vmatpush2.bf16.msra.mxu0 0
      %1168 = vmatprep.subr.bf16.mxu0 0
      %1169 = vmatpush2.bf16.msra.mxu0 0
      %1170 = vmatprep.subr.bf16.mxu0 0
      %1171 = vmatpush2.bf16.msra.mxu0 0
      %1172 = vmatprep.mubr.bf16.mxu0 0
      %1173 = vmatmul.mubr.bf16.gmra.mxu0 %v1135
      %v1174 = vpop.f32.mrf.mxu0
      %v1175 = vadd.f32 0.0, %v1174
      %v1176 = vpop.f32.mrf.mxu0
      %v1177 = vpop.f32.mrf.mxu0
      %v1178 = vadd.f32 0.0, %v1177
      %v1179 = vpop.f32.mrf.mxu0
      %1180 = vmatprep.mubr.bf16.mxu0 0
      %1181 = vmatmul.mubr.bf16.gmra.mxu0 %v1138
      %v1182 = vpop.f32.mrf.mxu0
      %v1183 = vadd.f32 0.0, %v1182
      %v1184 = vpop.f32.mrf.mxu0
      %v1185 = vpop.f32.mrf.mxu0
      %v1186 = vpop.f32.mrf.mxu0
      %1187 = vdwg.mxu0
      %v1191 = vunpack.c.l.b16 %v417
      %v1192 = vunpack.c.l.b16 %v418
      %v1193 = vunpack.c.l.b16 %v419
      %v1194 = vpack.c.b16 %v1192, %v1191
      %v1195 = vpack.c.b16 %v1193, %v1193
      %v1198 = vunpack.c.l.b16 %v479
      %v1199 = vunpack.c.l.b16 %v480
      %v1200 = vpack.c.b16 %v1199, %v1198
      %v1203 = vsel %vm521, %v1194, 0
      %v1206 = vsel %vm521, %v1195, 0
      %1208 = vmatprep.subr.bf16.mxu0 0
      %1209 = vmatpush1.bf16.msra.mxu0 0
      %1210 = vmatprep.subr.bf16.mxu0 0
      %1211 = vmatpush1.bf16.msra.mxu0 0
      %1212 = vmatprep.subr.bf16.mxu0 0
      %1213 = vmatpush1.bf16.msra.mxu0 0
      %1214 = vmatprep.subr.bf16.mxu0 0
      %1215 = vmatpush1.bf16.msra.mxu0 0
      %1216 = vmatprep.subr.bf16.mxu0 0
      %1217 = vmatpush1.bf16.msra.mxu0 0
      %1218 = vmatprep.subr.bf16.mxu0 0
      %1219 = vmatpush1.bf16.msra.mxu0 0
      %1220 = vmatprep.subr.bf16.mxu0 0
      %1221 = vmatpush1.bf16.msra.mxu0 0
      %1222 = vmatprep.subr.bf16.mxu0 0
      %1223 = vmatpush1.bf16.msra.mxu0 %v1200
      %1224 = vmatprep.subr.bf16.mxu0 0
      %1225 = vmatpush2.bf16.msra.mxu0 0
      %1226 = vmatprep.subr.bf16.mxu0 0
      %1227 = vmatpush2.bf16.msra.mxu0 0
      %1228 = vmatprep.subr.bf16.mxu0 0
      %1229 = vmatpush2.bf16.msra.mxu0 0
      %1230 = vmatprep.subr.bf16.mxu0 0
      %1231 = vmatpush2.bf16.msra.mxu0 0
      %1232 = vmatprep.subr.bf16.mxu0 0
      %1233 = vmatpush2.bf16.msra.mxu0 0
      %1234 = vmatprep.subr.bf16.mxu0 0
      %1235 = vmatpush2.bf16.msra.mxu0 0
      %1236 = vmatprep.subr.bf16.mxu0 0
      %1237 = vmatpush2.bf16.msra.mxu0 0
      %1238 = vmatprep.subr.bf16.mxu0 0
      %1239 = vmatpush2.bf16.msra.mxu0 0
      %1240 = vmatprep.mubr.bf16.mxu0 0
      %1241 = vmatmul.mubr.bf16.gmra.mxu0 %v1203
      %v1242 = vpop.f32.mrf.mxu0
      %v1243 = vadd.f32 0.0, %v1242
      %v1244 = vpop.f32.mrf.mxu0
      %v1245 = vpop.f32.mrf.mxu0
      %v1246 = vadd.f32 0.0, %v1245
      %v1247 = vpop.f32.mrf.mxu0
      %1248 = vmatprep.mubr.bf16.mxu0 0
      %1249 = vmatmul.mubr.bf16.gmra.mxu0 %v1206
      %v1250 = vpop.f32.mrf.mxu0
      %v1251 = vadd.f32 0.0, %v1250
      %v1252 = vpop.f32.mrf.mxu0
      %v1253 = vpop.f32.mrf.mxu0
      %v1254 = vpop.f32.mrf.mxu0
      %1255 = vdwg.mxu0
      %v1259 = vunpack.c.l.b16 %v420
      %v1260 = vunpack.c.l.b16 %v421
      %v1261 = vunpack.c.l.b16 %v422
      %v1262 = vpack.c.b16 %v1260, %v1259
      %v1263 = vpack.c.b16 %v1261, %v1261
      %v1266 = vunpack.c.l.b16 %v481
      %v1267 = vunpack.c.l.b16 %v482
      %v1268 = vpack.c.b16 %v1267, %v1266
      %v1271 = vsel %vm521, %v1262, 0
      %v1274 = vsel %vm521, %v1263, 0
      %1276 = vmatprep.subr.bf16.mxu0 0
      %1277 = vmatpush1.bf16.msra.mxu0 0
      %1278 = vmatprep.subr.bf16.mxu0 0
      %1279 = vmatpush1.bf16.msra.mxu0 0
      %1280 = vmatprep.subr.bf16.mxu0 0
      %1281 = vmatpush1.bf16.msra.mxu0 0
      %1282 = vmatprep.subr.bf16.mxu0 0
      %1283 = vmatpush1.bf16.msra.mxu0 0
      %1284 = vmatprep.subr.bf16.mxu0 0
      %1285 = vmatpush1.bf16.msra.mxu0 0
      %1286 = vmatprep.subr.bf16.mxu0 0
      %1287 = vmatpush1.bf16.msra.mxu0 0
      %1288 = vmatprep.subr.bf16.mxu0 0
      %1289 = vmatpush1.bf16.msra.mxu0 0
      %1290 = vmatprep.subr.bf16.mxu0 0
      %1291 = vmatpush1.bf16.msra.mxu0 %v1268
      %1292 = vmatprep.subr.bf16.mxu0 0
      %1293 = vmatpush2.bf16.msra.mxu0 0
      %1294 = vmatprep.subr.bf16.mxu0 0
      %1295 = vmatpush2.bf16.msra.mxu0 0
      %1296 = vmatprep.subr.bf16.mxu0 0
      %1297 = vmatpush2.bf16.msra.mxu0 0
      %1298 = vmatprep.subr.bf16.mxu0 0
      %1299 = vmatpush2.bf16.msra.mxu0 0
      %1300 = vmatprep.subr.bf16.mxu0 0
      %1301 = vmatpush2.bf16.msra.mxu0 0
      %1302 = vmatprep.subr.bf16.mxu0 0
      %1303 = vmatpush2.bf16.msra.mxu0 0
      %1304 = vmatprep.subr.bf16.mxu0 0
      %1305 = vmatpush2.bf16.msra.mxu0 0
      %1306 = vmatprep.subr.bf16.mxu0 0
      %1307 = vmatpush2.bf16.msra.mxu0 0
      %1308 = vmatprep.mubr.bf16.mxu0 0
      %1309 = vmatmul.mubr.bf16.gmra.mxu0 %v1271
      %v1310 = vpop.f32.mrf.mxu0
      %v1311 = vadd.f32 0.0, %v1310
      %v1312 = vpop.f32.mrf.mxu0
      %v1313 = vpop.f32.mrf.mxu0
      %v1314 = vadd.f32 0.0, %v1313
      %v1315 = vpop.f32.mrf.mxu0
      %1316 = vmatprep.mubr.bf16.mxu0 0
      %1317 = vmatmul.mubr.bf16.gmra.mxu0 %v1274
      %v1318 = vpop.f32.mrf.mxu0
      %v1319 = vadd.f32 0.0, %v1318
      %v1320 = vpop.f32.mrf.mxu0
      %v1321 = vpop.f32.mrf.mxu0
      %v1322 = vpop.f32.mrf.mxu0
      %1323 = vdwg.mxu0
      %v1327 = vunpack.c.l.b16 %v423
      %v1328 = vunpack.c.l.b16 %v424
      %v1329 = vunpack.c.l.b16 %v425
      %v1330 = vpack.c.b16 %v1328, %v1327
      %v1331 = vpack.c.b16 %v1329, %v1329
      %v1334 = vunpack.c.l.b16 %v483
      %v1335 = vunpack.c.l.b16 %v484
      %v1336 = vpack.c.b16 %v1335, %v1334
      %v1339 = vsel %vm521, %v1330, 0
      %v1342 = vsel %vm521, %v1331, 0
      %1344 = vmatprep.subr.bf16.mxu0 0
      %1345 = vmatpush1.bf16.msra.mxu0 0
      %1346 = vmatprep.subr.bf16.mxu0 0
      %1347 = vmatpush1.bf16.msra.mxu0 0
      %1348 = vmatprep.subr.bf16.mxu0 0
      %1349 = vmatpush1.bf16.msra.mxu0 0
      %1350 = vmatprep.subr.bf16.mxu0 0
      %1351 = vmatpush1.bf16.msra.mxu0 0
      %1352 = vmatprep.subr.bf16.mxu0 0
      %1353 = vmatpush1.bf16.msra.mxu0 0
      %1354 = vmatprep.subr.bf16.mxu0 0
      %1355 = vmatpush1.bf16.msra.mxu0 0
      %1356 = vmatprep.subr.bf16.mxu0 0
      %1357 = vmatpush1.bf16.msra.mxu0 0
      %1358 = vmatprep.subr.bf16.mxu0 0
      %1359 = vmatpush1.bf16.msra.mxu0 %v1336
      %1360 = vmatprep.subr.bf16.mxu0 0
      %1361 = vmatpush2.bf16.msra.mxu0 0
      %1362 = vmatprep.subr.bf16.mxu0 0
      %1363 = vmatpush2.bf16.msra.mxu0 0
      %1364 = vmatprep.subr.bf16.mxu0 0
      %1365 = vmatpush2.bf16.msra.mxu0 0
      %1366 = vmatprep.subr.bf16.mxu0 0
      %1367 = vmatpush2.bf16.msra.mxu0 0
      %1368 = vmatprep.subr.bf16.mxu0 0
      %1369 = vmatpush2.bf16.msra.mxu0 0
      %1370 = vmatprep.subr.bf16.mxu0 0
      %1371 = vmatpush2.bf16.msra.mxu0 0
      %1372 = vmatprep.subr.bf16.mxu0 0
      %1373 = vmatpush2.bf16.msra.mxu0 0
      %1374 = vmatprep.subr.bf16.mxu0 0
      %1375 = vmatpush2.bf16.msra.mxu0 0
      %1376 = vmatprep.mubr.bf16.mxu0 0
      %1377 = vmatmul.mubr.bf16.gmra.mxu0 %v1339
      %v1378 = vpop.f32.mrf.mxu0
      %v1379 = vadd.f32 0.0, %v1378
      %v1380 = vpop.f32.mrf.mxu0
      %v1381 = vpop.f32.mrf.mxu0
      %v1382 = vadd.f32 0.0, %v1381
      %v1383 = vpop.f32.mrf.mxu0
      %1384 = vmatprep.mubr.bf16.mxu0 0
      %1385 = vmatmul.mubr.bf16.gmra.mxu0 %v1342
      %v1386 = vpop.f32.mrf.mxu0
      %v1387 = vadd.f32 0.0, %v1386
      %v1388 = vpop.f32.mrf.mxu0
      %v1389 = vpop.f32.mrf.mxu0
      %v1390 = vpop.f32.mrf.mxu0
      %1391 = vdwg.mxu0
      %v1395 = vunpack.c.l.b16 %v426
      %v1396 = vunpack.c.l.b16 %v427
      %v1397 = vunpack.c.l.b16 %v428
      %v1398 = vpack.c.b16 %v1396, %v1395
      %v1399 = vpack.c.b16 %v1397, %v1397
      %v1402 = vunpack.c.l.b16 %v485
      %v1403 = vunpack.c.l.b16 %v486
      %v1404 = vpack.c.b16 %v1403, %v1402
      %v1407 = vsel %vm521, %v1398, 0
      %v1410 = vsel %vm521, %v1399, 0
      %1412 = vmatprep.subr.bf16.mxu0 0
      %1413 = vmatpush1.bf16.msra.mxu0 0
      %1414 = vmatprep.subr.bf16.mxu0 0
      %1415 = vmatpush1.bf16.msra.mxu0 0
      %1416 = vmatprep.subr.bf16.mxu0 0
      %1417 = vmatpush1.bf16.msra.mxu0 0
      %1418 = vmatprep.subr.bf16.mxu0 0
      %1419 = vmatpush1.bf16.msra.mxu0 0
      %1420 = vmatprep.subr.bf16.mxu0 0
      %1421 = vmatpush1.bf16.msra.mxu0 0
      %1422 = vmatprep.subr.bf16.mxu0 0
      %1423 = vmatpush1.bf16.msra.mxu0 0
      %1424 = vmatprep.subr.bf16.mxu0 0
      %1425 = vmatpush1.bf16.msra.mxu0 0
      %1426 = vmatprep.subr.bf16.mxu0 0
      %1427 = vmatpush1.bf16.msra.mxu0 %v1404
      %1428 = vmatprep.subr.bf16.mxu0 0
      %1429 = vmatpush2.bf16.msra.mxu0 0
      %1430 = vmatprep.subr.bf16.mxu0 0
      %1431 = vmatpush2.bf16.msra.mxu0 0
      %1432 = vmatprep.subr.bf16.mxu0 0
      %1433 = vmatpush2.bf16.msra.mxu0 0
      %1434 = vmatprep.subr.bf16.mxu0 0
      %1435 = vmatpush2.bf16.msra.mxu0 0
      %1436 = vmatprep.subr.bf16.mxu0 0
      %1437 = vmatpush2.bf16.msra.mxu0 0
      %1438 = vmatprep.subr.bf16.mxu0 0
      %1439 = vmatpush2.bf16.msra.mxu0 0
      %1440 = vmatprep.subr.bf16.mxu0 0
      %1441 = vmatpush2.bf16.msra.mxu0 0
      %1442 = vmatprep.subr.bf16.mxu0 0
      %1443 = vmatpush2.bf16.msra.mxu0 0
      %1444 = vmatprep.mubr.bf16.mxu0 0
      %1445 = vmatmul.mubr.bf16.gmra.mxu0 %v1407
      %v1446 = vpop.f32.mrf.mxu0
      %v1447 = vadd.f32 0.0, %v1446
      %v1448 = vpop.f32.mrf.mxu0
      %v1449 = vpop.f32.mrf.mxu0
      %v1450 = vadd.f32 0.0, %v1449
      %v1451 = vpop.f32.mrf.mxu0
      %1452 = vmatprep.mubr.bf16.mxu0 0
      %1453 = vmatmul.mubr.bf16.gmra.mxu0 %v1410
      %v1454 = vpop.f32.mrf.mxu0
      %v1455 = vadd.f32 0.0, %v1454
      %v1456 = vpop.f32.mrf.mxu0
      %v1457 = vpop.f32.mrf.mxu0
      %v1458 = vpop.f32.mrf.mxu0
      %1459 = vdwg.mxu0
      %v1463 = vunpack.c.l.b16 %v429
      %v1464 = vunpack.c.l.b16 %v430
      %v1465 = vunpack.c.l.b16 %v431
      %v1466 = vpack.c.b16 %v1464, %v1463
      %v1467 = vpack.c.b16 %v1465, %v1465
      %v1470 = vunpack.c.l.b16 %v487
      %v1471 = vunpack.c.l.b16 %v488
      %v1472 = vpack.c.b16 %v1471, %v1470
      %v1475 = vsel %vm521, %v1466, 0
      %v1478 = vsel %vm521, %v1467, 0
      %1480 = vmatprep.subr.bf16.mxu0 0
      %1481 = vmatpush1.bf16.msra.mxu0 0
      %1482 = vmatprep.subr.bf16.mxu0 0
      %1483 = vmatpush1.bf16.msra.mxu0 0
      %1484 = vmatprep.subr.bf16.mxu0 0
      %1485 = vmatpush1.bf16.msra.mxu0 0
      %1486 = vmatprep.subr.bf16.mxu0 0
      %1487 = vmatpush1.bf16.msra.mxu0 0
      %1488 = vmatprep.subr.bf16.mxu0 0
      %1489 = vmatpush1.bf16.msra.mxu0 0
      %1490 = vmatprep.subr.bf16.mxu0 0
      %1491 = vmatpush1.bf16.msra.mxu0 0
      %1492 = vmatprep.subr.bf16.mxu0 0
      %1493 = vmatpush1.bf16.msra.mxu0 0
      %1494 = vmatprep.subr.bf16.mxu0 0
      %1495 = vmatpush1.bf16.msra.mxu0 %v1472
      %1496 = vmatprep.subr.bf16.mxu0 0
      %1497 = vmatpush2.bf16.msra.mxu0 0
      %1498 = vmatprep.subr.bf16.mxu0 0
      %1499 = vmatpush2.bf16.msra.mxu0 0
      %1500 = vmatprep.subr.bf16.mxu0 0
      %1501 = vmatpush2.bf16.msra.mxu0 0
      %1502 = vmatprep.subr.bf16.mxu0 0
      %1503 = vmatpush2.bf16.msra.mxu0 0
      %1504 = vmatprep.subr.bf16.mxu0 0
      %1505 = vmatpush2.bf16.msra.mxu0 0
      %1506 = vmatprep.subr.bf16.mxu0 0
      %1507 = vmatpush2.bf16.msra.mxu0 0
      %1508 = vmatprep.subr.bf16.mxu0 0
      %1509 = vmatpush2.bf16.msra.mxu0 0
      %1510 = vmatprep.subr.bf16.mxu0 0
      %1511 = vmatpush2.bf16.msra.mxu0 0
      %1512 = vmatprep.mubr.bf16.mxu0 0
      %1513 = vmatmul.mubr.bf16.gmra.mxu0 %v1475
      %v1514 = vpop.f32.mrf.mxu0
      %v1515 = vadd.f32 0.0, %v1514
      %v1516 = vpop.f32.mrf.mxu0
      %v1517 = vpop.f32.mrf.mxu0
      %v1518 = vadd.f32 0.0, %v1517
      %v1519 = vpop.f32.mrf.mxu0
      %1520 = vmatprep.mubr.bf16.mxu0 0
      %1521 = vmatmul.mubr.bf16.gmra.mxu0 %v1478
      %v1522 = vpop.f32.mrf.mxu0
      %v1523 = vadd.f32 0.0, %v1522
      %v1524 = vpop.f32.mrf.mxu0
      %v1525 = vpop.f32.mrf.mxu0
      %v1526 = vpop.f32.mrf.mxu0
      %1527 = vdwg.mxu0
      %v1531 = vunpack.c.l.b16 %v432
      %v1532 = vunpack.c.l.b16 %v433
      %v1533 = vunpack.c.l.b16 %v434
      %v1534 = vpack.c.b16 %v1532, %v1531
      %v1535 = vpack.c.b16 %v1533, %v1533
      %v1538 = vunpack.c.l.b16 %v489
      %v1539 = vunpack.c.l.b16 %v490
      %v1540 = vpack.c.b16 %v1539, %v1538
      %v1543 = vsel %vm521, %v1534, 0
      %v1546 = vsel %vm521, %v1535, 0
      %1548 = vmatprep.subr.bf16.mxu0 0
      %1549 = vmatpush1.bf16.msra.mxu0 0
      %1550 = vmatprep.subr.bf16.mxu0 0
      %1551 = vmatpush1.bf16.msra.mxu0 0
      %1552 = vmatprep.subr.bf16.mxu0 0
      %1553 = vmatpush1.bf16.msra.mxu0 0
      %1554 = vmatprep.subr.bf16.mxu0 0
      %1555 = vmatpush1.bf16.msra.mxu0 0
      %1556 = vmatprep.subr.bf16.mxu0 0
      %1557 = vmatpush1.bf16.msra.mxu0 0
      %1558 = vmatprep.subr.bf16.mxu0 0
      %1559 = vmatpush1.bf16.msra.mxu0 0
      %1560 = vmatprep.subr.bf16.mxu0 0
      %1561 = vmatpush1.bf16.msra.mxu0 0
      %1562 = vmatprep.subr.bf16.mxu0 0
      %1563 = vmatpush1.bf16.msra.mxu0 %v1540
      %1564 = vmatprep.subr.bf16.mxu0 0
      %1565 = vmatpush2.bf16.msra.mxu0 0
      %1566 = vmatprep.subr.bf16.mxu0 0
      %1567 = vmatpush2.bf16.msra.mxu0 0
      %1568 = vmatprep.subr.bf16.mxu0 0
      %1569 = vmatpush2.bf16.msra.mxu0 0
      %1570 = vmatprep.subr.bf16.mxu0 0
      %1571 = vmatpush2.bf16.msra.mxu0 0
      %1572 = vmatprep.subr.bf16.mxu0 0
      %1573 = vmatpush2.bf16.msra.mxu0 0
      %1574 = vmatprep.subr.bf16.mxu0 0
      %1575 = vmatpush2.bf16.msra.mxu0 0
      %1576 = vmatprep.subr.bf16.mxu0 0
      %1577 = vmatpush2.bf16.msra.mxu0 0
      %1578 = vmatprep.subr.bf16.mxu0 0
      %1579 = vmatpush2.bf16.msra.mxu0 0
      %1580 = vmatprep.mubr.bf16.mxu0 0
      %1581 = vmatmul.mubr.bf16.gmra.mxu0 %v1543
      %v1582 = vpop.f32.mrf.mxu0
      %v1583 = vadd.f32 0.0, %v1582
      %v1584 = vpop.f32.mrf.mxu0
      %v1585 = vpop.f32.mrf.mxu0
      %v1586 = vadd.f32 0.0, %v1585
      %v1587 = vpop.f32.mrf.mxu0
      %1588 = vmatprep.mubr.bf16.mxu0 0
      %1589 = vmatmul.mubr.bf16.gmra.mxu0 %v1546
      %v1590 = vpop.f32.mrf.mxu0
      %v1591 = vadd.f32 0.0, %v1590
      %v1592 = vpop.f32.mrf.mxu0
      %v1593 = vpop.f32.mrf.mxu0
      %v1594 = vpop.f32.mrf.mxu0
      %1595 = vdwg.mxu0
      %v1599 = vunpack.c.l.b16 %v435
      %v1600 = vunpack.c.l.b16 %v436
      %v1601 = vunpack.c.l.b16 %v437
      %v1602 = vpack.c.b16 %v1600, %v1599
      %v1603 = vpack.c.b16 %v1601, %v1601
      %v1606 = vunpack.c.l.b16 %v491
      %v1607 = vunpack.c.l.b16 %v492
      %v1608 = vpack.c.b16 %v1607, %v1606
      %v1611 = vsel %vm521, %v1602, 0
      %v1614 = vsel %vm521, %v1603, 0
      %1616 = vmatprep.subr.bf16.mxu0 0
      %1617 = vmatpush1.bf16.msra.mxu0 0
      %1618 = vmatprep.subr.bf16.mxu0 0
      %1619 = vmatpush1.bf16.msra.mxu0 0
      %1620 = vmatprep.subr.bf16.mxu0 0
      %1621 = vmatpush1.bf16.msra.mxu0 0
      %1622 = vmatprep.subr.bf16.mxu0 0
      %1623 = vmatpush1.bf16.msra.mxu0 0
      %1624 = vmatprep.subr.bf16.mxu0 0
      %1625 = vmatpush1.bf16.msra.mxu0 0
      %1626 = vmatprep.subr.bf16.mxu0 0
      %1627 = vmatpush1.bf16.msra.mxu0 0
      %1628 = vmatprep.subr.bf16.mxu0 0
      %1629 = vmatpush1.bf16.msra.mxu0 0
      %1630 = vmatprep.subr.bf16.mxu0 0
      %1631 = vmatpush1.bf16.msra.mxu0 %v1608
      %1632 = vmatprep.subr.bf16.mxu0 0
      %1633 = vmatpush2.bf16.msra.mxu0 0
      %1634 = vmatprep.subr.bf16.mxu0 0
      %1635 = vmatpush2.bf16.msra.mxu0 0
      %1636 = vmatprep.subr.bf16.mxu0 0
      %1637 = vmatpush2.bf16.msra.mxu0 0
      %1638 = vmatprep.subr.bf16.mxu0 0
      %1639 = vmatpush2.bf16.msra.mxu0 0
      %1640 = vmatprep.subr.bf16.mxu0 0
      %1641 = vmatpush2.bf16.msra.mxu0 0
      %1642 = vmatprep.subr.bf16.mxu0 0
      %1643 = vmatpush2.bf16.msra.mxu0 0
      %1644 = vmatprep.subr.bf16.mxu0 0
      %1645 = vmatpush2.bf16.msra.mxu0 0
      %1646 = vmatprep.subr.bf16.mxu0 0
      %1647 = vmatpush2.bf16.msra.mxu0 0
      %1648 = vmatprep.mubr.bf16.mxu0 0
      %1649 = vmatmul.mubr.bf16.gmra.mxu0 %v1611
      %v1650 = vpop.f32.mrf.mxu0
      %v1651 = vadd.f32 0.0, %v1650
      %v1652 = vpop.f32.mrf.mxu0
      %v1653 = vpop.f32.mrf.mxu0
      %v1654 = vadd.f32 0.0, %v1653
      %v1655 = vpop.f32.mrf.mxu0
      %1656 = vmatprep.mubr.bf16.mxu0 0
      %1657 = vmatmul.mubr.bf16.gmra.mxu0 %v1614
      %v1658 = vpop.f32.mrf.mxu0
      %v1659 = vadd.f32 0.0, %v1658
      %v1660 = vpop.f32.mrf.mxu0
      %v1661 = vpop.f32.mrf.mxu0
      %v1662 = vpop.f32.mrf.mxu0
      %1663 = vdwg.mxu0
      %v1667 = vunpack.c.l.b16 %v438
      %v1668 = vunpack.c.l.b16 %v439
      %v1669 = vunpack.c.l.b16 %v440
      %v1670 = vpack.c.b16 %v1668, %v1667
      %v1671 = vpack.c.b16 %v1669, %v1669
      %v1674 = vunpack.c.l.b16 %v493
      %v1675 = vunpack.c.l.b16 %v494
      %v1676 = vpack.c.b16 %v1675, %v1674
      %v1679 = vsel %vm521, %v1670, 0
      %v1682 = vsel %vm521, %v1671, 0
      %1684 = vmatprep.subr.bf16.mxu0 0
      %1685 = vmatpush1.bf16.msra.mxu0 0
      %1686 = vmatprep.subr.bf16.mxu0 0
      %1687 = vmatpush1.bf16.msra.mxu0 0
      %1688 = vmatprep.subr.bf16.mxu0 0
      %1689 = vmatpush1.bf16.msra.mxu0 0
      %1690 = vmatprep.subr.bf16.mxu0 0
      %1691 = vmatpush1.bf16.msra.mxu0 0
      %1692 = vmatprep.subr.bf16.mxu0 0
      %1693 = vmatpush1.bf16.msra.mxu0 0
      %1694 = vmatprep.subr.bf16.mxu0 0
      %1695 = vmatpush1.bf16.msra.mxu0 0
      %1696 = vmatprep.subr.bf16.mxu0 0
      %1697 = vmatpush1.bf16.msra.mxu0 0
      %1698 = vmatprep.subr.bf16.mxu0 0
      %1699 = vmatpush1.bf16.msra.mxu0 %v1676
      %1700 = vmatprep.subr.bf16.mxu0 0
      %1701 = vmatpush2.bf16.msra.mxu0 0
      %1702 = vmatprep.subr.bf16.mxu0 0
      %1703 = vmatpush2.bf16.msra.mxu0 0
      %1704 = vmatprep.subr.bf16.mxu0 0
      %1705 = vmatpush2.bf16.msra.mxu0 0
      %1706 = vmatprep.subr.bf16.mxu0 0
      %1707 = vmatpush2.bf16.msra.mxu0 0
      %1708 = vmatprep.subr.bf16.mxu0 0
      %1709 = vmatpush2.bf16.msra.mxu0 0
      %1710 = vmatprep.subr.bf16.mxu0 0
      %1711 = vmatpush2.bf16.msra.mxu0 0
      %1712 = vmatprep.subr.bf16.mxu0 0
      %1713 = vmatpush2.bf16.msra.mxu0 0
      %1714 = vmatprep.subr.bf16.mxu0 0
      %1715 = vmatpush2.bf16.msra.mxu0 0
      %1716 = vmatprep.mubr.bf16.mxu0 0
      %1717 = vmatmul.mubr.bf16.gmra.mxu0 %v1679
      %v1718 = vpop.f32.mrf.mxu0
      %v1719 = vadd.f32 0.0, %v1718
      %v1720 = vpop.f32.mrf.mxu0
      %v1721 = vpop.f32.mrf.mxu0
      %v1722 = vadd.f32 0.0, %v1721
      %v1723 = vpop.f32.mrf.mxu0
      %1724 = vmatprep.mubr.bf16.mxu0 0
      %1725 = vmatmul.mubr.bf16.gmra.mxu0 %v1682
      %v1726 = vpop.f32.mrf.mxu0
      %v1727 = vadd.f32 0.0, %v1726
      %v1728 = vpop.f32.mrf.mxu0
      %v1729 = vpop.f32.mrf.mxu0
      %v1730 = vpop.f32.mrf.mxu0
      %1731 = vdwg.mxu0
      %v1735 = vunpack.c.l.b16 %v441
      %v1736 = vunpack.c.l.b16 %v442
      %v1737 = vunpack.c.l.b16 %v443
      %v1738 = vpack.c.b16 %v1736, %v1735
      %v1739 = vpack.c.b16 %v1737, %v1737
      %v1742 = vunpack.c.l.b16 %v495
      %v1743 = vunpack.c.l.b16 %v496
      %v1744 = vpack.c.b16 %v1743, %v1742
      %v1747 = vsel %vm521, %v1738, 0
      %v1750 = vsel %vm521, %v1739, 0
      %1752 = vmatprep.subr.bf16.mxu0 0
      %1753 = vmatpush1.bf16.msra.mxu0 0
      %1754 = vmatprep.subr.bf16.mxu0 0
      %1755 = vmatpush1.bf16.msra.mxu0 0
      %1756 = vmatprep.subr.bf16.mxu0 0
      %1757 = vmatpush1.bf16.msra.mxu0 0
      %1758 = vmatprep.subr.bf16.mxu0 0
      %1759 = vmatpush1.bf16.msra.mxu0 0
      %1760 = vmatprep.subr.bf16.mxu0 0
      %1761 = vmatpush1.bf16.msra.mxu0 0
      %1762 = vmatprep.subr.bf16.mxu0 0
      %1763 = vmatpush1.bf16.msra.mxu0 0
      %1764 = vmatprep.subr.bf16.mxu0 0
      %1765 = vmatpush1.bf16.msra.mxu0 0
      %1766 = vmatprep.subr.bf16.mxu0 0
      %1767 = vmatpush1.bf16.msra.mxu0 %v1744
      %1768 = vmatprep.subr.bf16.mxu0 0
      %1769 = vmatpush2.bf16.msra.mxu0 0
      %1770 = vmatprep.subr.bf16.mxu0 0
      %1771 = vmatpush2.bf16.msra.mxu0 0
      %1772 = vmatprep.subr.bf16.mxu0 0
      %1773 = vmatpush2.bf16.msra.mxu0 0
      %1774 = vmatprep.subr.bf16.mxu0 0
      %1775 = vmatpush2.bf16.msra.mxu0 0
      %1776 = vmatprep.subr.bf16.mxu0 0
      %1777 = vmatpush2.bf16.msra.mxu0 0
      %1778 = vmatprep.subr.bf16.mxu0 0
      %1779 = vmatpush2.bf16.msra.mxu0 0
      %1780 = vmatprep.subr.bf16.mxu0 0
      %1781 = vmatpush2.bf16.msra.mxu0 0
      %1782 = vmatprep.subr.bf16.mxu0 0
      %1783 = vmatpush2.bf16.msra.mxu0 0
      %1784 = vmatprep.mubr.bf16.mxu0 0
      %1785 = vmatmul.mubr.bf16.gmra.mxu0 %v1747
      %v1786 = vpop.f32.mrf.mxu0
      %v1787 = vadd.f32 0.0, %v1786
      %v1788 = vpop.f32.mrf.mxu0
      %v1789 = vpop.f32.mrf.mxu0
      %v1790 = vadd.f32 0.0, %v1789
      %v1791 = vpop.f32.mrf.mxu0
      %1792 = vmatprep.mubr.bf16.mxu0 0
      %1793 = vmatmul.mubr.bf16.gmra.mxu0 %v1750
      %v1794 = vpop.f32.mrf.mxu0
      %v1795 = vadd.f32 0.0, %v1794
      %v1796 = vpop.f32.mrf.mxu0
      %v1797 = vpop.f32.mrf.mxu0
      %v1798 = vpop.f32.mrf.mxu0
      %1799 = vdwg.mxu0
      %v1803 = vunpack.c.l.b16 %v444
      %v1804 = vunpack.c.l.b16 %v445
      %v1805 = vunpack.c.l.b16 %v446
      %v1806 = vpack.c.b16 %v1804, %v1803
      %v1807 = vpack.c.b16 %v1805, %v1805
      %v1810 = vunpack.c.l.b16 %v497
      %v1811 = vunpack.c.l.b16 %v498
      %v1812 = vpack.c.b16 %v1811, %v1810
      %v1815 = vsel %vm521, %v1806, 0
      %v1818 = vsel %vm521, %v1807, 0
      %1820 = vmatprep.subr.bf16.mxu0 0
      %1821 = vmatpush1.bf16.msra.mxu0 0
      %1822 = vmatprep.subr.bf16.mxu0 0
      %1823 = vmatpush1.bf16.msra.mxu0 0
      %1824 = vmatprep.subr.bf16.mxu0 0
      %1825 = vmatpush1.bf16.msra.mxu0 0
      %1826 = vmatprep.subr.bf16.mxu0 0
      %1827 = vmatpush1.bf16.msra.mxu0 0
      %1828 = vmatprep.subr.bf16.mxu0 0
      %1829 = vmatpush1.bf16.msra.mxu0 0
      %1830 = vmatprep.subr.bf16.mxu0 0
      %1831 = vmatpush1.bf16.msra.mxu0 0
      %1832 = vmatprep.subr.bf16.mxu0 0
      %1833 = vmatpush1.bf16.msra.mxu0 0
      %1834 = vmatprep.subr.bf16.mxu0 0
      %1835 = vmatpush1.bf16.msra.mxu0 %v1812
      %1836 = vmatprep.subr.bf16.mxu0 0
      %1837 = vmatpush2.bf16.msra.mxu0 0
      %1838 = vmatprep.subr.bf16.mxu0 0
      %1839 = vmatpush2.bf16.msra.mxu0 0
      %1840 = vmatprep.subr.bf16.mxu0 0
      %1841 = vmatpush2.bf16.msra.mxu0 0
      %1842 = vmatprep.subr.bf16.mxu0 0
      %1843 = vmatpush2.bf16.msra.mxu0 0
      %1844 = vmatprep.subr.bf16.mxu0 0
      %1845 = vmatpush2.bf16.msra.mxu0 0
      %1846 = vmatprep.subr.bf16.mxu0 0
      %1847 = vmatpush2.bf16.msra.mxu0 0
      %1848 = vmatprep.subr.bf16.mxu0 0
      %1849 = vmatpush2.bf16.msra.mxu0 0
      %1850 = vmatprep.subr.bf16.mxu0 0
      %1851 = vmatpush2.bf16.msra.mxu0 0
      %1852 = vmatprep.mubr.bf16.mxu0 0
      %1853 = vmatmul.mubr.bf16.gmra.mxu0 %v1815
      %v1854 = vpop.f32.mrf.mxu0
      %v1855 = vadd.f32 0.0, %v1854
      %v1856 = vpop.f32.mrf.mxu0
      %v1857 = vpop.f32.mrf.mxu0
      %v1858 = vadd.f32 0.0, %v1857
      %v1859 = vpop.f32.mrf.mxu0
      %1860 = vmatprep.mubr.bf16.mxu0 0
      %1861 = vmatmul.mubr.bf16.gmra.mxu0 %v1818
      %v1862 = vpop.f32.mrf.mxu0
      %v1863 = vadd.f32 0.0, %v1862
      %v1864 = vpop.f32.mrf.mxu0
      %v1865 = vpop.f32.mrf.mxu0
      %v1866 = vpop.f32.mrf.mxu0
      %1867 = vdwg.mxu0
      %v1871 = vunpack.c.l.b16 %v447
      %v1872 = vunpack.c.l.b16 %v448
      %v1873 = vunpack.c.l.b16 %v449
      %v1874 = vpack.c.b16 %v1872, %v1871
      %v1875 = vpack.c.b16 %v1873, %v1873
      %v1878 = vunpack.c.l.b16 %v499
      %v1879 = vunpack.c.l.b16 %v500
      %v1880 = vpack.c.b16 %v1879, %v1878
      %v1883 = vsel %vm521, %v1874, 0
      %v1886 = vsel %vm521, %v1875, 0
      %1888 = vmatprep.subr.bf16.mxu0 0
      %1889 = vmatpush1.bf16.msra.mxu0 0
      %1890 = vmatprep.subr.bf16.mxu0 0
      %1891 = vmatpush1.bf16.msra.mxu0 0
      %1892 = vmatprep.subr.bf16.mxu0 0
      %1893 = vmatpush1.bf16.msra.mxu0 0
      %1894 = vmatprep.subr.bf16.mxu0 0
      %1895 = vmatpush1.bf16.msra.mxu0 0
      %1896 = vmatprep.subr.bf16.mxu0 0
      %1897 = vmatpush1.bf16.msra.mxu0 0
      %1898 = vmatprep.subr.bf16.mxu0 0
      %1899 = vmatpush1.bf16.msra.mxu0 0
      %1900 = vmatprep.subr.bf16.mxu0 0
      %1901 = vmatpush1.bf16.msra.mxu0 0
      %1902 = vmatprep.subr.bf16.mxu0 0
      %1903 = vmatpush1.bf16.msra.mxu0 %v1880
      %1904 = vmatprep.subr.bf16.mxu0 0
      %1905 = vmatpush2.bf16.msra.mxu0 0
      %1906 = vmatprep.subr.bf16.mxu0 0
      %1907 = vmatpush2.bf16.msra.mxu0 0
      %1908 = vmatprep.subr.bf16.mxu0 0
      %1909 = vmatpush2.bf16.msra.mxu0 0
      %1910 = vmatprep.subr.bf16.mxu0 0
      %1911 = vmatpush2.bf16.msra.mxu0 0
      %1912 = vmatprep.subr.bf16.mxu0 0
      %1913 = vmatpush2.bf16.msra.mxu0 0
      %1914 = vmatprep.subr.bf16.mxu0 0
      %1915 = vmatpush2.bf16.msra.mxu0 0
      %1916 = vmatprep.subr.bf16.mxu0 0
      %1917 = vmatpush2.bf16.msra.mxu0 0
      %1918 = vmatprep.subr.bf16.mxu0 0
      %1919 = vmatpush2.bf16.msra.mxu0 0
      %1920 = vmatprep.mubr.bf16.mxu0 0
      %1921 = vmatmul.mubr.bf16.gmra.mxu0 %v1883
      %v1922 = vpop.f32.mrf.mxu0
      %v1923 = vadd.f32 0.0, %v1922
      %v1924 = vpop.f32.mrf.mxu0
      %v1925 = vpop.f32.mrf.mxu0
      %v1926 = vadd.f32 0.0, %v1925
      %v1927 = vpop.f32.mrf.mxu0
      %1928 = vmatprep.mubr.bf16.mxu0 0
      %1929 = vmatmul.mubr.bf16.gmra.mxu0 %v1886
      %v1930 = vpop.f32.mrf.mxu0
      %v1931 = vadd.f32 0.0, %v1930
      %v1932 = vpop.f32.mrf.mxu0
      %v1933 = vpop.f32.mrf.mxu0
      %v1934 = vpop.f32.mrf.mxu0
      %1935 = vdwg.mxu0
      %v1939 = vunpack.c.l.b16 %v450
      %v1940 = vunpack.c.l.b16 %v451
      %v1941 = vunpack.c.l.b16 %v452
      %v1942 = vpack.c.b16 %v1940, %v1939
      %v1943 = vpack.c.b16 %v1941, %v1941
      %v1946 = vunpack.c.l.b16 %v501
      %v1947 = vunpack.c.l.b16 %v502
      %v1948 = vpack.c.b16 %v1947, %v1946
      %v1951 = vsel %vm521, %v1942, 0
      %v1954 = vsel %vm521, %v1943, 0
      %1956 = vmatprep.subr.bf16.mxu0 0
      %1957 = vmatpush1.bf16.msra.mxu0 0
      %1958 = vmatprep.subr.bf16.mxu0 0
      %1959 = vmatpush1.bf16.msra.mxu0 0
      %1960 = vmatprep.subr.bf16.mxu0 0
      %1961 = vmatpush1.bf16.msra.mxu0 0
      %1962 = vmatprep.subr.bf16.mxu0 0
      %1963 = vmatpush1.bf16.msra.mxu0 0
      %1964 = vmatprep.subr.bf16.mxu0 0
      %1965 = vmatpush1.bf16.msra.mxu0 0
      %1966 = vmatprep.subr.bf16.mxu0 0
      %1967 = vmatpush1.bf16.msra.mxu0 0
      %1968 = vmatprep.subr.bf16.mxu0 0
      %1969 = vmatpush1.bf16.msra.mxu0 0
      %1970 = vmatprep.subr.bf16.mxu0 0
      %1971 = vmatpush1.bf16.msra.mxu0 %v1948
      %1972 = vmatprep.subr.bf16.mxu0 0
      %1973 = vmatpush2.bf16.msra.mxu0 0
      %1974 = vmatprep.subr.bf16.mxu0 0
      %1975 = vmatpush2.bf16.msra.mxu0 0
      %1976 = vmatprep.subr.bf16.mxu0 0
      %1977 = vmatpush2.bf16.msra.mxu0 0
      %1978 = vmatprep.subr.bf16.mxu0 0
      %1979 = vmatpush2.bf16.msra.mxu0 0
      %1980 = vmatprep.subr.bf16.mxu0 0
      %1981 = vmatpush2.bf16.msra.mxu0 0
      %1982 = vmatprep.subr.bf16.mxu0 0
      %1983 = vmatpush2.bf16.msra.mxu0 0
      %1984 = vmatprep.subr.bf16.mxu0 0
      %1985 = vmatpush2.bf16.msra.mxu0 0
      %1986 = vmatprep.subr.bf16.mxu0 0
      %1987 = vmatpush2.bf16.msra.mxu0 0
      %1988 = vmatprep.mubr.bf16.mxu0 0
      %1989 = vmatmul.mubr.bf16.gmra.mxu0 %v1951
      %v1990 = vpop.f32.mrf.mxu0
      %v1991 = vadd.f32 0.0, %v1990
      %v1992 = vpop.f32.mrf.mxu0
      %v1993 = vpop.f32.mrf.mxu0
      %v1994 = vadd.f32 0.0, %v1993
      %v1995 = vpop.f32.mrf.mxu0
      %1996 = vmatprep.mubr.bf16.mxu0 0
      %1997 = vmatmul.mubr.bf16.gmra.mxu0 %v1954
      %v1998 = vpop.f32.mrf.mxu0
      %v1999 = vadd.f32 0.0, %v1998
      %v2000 = vpop.f32.mrf.mxu0
      %v2001 = vpop.f32.mrf.mxu0
      %v2002 = vpop.f32.mrf.mxu0
      %2003 = vdwg.mxu0
      %v2007 = vunpack.c.l.b16 %v453
      %v2008 = vunpack.c.l.b16 %v454
      %v2009 = vunpack.c.l.b16 %v455
      %v2010 = vpack.c.b16 %v2008, %v2007
      %v2011 = vpack.c.b16 %v2009, %v2009
      %v2014 = vunpack.c.l.b16 %v503
      %v2015 = vunpack.c.l.b16 %v504
      %v2016 = vpack.c.b16 %v2015, %v2014
      %v2019 = vsel %vm521, %v2010, 0
      %v2022 = vsel %vm521, %v2011, 0
      %2024 = vmatprep.subr.bf16.mxu0 0
      %2025 = vmatpush1.bf16.msra.mxu0 0
      %2026 = vmatprep.subr.bf16.mxu0 0
      %2027 = vmatpush1.bf16.msra.mxu0 0
      %2028 = vmatprep.subr.bf16.mxu0 0
      %2029 = vmatpush1.bf16.msra.mxu0 0
      %2030 = vmatprep.subr.bf16.mxu0 0
      %2031 = vmatpush1.bf16.msra.mxu0 0
      %2032 = vmatprep.subr.bf16.mxu0 0
      %2033 = vmatpush1.bf16.msra.mxu0 0
      %2034 = vmatprep.subr.bf16.mxu0 0
      %2035 = vmatpush1.bf16.msra.mxu0 0
      %2036 = vmatprep.subr.bf16.mxu0 0
      %2037 = vmatpush1.bf16.msra.mxu0 0
      %2038 = vmatprep.subr.bf16.mxu0 0
      %2039 = vmatpush1.bf16.msra.mxu0 %v2016
      %2040 = vmatprep.subr.bf16.mxu0 0
      %2041 = vmatpush2.bf16.msra.mxu0 0
      %2042 = vmatprep.subr.bf16.mxu0 0
      %2043 = vmatpush2.bf16.msra.mxu0 0
      %2044 = vmatprep.subr.bf16.mxu0 0
      %2045 = vmatpush2.bf16.msra.mxu0 0
      %2046 = vmatprep.subr.bf16.mxu0 0
      %2047 = vmatpush2.bf16.msra.mxu0 0
      %2048 = vmatprep.subr.bf16.mxu0 0
      %2049 = vmatpush2.bf16.msra.mxu0 0
      %2050 = vmatprep.subr.bf16.mxu0 0
      %2051 = vmatpush2.bf16.msra.mxu0 0
      %2052 = vmatprep.subr.bf16.mxu0 0
      %2053 = vmatpush2.bf16.msra.mxu0 0
      %2054 = vmatprep.subr.bf16.mxu0 0
      %2055 = vmatpush2.bf16.msra.mxu0 0
      %2056 = vmatprep.mubr.bf16.mxu0 0
      %2057 = vmatmul.mubr.bf16.gmra.mxu0 %v2019
      %v2058 = vpop.f32.mrf.mxu0
      %v2059 = vadd.f32 0.0, %v2058
      %v2060 = vpop.f32.mrf.mxu0
      %v2061 = vpop.f32.mrf.mxu0
      %v2062 = vadd.f32 0.0, %v2061
      %v2063 = vpop.f32.mrf.mxu0
      %2064 = vmatprep.mubr.bf16.mxu0 0
      %2065 = vmatmul.mubr.bf16.gmra.mxu0 %v2022
      %v2066 = vpop.f32.mrf.mxu0
      %v2067 = vadd.f32 0.0, %v2066
      %v2068 = vpop.f32.mrf.mxu0
      %v2069 = vpop.f32.mrf.mxu0
      %v2070 = vpop.f32.mrf.mxu0
      %2071 = vdwg.mxu0
      %v2075 = vunpack.c.l.b16 %v456
      %v2076 = vunpack.c.l.b16 %v457
      %v2077 = vunpack.c.l.b16 %v458
      %v2078 = vpack.c.b16 %v2076, %v2075
      %v2079 = vpack.c.b16 %v2077, %v2077
      %v2082 = vunpack.c.l.b16 %v505
      %v2083 = vunpack.c.l.b16 %v506
      %v2084 = vpack.c.b16 %v2083, %v2082
      %v2087 = vsel %vm521, %v2078, 0
      %v2090 = vsel %vm521, %v2079, 0
      %2092 = vmatprep.subr.bf16.mxu0 0
      %2093 = vmatpush1.bf16.msra.mxu0 0
      %2094 = vmatprep.subr.bf16.mxu0 0
      %2095 = vmatpush1.bf16.msra.mxu0 0
      %2096 = vmatprep.subr.bf16.mxu0 0
      %2097 = vmatpush1.bf16.msra.mxu0 0
      %2098 = vmatprep.subr.bf16.mxu0 0
      %2099 = vmatpush1.bf16.msra.mxu0 0
      %2100 = vmatprep.subr.bf16.mxu0 0
      %2101 = vmatpush1.bf16.msra.mxu0 0
      %2102 = vmatprep.subr.bf16.mxu0 0
      %2103 = vmatpush1.bf16.msra.mxu0 0
      %2104 = vmatprep.subr.bf16.mxu0 0
      %2105 = vmatpush1.bf16.msra.mxu0 0
      %2106 = vmatprep.subr.bf16.mxu0 0
      %2107 = vmatpush1.bf16.msra.mxu0 %v2084
      %2108 = vmatprep.subr.bf16.mxu0 0
      %2109 = vmatpush2.bf16.msra.mxu0 0
      %2110 = vmatprep.subr.bf16.mxu0 0
      %2111 = vmatpush2.bf16.msra.mxu0 0
      %2112 = vmatprep.subr.bf16.mxu0 0
      %2113 = vmatpush2.bf16.msra.mxu0 0
      %2114 = vmatprep.subr.bf16.mxu0 0
      %2115 = vmatpush2.bf16.msra.mxu0 0
      %2116 = vmatprep.subr.bf16.mxu0 0
      %2117 = vmatpush2.bf16.msra.mxu0 0
      %2118 = vmatprep.subr.bf16.mxu0 0
      %2119 = vmatpush2.bf16.msra.mxu0 0
      %2120 = vmatprep.subr.bf16.mxu0 0
      %2121 = vmatpush2.bf16.msra.mxu0 0
      %2122 = vmatprep.subr.bf16.mxu0 0
      %2123 = vmatpush2.bf16.msra.mxu0 0
      %2124 = vmatprep.mubr.bf16.mxu0 0
      %2125 = vmatmul.mubr.bf16.gmra.mxu0 %v2087
      %v2126 = vpop.f32.mrf.mxu0
      %v2127 = vadd.f32 0.0, %v2126
      %v2128 = vpop.f32.mrf.mxu0
      %v2129 = vpop.f32.mrf.mxu0
      %v2130 = vadd.f32 0.0, %v2129
      %v2131 = vpop.f32.mrf.mxu0
      %2132 = vmatprep.mubr.bf16.mxu0 0
      %2133 = vmatmul.mubr.bf16.gmra.mxu0 %v2090
      %v2134 = vpop.f32.mrf.mxu0
      %v2135 = vadd.f32 0.0, %v2134
      %v2136 = vpop.f32.mrf.mxu0
      %v2137 = vpop.f32.mrf.mxu0
      %v2138 = vpop.f32.mrf.mxu0
      %2139 = vdwg.mxu0
      %v2140 = vld [vmem:[%s3] sm:$0xf]
      %v2141 = vld [vmem:[%s3 + $0x4] sm:$0xf]
      %v2142 = vld [vmem:[%s3 + $0x8] sm:$0xf]
      %v2143 = vld [vmem:[%s3 + $0xc] sm:$0xf]
      %v2144 = vld [vmem:[%s3 + $0x10] sm:$0x1]
      %v2145 = vld [vmem:[%s3 + $0x14] sm:$0xf]
      %v2146 = vld [vmem:[%s3 + $0x18] sm:$0xf]
      %v2147 = vld [vmem:[%s3 + $0x1c] sm:$0xf]
      %v2148 = vld [vmem:[%s3 + $0x20] sm:$0xf]
      %v2149 = vld [vmem:[%s3 + $0x24] sm:$0x1]
      %v2150 = vld [vmem:[%s3 + $0x28] sm:$0xf]
      %v2151 = vld [vmem:[%s3 + $0x2c] sm:$0xf]
      %v2152 = vld [vmem:[%s3 + $0x30] sm:$0xf]
      %v2153 = vld [vmem:[%s3 + $0x34] sm:$0xf]
      %v2154 = vld [vmem:[%s3 + $0x38] sm:$0x1]
      %v2155 = vld [vmem:[%s3 + $0x3c] sm:$0xf]
      %v2156 = vld [vmem:[%s3 + $0x40] sm:$0xf]
      %v2157 = vld [vmem:[%s3 + $0x44] sm:$0xf]
      %v2158 = vld [vmem:[%s3 + $0x48] sm:$0xf]
      %v2159 = vld [vmem:[%s3 + $0x4c] sm:$0x1]
      %v2160 = vld [vmem:[%s3 + $0x50] sm:$0xf]
      %v2161 = vld [vmem:[%s3 + $0x54] sm:$0xf]
      %v2162 = vld [vmem:[%s3 + $0x58] sm:$0xf]
      %v2163 = vld [vmem:[%s3 + $0x5c] sm:$0xf]
      %v2164 = vld [vmem:[%s3 + $0x60] sm:$0x1]
      %v2165 = vld [vmem:[%s3 + $0x64] sm:$0xf]
      %v2166 = vld [vmem:[%s3 + $0x68] sm:$0xf]
      %v2167 = vld [vmem:[%s3 + $0x6c] sm:$0xf]
      %v2168 = vld [vmem:[%s3 + $0x70] sm:$0xf]
      %v2169 = vld [vmem:[%s3 + $0x74] sm:$0x1]
      %v2170 = vld [vmem:[%s3 + $0x78] sm:$0xf]
      %v2171 = vld [vmem:[%s3 + $0x7c] sm:$0xf]
      %v2172 = vld [vmem:[%s3 + $0x80] sm:$0xf]
      %v2173 = vld [vmem:[%s3 + $0x84] sm:$0xf]
      %v2174 = vld [vmem:[%s3 + $0x88] sm:$0x1]
      %v2175 = vld [vmem:[%s3 + $0x8c] sm:$0xf]
      %v2176 = vld [vmem:[%s3 + $0x90] sm:$0xf]
      %v2177 = vld [vmem:[%s3 + $0x94] sm:$0xf]
      %v2178 = vld [vmem:[%s3 + $0x98] sm:$0xf]
      %v2179 = vld [vmem:[%s3 + $0x9c] sm:$0x1]
      %v2180 = vld [vmem:[%s3 + $0xa0] sm:$0xf]
      %v2181 = vld [vmem:[%s3 + $0xa4] sm:$0xf]
      %v2182 = vld [vmem:[%s3 + $0xa8] sm:$0xf]
      %v2183 = vld [vmem:[%s3 + $0xac] sm:$0xf]
      %v2184 = vld [vmem:[%s3 + $0xb0] sm:$0x1]
      %v2185 = vpack.c.bf16 %v566, %v563
      %v2186 = vpack.c.bf16 %v634, %v631
      %v2187 = vpack.c.bf16 %v702, %v699
      %v2188 = vpack.c.bf16 %v770, %v767
      %v2189 = vpack.c.bf16 %v838, %v835
      %v2190 = vpack.c.bf16 %v906, %v903
      %v2191 = vpack.c.bf16 %v974, %v971
      %v2192 = vpack.c.bf16 %v1042, %v1039
      %v2193 = vpack.c.bf16 %v1110, %v1107
      %v2194 = vpack.c.bf16 %v1178, %v1175
      %v2195 = vpack.c.bf16 %v1246, %v1243
      %v2196 = vpack.c.bf16 %v1314, %v1311
      %v2197 = vpack.c.bf16 %v1382, %v1379
      %v2198 = vpack.c.bf16 %v1450, %v1447
      %v2199 = vpack.c.bf16 %v1518, %v1515
      %v2200 = vpack.c.bf16 %v1586, %v1583
      %v2201 = vpack.c.bf16 %v1654, %v1651
      %v2202 = vpack.c.bf16 %v1722, %v1719
      %v2203 = vpack.c.bf16 %v1790, %v1787
      %v2204 = vpack.c.bf16 %v1858, %v1855
      %v2205 = vpack.c.bf16 %v1926, %v1923
      %v2206 = vpack.c.bf16 %v1994, %v1991
      %v2207 = vpack.c.bf16 %v2062, %v2059
      %v2208 = vpack.c.bf16 %v2130, %v2127
      %vm2281 = vcmask 1046528
      %v2282 = vrot.slane %v563, 1
      %v2283 = vrot.slane %v566, 1
      %v2284 = vsel %vm2281, %v2282, %v2283
      %v2285 = vrot.slane %v571, 1
      %v2286 = vsel %vm2281, %v2283, %v2285
      %v2287 = vrot.slane %v631, 1
      %v2288 = vrot.slane %v634, 1
      %v2289 = vsel %vm2281, %v2287, %v2288
      %v2290 = vrot.slane %v639, 1
      %v2291 = vsel %vm2281, %v2288, %v2290
      %v2292 = vrot.slane %v699, 1
      %v2293 = vrot.slane %v702, 1
      %v2294 = vsel %vm2281, %v2292, %v2293
      %v2295 = vrot.slane %v707, 1
      %v2296 = vsel %vm2281, %v2293, %v2295
      %v2297 = vrot.slane %v767, 1
      %v2298 = vrot.slane %v770, 1
      %v2299 = vsel %vm2281, %v2297, %v2298
      %v2300 = vrot.slane %v775, 1
      %v2301 = vsel %vm2281, %v2298, %v2300
      %v2302 = vrot.slane %v835, 1
      %v2303 = vrot.slane %v838, 1
      %v2304 = vsel %vm2281, %v2302, %v2303
      %v2305 = vrot.slane %v843, 1
      %v2306 = vsel %vm2281, %v2303, %v2305
      %v2307 = vrot.slane %v903, 1
      %v2308 = vrot.slane %v906, 1
      %v2309 = vsel %vm2281, %v2307, %v2308
      %v2310 = vrot.slane %v911, 1
      %v2311 = vsel %vm2281, %v2308, %v2310
      %v2312 = vrot.slane %v971, 1
      %v2313 = vrot.slane %v974, 1
      %v2314 = vsel %vm2281, %v2312, %v2313
      %v2315 = vrot.slane %v979, 1
      %v2316 = vsel %vm2281, %v2313, %v2315
      %v2317 = vrot.slane %v1039, 1
      %v2318 = vrot.slane %v1042, 1
      %v2319 = vsel %vm2281, %v2317, %v2318
      %v2320 = vrot.slane %v1047, 1
      %v2321 = vsel %vm2281, %v2318, %v2320
      %v2322 = vrot.slane %v1107, 1
      %v2323 = vrot.slane %v1110, 1
      %v2324 = vsel %vm2281, %v2322, %v2323
      %v2325 = vrot.slane %v1115, 1
      %v2326 = vsel %vm2281, %v2323, %v2325
      %v2327 = vrot.slane %v1175, 1
      %v2328 = vrot.slane %v1178, 1
      %v2329 = vsel %vm2281, %v2327, %v2328
      %v2330 = vrot.slane %v1183, 1
      %v2331 = vsel %vm2281, %v2328, %v2330
      %v2332 = vrot.slane %v1243, 1
      %v2333 = vrot.slane %v1246, 1
      %v2334 = vsel %vm2281, %v2332, %v2333
      %v2335 = vrot.slane %v1251, 1
      %v2336 = vsel %vm2281, %v2333, %v2335
      %v2337 = vrot.slane %v1311, 1
      %v2338 = vrot.slane %v1314, 1
      %v2339 = vsel %vm2281, %v2337, %v2338
      %v2340 = vrot.slane %v1319, 1
      %v2341 = vsel %vm2281, %v2338, %v2340
      %v2342 = vrot.slane %v1379, 1
      %v2343 = vrot.slane %v1382, 1
      %v2344 = vsel %vm2281, %v2342, %v2343
      %v2345 = vrot.slane %v1387, 1
      %v2346 = vsel %vm2281, %v2343, %v2345
      %v2347 = vrot.slane %v1447, 1
      %v2348 = vrot.slane %v1450, 1
      %v2349 = vsel %vm2281, %v2347, %v2348
      %v2350 = vrot.slane %v1455, 1
      %v2351 = vsel %vm2281, %v2348, %v2350
      %v2352 = vrot.slane %v1515, 1
      %v2353 = vrot.slane %v1518, 1
      %v2354 = vsel %vm2281, %v2352, %v2353
      %v2355 = vrot.slane %v1523, 1
      %v2356 = vsel %vm2281, %v2353, %v2355
      %v2357 = vrot.slane %v1583, 1
      %v2358 = vrot.slane %v1586, 1
      %v2359 = vsel %vm2281, %v2357, %v2358
      %v2360 = vrot.slane %v1591, 1
      %v2361 = vsel %vm2281, %v2358, %v2360
      %v2362 = vrot.slane %v1651, 1
      %v2363 = vrot.slane %v1654, 1
      %v2364 = vsel %vm2281, %v2362, %v2363
      %v2365 = vrot.slane %v1659, 1
      %v2366 = vsel %vm2281, %v2363, %v2365
      %v2367 = vrot.slane %v1719, 1
      %v2368 = vrot.slane %v1722, 1
      %v2369 = vsel %vm2281, %v2367, %v2368
      %v2370 = vrot.slane %v1727, 1
      %v2371 = vsel %vm2281, %v2368, %v2370
      %v2372 = vrot.slane %v1787, 1
      %v2373 = vrot.slane %v1790, 1
      %v2374 = vsel %vm2281, %v2372, %v2373
      %v2375 = vrot.slane %v1795, 1
      %v2376 = vsel %vm2281, %v2373, %v2375
      %v2377 = vrot.slane %v1855, 1
      %v2378 = vrot.slane %v1858, 1
      %v2379 = vsel %vm2281, %v2377, %v2378
      %v2380 = vrot.slane %v1863, 1
      %v2381 = vsel %vm2281, %v2378, %v2380
      %v2382 = vrot.slane %v1923, 1
      %v2383 = vrot.slane %v1926, 1
      %v2384 = vsel %vm2281, %v2382, %v2383
      %v2385 = vrot.slane %v1931, 1
      %v2386 = vsel %vm2281, %v2383, %v2385
      %v2387 = vrot.slane %v1991, 1
      %v2388 = vrot.slane %v1994, 1
      %v2389 = vsel %vm2281, %v2387, %v2388
      %v2390 = vrot.slane %v1999, 1
      %v2391 = vsel %vm2281, %v2388, %v2390
      %v2392 = vrot.slane %v2059, 1
      %v2393 = vrot.slane %v2062, 1
      %v2394 = vsel %vm2281, %v2392, %v2393
      %v2395 = vrot.slane %v2067, 1
      %v2396 = vsel %vm2281, %v2393, %v2395
      %v2397 = vrot.slane %v2127, 1
      %v2398 = vrot.slane %v2130, 1
      %v2399 = vsel %vm2281, %v2397, %v2398
      %v2400 = vrot.slane %v2135, 1
      %v2401 = vsel %vm2281, %v2398, %v2400
      %v2450 = vpack.c.bf16 %v2286, %v2284
      %v2451 = vpack.c.bf16 %v2291, %v2289
      %v2452 = vpack.c.bf16 %v2296, %v2294
      %v2453 = vpack.c.bf16 %v2301, %v2299
      %v2454 = vpack.c.bf16 %v2306, %v2304
      %v2455 = vpack.c.bf16 %v2311, %v2309
      %v2456 = vpack.c.bf16 %v2316, %v2314
      %v2457 = vpack.c.bf16 %v2321, %v2319
      %v2458 = vpack.c.bf16 %v2326, %v2324
      %v2459 = vpack.c.bf16 %v2331, %v2329
      %v2460 = vpack.c.bf16 %v2336, %v2334
      %v2461 = vpack.c.bf16 %v2341, %v2339
      %v2462 = vpack.c.bf16 %v2346, %v2344
      %v2463 = vpack.c.bf16 %v2351, %v2349
      %v2464 = vpack.c.bf16 %v2356, %v2354
      %v2465 = vpack.c.bf16 %v2361, %v2359
      %v2466 = vpack.c.bf16 %v2366, %v2364
      %v2467 = vpack.c.bf16 %v2371, %v2369
      %v2468 = vpack.c.bf16 %v2376, %v2374
      %v2469 = vpack.c.bf16 %v2381, %v2379
      %v2470 = vpack.c.bf16 %v2386, %v2384
      %v2471 = vpack.c.bf16 %v2391, %v2389
      %v2472 = vpack.c.bf16 %v2396, %v2394
      %v2473 = vpack.c.bf16 %v2401, %v2399
      %v2479 = vunpack.c.l.b16 %v2145
      %v2480 = vunpack.c.l.b16 %v2146
      %v2481 = vunpack.c.l.b16 %v2147
      %v2482 = vunpack.c.l.b16 %v2148
      %v2483 = vunpack.c.l.b16 %v2149
      %v2484 = vpack.c.b16 %v2480, %v2479
      %v2485 = vpack.c.b16 %v2482, %v2481
      %v2486 = vpack.c.b16 %v2483, %v2483
      %vm2489 = vcmask 277504
      %v2491 = vsel %vm2489, %v2450, 0
      %v2494 = vsel %vm2489, %v2451, 0
      %v2497 = vsel %vm2489, %v2452, 0
      %v2500 = vsel %vm2489, %v2453, 0
      %v2503 = vsel %vm2489, %v2454, 0
      %v2506 = vsel %vm2489, %v2455, 0
      %v2509 = vsel %vm2489, %v2456, 0
      %v2512 = vsel %vm2489, %v2457, 0
      %v2515 = vsel %vm2489, %v2458, 0
      %v2518 = vsel %vm2489, %v2459, 0
      %v2521 = vsel %vm2489, %v2460, 0
      %v2524 = vsel %vm2489, %v2461, 0
      %v2527 = vsel %vm2489, %v2462, 0
      %v2530 = vsel %vm2489, %v2463, 0
      %v2533 = vsel %vm2489, %v2464, 0
      %v2536 = vsel %vm2489, %v2465, 0
      %v2539 = vsel %vm2489, %v2466, 0
      %v2542 = vsel %vm2489, %v2467, 0
      %v2545 = vsel %vm2489, %v2468, 0
      %v2548 = vsel %vm2489, %v2469, 0
      %v2551 = vsel %vm2489, %v2470, 0
      %v2554 = vsel %vm2489, %v2471, 0
      %v2557 = vsel %vm2489, %v2472, 0
      %v2560 = vsel %vm2489, %v2473, 0
      %vm2562 = vcmask 1040384
      %v2564 = vsel %vm2562, %v2486, 0
      %2566 = vmatprep.subr.bf16.mxu0 0
      %2567 = vmatpush1.bf16.msra.mxu0 0
      %2568 = vmatprep.subr.bf16.mxu0 0
      %2569 = vmatpush1.bf16.msra.mxu0 0
      %2570 = vmatprep.subr.bf16.mxu0 0
      %2571 = vmatpush1.bf16.msra.mxu0 0
      %2572 = vmatprep.subr.bf16.mxu0 0
      %2573 = vmatpush1.bf16.msra.mxu0 0
      %2574 = vmatprep.subr.bf16.mxu0 0
      %2575 = vmatpush1.bf16.msra.mxu0 0
      %2576 = vmatprep.subr.bf16.mxu0 0
      %2577 = vmatpush1.bf16.msra.mxu0 %v2564
      %2578 = vmatprep.subr.bf16.mxu0 0
      %2579 = vmatpush1.bf16.msra.mxu0 %v2485
      %2580 = vmatprep.subr.bf16.mxu0 0
      %2581 = vmatpush1.bf16.msra.mxu0 %v2484
      %2582 = vmatprep.subr.bf16.mxu0 0
      %2583 = vmatpush2.bf16.msra.mxu0 0
      %2584 = vmatprep.subr.bf16.mxu0 0
      %2585 = vmatpush2.bf16.msra.mxu0 0
      %2586 = vmatprep.subr.bf16.mxu0 0
      %2587 = vmatpush2.bf16.msra.mxu0 0
      %2588 = vmatprep.subr.bf16.mxu0 0
      %2589 = vmatpush2.bf16.msra.mxu0 0
      %2590 = vmatprep.subr.bf16.mxu0 0
      %2591 = vmatpush2.bf16.msra.mxu0 0
      %2592 = vmatprep.subr.bf16.mxu0 0
      %2593 = vmatpush2.bf16.msra.mxu0 0
      %2594 = vmatprep.subr.bf16.mxu0 0
      %2595 = vmatpush2.bf16.msra.mxu0 0
      %2596 = vmatprep.subr.bf16.mxu0 0
      %2597 = vmatpush2.bf16.msra.mxu0 0
      %2598 = vmatprep.mubr.bf16.mxu0 0
      %2599 = vmatmul.mubr.bf16.gmra.mxu0 %v2491
      %v2600 = vpop.f32.mrf.mxu0
      %v2601 = vadd.f32 0.0, %v2600
      %v2602 = vpop.f32.mrf.mxu0
      %v2603 = vpop.f32.mrf.mxu0
      %v2604 = vadd.f32 0.0, %v2603
      %v2605 = vpop.f32.mrf.mxu0
      %2606 = vmatprep.mubr.bf16.mxu0 0
      %2607 = vmatmul.mubr.bf16.gmra.mxu0 %v2494
      %v2608 = vpop.f32.mrf.mxu0
      %v2609 = vadd.f32 0.0, %v2608
      %v2610 = vpop.f32.mrf.mxu0
      %v2611 = vpop.f32.mrf.mxu0
      %v2612 = vadd.f32 0.0, %v2611
      %v2613 = vpop.f32.mrf.mxu0
      %2614 = vmatprep.mubr.bf16.mxu0 0
      %2615 = vmatmul.mubr.bf16.gmra.mxu0 %v2497
      %v2616 = vpop.f32.mrf.mxu0
      %v2617 = vadd.f32 0.0, %v2616
      %v2618 = vpop.f32.mrf.mxu0
      %v2619 = vpop.f32.mrf.mxu0
      %v2620 = vadd.f32 0.0, %v2619
      %v2621 = vpop.f32.mrf.mxu0
      %2622 = vmatprep.mubr.bf16.mxu0 0
      %2623 = vmatmul.mubr.bf16.gmra.mxu0 %v2500
      %v2624 = vpop.f32.mrf.mxu0
      %v2625 = vadd.f32 0.0, %v2624
      %v2626 = vpop.f32.mrf.mxu0
      %v2627 = vpop.f32.mrf.mxu0
      %v2628 = vadd.f32 0.0, %v2627
      %v2629 = vpop.f32.mrf.mxu0
      %2630 = vmatprep.mubr.bf16.mxu0 0
      %2631 = vmatmul.mubr.bf16.gmra.mxu0 %v2503
      %v2632 = vpop.f32.mrf.mxu0
      %v2633 = vadd.f32 0.0, %v2632
      %v2634 = vpop.f32.mrf.mxu0
      %v2635 = vpop.f32.mrf.mxu0
      %v2636 = vadd.f32 0.0, %v2635
      %v2637 = vpop.f32.mrf.mxu0
      %2638 = vmatprep.mubr.bf16.mxu0 0
      %2639 = vmatmul.mubr.bf16.gmra.mxu0 %v2506
      %v2640 = vpop.f32.mrf.mxu0
      %v2641 = vadd.f32 0.0, %v2640
      %v2642 = vpop.f32.mrf.mxu0
      %v2643 = vpop.f32.mrf.mxu0
      %v2644 = vadd.f32 0.0, %v2643
      %v2645 = vpop.f32.mrf.mxu0
      %2646 = vmatprep.mubr.bf16.mxu0 0
      %2647 = vmatmul.mubr.bf16.gmra.mxu0 %v2509
      %v2648 = vpop.f32.mrf.mxu0
      %v2649 = vadd.f32 0.0, %v2648
      %v2650 = vpop.f32.mrf.mxu0
      %v2651 = vpop.f32.mrf.mxu0
      %v2652 = vadd.f32 0.0, %v2651
      %v2653 = vpop.f32.mrf.mxu0
      %2654 = vmatprep.mubr.bf16.mxu0 0
      %2655 = vmatmul.mubr.bf16.gmra.mxu0 %v2512
      %v2656 = vpop.f32.mrf.mxu0
      %v2657 = vadd.f32 0.0, %v2656
      %v2658 = vpop.f32.mrf.mxu0
      %v2659 = vpop.f32.mrf.mxu0
      %v2660 = vadd.f32 0.0, %v2659
      %v2661 = vpop.f32.mrf.mxu0
      %2662 = vmatprep.mubr.bf16.mxu0 0
      %2663 = vmatmul.mubr.bf16.gmra.mxu0 %v2515
      %v2664 = vpop.f32.mrf.mxu0
      %v2665 = vadd.f32 0.0, %v2664
      %v2666 = vpop.f32.mrf.mxu0
      %v2667 = vpop.f32.mrf.mxu0
      %v2668 = vadd.f32 0.0, %v2667
      %v2669 = vpop.f32.mrf.mxu0
      %2670 = vmatprep.mubr.bf16.mxu0 0
      %2671 = vmatmul.mubr.bf16.gmra.mxu0 %v2518
      %v2672 = vpop.f32.mrf.mxu0
      %v2673 = vadd.f32 0.0, %v2672
      %v2674 = vpop.f32.mrf.mxu0
      %v2675 = vpop.f32.mrf.mxu0
      %v2676 = vadd.f32 0.0, %v2675
      %v2677 = vpop.f32.mrf.mxu0
      %2678 = vmatprep.mubr.bf16.mxu0 0
      %2679 = vmatmul.mubr.bf16.gmra.mxu0 %v2521
      %v2680 = vpop.f32.mrf.mxu0
      %v2681 = vadd.f32 0.0, %v2680
      %v2682 = vpop.f32.mrf.mxu0
      %v2683 = vpop.f32.mrf.mxu0
      %v2684 = vadd.f32 0.0, %v2683
      %v2685 = vpop.f32.mrf.mxu0
      %2686 = vmatprep.mubr.bf16.mxu0 0
      %2687 = vmatmul.mubr.bf16.gmra.mxu0 %v2524
      %v2688 = vpop.f32.mrf.mxu0
      %v2689 = vadd.f32 0.0, %v2688
      %v2690 = vpop.f32.mrf.mxu0
      %v2691 = vpop.f32.mrf.mxu0
      %v2692 = vadd.f32 0.0, %v2691
      %v2693 = vpop.f32.mrf.mxu0
      %2694 = vmatprep.mubr.bf16.mxu0 0
      %2695 = vmatmul.mubr.bf16.gmra.mxu0 %v2527
      %v2696 = vpop.f32.mrf.mxu0
      %v2697 = vadd.f32 0.0, %v2696
      %v2698 = vpop.f32.mrf.mxu0
      %v2699 = vpop.f32.mrf.mxu0
      %v2700 = vadd.f32 0.0, %v2699
      %v2701 = vpop.f32.mrf.mxu0
      %2702 = vmatprep.mubr.bf16.mxu0 0
      %2703 = vmatmul.mubr.bf16.gmra.mxu0 %v2530
      %v2704 = vpop.f32.mrf.mxu0
      %v2705 = vadd.f32 0.0, %v2704
      %v2706 = vpop.f32.mrf.mxu0
      %v2707 = vpop.f32.mrf.mxu0
      %v2708 = vadd.f32 0.0, %v2707
      %v2709 = vpop.f32.mrf.mxu0
      %2710 = vmatprep.mubr.bf16.mxu0 0
      %2711 = vmatmul.mubr.bf16.gmra.mxu0 %v2533
      %v2712 = vpop.f32.mrf.mxu0
      %v2713 = vadd.f32 0.0, %v2712
      %v2714 = vpop.f32.mrf.mxu0
      %v2715 = vpop.f32.mrf.mxu0
      %v2716 = vadd.f32 0.0, %v2715
      %v2717 = vpop.f32.mrf.mxu0
      %2718 = vmatprep.mubr.bf16.mxu0 0
      %2719 = vmatmul.mubr.bf16.gmra.mxu0 %v2536
      %v2720 = vpop.f32.mrf.mxu0
      %v2721 = vadd.f32 0.0, %v2720
      %v2722 = vpop.f32.mrf.mxu0
      %v2723 = vpop.f32.mrf.mxu0
      %v2724 = vadd.f32 0.0, %v2723
      %v2725 = vpop.f32.mrf.mxu0
      %2726 = vmatprep.mubr.bf16.mxu0 0
      %2727 = vmatmul.mubr.bf16.gmra.mxu0 %v2539
      %v2728 = vpop.f32.mrf.mxu0
      %v2729 = vadd.f32 0.0, %v2728
      %v2730 = vpop.f32.mrf.mxu0
      %v2731 = vpop.f32.mrf.mxu0
      %v2732 = vadd.f32 0.0, %v2731
      %v2733 = vpop.f32.mrf.mxu0
      %2734 = vmatprep.mubr.bf16.mxu0 0
      %2735 = vmatmul.mubr.bf16.gmra.mxu0 %v2542
      %v2736 = vpop.f32.mrf.mxu0
      %v2737 = vadd.f32 0.0, %v2736
      %v2738 = vpop.f32.mrf.mxu0
      %v2739 = vpop.f32.mrf.mxu0
      %v2740 = vadd.f32 0.0, %v2739
      %v2741 = vpop.f32.mrf.mxu0
      %2742 = vmatprep.mubr.bf16.mxu0 0
      %2743 = vmatmul.mubr.bf16.gmra.mxu0 %v2545
      %v2744 = vpop.f32.mrf.mxu0
      %v2745 = vadd.f32 0.0, %v2744
      %v2746 = vpop.f32.mrf.mxu0
      %v2747 = vpop.f32.mrf.mxu0
      %v2748 = vadd.f32 0.0, %v2747
      %v2749 = vpop.f32.mrf.mxu0
      %2750 = vmatprep.mubr.bf16.mxu0 0
      %2751 = vmatmul.mubr.bf16.gmra.mxu0 %v2548
      %v2752 = vpop.f32.mrf.mxu0
      %v2753 = vadd.f32 0.0, %v2752
      %v2754 = vpop.f32.mrf.mxu0
      %v2755 = vpop.f32.mrf.mxu0
      %v2756 = vadd.f32 0.0, %v2755
      %v2757 = vpop.f32.mrf.mxu0
      %2758 = vmatprep.mubr.bf16.mxu0 0
      %2759 = vmatmul.mubr.bf16.gmra.mxu0 %v2551
      %v2760 = vpop.f32.mrf.mxu0
      %v2761 = vadd.f32 0.0, %v2760
      %v2762 = vpop.f32.mrf.mxu0
      %v2763 = vpop.f32.mrf.mxu0
      %v2764 = vadd.f32 0.0, %v2763
      %v2765 = vpop.f32.mrf.mxu0
      %2766 = vmatprep.mubr.bf16.mxu0 0
      %2767 = vmatmul.mubr.bf16.gmra.mxu0 %v2554
      %v2768 = vpop.f32.mrf.mxu0
      %v2769 = vadd.f32 0.0, %v2768
      %v2770 = vpop.f32.mrf.mxu0
      %v2771 = vpop.f32.mrf.mxu0
      %v2772 = vadd.f32 0.0, %v2771
      %v2773 = vpop.f32.mrf.mxu0
      %2774 = vmatprep.mubr.bf16.mxu0 0
      %2775 = vmatmul.mubr.bf16.gmra.mxu0 %v2557
      %v2776 = vpop.f32.mrf.mxu0
      %v2777 = vadd.f32 0.0, %v2776
      %v2778 = vpop.f32.mrf.mxu0
      %v2779 = vpop.f32.mrf.mxu0
      %v2780 = vadd.f32 0.0, %v2779
      %v2781 = vpop.f32.mrf.mxu0
      %2782 = vmatprep.mubr.bf16.mxu0 0
      %2783 = vmatmul.mubr.bf16.gmra.mxu0 %v2560
      %v2784 = vpop.f32.mrf.mxu0
      %v2785 = vadd.f32 0.0, %v2784
      %v2786 = vpop.f32.mrf.mxu0
      %v2787 = vpop.f32.mrf.mxu0
      %v2788 = vadd.f32 0.0, %v2787
      %v2789 = vpop.f32.mrf.mxu0
      %2790 = vdwg.mxu0
      %v2796 = vunpack.c.l.b16 %v2140
      %v2797 = vunpack.c.l.b16 %v2141
      %v2798 = vunpack.c.l.b16 %v2142
      %v2799 = vunpack.c.l.b16 %v2143
      %v2800 = vunpack.c.l.b16 %v2144
      %v2801 = vpack.c.b16 %v2797, %v2796
      %v2802 = vpack.c.b16 %v2799, %v2798
      %v2803 = vpack.c.b16 %v2800, %v2800
      %v2807 = vsel %vm2489, %v2185, 0
      %v2810 = vsel %vm2489, %v2186, 0
      %v2813 = vsel %vm2489, %v2187, 0
      %v2816 = vsel %vm2489, %v2188, 0
      %v2819 = vsel %vm2489, %v2189, 0
      %v2822 = vsel %vm2489, %v2190, 0
      %v2825 = vsel %vm2489, %v2191, 0
      %v2828 = vsel %vm2489, %v2192, 0
      %v2831 = vsel %vm2489, %v2193, 0
      %v2834 = vsel %vm2489, %v2194, 0
      %v2837 = vsel %vm2489, %v2195, 0
      %v2840 = vsel %vm2489, %v2196, 0
      %v2843 = vsel %vm2489, %v2197, 0
      %v2846 = vsel %vm2489, %v2198, 0
      %v2849 = vsel %vm2489, %v2199, 0
      %v2852 = vsel %vm2489, %v2200, 0
      %v2855 = vsel %vm2489, %v2201, 0
      %v2858 = vsel %vm2489, %v2202, 0
      %v2861 = vsel %vm2489, %v2203, 0
      %v2864 = vsel %vm2489, %v2204, 0
      %v2867 = vsel %vm2489, %v2205, 0
      %v2870 = vsel %vm2489, %v2206, 0
      %v2873 = vsel %vm2489, %v2207, 0
      %v2876 = vsel %vm2489, %v2208, 0
      %v2879 = vsel %vm2562, %v2803, 0
      %2881 = vmatprep.subr.bf16.mxu0 0
      %2882 = vmatpush1.bf16.msra.mxu0 0
      %2883 = vmatprep.subr.bf16.mxu0 0
      %2884 = vmatpush1.bf16.msra.mxu0 0
      %2885 = vmatprep.subr.bf16.mxu0 0
      %2886 = vmatpush1.bf16.msra.mxu0 0
      %2887 = vmatprep.subr.bf16.mxu0 0
      %2888 = vmatpush1.bf16.msra.mxu0 0
      %2889 = vmatprep.subr.bf16.mxu0 0
      %2890 = vmatpush1.bf16.msra.mxu0 0
      %2891 = vmatprep.subr.bf16.mxu0 0
      %2892 = vmatpush1.bf16.msra.mxu0 %v2879
      %2893 = vmatprep.subr.bf16.mxu0 0
      %2894 = vmatpush1.bf16.msra.mxu0 %v2802
      %2895 = vmatprep.subr.bf16.mxu0 0
      %2896 = vmatpush1.bf16.msra.mxu0 %v2801
      %2897 = vmatprep.subr.bf16.mxu0 0
      %2898 = vmatpush2.bf16.msra.mxu0 0
      %2899 = vmatprep.subr.bf16.mxu0 0
      %2900 = vmatpush2.bf16.msra.mxu0 0
      %2901 = vmatprep.subr.bf16.mxu0 0
      %2902 = vmatpush2.bf16.msra.mxu0 0
      %2903 = vmatprep.subr.bf16.mxu0 0
      %2904 = vmatpush2.bf16.msra.mxu0 0
      %2905 = vmatprep.subr.bf16.mxu0 0
      %2906 = vmatpush2.bf16.msra.mxu0 0
      %2907 = vmatprep.subr.bf16.mxu0 0
      %2908 = vmatpush2.bf16.msra.mxu0 0
      %2909 = vmatprep.subr.bf16.mxu0 0
      %2910 = vmatpush2.bf16.msra.mxu0 0
      %2911 = vmatprep.subr.bf16.mxu0 0
      %2912 = vmatpush2.bf16.msra.mxu0 0
      %2913 = vmatprep.mubr.bf16.mxu0 0
      %2914 = vmatmul.mubr.bf16.gmra.mxu0 %v2807
      %v2915 = vpop.f32.mrf.mxu0
      %v2916 = vadd.f32 %v2601, %v2915
      %v2917 = vpop.f32.mrf.mxu0
      %v2918 = vpop.f32.mrf.mxu0
      %v2919 = vadd.f32 %v2604, %v2918
      %v2920 = vpop.f32.mrf.mxu0
      %2921 = vmatprep.mubr.bf16.mxu0 0
      %2922 = vmatmul.mubr.bf16.gmra.mxu0 %v2810
      %v2923 = vpop.f32.mrf.mxu0
      %v2924 = vadd.f32 %v2609, %v2923
      %v2925 = vpop.f32.mrf.mxu0
      %v2926 = vpop.f32.mrf.mxu0
      %v2927 = vadd.f32 %v2612, %v2926
      %v2928 = vpop.f32.mrf.mxu0
      %2929 = vmatprep.mubr.bf16.mxu0 0
      %2930 = vmatmul.mubr.bf16.gmra.mxu0 %v2813
      %v2931 = vpop.f32.mrf.mxu0
      %v2932 = vadd.f32 %v2617, %v2931
      %v2933 = vpop.f32.mrf.mxu0
      %v2934 = vpop.f32.mrf.mxu0
      %v2935 = vadd.f32 %v2620, %v2934
      %v2936 = vpop.f32.mrf.mxu0
      %2937 = vmatprep.mubr.bf16.mxu0 0
      %2938 = vmatmul.mubr.bf16.gmra.mxu0 %v2816
      %v2939 = vpop.f32.mrf.mxu0
      %v2940 = vadd.f32 %v2625, %v2939
      %v2941 = vpop.f32.mrf.mxu0
      %v2942 = vpop.f32.mrf.mxu0
      %v2943 = vadd.f32 %v2628, %v2942
      %v2944 = vpop.f32.mrf.mxu0
      %2945 = vmatprep.mubr.bf16.mxu0 0
      %2946 = vmatmul.mubr.bf16.gmra.mxu0 %v2819
      %v2947 = vpop.f32.mrf.mxu0
      %v2948 = vadd.f32 %v2633, %v2947
      %v2949 = vpop.f32.mrf.mxu0
      %v2950 = vpop.f32.mrf.mxu0
      %v2951 = vadd.f32 %v2636, %v2950
      %v2952 = vpop.f32.mrf.mxu0
      %2953 = vmatprep.mubr.bf16.mxu0 0
      %2954 = vmatmul.mubr.bf16.gmra.mxu0 %v2822
      %v2955 = vpop.f32.mrf.mxu0
      %v2956 = vadd.f32 %v2641, %v2955
      %v2957 = vpop.f32.mrf.mxu0
      %v2958 = vpop.f32.mrf.mxu0
      %v2959 = vadd.f32 %v2644, %v2958
      %v2960 = vpop.f32.mrf.mxu0
      %2961 = vmatprep.mubr.bf16.mxu0 0
      %2962 = vmatmul.mubr.bf16.gmra.mxu0 %v2825
      %v2963 = vpop.f32.mrf.mxu0
      %v2964 = vadd.f32 %v2649, %v2963
      %v2965 = vpop.f32.mrf.mxu0
      %v2966 = vpop.f32.mrf.mxu0
      %v2967 = vadd.f32 %v2652, %v2966
      %v2968 = vpop.f32.mrf.mxu0
      %2969 = vmatprep.mubr.bf16.mxu0 0
      %2970 = vmatmul.mubr.bf16.gmra.mxu0 %v2828
      %v2971 = vpop.f32.mrf.mxu0
      %v2972 = vadd.f32 %v2657, %v2971
      %v2973 = vpop.f32.mrf.mxu0
      %v2974 = vpop.f32.mrf.mxu0
      %v2975 = vadd.f32 %v2660, %v2974
      %v2976 = vpop.f32.mrf.mxu0
      %2977 = vmatprep.mubr.bf16.mxu0 0
      %2978 = vmatmul.mubr.bf16.gmra.mxu0 %v2831
      %v2979 = vpop.f32.mrf.mxu0
      %v2980 = vadd.f32 %v2665, %v2979
      %v2981 = vpop.f32.mrf.mxu0
      %v2982 = vpop.f32.mrf.mxu0
      %v2983 = vadd.f32 %v2668, %v2982
      %v2984 = vpop.f32.mrf.mxu0
      %2985 = vmatprep.mubr.bf16.mxu0 0
      %2986 = vmatmul.mubr.bf16.gmra.mxu0 %v2834
      %v2987 = vpop.f32.mrf.mxu0
      %v2988 = vadd.f32 %v2673, %v2987
      %v2989 = vpop.f32.mrf.mxu0
      %v2990 = vpop.f32.mrf.mxu0
      %v2991 = vadd.f32 %v2676, %v2990
      %v2992 = vpop.f32.mrf.mxu0
      %2993 = vmatprep.mubr.bf16.mxu0 0
      %2994 = vmatmul.mubr.bf16.gmra.mxu0 %v2837
      %v2995 = vpop.f32.mrf.mxu0
      %v2996 = vadd.f32 %v2681, %v2995
      %v2997 = vpop.f32.mrf.mxu0
      %v2998 = vpop.f32.mrf.mxu0
      %v2999 = vadd.f32 %v2684, %v2998
      %v3000 = vpop.f32.mrf.mxu0
      %3001 = vmatprep.mubr.bf16.mxu0 0
      %3002 = vmatmul.mubr.bf16.gmra.mxu0 %v2840
      %v3003 = vpop.f32.mrf.mxu0
      %v3004 = vadd.f32 %v2689, %v3003
      %v3005 = vpop.f32.mrf.mxu0
      %v3006 = vpop.f32.mrf.mxu0
      %v3007 = vadd.f32 %v2692, %v3006
      %v3008 = vpop.f32.mrf.mxu0
      %3009 = vmatprep.mubr.bf16.mxu0 0
      %3010 = vmatmul.mubr.bf16.gmra.mxu0 %v2843
      %v3011 = vpop.f32.mrf.mxu0
      %v3012 = vadd.f32 %v2697, %v3011
      %v3013 = vpop.f32.mrf.mxu0
      %v3014 = vpop.f32.mrf.mxu0
      %v3015 = vadd.f32 %v2700, %v3014
      %v3016 = vpop.f32.mrf.mxu0
      %3017 = vmatprep.mubr.bf16.mxu0 0
      %3018 = vmatmul.mubr.bf16.gmra.mxu0 %v2846
      %v3019 = vpop.f32.mrf.mxu0
      %v3020 = vadd.f32 %v2705, %v3019
      %v3021 = vpop.f32.mrf.mxu0
      %v3022 = vpop.f32.mrf.mxu0
      %v3023 = vadd.f32 %v2708, %v3022
      %v3024 = vpop.f32.mrf.mxu0
      %3025 = vmatprep.mubr.bf16.mxu0 0
      %3026 = vmatmul.mubr.bf16.gmra.mxu0 %v2849
      %v3027 = vpop.f32.mrf.mxu0
      %v3028 = vadd.f32 %v2713, %v3027
      %v3029 = vpop.f32.mrf.mxu0
      %v3030 = vpop.f32.mrf.mxu0
      %v3031 = vadd.f32 %v2716, %v3030
      %v3032 = vpop.f32.mrf.mxu0
      %3033 = vmatprep.mubr.bf16.mxu0 0
      %3034 = vmatmul.mubr.bf16.gmra.mxu0 %v2852
      %v3035 = vpop.f32.mrf.mxu0
      %v3036 = vadd.f32 %v2721, %v3035
      %v3037 = vpop.f32.mrf.mxu0
      %v3038 = vpop.f32.mrf.mxu0
      %v3039 = vadd.f32 %v2724, %v3038
      %v3040 = vpop.f32.mrf.mxu0
      %3041 = vmatprep.mubr.bf16.mxu0 0
      %3042 = vmatmul.mubr.bf16.gmra.mxu0 %v2855
      %v3043 = vpop.f32.mrf.mxu0
      %v3044 = vadd.f32 %v2729, %v3043
      %v3045 = vpop.f32.mrf.mxu0
      %v3046 = vpop.f32.mrf.mxu0
      %v3047 = vadd.f32 %v2732, %v3046
      %v3048 = vpop.f32.mrf.mxu0
      %3049 = vmatprep.mubr.bf16.mxu0 0
      %3050 = vmatmul.mubr.bf16.gmra.mxu0 %v2858
      %v3051 = vpop.f32.mrf.mxu0
      %v3052 = vadd.f32 %v2737, %v3051
      %v3053 = vpop.f32.mrf.mxu0
      %v3054 = vpop.f32.mrf.mxu0
      %v3055 = vadd.f32 %v2740, %v3054
      %v3056 = vpop.f32.mrf.mxu0
      %3057 = vmatprep.mubr.bf16.mxu0 0
      %3058 = vmatmul.mubr.bf16.gmra.mxu0 %v2861
      %v3059 = vpop.f32.mrf.mxu0
      %v3060 = vadd.f32 %v2745, %v3059
      %v3061 = vpop.f32.mrf.mxu0
      %v3062 = vpop.f32.mrf.mxu0
      %v3063 = vadd.f32 %v2748, %v3062
      %v3064 = vpop.f32.mrf.mxu0
      %3065 = vmatprep.mubr.bf16.mxu0 0
      %3066 = vmatmul.mubr.bf16.gmra.mxu0 %v2864
      %v3067 = vpop.f32.mrf.mxu0
      %v3068 = vadd.f32 %v2753, %v3067
      %v3069 = vpop.f32.mrf.mxu0
      %v3070 = vpop.f32.mrf.mxu0
      %v3071 = vadd.f32 %v2756, %v3070
      %v3072 = vpop.f32.mrf.mxu0
      %3073 = vmatprep.mubr.bf16.mxu0 0
      %3074 = vmatmul.mubr.bf16.gmra.mxu0 %v2867
      %v3075 = vpop.f32.mrf.mxu0
      %v3076 = vadd.f32 %v2761, %v3075
      %v3077 = vpop.f32.mrf.mxu0
      %v3078 = vpop.f32.mrf.mxu0
      %v3079 = vadd.f32 %v2764, %v3078
      %v3080 = vpop.f32.mrf.mxu0
      %3081 = vmatprep.mubr.bf16.mxu0 0
      %3082 = vmatmul.mubr.bf16.gmra.mxu0 %v2870
      %v3083 = vpop.f32.mrf.mxu0
      %v3084 = vadd.f32 %v2769, %v3083
      %v3085 = vpop.f32.mrf.mxu0
      %v3086 = vpop.f32.mrf.mxu0
      %v3087 = vadd.f32 %v2772, %v3086
      %v3088 = vpop.f32.mrf.mxu0
      %3089 = vmatprep.mubr.bf16.mxu0 0
      %3090 = vmatmul.mubr.bf16.gmra.mxu0 %v2873
      %v3091 = vpop.f32.mrf.mxu0
      %v3092 = vadd.f32 %v2777, %v3091
      %v3093 = vpop.f32.mrf.mxu0
      %v3094 = vpop.f32.mrf.mxu0
      %v3095 = vadd.f32 %v2780, %v3094
      %v3096 = vpop.f32.mrf.mxu0
      %3097 = vmatprep.mubr.bf16.mxu0 0
      %3098 = vmatmul.mubr.bf16.gmra.mxu0 %v2876
      %v3099 = vpop.f32.mrf.mxu0
      %v3100 = vadd.f32 %v2785, %v3099
      %v3101 = vpop.f32.mrf.mxu0
      %v3102 = vpop.f32.mrf.mxu0
      %v3103 = vadd.f32 %v2788, %v3102
      %v3104 = vpop.f32.mrf.mxu0
      %3105 = vdwg.mxu0
      %vm3106 = vcmask 1045504
      %v3107 = vrot.slane %v563, 2
      %v3108 = vrot.slane %v566, 2
      %v3109 = vsel %vm3106, %v3107, %v3108
      %v3110 = vrot.slane %v571, 2
      %v3111 = vsel %vm3106, %v3108, %v3110
      %v3112 = vrot.slane %v631, 2
      %v3113 = vrot.slane %v634, 2
      %v3114 = vsel %vm3106, %v3112, %v3113
      %v3115 = vrot.slane %v639, 2
      %v3116 = vsel %vm3106, %v3113, %v3115
      %v3117 = vrot.slane %v699, 2
      %v3118 = vrot.slane %v702, 2
      %v3119 = vsel %vm3106, %v3117, %v3118
      %v3120 = vrot.slane %v707, 2
      %v3121 = vsel %vm3106, %v3118, %v3120
      %v3122 = vrot.slane %v767, 2
      %v3123 = vrot.slane %v770, 2
      %v3124 = vsel %vm3106, %v3122, %v3123
      %v3125 = vrot.slane %v775, 2
      %v3126 = vsel %vm3106, %v3123, %v3125
      %v3127 = vrot.slane %v835, 2
      %v3128 = vrot.slane %v838, 2
      %v3129 = vsel %vm3106, %v3127, %v3128
      %v3130 = vrot.slane %v843, 2
      %v3131 = vsel %vm3106, %v3128, %v3130
      %v3132 = vrot.slane %v903, 2
      %v3133 = vrot.slane %v906, 2
      %v3134 = vsel %vm3106, %v3132, %v3133
      %v3135 = vrot.slane %v911, 2
      %v3136 = vsel %vm3106, %v3133, %v3135
      %v3137 = vrot.slane %v971, 2
      %v3138 = vrot.slane %v974, 2
      %v3139 = vsel %vm3106, %v3137, %v3138
      %v3140 = vrot.slane %v979, 2
      %v3141 = vsel %vm3106, %v3138, %v3140
      %v3142 = vrot.slane %v1039, 2
      %v3143 = vrot.slane %v1042, 2
      %v3144 = vsel %vm3106, %v3142, %v3143
      %v3145 = vrot.slane %v1047, 2
      %v3146 = vsel %vm3106, %v3143, %v3145
      %v3147 = vrot.slane %v1107, 2
      %v3148 = vrot.slane %v1110, 2
      %v3149 = vsel %vm3106, %v3147, %v3148
      %v3150 = vrot.slane %v1115, 2
      %v3151 = vsel %vm3106, %v3148, %v3150
      %v3152 = vrot.slane %v1175, 2
      %v3153 = vrot.slane %v1178, 2
      %v3154 = vsel %vm3106, %v3152, %v3153
      %v3155 = vrot.slane %v1183, 2
      %v3156 = vsel %vm3106, %v3153, %v3155
      %v3157 = vrot.slane %v1243, 2
      %v3158 = vrot.slane %v1246, 2
      %v3159 = vsel %vm3106, %v3157, %v3158
      %v3160 = vrot.slane %v1251, 2
      %v3161 = vsel %vm3106, %v3158, %v3160
      %v3162 = vrot.slane %v1311, 2
      %v3163 = vrot.slane %v1314, 2
      %v3164 = vsel %vm3106, %v3162, %v3163
      %v3165 = vrot.slane %v1319, 2
      %v3166 = vsel %vm3106, %v3163, %v3165
      %v3167 = vrot.slane %v1379, 2
      %v3168 = vrot.slane %v1382, 2
      %v3169 = vsel %vm3106, %v3167, %v3168
      %v3170 = vrot.slane %v1387, 2
      %v3171 = vsel %vm3106, %v3168, %v3170
      %v3172 = vrot.slane %v1447, 2
      %v3173 = vrot.slane %v1450, 2
      %v3174 = vsel %vm3106, %v3172, %v3173
      %v3175 = vrot.slane %v1455, 2
      %v3176 = vsel %vm3106, %v3173, %v3175
      %v3177 = vrot.slane %v1515, 2
      %v3178 = vrot.slane %v1518, 2
      %v3179 = vsel %vm3106, %v3177, %v3178
      %v3180 = vrot.slane %v1523, 2
      %v3181 = vsel %vm3106, %v3178, %v3180
      %v3182 = vrot.slane %v1583, 2
      %v3183 = vrot.slane %v1586, 2
      %v3184 = vsel %vm3106, %v3182, %v3183
      %v3185 = vrot.slane %v1591, 2
      %v3186 = vsel %vm3106, %v3183, %v3185
      %v3187 = vrot.slane %v1651, 2
      %v3188 = vrot.slane %v1654, 2
      %v3189 = vsel %vm3106, %v3187, %v3188
      %v3190 = vrot.slane %v1659, 2
      %v3191 = vsel %vm3106, %v3188, %v3190
      %v3192 = vrot.slane %v1719, 2
      %v3193 = vrot.slane %v1722, 2
      %v3194 = vsel %vm3106, %v3192, %v3193
      %v3195 = vrot.slane %v1727, 2
      %v3196 = vsel %vm3106, %v3193, %v3195
      %v3197 = vrot.slane %v1787, 2
      %v3198 = vrot.slane %v1790, 2
      %v3199 = vsel %vm3106, %v3197, %v3198
      %v3200 = vrot.slane %v1795, 2
      %v3201 = vsel %vm3106, %v3198, %v3200
      %v3202 = vrot.slane %v1855, 2
      %v3203 = vrot.slane %v1858, 2
      %v3204 = vsel %vm3106, %v3202, %v3203
      %v3205 = vrot.slane %v1863, 2
      %v3206 = vsel %vm3106, %v3203, %v3205
      %v3207 = vrot.slane %v1923, 2
      %v3208 = vrot.slane %v1926, 2
      %v3209 = vsel %vm3106, %v3207, %v3208
      %v3210 = vrot.slane %v1931, 2
      %v3211 = vsel %vm3106, %v3208, %v3210
      %v3212 = vrot.slane %v1991, 2
      %v3213 = vrot.slane %v1994, 2
      %v3214 = vsel %vm3106, %v3212, %v3213
      %v3215 = vrot.slane %v1999, 2
      %v3216 = vsel %vm3106, %v3213, %v3215
      %v3217 = vrot.slane %v2059, 2
      %v3218 = vrot.slane %v2062, 2
      %v3219 = vsel %vm3106, %v3217, %v3218
      %v3220 = vrot.slane %v2067, 2
      %v3221 = vsel %vm3106, %v3218, %v3220
      %v3222 = vrot.slane %v2127, 2
      %v3223 = vrot.slane %v2130, 2
      %v3224 = vsel %vm3106, %v3222, %v3223
      %v3225 = vrot.slane %v2135, 2
      %v3226 = vsel %vm3106, %v3223, %v3225
      %v3275 = vpack.c.bf16 %v3111, %v3109
      %v3276 = vpack.c.bf16 %v3116, %v3114
      %v3277 = vpack.c.bf16 %v3121, %v3119
      %v3278 = vpack.c.bf16 %v3126, %v3124
      %v3279 = vpack.c.bf16 %v3131, %v3129
      %v3280 = vpack.c.bf16 %v3136, %v3134
      %v3281 = vpack.c.bf16 %v3141, %v3139
      %v3282 = vpack.c.bf16 %v3146, %v3144
      %v3283 = vpack.c.bf16 %v3151, %v3149
      %v3284 = vpack.c.bf16 %v3156, %v3154
      %v3285 = vpack.c.bf16 %v3161, %v3159
      %v3286 = vpack.c.bf16 %v3166, %v3164
      %v3287 = vpack.c.bf16 %v3171, %v3169
      %v3288 = vpack.c.bf16 %v3176, %v3174
      %v3289 = vpack.c.bf16 %v3181, %v3179
      %v3290 = vpack.c.bf16 %v3186, %v3184
      %v3291 = vpack.c.bf16 %v3191, %v3189
      %v3292 = vpack.c.bf16 %v3196, %v3194
      %v3293 = vpack.c.bf16 %v3201, %v3199
      %v3294 = vpack.c.bf16 %v3206, %v3204
      %v3295 = vpack.c.bf16 %v3211, %v3209
      %v3296 = vpack.c.bf16 %v3216, %v3214
      %v3297 = vpack.c.bf16 %v3221, %v3219
      %v3298 = vpack.c.bf16 %v3226, %v3224
      %v3304 = vunpack.c.l.b16 %v2150
      %v3305 = vunpack.c.l.b16 %v2151
      %v3306 = vunpack.c.l.b16 %v2152
      %v3307 = vunpack.c.l.b16 %v2153
      %v3308 = vunpack.c.l.b16 %v2154
      %v3309 = vpack.c.b16 %v3305, %v3304
      %v3310 = vpack.c.b16 %v3307, %v3306
      %v3311 = vpack.c.b16 %v3308, %v3308
      %v3315 = vsel %vm2489, %v3275, 0
      %v3318 = vsel %vm2489, %v3276, 0
      %v3321 = vsel %vm2489, %v3277, 0
      %v3324 = vsel %vm2489, %v3278, 0
      %v3327 = vsel %vm2489, %v3279, 0
      %v3330 = vsel %vm2489, %v3280, 0
      %v3333 = vsel %vm2489, %v3281, 0
      %v3336 = vsel %vm2489, %v3282, 0
      %v3339 = vsel %vm2489, %v3283, 0
      %v3342 = vsel %vm2489, %v3284, 0
      %v3345 = vsel %vm2489, %v3285, 0
      %v3348 = vsel %vm2489, %v3286, 0
      %v3351 = vsel %vm2489, %v3287, 0
      %v3354 = vsel %vm2489, %v3288, 0
      %v3357 = vsel %vm2489, %v3289, 0
      %v3360 = vsel %vm2489, %v3290, 0
      %v3363 = vsel %vm2489, %v3291, 0
      %v3366 = vsel %vm2489, %v3292, 0
      %v3369 = vsel %vm2489, %v3293, 0
      %v3372 = vsel %vm2489, %v3294, 0
      %v3375 = vsel %vm2489, %v3295, 0
      %v3378 = vsel %vm2489, %v3296, 0
      %v3381 = vsel %vm2489, %v3297, 0
      %v3384 = vsel %vm2489, %v3298, 0
      %v3387 = vsel %vm2562, %v3311, 0
      %3389 = vmatprep.subr.bf16.mxu0 0
      %3390 = vmatpush1.bf16.msra.mxu0 0
      %3391 = vmatprep.subr.bf16.mxu0 0
      %3392 = vmatpush1.bf16.msra.mxu0 0
      %3393 = vmatprep.subr.bf16.mxu0 0
      %3394 = vmatpush1.bf16.msra.mxu0 0
      %3395 = vmatprep.subr.bf16.mxu0 0
      %3396 = vmatpush1.bf16.msra.mxu0 0
      %3397 = vmatprep.subr.bf16.mxu0 0
      %3398 = vmatpush1.bf16.msra.mxu0 0
      %3399 = vmatprep.subr.bf16.mxu0 0
      %3400 = vmatpush1.bf16.msra.mxu0 %v3387
      %3401 = vmatprep.subr.bf16.mxu0 0
      %3402 = vmatpush1.bf16.msra.mxu0 %v3310
      %3403 = vmatprep.subr.bf16.mxu0 0
      %3404 = vmatpush1.bf16.msra.mxu0 %v3309
      %3405 = vmatprep.subr.bf16.mxu0 0
      %3406 = vmatpush2.bf16.msra.mxu0 0
      %3407 = vmatprep.subr.bf16.mxu0 0
      %3408 = vmatpush2.bf16.msra.mxu0 0
      %3409 = vmatprep.subr.bf16.mxu0 0
      %3410 = vmatpush2.bf16.msra.mxu0 0
      %3411 = vmatprep.subr.bf16.mxu0 0
      %3412 = vmatpush2.bf16.msra.mxu0 0
      %3413 = vmatprep.subr.bf16.mxu0 0
      %3414 = vmatpush2.bf16.msra.mxu0 0
      %3415 = vmatprep.subr.bf16.mxu0 0
      %3416 = vmatpush2.bf16.msra.mxu0 0
      %3417 = vmatprep.subr.bf16.mxu0 0
      %3418 = vmatpush2.bf16.msra.mxu0 0
      %3419 = vmatprep.subr.bf16.mxu0 0
      %3420 = vmatpush2.bf16.msra.mxu0 0
      %3421 = vmatprep.mubr.bf16.mxu0 0
      %3422 = vmatmul.mubr.bf16.gmra.mxu0 %v3315
      %v3423 = vpop.f32.mrf.mxu0
      %v3424 = vadd.f32 0.0, %v3423
      %v3425 = vpop.f32.mrf.mxu0
      %v3426 = vpop.f32.mrf.mxu0
      %v3427 = vadd.f32 0.0, %v3426
      %v3428 = vpop.f32.mrf.mxu0
      %3429 = vmatprep.mubr.bf16.mxu0 0
      %3430 = vmatmul.mubr.bf16.gmra.mxu0 %v3318
      %v3431 = vpop.f32.mrf.mxu0
      %v3432 = vadd.f32 0.0, %v3431
      %v3433 = vpop.f32.mrf.mxu0
      %v3434 = vpop.f32.mrf.mxu0
      %v3435 = vadd.f32 0.0, %v3434
      %v3436 = vpop.f32.mrf.mxu0
      %3437 = vmatprep.mubr.bf16.mxu0 0
      %3438 = vmatmul.mubr.bf16.gmra.mxu0 %v3321
      %v3439 = vpop.f32.mrf.mxu0
      %v3440 = vadd.f32 0.0, %v3439
      %v3441 = vpop.f32.mrf.mxu0
      %v3442 = vpop.f32.mrf.mxu0
      %v3443 = vadd.f32 0.0, %v3442
      %v3444 = vpop.f32.mrf.mxu0
      %3445 = vmatprep.mubr.bf16.mxu0 0
      %3446 = vmatmul.mubr.bf16.gmra.mxu0 %v3324
      %v3447 = vpop.f32.mrf.mxu0
      %v3448 = vadd.f32 0.0, %v3447
      %v3449 = vpop.f32.mrf.mxu0
      %v3450 = vpop.f32.mrf.mxu0
      %v3451 = vadd.f32 0.0, %v3450
      %v3452 = vpop.f32.mrf.mxu0
      %3453 = vmatprep.mubr.bf16.mxu0 0
      %3454 = vmatmul.mubr.bf16.gmra.mxu0 %v3327
      %v3455 = vpop.f32.mrf.mxu0
      %v3456 = vadd.f32 0.0, %v3455
      %v3457 = vpop.f32.mrf.mxu0
      %v3458 = vpop.f32.mrf.mxu0
      %v3459 = vadd.f32 0.0, %v3458
      %v3460 = vpop.f32.mrf.mxu0
      %3461 = vmatprep.mubr.bf16.mxu0 0
      %3462 = vmatmul.mubr.bf16.gmra.mxu0 %v3330
      %v3463 = vpop.f32.mrf.mxu0
      %v3464 = vadd.f32 0.0, %v3463
      %v3465 = vpop.f32.mrf.mxu0
      %v3466 = vpop.f32.mrf.mxu0
      %v3467 = vadd.f32 0.0, %v3466
      %v3468 = vpop.f32.mrf.mxu0
      %3469 = vmatprep.mubr.bf16.mxu0 0
      %3470 = vmatmul.mubr.bf16.gmra.mxu0 %v3333
      %v3471 = vpop.f32.mrf.mxu0
      %v3472 = vadd.f32 0.0, %v3471
      %v3473 = vpop.f32.mrf.mxu0
      %v3474 = vpop.f32.mrf.mxu0
      %v3475 = vadd.f32 0.0, %v3474
      %v3476 = vpop.f32.mrf.mxu0
      %3477 = vmatprep.mubr.bf16.mxu0 0
      %3478 = vmatmul.mubr.bf16.gmra.mxu0 %v3336
      %v3479 = vpop.f32.mrf.mxu0
      %v3480 = vadd.f32 0.0, %v3479
      %v3481 = vpop.f32.mrf.mxu0
      %v3482 = vpop.f32.mrf.mxu0
      %v3483 = vadd.f32 0.0, %v3482
      %v3484 = vpop.f32.mrf.mxu0
      %3485 = vmatprep.mubr.bf16.mxu0 0
      %3486 = vmatmul.mubr.bf16.gmra.mxu0 %v3339
      %v3487 = vpop.f32.mrf.mxu0
      %v3488 = vadd.f32 0.0, %v3487
      %v3489 = vpop.f32.mrf.mxu0
      %v3490 = vpop.f32.mrf.mxu0
      %v3491 = vadd.f32 0.0, %v3490
      %v3492 = vpop.f32.mrf.mxu0
      %3493 = vmatprep.mubr.bf16.mxu0 0
      %3494 = vmatmul.mubr.bf16.gmra.mxu0 %v3342
      %v3495 = vpop.f32.mrf.mxu0
      %v3496 = vadd.f32 0.0, %v3495
      %v3497 = vpop.f32.mrf.mxu0
      %v3498 = vpop.f32.mrf.mxu0
      %v3499 = vadd.f32 0.0, %v3498
      %v3500 = vpop.f32.mrf.mxu0
      %3501 = vmatprep.mubr.bf16.mxu0 0
      %3502 = vmatmul.mubr.bf16.gmra.mxu0 %v3345
      %v3503 = vpop.f32.mrf.mxu0
      %v3504 = vadd.f32 0.0, %v3503
      %v3505 = vpop.f32.mrf.mxu0
      %v3506 = vpop.f32.mrf.mxu0
      %v3507 = vadd.f32 0.0, %v3506
      %v3508 = vpop.f32.mrf.mxu0
      %3509 = vmatprep.mubr.bf16.mxu0 0
      %3510 = vmatmul.mubr.bf16.gmra.mxu0 %v3348
      %v3511 = vpop.f32.mrf.mxu0
      %v3512 = vadd.f32 0.0, %v3511
      %v3513 = vpop.f32.mrf.mxu0
      %v3514 = vpop.f32.mrf.mxu0
      %v3515 = vadd.f32 0.0, %v3514
      %v3516 = vpop.f32.mrf.mxu0
      %3517 = vmatprep.mubr.bf16.mxu0 0
      %3518 = vmatmul.mubr.bf16.gmra.mxu0 %v3351
      %v3519 = vpop.f32.mrf.mxu0
      %v3520 = vadd.f32 0.0, %v3519
      %v3521 = vpop.f32.mrf.mxu0
      %v3522 = vpop.f32.mrf.mxu0
      %v3523 = vadd.f32 0.0, %v3522
      %v3524 = vpop.f32.mrf.mxu0
      %3525 = vmatprep.mubr.bf16.mxu0 0
      %3526 = vmatmul.mubr.bf16.gmra.mxu0 %v3354
      %v3527 = vpop.f32.mrf.mxu0
      %v3528 = vadd.f32 0.0, %v3527
      %v3529 = vpop.f32.mrf.mxu0
      %v3530 = vpop.f32.mrf.mxu0
      %v3531 = vadd.f32 0.0, %v3530
      %v3532 = vpop.f32.mrf.mxu0
      %3533 = vmatprep.mubr.bf16.mxu0 0
      %3534 = vmatmul.mubr.bf16.gmra.mxu0 %v3357
      %v3535 = vpop.f32.mrf.mxu0
      %v3536 = vadd.f32 0.0, %v3535
      %v3537 = vpop.f32.mrf.mxu0
      %v3538 = vpop.f32.mrf.mxu0
      %v3539 = vadd.f32 0.0, %v3538
      %v3540 = vpop.f32.mrf.mxu0
      %3541 = vmatprep.mubr.bf16.mxu0 0
      %3542 = vmatmul.mubr.bf16.gmra.mxu0 %v3360
      %v3543 = vpop.f32.mrf.mxu0
      %v3544 = vadd.f32 0.0, %v3543
      %v3545 = vpop.f32.mrf.mxu0
      %v3546 = vpop.f32.mrf.mxu0
      %v3547 = vadd.f32 0.0, %v3546
      %v3548 = vpop.f32.mrf.mxu0
      %3549 = vmatprep.mubr.bf16.mxu0 0
      %3550 = vmatmul.mubr.bf16.gmra.mxu0 %v3363
      %v3551 = vpop.f32.mrf.mxu0
      %v3552 = vadd.f32 0.0, %v3551
      %v3553 = vpop.f32.mrf.mxu0
      %v3554 = vpop.f32.mrf.mxu0
      %v3555 = vadd.f32 0.0, %v3554
      %v3556 = vpop.f32.mrf.mxu0
      %3557 = vmatprep.mubr.bf16.mxu0 0
      %3558 = vmatmul.mubr.bf16.gmra.mxu0 %v3366
      %v3559 = vpop.f32.mrf.mxu0
      %v3560 = vadd.f32 0.0, %v3559
      %v3561 = vpop.f32.mrf.mxu0
      %v3562 = vpop.f32.mrf.mxu0
      %v3563 = vadd.f32 0.0, %v3562
      %v3564 = vpop.f32.mrf.mxu0
      %3565 = vmatprep.mubr.bf16.mxu0 0
      %3566 = vmatmul.mubr.bf16.gmra.mxu0 %v3369
      %v3567 = vpop.f32.mrf.mxu0
      %v3568 = vadd.f32 0.0, %v3567
      %v3569 = vpop.f32.mrf.mxu0
      %v3570 = vpop.f32.mrf.mxu0
      %v3571 = vadd.f32 0.0, %v3570
      %v3572 = vpop.f32.mrf.mxu0
      %3573 = vmatprep.mubr.bf16.mxu0 0
      %3574 = vmatmul.mubr.bf16.gmra.mxu0 %v3372
      %v3575 = vpop.f32.mrf.mxu0
      %v3576 = vadd.f32 0.0, %v3575
      %v3577 = vpop.f32.mrf.mxu0
      %v3578 = vpop.f32.mrf.mxu0
      %v3579 = vadd.f32 0.0, %v3578
      %v3580 = vpop.f32.mrf.mxu0
      %3581 = vmatprep.mubr.bf16.mxu0 0
      %3582 = vmatmul.mubr.bf16.gmra.mxu0 %v3375
      %v3583 = vpop.f32.mrf.mxu0
      %v3584 = vadd.f32 0.0, %v3583
      %v3585 = vpop.f32.mrf.mxu0
      %v3586 = vpop.f32.mrf.mxu0
      %v3587 = vadd.f32 0.0, %v3586
      %v3588 = vpop.f32.mrf.mxu0
      %3589 = vmatprep.mubr.bf16.mxu0 0
      %3590 = vmatmul.mubr.bf16.gmra.mxu0 %v3378
      %v3591 = vpop.f32.mrf.mxu0
      %v3592 = vadd.f32 0.0, %v3591
      %v3593 = vpop.f32.mrf.mxu0
      %v3594 = vpop.f32.mrf.mxu0
      %v3595 = vadd.f32 0.0, %v3594
      %v3596 = vpop.f32.mrf.mxu0
      %3597 = vmatprep.mubr.bf16.mxu0 0
      %3598 = vmatmul.mubr.bf16.gmra.mxu0 %v3381
      %v3599 = vpop.f32.mrf.mxu0
      %v3600 = vadd.f32 0.0, %v3599
      %v3601 = vpop.f32.mrf.mxu0
      %v3602 = vpop.f32.mrf.mxu0
      %v3603 = vadd.f32 0.0, %v3602
      %v3604 = vpop.f32.mrf.mxu0
      %3605 = vmatprep.mubr.bf16.mxu0 0
      %3606 = vmatmul.mubr.bf16.gmra.mxu0 %v3384
      %v3607 = vpop.f32.mrf.mxu0
      %v3608 = vadd.f32 0.0, %v3607
      %v3609 = vpop.f32.mrf.mxu0
      %v3610 = vpop.f32.mrf.mxu0
      %v3611 = vadd.f32 0.0, %v3610
      %v3612 = vpop.f32.mrf.mxu0
      %3613 = vdwg.mxu0
      %v3614 = vadd.f32 %v2916, %v3424
      %v3615 = vadd.f32 %v2919, %v3427
      %v3616 = vadd.f32 %v2924, %v3432
      %v3617 = vadd.f32 %v2927, %v3435
      %v3618 = vadd.f32 %v2932, %v3440
      %v3619 = vadd.f32 %v2935, %v3443
      %v3620 = vadd.f32 %v2940, %v3448
      %v3621 = vadd.f32 %v2943, %v3451
      %v3622 = vadd.f32 %v2948, %v3456
      %v3623 = vadd.f32 %v2951, %v3459
      %v3624 = vadd.f32 %v2956, %v3464
      %v3625 = vadd.f32 %v2959, %v3467
      %v3626 = vadd.f32 %v2964, %v3472
      %v3627 = vadd.f32 %v2967, %v3475
      %v3628 = vadd.f32 %v2972, %v3480
      %v3629 = vadd.f32 %v2975, %v3483
      %v3630 = vadd.f32 %v2980, %v3488
      %v3631 = vadd.f32 %v2983, %v3491
      %v3632 = vadd.f32 %v2988, %v3496
      %v3633 = vadd.f32 %v2991, %v3499
      %v3634 = vadd.f32 %v2996, %v3504
      %v3635 = vadd.f32 %v2999, %v3507
      %v3636 = vadd.f32 %v3004, %v3512
      %v3637 = vadd.f32 %v3007, %v3515
      %v3638 = vadd.f32 %v3012, %v3520
      %v3639 = vadd.f32 %v3015, %v3523
      %v3640 = vadd.f32 %v3020, %v3528
      %v3641 = vadd.f32 %v3023, %v3531
      %v3642 = vadd.f32 %v3028, %v3536
      %v3643 = vadd.f32 %v3031, %v3539
      %v3644 = vadd.f32 %v3036, %v3544
      %v3645 = vadd.f32 %v3039, %v3547
      %v3646 = vadd.f32 %v3044, %v3552
      %v3647 = vadd.f32 %v3047, %v3555
      %v3648 = vadd.f32 %v3052, %v3560
      %v3649 = vadd.f32 %v3055, %v3563
      %v3650 = vadd.f32 %v3060, %v3568
      %v3651 = vadd.f32 %v3063, %v3571
      %v3652 = vadd.f32 %v3068, %v3576
      %v3653 = vadd.f32 %v3071, %v3579
      %v3654 = vadd.f32 %v3076, %v3584
      %v3655 = vadd.f32 %v3079, %v3587
      %v3656 = vadd.f32 %v3084, %v3592
      %v3657 = vadd.f32 %v3087, %v3595
      %v3658 = vadd.f32 %v3092, %v3600
      %v3659 = vadd.f32 %v3095, %v3603
      %v3660 = vadd.f32 %v3100, %v3608
      %v3661 = vadd.f32 %v3103, %v3611
      %vm3662 = vcmask 1044480
      %v3663 = vrot.slane %v563, 3
      %v3664 = vrot.slane %v566, 3
      %v3665 = vsel %vm3662, %v3663, %v3664
      %v3666 = vrot.slane %v571, 3
      %v3667 = vsel %vm3662, %v3664, %v3666
      %v3668 = vrot.slane %v631, 3
      %v3669 = vrot.slane %v634, 3
      %v3670 = vsel %vm3662, %v3668, %v3669
      %v3671 = vrot.slane %v639, 3
      %v3672 = vsel %vm3662, %v3669, %v3671
      %v3673 = vrot.slane %v699, 3
      %v3674 = vrot.slane %v702, 3
      %v3675 = vsel %vm3662, %v3673, %v3674
      %v3676 = vrot.slane %v707, 3
      %v3677 = vsel %vm3662, %v3674, %v3676
      %v3678 = vrot.slane %v767, 3
      %v3679 = vrot.slane %v770, 3
      %v3680 = vsel %vm3662, %v3678, %v3679
      %v3681 = vrot.slane %v775, 3
      %v3682 = vsel %vm3662, %v3679, %v3681
      %v3683 = vrot.slane %v835, 3
      %v3684 = vrot.slane %v838, 3
      %v3685 = vsel %vm3662, %v3683, %v3684
      %v3686 = vrot.slane %v843, 3
      %v3687 = vsel %vm3662, %v3684, %v3686
      %v3688 = vrot.slane %v903, 3
      %v3689 = vrot.slane %v906, 3
      %v3690 = vsel %vm3662, %v3688, %v3689
      %v3691 = vrot.slane %v911, 3
      %v3692 = vsel %vm3662, %v3689, %v3691
      %v3693 = vrot.slane %v971, 3
      %v3694 = vrot.slane %v974, 3
      %v3695 = vsel %vm3662, %v3693, %v3694
      %v3696 = vrot.slane %v979, 3
      %v3697 = vsel %vm3662, %v3694, %v3696
      %v3698 = vrot.slane %v1039, 3
      %v3699 = vrot.slane %v1042, 3
      %v3700 = vsel %vm3662, %v3698, %v3699
      %v3701 = vrot.slane %v1047, 3
      %v3702 = vsel %vm3662, %v3699, %v3701
      %v3703 = vrot.slane %v1107, 3
      %v3704 = vrot.slane %v1110, 3
      %v3705 = vsel %vm3662, %v3703, %v3704
      %v3706 = vrot.slane %v1115, 3
      %v3707 = vsel %vm3662, %v3704, %v3706
      %v3708 = vrot.slane %v1175, 3
      %v3709 = vrot.slane %v1178, 3
      %v3710 = vsel %vm3662, %v3708, %v3709
      %v3711 = vrot.slane %v1183, 3
      %v3712 = vsel %vm3662, %v3709, %v3711
      %v3713 = vrot.slane %v1243, 3
      %v3714 = vrot.slane %v1246, 3
      %v3715 = vsel %vm3662, %v3713, %v3714
      %v3716 = vrot.slane %v1251, 3
      %v3717 = vsel %vm3662, %v3714, %v3716
      %v3718 = vrot.slane %v1311, 3
      %v3719 = vrot.slane %v1314, 3
      %v3720 = vsel %vm3662, %v3718, %v3719
      %v3721 = vrot.slane %v1319, 3
      %v3722 = vsel %vm3662, %v3719, %v3721
      %v3723 = vrot.slane %v1379, 3
      %v3724 = vrot.slane %v1382, 3
      %v3725 = vsel %vm3662, %v3723, %v3724
      %v3726 = vrot.slane %v1387, 3
      %v3727 = vsel %vm3662, %v3724, %v3726
      %v3728 = vrot.slane %v1447, 3
      %v3729 = vrot.slane %v1450, 3
      %v3730 = vsel %vm3662, %v3728, %v3729
      %v3731 = vrot.slane %v1455, 3
      %v3732 = vsel %vm3662, %v3729, %v3731
      %v3733 = vrot.slane %v1515, 3
      %v3734 = vrot.slane %v1518, 3
      %v3735 = vsel %vm3662, %v3733, %v3734
      %v3736 = vrot.slane %v1523, 3
      %v3737 = vsel %vm3662, %v3734, %v3736
      %v3738 = vrot.slane %v1583, 3
      %v3739 = vrot.slane %v1586, 3
      %v3740 = vsel %vm3662, %v3738, %v3739
      %v3741 = vrot.slane %v1591, 3
      %v3742 = vsel %vm3662, %v3739, %v3741
      %v3743 = vrot.slane %v1651, 3
      %v3744 = vrot.slane %v1654, 3
      %v3745 = vsel %vm3662, %v3743, %v3744
      %v3746 = vrot.slane %v1659, 3
      %v3747 = vsel %vm3662, %v3744, %v3746
      %v3748 = vrot.slane %v1719, 3
      %v3749 = vrot.slane %v1722, 3
      %v3750 = vsel %vm3662, %v3748, %v3749
      %v3751 = vrot.slane %v1727, 3
      %v3752 = vsel %vm3662, %v3749, %v3751
      %v3753 = vrot.slane %v1787, 3
      %v3754 = vrot.slane %v1790, 3
      %v3755 = vsel %vm3662, %v3753, %v3754
      %v3756 = vrot.slane %v1795, 3
      %v3757 = vsel %vm3662, %v3754, %v3756
      %v3758 = vrot.slane %v1855, 3
      %v3759 = vrot.slane %v1858, 3
      %v3760 = vsel %vm3662, %v3758, %v3759
      %v3761 = vrot.slane %v1863, 3
      %v3762 = vsel %vm3662, %v3759, %v3761
      %v3763 = vrot.slane %v1923, 3
      %v3764 = vrot.slane %v1926, 3
      %v3765 = vsel %vm3662, %v3763, %v3764
      %v3766 = vrot.slane %v1931, 3
      %v3767 = vsel %vm3662, %v3764, %v3766
      %v3768 = vrot.slane %v1991, 3
      %v3769 = vrot.slane %v1994, 3
      %v3770 = vsel %vm3662, %v3768, %v3769
      %v3771 = vrot.slane %v1999, 3
      %v3772 = vsel %vm3662, %v3769, %v3771
      %v3773 = vrot.slane %v2059, 3
      %v3774 = vrot.slane %v2062, 3
      %v3775 = vsel %vm3662, %v3773, %v3774
      %v3776 = vrot.slane %v2067, 3
      %v3777 = vsel %vm3662, %v3774, %v3776
      %v3778 = vrot.slane %v2127, 3
      %v3779 = vrot.slane %v2130, 3
      %v3780 = vsel %vm3662, %v3778, %v3779
      %v3781 = vrot.slane %v2135, 3
      %v3782 = vsel %vm3662, %v3779, %v3781
      %v3831 = vpack.c.bf16 %v3667, %v3665
      %v3832 = vpack.c.bf16 %v3672, %v3670
      %v3833 = vpack.c.bf16 %v3677, %v3675
      %v3834 = vpack.c.bf16 %v3682, %v3680
      %v3835 = vpack.c.bf16 %v3687, %v3685
      %v3836 = vpack.c.bf16 %v3692, %v3690
      %v3837 = vpack.c.bf16 %v3697, %v3695
      %v3838 = vpack.c.bf16 %v3702, %v3700
      %v3839 = vpack.c.bf16 %v3707, %v3705
      %v3840 = vpack.c.bf16 %v3712, %v3710
      %v3841 = vpack.c.bf16 %v3717, %v3715
      %v3842 = vpack.c.bf16 %v3722, %v3720
      %v3843 = vpack.c.bf16 %v3727, %v3725
      %v3844 = vpack.c.bf16 %v3732, %v3730
      %v3845 = vpack.c.bf16 %v3737, %v3735
      %v3846 = vpack.c.bf16 %v3742, %v3740
      %v3847 = vpack.c.bf16 %v3747, %v3745
      %v3848 = vpack.c.bf16 %v3752, %v3750
      %v3849 = vpack.c.bf16 %v3757, %v3755
      %v3850 = vpack.c.bf16 %v3762, %v3760
      %v3851 = vpack.c.bf16 %v3767, %v3765
      %v3852 = vpack.c.bf16 %v3772, %v3770
      %v3853 = vpack.c.bf16 %v3777, %v3775
      %v3854 = vpack.c.bf16 %v3782, %v3780
      %v3860 = vunpack.c.l.b16 %v2155
      %v3861 = vunpack.c.l.b16 %v2156
      %v3862 = vunpack.c.l.b16 %v2157
      %v3863 = vunpack.c.l.b16 %v2158
      %v3864 = vunpack.c.l.b16 %v2159
      %v3865 = vpack.c.b16 %v3861, %v3860
      %v3866 = vpack.c.b16 %v3863, %v3862
      %v3867 = vpack.c.b16 %v3864, %v3864
      %v3871 = vsel %vm2489, %v3831, 0
      %v3874 = vsel %vm2489, %v3832, 0
      %v3877 = vsel %vm2489, %v3833, 0
      %v3880 = vsel %vm2489, %v3834, 0
      %v3883 = vsel %vm2489, %v3835, 0
      %v3886 = vsel %vm2489, %v3836, 0
      %v3889 = vsel %vm2489, %v3837, 0
      %v3892 = vsel %vm2489, %v3838, 0
      %v3895 = vsel %vm2489, %v3839, 0
      %v3898 = vsel %vm2489, %v3840, 0
      %v3901 = vsel %vm2489, %v3841, 0
      %v3904 = vsel %vm2489, %v3842, 0
      %v3907 = vsel %vm2489, %v3843, 0
      %v3910 = vsel %vm2489, %v3844, 0
      %v3913 = vsel %vm2489, %v3845, 0
      %v3916 = vsel %vm2489, %v3846, 0
      %v3919 = vsel %vm2489, %v3847, 0
      %v3922 = vsel %vm2489, %v3848, 0
      %v3925 = vsel %vm2489, %v3849, 0
      %v3928 = vsel %vm2489, %v3850, 0
      %v3931 = vsel %vm2489, %v3851, 0
      %v3934 = vsel %vm2489, %v3852, 0
      %v3937 = vsel %vm2489, %v3853, 0
      %v3940 = vsel %vm2489, %v3854, 0
      %v3943 = vsel %vm2562, %v3867, 0
      %3945 = vmatprep.subr.bf16.mxu0 0
      %3946 = vmatpush1.bf16.msra.mxu0 0
      %3947 = vmatprep.subr.bf16.mxu0 0
      %3948 = vmatpush1.bf16.msra.mxu0 0
      %3949 = vmatprep.subr.bf16.mxu0 0
      %3950 = vmatpush1.bf16.msra.mxu0 0
      %3951 = vmatprep.subr.bf16.mxu0 0
      %3952 = vmatpush1.bf16.msra.mxu0 0
      %3953 = vmatprep.subr.bf16.mxu0 0
      %3954 = vmatpush1.bf16.msra.mxu0 0
      %3955 = vmatprep.subr.bf16.mxu0 0
      %3956 = vmatpush1.bf16.msra.mxu0 %v3943
      %3957 = vmatprep.subr.bf16.mxu0 0
      %3958 = vmatpush1.bf16.msra.mxu0 %v3866
      %3959 = vmatprep.subr.bf16.mxu0 0
      %3960 = vmatpush1.bf16.msra.mxu0 %v3865
      %3961 = vmatprep.subr.bf16.mxu0 0
      %3962 = vmatpush2.bf16.msra.mxu0 0
      %3963 = vmatprep.subr.bf16.mxu0 0
      %3964 = vmatpush2.bf16.msra.mxu0 0
      %3965 = vmatprep.subr.bf16.mxu0 0
      %3966 = vmatpush2.bf16.msra.mxu0 0
      %3967 = vmatprep.subr.bf16.mxu0 0
      %3968 = vmatpush2.bf16.msra.mxu0 0
      %3969 = vmatprep.subr.bf16.mxu0 0
      %3970 = vmatpush2.bf16.msra.mxu0 0
      %3971 = vmatprep.subr.bf16.mxu0 0
      %3972 = vmatpush2.bf16.msra.mxu0 0
      %3973 = vmatprep.subr.bf16.mxu0 0
      %3974 = vmatpush2.bf16.msra.mxu0 0
      %3975 = vmatprep.subr.bf16.mxu0 0
      %3976 = vmatpush2.bf16.msra.mxu0 0
      %3977 = vmatprep.mubr.bf16.mxu0 0
      %3978 = vmatmul.mubr.bf16.gmra.mxu0 %v3871
      %v3979 = vpop.f32.mrf.mxu0
      %v3980 = vadd.f32 0.0, %v3979
      %v3981 = vpop.f32.mrf.mxu0
      %v3982 = vpop.f32.mrf.mxu0
      %v3983 = vadd.f32 0.0, %v3982
      %v3984 = vpop.f32.mrf.mxu0
      %3985 = vmatprep.mubr.bf16.mxu0 0
      %3986 = vmatmul.mubr.bf16.gmra.mxu0 %v3874
      %v3987 = vpop.f32.mrf.mxu0
      %v3988 = vadd.f32 0.0, %v3987
      %v3989 = vpop.f32.mrf.mxu0
      %v3990 = vpop.f32.mrf.mxu0
      %v3991 = vadd.f32 0.0, %v3990
      %v3992 = vpop.f32.mrf.mxu0
      %3993 = vmatprep.mubr.bf16.mxu0 0
      %3994 = vmatmul.mubr.bf16.gmra.mxu0 %v3877
      %v3995 = vpop.f32.mrf.mxu0
      %v3996 = vadd.f32 0.0, %v3995
      %v3997 = vpop.f32.mrf.mxu0
      %v3998 = vpop.f32.mrf.mxu0
      %v3999 = vadd.f32 0.0, %v3998
      %v4000 = vpop.f32.mrf.mxu0
      %4001 = vmatprep.mubr.bf16.mxu0 0
      %4002 = vmatmul.mubr.bf16.gmra.mxu0 %v3880
      %v4003 = vpop.f32.mrf.mxu0
      %v4004 = vadd.f32 0.0, %v4003
      %v4005 = vpop.f32.mrf.mxu0
      %v4006 = vpop.f32.mrf.mxu0
      %v4007 = vadd.f32 0.0, %v4006
      %v4008 = vpop.f32.mrf.mxu0
      %4009 = vmatprep.mubr.bf16.mxu0 0
      %4010 = vmatmul.mubr.bf16.gmra.mxu0 %v3883
      %v4011 = vpop.f32.mrf.mxu0
      %v4012 = vadd.f32 0.0, %v4011
      %v4013 = vpop.f32.mrf.mxu0
      %v4014 = vpop.f32.mrf.mxu0
      %v4015 = vadd.f32 0.0, %v4014
      %v4016 = vpop.f32.mrf.mxu0
      %4017 = vmatprep.mubr.bf16.mxu0 0
      %4018 = vmatmul.mubr.bf16.gmra.mxu0 %v3886
      %v4019 = vpop.f32.mrf.mxu0
      %v4020 = vadd.f32 0.0, %v4019
      %v4021 = vpop.f32.mrf.mxu0
      %v4022 = vpop.f32.mrf.mxu0
      %v4023 = vadd.f32 0.0, %v4022
      %v4024 = vpop.f32.mrf.mxu0
      %4025 = vmatprep.mubr.bf16.mxu0 0
      %4026 = vmatmul.mubr.bf16.gmra.mxu0 %v3889
      %v4027 = vpop.f32.mrf.mxu0
      %v4028 = vadd.f32 0.0, %v4027
      %v4029 = vpop.f32.mrf.mxu0
      %v4030 = vpop.f32.mrf.mxu0
      %v4031 = vadd.f32 0.0, %v4030
      %v4032 = vpop.f32.mrf.mxu0
      %4033 = vmatprep.mubr.bf16.mxu0 0
      %4034 = vmatmul.mubr.bf16.gmra.mxu0 %v3892
      %v4035 = vpop.f32.mrf.mxu0
      %v4036 = vadd.f32 0.0, %v4035
      %v4037 = vpop.f32.mrf.mxu0
      %v4038 = vpop.f32.mrf.mxu0
      %v4039 = vadd.f32 0.0, %v4038
      %v4040 = vpop.f32.mrf.mxu0
      %4041 = vmatprep.mubr.bf16.mxu0 0
      %4042 = vmatmul.mubr.bf16.gmra.mxu0 %v3895
      %v4043 = vpop.f32.mrf.mxu0
      %v4044 = vadd.f32 0.0, %v4043
      %v4045 = vpop.f32.mrf.mxu0
      %v4046 = vpop.f32.mrf.mxu0
      %v4047 = vadd.f32 0.0, %v4046
      %v4048 = vpop.f32.mrf.mxu0
      %4049 = vmatprep.mubr.bf16.mxu0 0
      %4050 = vmatmul.mubr.bf16.gmra.mxu0 %v3898
      %v4051 = vpop.f32.mrf.mxu0
      %v4052 = vadd.f32 0.0, %v4051
      %v4053 = vpop.f32.mrf.mxu0
      %v4054 = vpop.f32.mrf.mxu0
      %v4055 = vadd.f32 0.0, %v4054
      %v4056 = vpop.f32.mrf.mxu0
      %4057 = vmatprep.mubr.bf16.mxu0 0
      %4058 = vmatmul.mubr.bf16.gmra.mxu0 %v3901
      %v4059 = vpop.f32.mrf.mxu0
      %v4060 = vadd.f32 0.0, %v4059
      %v4061 = vpop.f32.mrf.mxu0
      %v4062 = vpop.f32.mrf.mxu0
      %v4063 = vadd.f32 0.0, %v4062
      %v4064 = vpop.f32.mrf.mxu0
      %4065 = vmatprep.mubr.bf16.mxu0 0
      %4066 = vmatmul.mubr.bf16.gmra.mxu0 %v3904
      %v4067 = vpop.f32.mrf.mxu0
      %v4068 = vadd.f32 0.0, %v4067
      %v4069 = vpop.f32.mrf.mxu0
      %v4070 = vpop.f32.mrf.mxu0
      %v4071 = vadd.f32 0.0, %v4070
      %v4072 = vpop.f32.mrf.mxu0
      %4073 = vmatprep.mubr.bf16.mxu0 0
      %4074 = vmatmul.mubr.bf16.gmra.mxu0 %v3907
      %v4075 = vpop.f32.mrf.mxu0
      %v4076 = vadd.f32 0.0, %v4075
      %v4077 = vpop.f32.mrf.mxu0
      %v4078 = vpop.f32.mrf.mxu0
      %v4079 = vadd.f32 0.0, %v4078
      %v4080 = vpop.f32.mrf.mxu0
      %4081 = vmatprep.mubr.bf16.mxu0 0
      %4082 = vmatmul.mubr.bf16.gmra.mxu0 %v3910
      %v4083 = vpop.f32.mrf.mxu0
      %v4084 = vadd.f32 0.0, %v4083
      %v4085 = vpop.f32.mrf.mxu0
      %v4086 = vpop.f32.mrf.mxu0
      %v4087 = vadd.f32 0.0, %v4086
      %v4088 = vpop.f32.mrf.mxu0
      %4089 = vmatprep.mubr.bf16.mxu0 0
      %4090 = vmatmul.mubr.bf16.gmra.mxu0 %v3913
      %v4091 = vpop.f32.mrf.mxu0
      %v4092 = vadd.f32 0.0, %v4091
      %v4093 = vpop.f32.mrf.mxu0
      %v4094 = vpop.f32.mrf.mxu0
      %v4095 = vadd.f32 0.0, %v4094
      %v4096 = vpop.f32.mrf.mxu0
      %4097 = vmatprep.mubr.bf16.mxu0 0
      %4098 = vmatmul.mubr.bf16.gmra.mxu0 %v3916
      %v4099 = vpop.f32.mrf.mxu0
      %v4100 = vadd.f32 0.0, %v4099
      %v4101 = vpop.f32.mrf.mxu0
      %v4102 = vpop.f32.mrf.mxu0
      %v4103 = vadd.f32 0.0, %v4102
      %v4104 = vpop.f32.mrf.mxu0
      %4105 = vmatprep.mubr.bf16.mxu0 0
      %4106 = vmatmul.mubr.bf16.gmra.mxu0 %v3919
      %v4107 = vpop.f32.mrf.mxu0
      %v4108 = vadd.f32 0.0, %v4107
      %v4109 = vpop.f32.mrf.mxu0
      %v4110 = vpop.f32.mrf.mxu0
      %v4111 = vadd.f32 0.0, %v4110
      %v4112 = vpop.f32.mrf.mxu0
      %4113 = vmatprep.mubr.bf16.mxu0 0
      %4114 = vmatmul.mubr.bf16.gmra.mxu0 %v3922
      %v4115 = vpop.f32.mrf.mxu0
      %v4116 = vadd.f32 0.0, %v4115
      %v4117 = vpop.f32.mrf.mxu0
      %v4118 = vpop.f32.mrf.mxu0
      %v4119 = vadd.f32 0.0, %v4118
      %v4120 = vpop.f32.mrf.mxu0
      %4121 = vmatprep.mubr.bf16.mxu0 0
      %4122 = vmatmul.mubr.bf16.gmra.mxu0 %v3925
      %v4123 = vpop.f32.mrf.mxu0
      %v4124 = vadd.f32 0.0, %v4123
      %v4125 = vpop.f32.mrf.mxu0
      %v4126 = vpop.f32.mrf.mxu0
      %v4127 = vadd.f32 0.0, %v4126
      %v4128 = vpop.f32.mrf.mxu0
      %4129 = vmatprep.mubr.bf16.mxu0 0
      %4130 = vmatmul.mubr.bf16.gmra.mxu0 %v3928
      %v4131 = vpop.f32.mrf.mxu0
      %v4132 = vadd.f32 0.0, %v4131
      %v4133 = vpop.f32.mrf.mxu0
      %v4134 = vpop.f32.mrf.mxu0
      %v4135 = vadd.f32 0.0, %v4134
      %v4136 = vpop.f32.mrf.mxu0
      %4137 = vmatprep.mubr.bf16.mxu0 0
      %4138 = vmatmul.mubr.bf16.gmra.mxu0 %v3931
      %v4139 = vpop.f32.mrf.mxu0
      %v4140 = vadd.f32 0.0, %v4139
      %v4141 = vpop.f32.mrf.mxu0
      %v4142 = vpop.f32.mrf.mxu0
      %v4143 = vadd.f32 0.0, %v4142
      %v4144 = vpop.f32.mrf.mxu0
      %4145 = vmatprep.mubr.bf16.mxu0 0
      %4146 = vmatmul.mubr.bf16.gmra.mxu0 %v3934
      %v4147 = vpop.f32.mrf.mxu0
      %v4148 = vadd.f32 0.0, %v4147
      %v4149 = vpop.f32.mrf.mxu0
      %v4150 = vpop.f32.mrf.mxu0
      %v4151 = vadd.f32 0.0, %v4150
      %v4152 = vpop.f32.mrf.mxu0
      %4153 = vmatprep.mubr.bf16.mxu0 0
      %4154 = vmatmul.mubr.bf16.gmra.mxu0 %v3937
      %v4155 = vpop.f32.mrf.mxu0
      %v4156 = vadd.f32 0.0, %v4155
      %v4157 = vpop.f32.mrf.mxu0
      %v4158 = vpop.f32.mrf.mxu0
      %v4159 = vadd.f32 0.0, %v4158
      %v4160 = vpop.f32.mrf.mxu0
      %4161 = vmatprep.mubr.bf16.mxu0 0
      %4162 = vmatmul.mubr.bf16.gmra.mxu0 %v3940
      %v4163 = vpop.f32.mrf.mxu0
      %v4164 = vadd.f32 0.0, %v4163
      %v4165 = vpop.f32.mrf.mxu0
      %v4166 = vpop.f32.mrf.mxu0
      %v4167 = vadd.f32 0.0, %v4166
      %v4168 = vpop.f32.mrf.mxu0
      %4169 = vdwg.mxu0
      %v4170 = vadd.f32 %v3614, %v3980
      %v4171 = vadd.f32 %v3615, %v3983
      %v4172 = vadd.f32 %v3616, %v3988
      %v4173 = vadd.f32 %v3617, %v3991
      %v4174 = vadd.f32 %v3618, %v3996
      %v4175 = vadd.f32 %v3619, %v3999
      %v4176 = vadd.f32 %v3620, %v4004
      %v4177 = vadd.f32 %v3621, %v4007
      %v4178 = vadd.f32 %v3622, %v4012
      %v4179 = vadd.f32 %v3623, %v4015
      %v4180 = vadd.f32 %v3624, %v4020
      %v4181 = vadd.f32 %v3625, %v4023
      %v4182 = vadd.f32 %v3626, %v4028
      %v4183 = vadd.f32 %v3627, %v4031
      %v4184 = vadd.f32 %v3628, %v4036
      %v4185 = vadd.f32 %v3629, %v4039
      %v4186 = vadd.f32 %v3630, %v4044
      %v4187 = vadd.f32 %v3631, %v4047
      %v4188 = vadd.f32 %v3632, %v4052
      %v4189 = vadd.f32 %v3633, %v4055
      %v4190 = vadd.f32 %v3634, %v4060
      %v4191 = vadd.f32 %v3635, %v4063
      %v4192 = vadd.f32 %v3636, %v4068
      %v4193 = vadd.f32 %v3637, %v4071
      %v4194 = vadd.f32 %v3638, %v4076
      %v4195 = vadd.f32 %v3639, %v4079
      %v4196 = vadd.f32 %v3640, %v4084
      %v4197 = vadd.f32 %v3641, %v4087
      %v4198 = vadd.f32 %v3642, %v4092
      %v4199 = vadd.f32 %v3643, %v4095
      %v4200 = vadd.f32 %v3644, %v4100
      %v4201 = vadd.f32 %v3645, %v4103
      %v4202 = vadd.f32 %v3646, %v4108
      %v4203 = vadd.f32 %v3647, %v4111
      %v4204 = vadd.f32 %v3648, %v4116
      %v4205 = vadd.f32 %v3649, %v4119
      %v4206 = vadd.f32 %v3650, %v4124
      %v4207 = vadd.f32 %v3651, %v4127
      %v4208 = vadd.f32 %v3652, %v4132
      %v4209 = vadd.f32 %v3653, %v4135
      %v4210 = vadd.f32 %v3654, %v4140
      %v4211 = vadd.f32 %v3655, %v4143
      %v4212 = vadd.f32 %v3656, %v4148
      %v4213 = vadd.f32 %v3657, %v4151
      %v4214 = vadd.f32 %v3658, %v4156
      %v4215 = vadd.f32 %v3659, %v4159
      %v4216 = vadd.f32 %v3660, %v4164
      %v4217 = vadd.f32 %v3661, %v4167
      %vm4218 = vcmask 1043456
      %v4219 = vrot.slane %v563, 4
      %v4220 = vrot.slane %v566, 4
      %v4221 = vsel %vm4218, %v4219, %v4220
      %v4222 = vrot.slane %v571, 4
      %v4223 = vsel %vm4218, %v4220, %v4222
      %v4224 = vrot.slane %v631, 4
      %v4225 = vrot.slane %v634, 4
      %v4226 = vsel %vm4218, %v4224, %v4225
      %v4227 = vrot.slane %v639, 4
      %v4228 = vsel %vm4218, %v4225, %v4227
      %v4229 = vrot.slane %v699, 4
      %v4230 = vrot.slane %v702, 4
      %v4231 = vsel %vm4218, %v4229, %v4230
      %v4232 = vrot.slane %v707, 4
      %v4233 = vsel %vm4218, %v4230, %v4232
      %v4234 = vrot.slane %v767, 4
      %v4235 = vrot.slane %v770, 4
      %v4236 = vsel %vm4218, %v4234, %v4235
      %v4237 = vrot.slane %v775, 4
      %v4238 = vsel %vm4218, %v4235, %v4237
      %v4239 = vrot.slane %v835, 4
      %v4240 = vrot.slane %v838, 4
      %v4241 = vsel %vm4218, %v4239, %v4240
      %v4242 = vrot.slane %v843, 4
      %v4243 = vsel %vm4218, %v4240, %v4242
      %v4244 = vrot.slane %v903, 4
      %v4245 = vrot.slane %v906, 4
      %v4246 = vsel %vm4218, %v4244, %v4245
      %v4247 = vrot.slane %v911, 4
      %v4248 = vsel %vm4218, %v4245, %v4247
      %v4249 = vrot.slane %v971, 4
      %v4250 = vrot.slane %v974, 4
      %v4251 = vsel %vm4218, %v4249, %v4250
      %v4252 = vrot.slane %v979, 4
      %v4253 = vsel %vm4218, %v4250, %v4252
      %v4254 = vrot.slane %v1039, 4
      %v4255 = vrot.slane %v1042, 4
      %v4256 = vsel %vm4218, %v4254, %v4255
      %v4257 = vrot.slane %v1047, 4
      %v4258 = vsel %vm4218, %v4255, %v4257
      %v4259 = vrot.slane %v1107, 4
      %v4260 = vrot.slane %v1110, 4
      %v4261 = vsel %vm4218, %v4259, %v4260
      %v4262 = vrot.slane %v1115, 4
      %v4263 = vsel %vm4218, %v4260, %v4262
      %v4264 = vrot.slane %v1175, 4
      %v4265 = vrot.slane %v1178, 4
      %v4266 = vsel %vm4218, %v4264, %v4265
      %v4267 = vrot.slane %v1183, 4
      %v4268 = vsel %vm4218, %v4265, %v4267
      %v4269 = vrot.slane %v1243, 4
      %v4270 = vrot.slane %v1246, 4
      %v4271 = vsel %vm4218, %v4269, %v4270
      %v4272 = vrot.slane %v1251, 4
      %v4273 = vsel %vm4218, %v4270, %v4272
      %v4274 = vrot.slane %v1311, 4
      %v4275 = vrot.slane %v1314, 4
      %v4276 = vsel %vm4218, %v4274, %v4275
      %v4277 = vrot.slane %v1319, 4
      %v4278 = vsel %vm4218, %v4275, %v4277
      %v4279 = vrot.slane %v1379, 4
      %v4280 = vrot.slane %v1382, 4
      %v4281 = vsel %vm4218, %v4279, %v4280
      %v4282 = vrot.slane %v1387, 4
      %v4283 = vsel %vm4218, %v4280, %v4282
      %v4284 = vrot.slane %v1447, 4
      %v4285 = vrot.slane %v1450, 4
      %v4286 = vsel %vm4218, %v4284, %v4285
      %v4287 = vrot.slane %v1455, 4
      %v4288 = vsel %vm4218, %v4285, %v4287
      %v4289 = vrot.slane %v1515, 4
      %v4290 = vrot.slane %v1518, 4
      %v4291 = vsel %vm4218, %v4289, %v4290
      %v4292 = vrot.slane %v1523, 4
      %v4293 = vsel %vm4218, %v4290, %v4292
      %v4294 = vrot.slane %v1583, 4
      %v4295 = vrot.slane %v1586, 4
      %v4296 = vsel %vm4218, %v4294, %v4295
      %v4297 = vrot.slane %v1591, 4
      %v4298 = vsel %vm4218, %v4295, %v4297
      %v4299 = vrot.slane %v1651, 4
      %v4300 = vrot.slane %v1654, 4
      %v4301 = vsel %vm4218, %v4299, %v4300
      %v4302 = vrot.slane %v1659, 4
      %v4303 = vsel %vm4218, %v4300, %v4302
      %v4304 = vrot.slane %v1719, 4
      %v4305 = vrot.slane %v1722, 4
      %v4306 = vsel %vm4218, %v4304, %v4305
      %v4307 = vrot.slane %v1727, 4
      %v4308 = vsel %vm4218, %v4305, %v4307
      %v4309 = vrot.slane %v1787, 4
      %v4310 = vrot.slane %v1790, 4
      %v4311 = vsel %vm4218, %v4309, %v4310
      %v4312 = vrot.slane %v1795, 4
      %v4313 = vsel %vm4218, %v4310, %v4312
      %v4314 = vrot.slane %v1855, 4
      %v4315 = vrot.slane %v1858, 4
      %v4316 = vsel %vm4218, %v4314, %v4315
      %v4317 = vrot.slane %v1863, 4
      %v4318 = vsel %vm4218, %v4315, %v4317
      %v4319 = vrot.slane %v1923, 4
      %v4320 = vrot.slane %v1926, 4
      %v4321 = vsel %vm4218, %v4319, %v4320
      %v4322 = vrot.slane %v1931, 4
      %v4323 = vsel %vm4218, %v4320, %v4322
      %v4324 = vrot.slane %v1991, 4
      %v4325 = vrot.slane %v1994, 4
      %v4326 = vsel %vm4218, %v4324, %v4325
      %v4327 = vrot.slane %v1999, 4
      %v4328 = vsel %vm4218, %v4325, %v4327
      %v4329 = vrot.slane %v2059, 4
      %v4330 = vrot.slane %v2062, 4
      %v4331 = vsel %vm4218, %v4329, %v4330
      %v4332 = vrot.slane %v2067, 4
      %v4333 = vsel %vm4218, %v4330, %v4332
      %v4334 = vrot.slane %v2127, 4
      %v4335 = vrot.slane %v2130, 4
      %v4336 = vsel %vm4218, %v4334, %v4335
      %v4337 = vrot.slane %v2135, 4
      %v4338 = vsel %vm4218, %v4335, %v4337
      %v4387 = vpack.c.bf16 %v4223, %v4221
      %v4388 = vpack.c.bf16 %v4228, %v4226
      %v4389 = vpack.c.bf16 %v4233, %v4231
      %v4390 = vpack.c.bf16 %v4238, %v4236
      %v4391 = vpack.c.bf16 %v4243, %v4241
      %v4392 = vpack.c.bf16 %v4248, %v4246
      %v4393 = vpack.c.bf16 %v4253, %v4251
      %v4394 = vpack.c.bf16 %v4258, %v4256
      %v4395 = vpack.c.bf16 %v4263, %v4261
      %v4396 = vpack.c.bf16 %v4268, %v4266
      %v4397 = vpack.c.bf16 %v4273, %v4271
      %v4398 = vpack.c.bf16 %v4278, %v4276
      %v4399 = vpack.c.bf16 %v4283, %v4281
      %v4400 = vpack.c.bf16 %v4288, %v4286
      %v4401 = vpack.c.bf16 %v4293, %v4291
      %v4402 = vpack.c.bf16 %v4298, %v4296
      %v4403 = vpack.c.bf16 %v4303, %v4301
      %v4404 = vpack.c.bf16 %v4308, %v4306
      %v4405 = vpack.c.bf16 %v4313, %v4311
      %v4406 = vpack.c.bf16 %v4318, %v4316
      %v4407 = vpack.c.bf16 %v4323, %v4321
      %v4408 = vpack.c.bf16 %v4328, %v4326
      %v4409 = vpack.c.bf16 %v4333, %v4331
      %v4410 = vpack.c.bf16 %v4338, %v4336
      %v4416 = vunpack.c.l.b16 %v2160
      %v4417 = vunpack.c.l.b16 %v2161
      %v4418 = vunpack.c.l.b16 %v2162
      %v4419 = vunpack.c.l.b16 %v2163
      %v4420 = vunpack.c.l.b16 %v2164
      %v4421 = vpack.c.b16 %v4417, %v4416
      %v4422 = vpack.c.b16 %v4419, %v4418
      %v4423 = vpack.c.b16 %v4420, %v4420
      %v4427 = vsel %vm2489, %v4387, 0
      %v4430 = vsel %vm2489, %v4388, 0
      %v4433 = vsel %vm2489, %v4389, 0
      %v4436 = vsel %vm2489, %v4390, 0
      %v4439 = vsel %vm2489, %v4391, 0
      %v4442 = vsel %vm2489, %v4392, 0
      %v4445 = vsel %vm2489, %v4393, 0
      %v4448 = vsel %vm2489, %v4394, 0
      %v4451 = vsel %vm2489, %v4395, 0
      %v4454 = vsel %vm2489, %v4396, 0
      %v4457 = vsel %vm2489, %v4397, 0
      %v4460 = vsel %vm2489, %v4398, 0
      %v4463 = vsel %vm2489, %v4399, 0
      %v4466 = vsel %vm2489, %v4400, 0
      %v4469 = vsel %vm2489, %v4401, 0
      %v4472 = vsel %vm2489, %v4402, 0
      %v4475 = vsel %vm2489, %v4403, 0
      %v4478 = vsel %vm2489, %v4404, 0
      %v4481 = vsel %vm2489, %v4405, 0
      %v4484 = vsel %vm2489, %v4406, 0
      %v4487 = vsel %vm2489, %v4407, 0
      %v4490 = vsel %vm2489, %v4408, 0
      %v4493 = vsel %vm2489, %v4409, 0
      %v4496 = vsel %vm2489, %v4410, 0
      %v4499 = vsel %vm2562, %v4423, 0
      %4501 = vmatprep.subr.bf16.mxu0 0
      %4502 = vmatpush1.bf16.msra.mxu0 0
      %4503 = vmatprep.subr.bf16.mxu0 0
      %4504 = vmatpush1.bf16.msra.mxu0 0
      %4505 = vmatprep.subr.bf16.mxu0 0
      %4506 = vmatpush1.bf16.msra.mxu0 0
      %4507 = vmatprep.subr.bf16.mxu0 0
      %4508 = vmatpush1.bf16.msra.mxu0 0
      %4509 = vmatprep.subr.bf16.mxu0 0
      %4510 = vmatpush1.bf16.msra.mxu0 0
      %4511 = vmatprep.subr.bf16.mxu0 0
      %4512 = vmatpush1.bf16.msra.mxu0 %v4499
      %4513 = vmatprep.subr.bf16.mxu0 0
      %4514 = vmatpush1.bf16.msra.mxu0 %v4422
      %4515 = vmatprep.subr.bf16.mxu0 0
      %4516 = vmatpush1.bf16.msra.mxu0 %v4421
      %4517 = vmatprep.subr.bf16.mxu0 0
      %4518 = vmatpush2.bf16.msra.mxu0 0
      %4519 = vmatprep.subr.bf16.mxu0 0
      %4520 = vmatpush2.bf16.msra.mxu0 0
      %4521 = vmatprep.subr.bf16.mxu0 0
      %4522 = vmatpush2.bf16.msra.mxu0 0
      %4523 = vmatprep.subr.bf16.mxu0 0
      %4524 = vmatpush2.bf16.msra.mxu0 0
      %4525 = vmatprep.subr.bf16.mxu0 0
      %4526 = vmatpush2.bf16.msra.mxu0 0
      %4527 = vmatprep.subr.bf16.mxu0 0
      %4528 = vmatpush2.bf16.msra.mxu0 0
      %4529 = vmatprep.subr.bf16.mxu0 0
      %4530 = vmatpush2.bf16.msra.mxu0 0
      %4531 = vmatprep.subr.bf16.mxu0 0
      %4532 = vmatpush2.bf16.msra.mxu0 0
      %4533 = vmatprep.mubr.bf16.mxu0 0
      %4534 = vmatmul.mubr.bf16.gmra.mxu0 %v4427
      %v4535 = vpop.f32.mrf.mxu0
      %v4536 = vadd.f32 0.0, %v4535
      %v4537 = vpop.f32.mrf.mxu0
      %v4538 = vpop.f32.mrf.mxu0
      %v4539 = vadd.f32 0.0, %v4538
      %v4540 = vpop.f32.mrf.mxu0
      %4541 = vmatprep.mubr.bf16.mxu0 0
      %4542 = vmatmul.mubr.bf16.gmra.mxu0 %v4430
      %v4543 = vpop.f32.mrf.mxu0
      %v4544 = vadd.f32 0.0, %v4543
      %v4545 = vpop.f32.mrf.mxu0
      %v4546 = vpop.f32.mrf.mxu0
      %v4547 = vadd.f32 0.0, %v4546
      %v4548 = vpop.f32.mrf.mxu0
      %4549 = vmatprep.mubr.bf16.mxu0 0
      %4550 = vmatmul.mubr.bf16.gmra.mxu0 %v4433
      %v4551 = vpop.f32.mrf.mxu0
      %v4552 = vadd.f32 0.0, %v4551
      %v4553 = vpop.f32.mrf.mxu0
      %v4554 = vpop.f32.mrf.mxu0
      %v4555 = vadd.f32 0.0, %v4554
      %v4556 = vpop.f32.mrf.mxu0
      %4557 = vmatprep.mubr.bf16.mxu0 0
      %4558 = vmatmul.mubr.bf16.gmra.mxu0 %v4436
      %v4559 = vpop.f32.mrf.mxu0
      %v4560 = vadd.f32 0.0, %v4559
      %v4561 = vpop.f32.mrf.mxu0
      %v4562 = vpop.f32.mrf.mxu0
      %v4563 = vadd.f32 0.0, %v4562
      %v4564 = vpop.f32.mrf.mxu0
      %4565 = vmatprep.mubr.bf16.mxu0 0
      %4566 = vmatmul.mubr.bf16.gmra.mxu0 %v4439
      %v4567 = vpop.f32.mrf.mxu0
      %v4568 = vadd.f32 0.0, %v4567
      %v4569 = vpop.f32.mrf.mxu0
      %v4570 = vpop.f32.mrf.mxu0
      %v4571 = vadd.f32 0.0, %v4570
      %v4572 = vpop.f32.mrf.mxu0
      %4573 = vmatprep.mubr.bf16.mxu0 0
      %4574 = vmatmul.mubr.bf16.gmra.mxu0 %v4442
      %v4575 = vpop.f32.mrf.mxu0
      %v4576 = vadd.f32 0.0, %v4575
      %v4577 = vpop.f32.mrf.mxu0
      %v4578 = vpop.f32.mrf.mxu0
      %v4579 = vadd.f32 0.0, %v4578
      %v4580 = vpop.f32.mrf.mxu0
      %4581 = vmatprep.mubr.bf16.mxu0 0
      %4582 = vmatmul.mubr.bf16.gmra.mxu0 %v4445
      %v4583 = vpop.f32.mrf.mxu0
      %v4584 = vadd.f32 0.0, %v4583
      %v4585 = vpop.f32.mrf.mxu0
      %v4586 = vpop.f32.mrf.mxu0
      %v4587 = vadd.f32 0.0, %v4586
      %v4588 = vpop.f32.mrf.mxu0
      %4589 = vmatprep.mubr.bf16.mxu0 0
      %4590 = vmatmul.mubr.bf16.gmra.mxu0 %v4448
      %v4591 = vpop.f32.mrf.mxu0
      %v4592 = vadd.f32 0.0, %v4591
      %v4593 = vpop.f32.mrf.mxu0
      %v4594 = vpop.f32.mrf.mxu0
      %v4595 = vadd.f32 0.0, %v4594
      %v4596 = vpop.f32.mrf.mxu0
      %4597 = vmatprep.mubr.bf16.mxu0 0
      %4598 = vmatmul.mubr.bf16.gmra.mxu0 %v4451
      %v4599 = vpop.f32.mrf.mxu0
      %v4600 = vadd.f32 0.0, %v4599
      %v4601 = vpop.f32.mrf.mxu0
      %v4602 = vpop.f32.mrf.mxu0
      %v4603 = vadd.f32 0.0, %v4602
      %v4604 = vpop.f32.mrf.mxu0
      %4605 = vmatprep.mubr.bf16.mxu0 0
      %4606 = vmatmul.mubr.bf16.gmra.mxu0 %v4454
      %v4607 = vpop.f32.mrf.mxu0
      %v4608 = vadd.f32 0.0, %v4607
      %v4609 = vpop.f32.mrf.mxu0
      %v4610 = vpop.f32.mrf.mxu0
      %v4611 = vadd.f32 0.0, %v4610
      %v4612 = vpop.f32.mrf.mxu0
      %4613 = vmatprep.mubr.bf16.mxu0 0
      %4614 = vmatmul.mubr.bf16.gmra.mxu0 %v4457
      %v4615 = vpop.f32.mrf.mxu0
      %v4616 = vadd.f32 0.0, %v4615
      %v4617 = vpop.f32.mrf.mxu0
      %v4618 = vpop.f32.mrf.mxu0
      %v4619 = vadd.f32 0.0, %v4618
      %v4620 = vpop.f32.mrf.mxu0
      %4621 = vmatprep.mubr.bf16.mxu0 0
      %4622 = vmatmul.mubr.bf16.gmra.mxu0 %v4460
      %v4623 = vpop.f32.mrf.mxu0
      %v4624 = vadd.f32 0.0, %v4623
      %v4625 = vpop.f32.mrf.mxu0
      %v4626 = vpop.f32.mrf.mxu0
      %v4627 = vadd.f32 0.0, %v4626
      %v4628 = vpop.f32.mrf.mxu0
      %4629 = vmatprep.mubr.bf16.mxu0 0
      %4630 = vmatmul.mubr.bf16.gmra.mxu0 %v4463
      %v4631 = vpop.f32.mrf.mxu0
      %v4632 = vadd.f32 0.0, %v4631
      %v4633 = vpop.f32.mrf.mxu0
      %v4634 = vpop.f32.mrf.mxu0
      %v4635 = vadd.f32 0.0, %v4634
      %v4636 = vpop.f32.mrf.mxu0
      %4637 = vmatprep.mubr.bf16.mxu0 0
      %4638 = vmatmul.mubr.bf16.gmra.mxu0 %v4466
      %v4639 = vpop.f32.mrf.mxu0
      %v4640 = vadd.f32 0.0, %v4639
      %v4641 = vpop.f32.mrf.mxu0
      %v4642 = vpop.f32.mrf.mxu0
      %v4643 = vadd.f32 0.0, %v4642
      %v4644 = vpop.f32.mrf.mxu0
      %4645 = vmatprep.mubr.bf16.mxu0 0
      %4646 = vmatmul.mubr.bf16.gmra.mxu0 %v4469
      %v4647 = vpop.f32.mrf.mxu0
      %v4648 = vadd.f32 0.0, %v4647
      %v4649 = vpop.f32.mrf.mxu0
      %v4650 = vpop.f32.mrf.mxu0
      %v4651 = vadd.f32 0.0, %v4650
      %v4652 = vpop.f32.mrf.mxu0
      %4653 = vmatprep.mubr.bf16.mxu0 0
      %4654 = vmatmul.mubr.bf16.gmra.mxu0 %v4472
      %v4655 = vpop.f32.mrf.mxu0
      %v4656 = vadd.f32 0.0, %v4655
      %v4657 = vpop.f32.mrf.mxu0
      %v4658 = vpop.f32.mrf.mxu0
      %v4659 = vadd.f32 0.0, %v4658
      %v4660 = vpop.f32.mrf.mxu0
      %4661 = vmatprep.mubr.bf16.mxu0 0
      %4662 = vmatmul.mubr.bf16.gmra.mxu0 %v4475
      %v4663 = vpop.f32.mrf.mxu0
      %v4664 = vadd.f32 0.0, %v4663
      %v4665 = vpop.f32.mrf.mxu0
      %v4666 = vpop.f32.mrf.mxu0
      %v4667 = vadd.f32 0.0, %v4666
      %v4668 = vpop.f32.mrf.mxu0
      %4669 = vmatprep.mubr.bf16.mxu0 0
      %4670 = vmatmul.mubr.bf16.gmra.mxu0 %v4478
      %v4671 = vpop.f32.mrf.mxu0
      %v4672 = vadd.f32 0.0, %v4671
      %v4673 = vpop.f32.mrf.mxu0
      %v4674 = vpop.f32.mrf.mxu0
      %v4675 = vadd.f32 0.0, %v4674
      %v4676 = vpop.f32.mrf.mxu0
      %4677 = vmatprep.mubr.bf16.mxu0 0
      %4678 = vmatmul.mubr.bf16.gmra.mxu0 %v4481
      %v4679 = vpop.f32.mrf.mxu0
      %v4680 = vadd.f32 0.0, %v4679
      %v4681 = vpop.f32.mrf.mxu0
      %v4682 = vpop.f32.mrf.mxu0
      %v4683 = vadd.f32 0.0, %v4682
      %v4684 = vpop.f32.mrf.mxu0
      %4685 = vmatprep.mubr.bf16.mxu0 0
      %4686 = vmatmul.mubr.bf16.gmra.mxu0 %v4484
      %v4687 = vpop.f32.mrf.mxu0
      %v4688 = vadd.f32 0.0, %v4687
      %v4689 = vpop.f32.mrf.mxu0
      %v4690 = vpop.f32.mrf.mxu0
      %v4691 = vadd.f32 0.0, %v4690
      %v4692 = vpop.f32.mrf.mxu0
      %4693 = vmatprep.mubr.bf16.mxu0 0
      %4694 = vmatmul.mubr.bf16.gmra.mxu0 %v4487
      %v4695 = vpop.f32.mrf.mxu0
      %v4696 = vadd.f32 0.0, %v4695
      %v4697 = vpop.f32.mrf.mxu0
      %v4698 = vpop.f32.mrf.mxu0
      %v4699 = vadd.f32 0.0, %v4698
      %v4700 = vpop.f32.mrf.mxu0
      %4701 = vmatprep.mubr.bf16.mxu0 0
      %4702 = vmatmul.mubr.bf16.gmra.mxu0 %v4490
      %v4703 = vpop.f32.mrf.mxu0
      %v4704 = vadd.f32 0.0, %v4703
      %v4705 = vpop.f32.mrf.mxu0
      %v4706 = vpop.f32.mrf.mxu0
      %v4707 = vadd.f32 0.0, %v4706
      %v4708 = vpop.f32.mrf.mxu0
      %4709 = vmatprep.mubr.bf16.mxu0 0
      %4710 = vmatmul.mubr.bf16.gmra.mxu0 %v4493
      %v4711 = vpop.f32.mrf.mxu0
      %v4712 = vadd.f32 0.0, %v4711
      %v4713 = vpop.f32.mrf.mxu0
      %v4714 = vpop.f32.mrf.mxu0
      %v4715 = vadd.f32 0.0, %v4714
      %v4716 = vpop.f32.mrf.mxu0
      %4717 = vmatprep.mubr.bf16.mxu0 0
      %4718 = vmatmul.mubr.bf16.gmra.mxu0 %v4496
      %v4719 = vpop.f32.mrf.mxu0
      %v4720 = vadd.f32 0.0, %v4719
      %v4721 = vpop.f32.mrf.mxu0
      %v4722 = vpop.f32.mrf.mxu0
      %v4723 = vadd.f32 0.0, %v4722
      %v4724 = vpop.f32.mrf.mxu0
      %4725 = vdwg.mxu0
      %v4726 = vadd.f32 %v4170, %v4536
      %v4727 = vadd.f32 %v4171, %v4539
      %v4728 = vadd.f32 %v4172, %v4544
      %v4729 = vadd.f32 %v4173, %v4547
      %v4730 = vadd.f32 %v4174, %v4552
      %v4731 = vadd.f32 %v4175, %v4555
      %v4732 = vadd.f32 %v4176, %v4560
      %v4733 = vadd.f32 %v4177, %v4563
      %v4734 = vadd.f32 %v4178, %v4568
      %v4735 = vadd.f32 %v4179, %v4571
      %v4736 = vadd.f32 %v4180, %v4576
      %v4737 = vadd.f32 %v4181, %v4579
      %v4738 = vadd.f32 %v4182, %v4584
      %v4739 = vadd.f32 %v4183, %v4587
      %v4740 = vadd.f32 %v4184, %v4592
      %v4741 = vadd.f32 %v4185, %v4595
      %v4742 = vadd.f32 %v4186, %v4600
      %v4743 = vadd.f32 %v4187, %v4603
      %v4744 = vadd.f32 %v4188, %v4608
      %v4745 = vadd.f32 %v4189, %v4611
      %v4746 = vadd.f32 %v4190, %v4616
      %v4747 = vadd.f32 %v4191, %v4619
      %v4748 = vadd.f32 %v4192, %v4624
      %v4749 = vadd.f32 %v4193, %v4627
      %v4750 = vadd.f32 %v4194, %v4632
      %v4751 = vadd.f32 %v4195, %v4635
      %v4752 = vadd.f32 %v4196, %v4640
      %v4753 = vadd.f32 %v4197, %v4643
      %v4754 = vadd.f32 %v4198, %v4648
      %v4755 = vadd.f32 %v4199, %v4651
      %v4756 = vadd.f32 %v4200, %v4656
      %v4757 = vadd.f32 %v4201, %v4659
      %v4758 = vadd.f32 %v4202, %v4664
      %v4759 = vadd.f32 %v4203, %v4667
      %v4760 = vadd.f32 %v4204, %v4672
      %v4761 = vadd.f32 %v4205, %v4675
      %v4762 = vadd.f32 %v4206, %v4680
      %v4763 = vadd.f32 %v4207, %v4683
      %v4764 = vadd.f32 %v4208, %v4688
      %v4765 = vadd.f32 %v4209, %v4691
      %v4766 = vadd.f32 %v4210, %v4696
      %v4767 = vadd.f32 %v4211, %v4699
      %v4768 = vadd.f32 %v4212, %v4704
      %v4769 = vadd.f32 %v4213, %v4707
      %v4770 = vadd.f32 %v4214, %v4712
      %v4771 = vadd.f32 %v4215, %v4715
      %v4772 = vadd.f32 %v4216, %v4720
      %v4773 = vadd.f32 %v4217, %v4723
      %vm4774 = vcmask 1042432
      %v4775 = vrot.slane %v563, 5
      %v4776 = vrot.slane %v566, 5
      %v4777 = vsel %vm4774, %v4775, %v4776
      %v4778 = vrot.slane %v571, 5
      %v4779 = vsel %vm4774, %v4776, %v4778
      %v4780 = vrot.slane %v631, 5
      %v4781 = vrot.slane %v634, 5
      %v4782 = vsel %vm4774, %v4780, %v4781
      %v4783 = vrot.slane %v639, 5
      %v4784 = vsel %vm4774, %v4781, %v4783
      %v4785 = vrot.slane %v699, 5
      %v4786 = vrot.slane %v702, 5
      %v4787 = vsel %vm4774, %v4785, %v4786
      %v4788 = vrot.slane %v707, 5
      %v4789 = vsel %vm4774, %v4786, %v4788
      %v4790 = vrot.slane %v767, 5
      %v4791 = vrot.slane %v770, 5
      %v4792 = vsel %vm4774, %v4790, %v4791
      %v4793 = vrot.slane %v775, 5
      %v4794 = vsel %vm4774, %v4791, %v4793
      %v4795 = vrot.slane %v835, 5
      %v4796 = vrot.slane %v838, 5
      %v4797 = vsel %vm4774, %v4795, %v4796
      %v4798 = vrot.slane %v843, 5
      %v4799 = vsel %vm4774, %v4796, %v4798
      %v4800 = vrot.slane %v903, 5
      %v4801 = vrot.slane %v906, 5
      %v4802 = vsel %vm4774, %v4800, %v4801
      %v4803 = vrot.slane %v911, 5
      %v4804 = vsel %vm4774, %v4801, %v4803
      %v4805 = vrot.slane %v971, 5
      %v4806 = vrot.slane %v974, 5
      %v4807 = vsel %vm4774, %v4805, %v4806
      %v4808 = vrot.slane %v979, 5
      %v4809 = vsel %vm4774, %v4806, %v4808
      %v4810 = vrot.slane %v1039, 5
      %v4811 = vrot.slane %v1042, 5
      %v4812 = vsel %vm4774, %v4810, %v4811
      %v4813 = vrot.slane %v1047, 5
      %v4814 = vsel %vm4774, %v4811, %v4813
      %v4815 = vrot.slane %v1107, 5
      %v4816 = vrot.slane %v1110, 5
      %v4817 = vsel %vm4774, %v4815, %v4816
      %v4818 = vrot.slane %v1115, 5
      %v4819 = vsel %vm4774, %v4816, %v4818
      %v4820 = vrot.slane %v1175, 5
      %v4821 = vrot.slane %v1178, 5
      %v4822 = vsel %vm4774, %v4820, %v4821
      %v4823 = vrot.slane %v1183, 5
      %v4824 = vsel %vm4774, %v4821, %v4823
      %v4825 = vrot.slane %v1243, 5
      %v4826 = vrot.slane %v1246, 5
      %v4827 = vsel %vm4774, %v4825, %v4826
      %v4828 = vrot.slane %v1251, 5
      %v4829 = vsel %vm4774, %v4826, %v4828
      %v4830 = vrot.slane %v1311, 5
      %v4831 = vrot.slane %v1314, 5
      %v4832 = vsel %vm4774, %v4830, %v4831
      %v4833 = vrot.slane %v1319, 5
      %v4834 = vsel %vm4774, %v4831, %v4833
      %v4835 = vrot.slane %v1379, 5
      %v4836 = vrot.slane %v1382, 5
      %v4837 = vsel %vm4774, %v4835, %v4836
      %v4838 = vrot.slane %v1387, 5
      %v4839 = vsel %vm4774, %v4836, %v4838
      %v4840 = vrot.slane %v1447, 5
      %v4841 = vrot.slane %v1450, 5
      %v4842 = vsel %vm4774, %v4840, %v4841
      %v4843 = vrot.slane %v1455, 5
      %v4844 = vsel %vm4774, %v4841, %v4843
      %v4845 = vrot.slane %v1515, 5
      %v4846 = vrot.slane %v1518, 5
      %v4847 = vsel %vm4774, %v4845, %v4846
      %v4848 = vrot.slane %v1523, 5
      %v4849 = vsel %vm4774, %v4846, %v4848
      %v4850 = vrot.slane %v1583, 5
      %v4851 = vrot.slane %v1586, 5
      %v4852 = vsel %vm4774, %v4850, %v4851
      %v4853 = vrot.slane %v1591, 5
      %v4854 = vsel %vm4774, %v4851, %v4853
      %v4855 = vrot.slane %v1651, 5
      %v4856 = vrot.slane %v1654, 5
      %v4857 = vsel %vm4774, %v4855, %v4856
      %v4858 = vrot.slane %v1659, 5
      %v4859 = vsel %vm4774, %v4856, %v4858
      %v4860 = vrot.slane %v1719, 5
      %v4861 = vrot.slane %v1722, 5
      %v4862 = vsel %vm4774, %v4860, %v4861
      %v4863 = vrot.slane %v1727, 5
      %v4864 = vsel %vm4774, %v4861, %v4863
      %v4865 = vrot.slane %v1787, 5
      %v4866 = vrot.slane %v1790, 5
      %v4867 = vsel %vm4774, %v4865, %v4866
      %v4868 = vrot.slane %v1795, 5
      %v4869 = vsel %vm4774, %v4866, %v4868
      %v4870 = vrot.slane %v1855, 5
      %v4871 = vrot.slane %v1858, 5
      %v4872 = vsel %vm4774, %v4870, %v4871
      %v4873 = vrot.slane %v1863, 5
      %v4874 = vsel %vm4774, %v4871, %v4873
      %v4875 = vrot.slane %v1923, 5
      %v4876 = vrot.slane %v1926, 5
      %v4877 = vsel %vm4774, %v4875, %v4876
      %v4878 = vrot.slane %v1931, 5
      %v4879 = vsel %vm4774, %v4876, %v4878
      %v4880 = vrot.slane %v1991, 5
      %v4881 = vrot.slane %v1994, 5
      %v4882 = vsel %vm4774, %v4880, %v4881
      %v4883 = vrot.slane %v1999, 5
      %v4884 = vsel %vm4774, %v4881, %v4883
      %v4885 = vrot.slane %v2059, 5
      %v4886 = vrot.slane %v2062, 5
      %v4887 = vsel %vm4774, %v4885, %v4886
      %v4888 = vrot.slane %v2067, 5
      %v4889 = vsel %vm4774, %v4886, %v4888
      %v4890 = vrot.slane %v2127, 5
      %v4891 = vrot.slane %v2130, 5
      %v4892 = vsel %vm4774, %v4890, %v4891
      %v4893 = vrot.slane %v2135, 5
      %v4894 = vsel %vm4774, %v4891, %v4893
      %v4943 = vpack.c.bf16 %v4779, %v4777
      %v4944 = vpack.c.bf16 %v4784, %v4782
      %v4945 = vpack.c.bf16 %v4789, %v4787
      %v4946 = vpack.c.bf16 %v4794, %v4792
      %v4947 = vpack.c.bf16 %v4799, %v4797
      %v4948 = vpack.c.bf16 %v4804, %v4802
      %v4949 = vpack.c.bf16 %v4809, %v4807
      %v4950 = vpack.c.bf16 %v4814, %v4812
      %v4951 = vpack.c.bf16 %v4819, %v4817
      %v4952 = vpack.c.bf16 %v4824, %v4822
      %v4953 = vpack.c.bf16 %v4829, %v4827
      %v4954 = vpack.c.bf16 %v4834, %v4832
      %v4955 = vpack.c.bf16 %v4839, %v4837
      %v4956 = vpack.c.bf16 %v4844, %v4842
      %v4957 = vpack.c.bf16 %v4849, %v4847
      %v4958 = vpack.c.bf16 %v4854, %v4852
      %v4959 = vpack.c.bf16 %v4859, %v4857
      %v4960 = vpack.c.bf16 %v4864, %v4862
      %v4961 = vpack.c.bf16 %v4869, %v4867
      %v4962 = vpack.c.bf16 %v4874, %v4872
      %v4963 = vpack.c.bf16 %v4879, %v4877
      %v4964 = vpack.c.bf16 %v4884, %v4882
      %v4965 = vpack.c.bf16 %v4889, %v4887
      %v4966 = vpack.c.bf16 %v4894, %v4892
      %v4972 = vunpack.c.l.b16 %v2165
      %v4973 = vunpack.c.l.b16 %v2166
      %v4974 = vunpack.c.l.b16 %v2167
      %v4975 = vunpack.c.l.b16 %v2168
      %v4976 = vunpack.c.l.b16 %v2169
      %v4977 = vpack.c.b16 %v4973, %v4972
      %v4978 = vpack.c.b16 %v4975, %v4974
      %v4979 = vpack.c.b16 %v4976, %v4976
      %v4983 = vsel %vm2489, %v4943, 0
      %v4986 = vsel %vm2489, %v4944, 0
      %v4989 = vsel %vm2489, %v4945, 0
      %v4992 = vsel %vm2489, %v4946, 0
      %v4995 = vsel %vm2489, %v4947, 0
      %v4998 = vsel %vm2489, %v4948, 0
      %v5001 = vsel %vm2489, %v4949, 0
      %v5004 = vsel %vm2489, %v4950, 0
      %v5007 = vsel %vm2489, %v4951, 0
      %v5010 = vsel %vm2489, %v4952, 0
      %v5013 = vsel %vm2489, %v4953, 0
      %v5016 = vsel %vm2489, %v4954, 0
      %v5019 = vsel %vm2489, %v4955, 0
      %v5022 = vsel %vm2489, %v4956, 0
      %v5025 = vsel %vm2489, %v4957, 0
      %v5028 = vsel %vm2489, %v4958, 0
      %v5031 = vsel %vm2489, %v4959, 0
      %v5034 = vsel %vm2489, %v4960, 0
      %v5037 = vsel %vm2489, %v4961, 0
      %v5040 = vsel %vm2489, %v4962, 0
      %v5043 = vsel %vm2489, %v4963, 0
      %v5046 = vsel %vm2489, %v4964, 0
      %v5049 = vsel %vm2489, %v4965, 0
      %v5052 = vsel %vm2489, %v4966, 0
      %v5055 = vsel %vm2562, %v4979, 0
      %5057 = vmatprep.subr.bf16.mxu0 0
      %5058 = vmatpush1.bf16.msra.mxu0 0
      %5059 = vmatprep.subr.bf16.mxu0 0
      %5060 = vmatpush1.bf16.msra.mxu0 0
      %5061 = vmatprep.subr.bf16.mxu0 0
      %5062 = vmatpush1.bf16.msra.mxu0 0
      %5063 = vmatprep.subr.bf16.mxu0 0
      %5064 = vmatpush1.bf16.msra.mxu0 0
      %5065 = vmatprep.subr.bf16.mxu0 0
      %5066 = vmatpush1.bf16.msra.mxu0 0
      %5067 = vmatprep.subr.bf16.mxu0 0
      %5068 = vmatpush1.bf16.msra.mxu0 %v5055
      %5069 = vmatprep.subr.bf16.mxu0 0
      %5070 = vmatpush1.bf16.msra.mxu0 %v4978
      %5071 = vmatprep.subr.bf16.mxu0 0
      %5072 = vmatpush1.bf16.msra.mxu0 %v4977
      %5073 = vmatprep.subr.bf16.mxu0 0
      %5074 = vmatpush2.bf16.msra.mxu0 0
      %5075 = vmatprep.subr.bf16.mxu0 0
      %5076 = vmatpush2.bf16.msra.mxu0 0
      %5077 = vmatprep.subr.bf16.mxu0 0
      %5078 = vmatpush2.bf16.msra.mxu0 0
      %5079 = vmatprep.subr.bf16.mxu0 0
      %5080 = vmatpush2.bf16.msra.mxu0 0
      %5081 = vmatprep.subr.bf16.mxu0 0
      %5082 = vmatpush2.bf16.msra.mxu0 0
      %5083 = vmatprep.subr.bf16.mxu0 0
      %5084 = vmatpush2.bf16.msra.mxu0 0
      %5085 = vmatprep.subr.bf16.mxu0 0
      %5086 = vmatpush2.bf16.msra.mxu0 0
      %5087 = vmatprep.subr.bf16.mxu0 0
      %5088 = vmatpush2.bf16.msra.mxu0 0
      %5089 = vmatprep.mubr.bf16.mxu0 0
      %5090 = vmatmul.mubr.bf16.gmra.mxu0 %v4983
      %v5091 = vpop.f32.mrf.mxu0
      %v5092 = vadd.f32 0.0, %v5091
      %v5093 = vpop.f32.mrf.mxu0
      %v5094 = vpop.f32.mrf.mxu0
      %v5095 = vadd.f32 0.0, %v5094
      %v5096 = vpop.f32.mrf.mxu0
      %5097 = vmatprep.mubr.bf16.mxu0 0
      %5098 = vmatmul.mubr.bf16.gmra.mxu0 %v4986
      %v5099 = vpop.f32.mrf.mxu0
      %v5100 = vadd.f32 0.0, %v5099
      %v5101 = vpop.f32.mrf.mxu0
      %v5102 = vpop.f32.mrf.mxu0
      %v5103 = vadd.f32 0.0, %v5102
      %v5104 = vpop.f32.mrf.mxu0
      %5105 = vmatprep.mubr.bf16.mxu0 0
      %5106 = vmatmul.mubr.bf16.gmra.mxu0 %v4989
      %v5107 = vpop.f32.mrf.mxu0
      %v5108 = vadd.f32 0.0, %v5107
      %v5109 = vpop.f32.mrf.mxu0
      %v5110 = vpop.f32.mrf.mxu0
      %v5111 = vadd.f32 0.0, %v5110
      %v5112 = vpop.f32.mrf.mxu0
      %5113 = vmatprep.mubr.bf16.mxu0 0
      %5114 = vmatmul.mubr.bf16.gmra.mxu0 %v4992
      %v5115 = vpop.f32.mrf.mxu0
      %v5116 = vadd.f32 0.0, %v5115
      %v5117 = vpop.f32.mrf.mxu0
      %v5118 = vpop.f32.mrf.mxu0
      %v5119 = vadd.f32 0.0, %v5118
      %v5120 = vpop.f32.mrf.mxu0
      %5121 = vmatprep.mubr.bf16.mxu0 0
      %5122 = vmatmul.mubr.bf16.gmra.mxu0 %v4995
      %v5123 = vpop.f32.mrf.mxu0
      %v5124 = vadd.f32 0.0, %v5123
      %v5125 = vpop.f32.mrf.mxu0
      %v5126 = vpop.f32.mrf.mxu0
      %v5127 = vadd.f32 0.0, %v5126
      %v5128 = vpop.f32.mrf.mxu0
      %5129 = vmatprep.mubr.bf16.mxu0 0
      %5130 = vmatmul.mubr.bf16.gmra.mxu0 %v4998
      %v5131 = vpop.f32.mrf.mxu0
      %v5132 = vadd.f32 0.0, %v5131
      %v5133 = vpop.f32.mrf.mxu0
      %v5134 = vpop.f32.mrf.mxu0
      %v5135 = vadd.f32 0.0, %v5134
      %v5136 = vpop.f32.mrf.mxu0
      %5137 = vmatprep.mubr.bf16.mxu0 0
      %5138 = vmatmul.mubr.bf16.gmra.mxu0 %v5001
      %v5139 = vpop.f32.mrf.mxu0
      %v5140 = vadd.f32 0.0, %v5139
      %v5141 = vpop.f32.mrf.mxu0
      %v5142 = vpop.f32.mrf.mxu0
      %v5143 = vadd.f32 0.0, %v5142
      %v5144 = vpop.f32.mrf.mxu0
      %5145 = vmatprep.mubr.bf16.mxu0 0
      %5146 = vmatmul.mubr.bf16.gmra.mxu0 %v5004
      %v5147 = vpop.f32.mrf.mxu0
      %v5148 = vadd.f32 0.0, %v5147
      %v5149 = vpop.f32.mrf.mxu0
      %v5150 = vpop.f32.mrf.mxu0
      %v5151 = vadd.f32 0.0, %v5150
      %v5152 = vpop.f32.mrf.mxu0
      %5153 = vmatprep.mubr.bf16.mxu0 0
      %5154 = vmatmul.mubr.bf16.gmra.mxu0 %v5007
      %v5155 = vpop.f32.mrf.mxu0
      %v5156 = vadd.f32 0.0, %v5155
      %v5157 = vpop.f32.mrf.mxu0
      %v5158 = vpop.f32.mrf.mxu0
      %v5159 = vadd.f32 0.0, %v5158
      %v5160 = vpop.f32.mrf.mxu0
      %5161 = vmatprep.mubr.bf16.mxu0 0
      %5162 = vmatmul.mubr.bf16.gmra.mxu0 %v5010
      %v5163 = vpop.f32.mrf.mxu0
      %v5164 = vadd.f32 0.0, %v5163
      %v5165 = vpop.f32.mrf.mxu0
      %v5166 = vpop.f32.mrf.mxu0
      %v5167 = vadd.f32 0.0, %v5166
      %v5168 = vpop.f32.mrf.mxu0
      %5169 = vmatprep.mubr.bf16.mxu0 0
      %5170 = vmatmul.mubr.bf16.gmra.mxu0 %v5013
      %v5171 = vpop.f32.mrf.mxu0
      %v5172 = vadd.f32 0.0, %v5171
      %v5173 = vpop.f32.mrf.mxu0
      %v5174 = vpop.f32.mrf.mxu0
      %v5175 = vadd.f32 0.0, %v5174
      %v5176 = vpop.f32.mrf.mxu0
      %5177 = vmatprep.mubr.bf16.mxu0 0
      %5178 = vmatmul.mubr.bf16.gmra.mxu0 %v5016
      %v5179 = vpop.f32.mrf.mxu0
      %v5180 = vadd.f32 0.0, %v5179
      %v5181 = vpop.f32.mrf.mxu0
      %v5182 = vpop.f32.mrf.mxu0
      %v5183 = vadd.f32 0.0, %v5182
      %v5184 = vpop.f32.mrf.mxu0
      %5185 = vmatprep.mubr.bf16.mxu0 0
      %5186 = vmatmul.mubr.bf16.gmra.mxu0 %v5019
      %v5187 = vpop.f32.mrf.mxu0
      %v5188 = vadd.f32 0.0, %v5187
      %v5189 = vpop.f32.mrf.mxu0
      %v5190 = vpop.f32.mrf.mxu0
      %v5191 = vadd.f32 0.0, %v5190
      %v5192 = vpop.f32.mrf.mxu0
      %5193 = vmatprep.mubr.bf16.mxu0 0
      %5194 = vmatmul.mubr.bf16.gmra.mxu0 %v5022
      %v5195 = vpop.f32.mrf.mxu0
      %v5196 = vadd.f32 0.0, %v5195
      %v5197 = vpop.f32.mrf.mxu0
      %v5198 = vpop.f32.mrf.mxu0
      %v5199 = vadd.f32 0.0, %v5198
      %v5200 = vpop.f32.mrf.mxu0
      %5201 = vmatprep.mubr.bf16.mxu0 0
      %5202 = vmatmul.mubr.bf16.gmra.mxu0 %v5025
      %v5203 = vpop.f32.mrf.mxu0
      %v5204 = vadd.f32 0.0, %v5203
      %v5205 = vpop.f32.mrf.mxu0
      %v5206 = vpop.f32.mrf.mxu0
      %v5207 = vadd.f32 0.0, %v5206
      %v5208 = vpop.f32.mrf.mxu0
      %5209 = vmatprep.mubr.bf16.mxu0 0
      %5210 = vmatmul.mubr.bf16.gmra.mxu0 %v5028
      %v5211 = vpop.f32.mrf.mxu0
      %v5212 = vadd.f32 0.0, %v5211
      %v5213 = vpop.f32.mrf.mxu0
      %v5214 = vpop.f32.mrf.mxu0
      %v5215 = vadd.f32 0.0, %v5214
      %v5216 = vpop.f32.mrf.mxu0
      %5217 = vmatprep.mubr.bf16.mxu0 0
      %5218 = vmatmul.mubr.bf16.gmra.mxu0 %v5031
      %v5219 = vpop.f32.mrf.mxu0
      %v5220 = vadd.f32 0.0, %v5219
      %v5221 = vpop.f32.mrf.mxu0
      %v5222 = vpop.f32.mrf.mxu0
      %v5223 = vadd.f32 0.0, %v5222
      %v5224 = vpop.f32.mrf.mxu0
      %5225 = vmatprep.mubr.bf16.mxu0 0
      %5226 = vmatmul.mubr.bf16.gmra.mxu0 %v5034
      %v5227 = vpop.f32.mrf.mxu0
      %v5228 = vadd.f32 0.0, %v5227
      %v5229 = vpop.f32.mrf.mxu0
      %v5230 = vpop.f32.mrf.mxu0
      %v5231 = vadd.f32 0.0, %v5230
      %v5232 = vpop.f32.mrf.mxu0
      %5233 = vmatprep.mubr.bf16.mxu0 0
      %5234 = vmatmul.mubr.bf16.gmra.mxu0 %v5037
      %v5235 = vpop.f32.mrf.mxu0
      %v5236 = vadd.f32 0.0, %v5235
      %v5237 = vpop.f32.mrf.mxu0
      %v5238 = vpop.f32.mrf.mxu0
      %v5239 = vadd.f32 0.0, %v5238
      %v5240 = vpop.f32.mrf.mxu0
      %5241 = vmatprep.mubr.bf16.mxu0 0
      %5242 = vmatmul.mubr.bf16.gmra.mxu0 %v5040
      %v5243 = vpop.f32.mrf.mxu0
      %v5244 = vadd.f32 0.0, %v5243
      %v5245 = vpop.f32.mrf.mxu0
      %v5246 = vpop.f32.mrf.mxu0
      %v5247 = vadd.f32 0.0, %v5246
      %v5248 = vpop.f32.mrf.mxu0
      %5249 = vmatprep.mubr.bf16.mxu0 0
      %5250 = vmatmul.mubr.bf16.gmra.mxu0 %v5043
      %v5251 = vpop.f32.mrf.mxu0
      %v5252 = vadd.f32 0.0, %v5251
      %v5253 = vpop.f32.mrf.mxu0
      %v5254 = vpop.f32.mrf.mxu0
      %v5255 = vadd.f32 0.0, %v5254
      %v5256 = vpop.f32.mrf.mxu0
      %5257 = vmatprep.mubr.bf16.mxu0 0
      %5258 = vmatmul.mubr.bf16.gmra.mxu0 %v5046
      %v5259 = vpop.f32.mrf.mxu0
      %v5260 = vadd.f32 0.0, %v5259
      %v5261 = vpop.f32.mrf.mxu0
      %v5262 = vpop.f32.mrf.mxu0
      %v5263 = vadd.f32 0.0, %v5262
      %v5264 = vpop.f32.mrf.mxu0
      %5265 = vmatprep.mubr.bf16.mxu0 0
      %5266 = vmatmul.mubr.bf16.gmra.mxu0 %v5049
      %v5267 = vpop.f32.mrf.mxu0
      %v5268 = vadd.f32 0.0, %v5267
      %v5269 = vpop.f32.mrf.mxu0
      %v5270 = vpop.f32.mrf.mxu0
      %v5271 = vadd.f32 0.0, %v5270
      %v5272 = vpop.f32.mrf.mxu0
      %5273 = vmatprep.mubr.bf16.mxu0 0
      %5274 = vmatmul.mubr.bf16.gmra.mxu0 %v5052
      %v5275 = vpop.f32.mrf.mxu0
      %v5276 = vadd.f32 0.0, %v5275
      %v5277 = vpop.f32.mrf.mxu0
      %v5278 = vpop.f32.mrf.mxu0
      %v5279 = vadd.f32 0.0, %v5278
      %v5280 = vpop.f32.mrf.mxu0
      %5281 = vdwg.mxu0
      %v5282 = vadd.f32 %v4726, %v5092
      %v5283 = vadd.f32 %v4727, %v5095
      %v5284 = vadd.f32 %v4728, %v5100
      %v5285 = vadd.f32 %v4729, %v5103
      %v5286 = vadd.f32 %v4730, %v5108
      %v5287 = vadd.f32 %v4731, %v5111
      %v5288 = vadd.f32 %v4732, %v5116
      %v5289 = vadd.f32 %v4733, %v5119
      %v5290 = vadd.f32 %v4734, %v5124
      %v5291 = vadd.f32 %v4735, %v5127
      %v5292 = vadd.f32 %v4736, %v5132
      %v5293 = vadd.f32 %v4737, %v5135
      %v5294 = vadd.f32 %v4738, %v5140
      %v5295 = vadd.f32 %v4739, %v5143
      %v5296 = vadd.f32 %v4740, %v5148
      %v5297 = vadd.f32 %v4741, %v5151
      %v5298 = vadd.f32 %v4742, %v5156
      %v5299 = vadd.f32 %v4743, %v5159
      %v5300 = vadd.f32 %v4744, %v5164
      %v5301 = vadd.f32 %v4745, %v5167
      %v5302 = vadd.f32 %v4746, %v5172
      %v5303 = vadd.f32 %v4747, %v5175
      %v5304 = vadd.f32 %v4748, %v5180
      %v5305 = vadd.f32 %v4749, %v5183
      %v5306 = vadd.f32 %v4750, %v5188
      %v5307 = vadd.f32 %v4751, %v5191
      %v5308 = vadd.f32 %v4752, %v5196
      %v5309 = vadd.f32 %v4753, %v5199
      %v5310 = vadd.f32 %v4754, %v5204
      %v5311 = vadd.f32 %v4755, %v5207
      %v5312 = vadd.f32 %v4756, %v5212
      %v5313 = vadd.f32 %v4757, %v5215
      %v5314 = vadd.f32 %v4758, %v5220
      %v5315 = vadd.f32 %v4759, %v5223
      %v5316 = vadd.f32 %v4760, %v5228
      %v5317 = vadd.f32 %v4761, %v5231
      %v5318 = vadd.f32 %v4762, %v5236
      %v5319 = vadd.f32 %v4763, %v5239
      %v5320 = vadd.f32 %v4764, %v5244
      %v5321 = vadd.f32 %v4765, %v5247
      %v5322 = vadd.f32 %v4766, %v5252
      %v5323 = vadd.f32 %v4767, %v5255
      %v5324 = vadd.f32 %v4768, %v5260
      %v5325 = vadd.f32 %v4769, %v5263
      %v5326 = vadd.f32 %v4770, %v5268
      %v5327 = vadd.f32 %v4771, %v5271
      %v5328 = vadd.f32 %v4772, %v5276
      %v5329 = vadd.f32 %v4773, %v5279
      %vm5330 = vcmask 1041408
      %v5331 = vrot.slane %v563, 6
      %v5332 = vrot.slane %v566, 6
      %v5333 = vsel %vm5330, %v5331, %v5332
      %v5334 = vrot.slane %v571, 6
      %v5335 = vsel %vm5330, %v5332, %v5334
      %v5336 = vrot.slane %v631, 6
      %v5337 = vrot.slane %v634, 6
      %v5338 = vsel %vm5330, %v5336, %v5337
      %v5339 = vrot.slane %v639, 6
      %v5340 = vsel %vm5330, %v5337, %v5339
      %v5341 = vrot.slane %v699, 6
      %v5342 = vrot.slane %v702, 6
      %v5343 = vsel %vm5330, %v5341, %v5342
      %v5344 = vrot.slane %v707, 6
      %v5345 = vsel %vm5330, %v5342, %v5344
      %v5346 = vrot.slane %v767, 6
      %v5347 = vrot.slane %v770, 6
      %v5348 = vsel %vm5330, %v5346, %v5347
      %v5349 = vrot.slane %v775, 6
      %v5350 = vsel %vm5330, %v5347, %v5349
      %v5351 = vrot.slane %v835, 6
      %v5352 = vrot.slane %v838, 6
      %v5353 = vsel %vm5330, %v5351, %v5352
      %v5354 = vrot.slane %v843, 6
      %v5355 = vsel %vm5330, %v5352, %v5354
      %v5356 = vrot.slane %v903, 6
      %v5357 = vrot.slane %v906, 6
      %v5358 = vsel %vm5330, %v5356, %v5357
      %v5359 = vrot.slane %v911, 6
      %v5360 = vsel %vm5330, %v5357, %v5359
      %v5361 = vrot.slane %v971, 6
      %v5362 = vrot.slane %v974, 6
      %v5363 = vsel %vm5330, %v5361, %v5362
      %v5364 = vrot.slane %v979, 6
      %v5365 = vsel %vm5330, %v5362, %v5364
      %v5366 = vrot.slane %v1039, 6
      %v5367 = vrot.slane %v1042, 6
      %v5368 = vsel %vm5330, %v5366, %v5367
      %v5369 = vrot.slane %v1047, 6
      %v5370 = vsel %vm5330, %v5367, %v5369
      %v5371 = vrot.slane %v1107, 6
      %v5372 = vrot.slane %v1110, 6
      %v5373 = vsel %vm5330, %v5371, %v5372
      %v5374 = vrot.slane %v1115, 6
      %v5375 = vsel %vm5330, %v5372, %v5374
      %v5376 = vrot.slane %v1175, 6
      %v5377 = vrot.slane %v1178, 6
      %v5378 = vsel %vm5330, %v5376, %v5377
      %v5379 = vrot.slane %v1183, 6
      %v5380 = vsel %vm5330, %v5377, %v5379
      %v5381 = vrot.slane %v1243, 6
      %v5382 = vrot.slane %v1246, 6
      %v5383 = vsel %vm5330, %v5381, %v5382
      %v5384 = vrot.slane %v1251, 6
      %v5385 = vsel %vm5330, %v5382, %v5384
      %v5386 = vrot.slane %v1311, 6
      %v5387 = vrot.slane %v1314, 6
      %v5388 = vsel %vm5330, %v5386, %v5387
      %v5389 = vrot.slane %v1319, 6
      %v5390 = vsel %vm5330, %v5387, %v5389
      %v5391 = vrot.slane %v1379, 6
      %v5392 = vrot.slane %v1382, 6
      %v5393 = vsel %vm5330, %v5391, %v5392
      %v5394 = vrot.slane %v1387, 6
      %v5395 = vsel %vm5330, %v5392, %v5394
      %v5396 = vrot.slane %v1447, 6
      %v5397 = vrot.slane %v1450, 6
      %v5398 = vsel %vm5330, %v5396, %v5397
      %v5399 = vrot.slane %v1455, 6
      %v5400 = vsel %vm5330, %v5397, %v5399
      %v5401 = vrot.slane %v1515, 6
      %v5402 = vrot.slane %v1518, 6
      %v5403 = vsel %vm5330, %v5401, %v5402
      %v5404 = vrot.slane %v1523, 6
      %v5405 = vsel %vm5330, %v5402, %v5404
      %v5406 = vrot.slane %v1583, 6
      %v5407 = vrot.slane %v1586, 6
      %v5408 = vsel %vm5330, %v5406, %v5407
      %v5409 = vrot.slane %v1591, 6
      %v5410 = vsel %vm5330, %v5407, %v5409
      %v5411 = vrot.slane %v1651, 6
      %v5412 = vrot.slane %v1654, 6
      %v5413 = vsel %vm5330, %v5411, %v5412
      %v5414 = vrot.slane %v1659, 6
      %v5415 = vsel %vm5330, %v5412, %v5414
      %v5416 = vrot.slane %v1719, 6
      %v5417 = vrot.slane %v1722, 6
      %v5418 = vsel %vm5330, %v5416, %v5417
      %v5419 = vrot.slane %v1727, 6
      %v5420 = vsel %vm5330, %v5417, %v5419
      %v5421 = vrot.slane %v1787, 6
      %v5422 = vrot.slane %v1790, 6
      %v5423 = vsel %vm5330, %v5421, %v5422
      %v5424 = vrot.slane %v1795, 6
      %v5425 = vsel %vm5330, %v5422, %v5424
      %v5426 = vrot.slane %v1855, 6
      %v5427 = vrot.slane %v1858, 6
      %v5428 = vsel %vm5330, %v5426, %v5427
      %v5429 = vrot.slane %v1863, 6
      %v5430 = vsel %vm5330, %v5427, %v5429
      %v5431 = vrot.slane %v1923, 6
      %v5432 = vrot.slane %v1926, 6
      %v5433 = vsel %vm5330, %v5431, %v5432
      %v5434 = vrot.slane %v1931, 6
      %v5435 = vsel %vm5330, %v5432, %v5434
      %v5436 = vrot.slane %v1991, 6
      %v5437 = vrot.slane %v1994, 6
      %v5438 = vsel %vm5330, %v5436, %v5437
      %v5439 = vrot.slane %v1999, 6
      %v5440 = vsel %vm5330, %v5437, %v5439
      %v5441 = vrot.slane %v2059, 6
      %v5442 = vrot.slane %v2062, 6
      %v5443 = vsel %vm5330, %v5441, %v5442
      %v5444 = vrot.slane %v2067, 6
      %v5445 = vsel %vm5330, %v5442, %v5444
      %v5446 = vrot.slane %v2127, 6
      %v5447 = vrot.slane %v2130, 6
      %v5448 = vsel %vm5330, %v5446, %v5447
      %v5449 = vrot.slane %v2135, 6
      %v5450 = vsel %vm5330, %v5447, %v5449
      %v5499 = vpack.c.bf16 %v5335, %v5333
      %v5500 = vpack.c.bf16 %v5340, %v5338
      %v5501 = vpack.c.bf16 %v5345, %v5343
      %v5502 = vpack.c.bf16 %v5350, %v5348
      %v5503 = vpack.c.bf16 %v5355, %v5353
      %v5504 = vpack.c.bf16 %v5360, %v5358
      %v5505 = vpack.c.bf16 %v5365, %v5363
      %v5506 = vpack.c.bf16 %v5370, %v5368
      %v5507 = vpack.c.bf16 %v5375, %v5373
      %v5508 = vpack.c.bf16 %v5380, %v5378
      %v5509 = vpack.c.bf16 %v5385, %v5383
      %v5510 = vpack.c.bf16 %v5390, %v5388
      %v5511 = vpack.c.bf16 %v5395, %v5393
      %v5512 = vpack.c.bf16 %v5400, %v5398
      %v5513 = vpack.c.bf16 %v5405, %v5403
      %v5514 = vpack.c.bf16 %v5410, %v5408
      %v5515 = vpack.c.bf16 %v5415, %v5413
      %v5516 = vpack.c.bf16 %v5420, %v5418
      %v5517 = vpack.c.bf16 %v5425, %v5423
      %v5518 = vpack.c.bf16 %v5430, %v5428
      %v5519 = vpack.c.bf16 %v5435, %v5433
      %v5520 = vpack.c.bf16 %v5440, %v5438
      %v5521 = vpack.c.bf16 %v5445, %v5443
      %v5522 = vpack.c.bf16 %v5450, %v5448
      %v5528 = vunpack.c.l.b16 %v2170
      %v5529 = vunpack.c.l.b16 %v2171
      %v5530 = vunpack.c.l.b16 %v2172
      %v5531 = vunpack.c.l.b16 %v2173
      %v5532 = vunpack.c.l.b16 %v2174
      %v5533 = vpack.c.b16 %v5529, %v5528
      %v5534 = vpack.c.b16 %v5531, %v5530
      %v5535 = vpack.c.b16 %v5532, %v5532
      %v5539 = vsel %vm2489, %v5499, 0
      %v5542 = vsel %vm2489, %v5500, 0
      %v5545 = vsel %vm2489, %v5501, 0
      %v5548 = vsel %vm2489, %v5502, 0
      %v5551 = vsel %vm2489, %v5503, 0
      %v5554 = vsel %vm2489, %v5504, 0
      %v5557 = vsel %vm2489, %v5505, 0
      %v5560 = vsel %vm2489, %v5506, 0
      %v5563 = vsel %vm2489, %v5507, 0
      %v5566 = vsel %vm2489, %v5508, 0
      %v5569 = vsel %vm2489, %v5509, 0
      %v5572 = vsel %vm2489, %v5510, 0
      %v5575 = vsel %vm2489, %v5511, 0
      %v5578 = vsel %vm2489, %v5512, 0
      %v5581 = vsel %vm2489, %v5513, 0
      %v5584 = vsel %vm2489, %v5514, 0
      %v5587 = vsel %vm2489, %v5515, 0
      %v5590 = vsel %vm2489, %v5516, 0
      %v5593 = vsel %vm2489, %v5517, 0
      %v5596 = vsel %vm2489, %v5518, 0
      %v5599 = vsel %vm2489, %v5519, 0
      %v5602 = vsel %vm2489, %v5520, 0
      %v5605 = vsel %vm2489, %v5521, 0
      %v5608 = vsel %vm2489, %v5522, 0
      %v5611 = vsel %vm2562, %v5535, 0
      %5613 = vmatprep.subr.bf16.mxu0 0
      %5614 = vmatpush1.bf16.msra.mxu0 0
      %5615 = vmatprep.subr.bf16.mxu0 0
      %5616 = vmatpush1.bf16.msra.mxu0 0
      %5617 = vmatprep.subr.bf16.mxu0 0
      %5618 = vmatpush1.bf16.msra.mxu0 0
      %5619 = vmatprep.subr.bf16.mxu0 0
      %5620 = vmatpush1.bf16.msra.mxu0 0
      %5621 = vmatprep.subr.bf16.mxu0 0
      %5622 = vmatpush1.bf16.msra.mxu0 0
      %5623 = vmatprep.subr.bf16.mxu0 0
      %5624 = vmatpush1.bf16.msra.mxu0 %v5611
      %5625 = vmatprep.subr.bf16.mxu0 0
      %5626 = vmatpush1.bf16.msra.mxu0 %v5534
      %5627 = vmatprep.subr.bf16.mxu0 0
      %5628 = vmatpush1.bf16.msra.mxu0 %v5533
      %5629 = vmatprep.subr.bf16.mxu0 0
      %5630 = vmatpush2.bf16.msra.mxu0 0
      %5631 = vmatprep.subr.bf16.mxu0 0
      %5632 = vmatpush2.bf16.msra.mxu0 0
      %5633 = vmatprep.subr.bf16.mxu0 0
      %5634 = vmatpush2.bf16.msra.mxu0 0
      %5635 = vmatprep.subr.bf16.mxu0 0
      %5636 = vmatpush2.bf16.msra.mxu0 0
      %5637 = vmatprep.subr.bf16.mxu0 0
      %5638 = vmatpush2.bf16.msra.mxu0 0
      %5639 = vmatprep.subr.bf16.mxu0 0
      %5640 = vmatpush2.bf16.msra.mxu0 0
      %5641 = vmatprep.subr.bf16.mxu0 0
      %5642 = vmatpush2.bf16.msra.mxu0 0
      %5643 = vmatprep.subr.bf16.mxu0 0
      %5644 = vmatpush2.bf16.msra.mxu0 0
      %5645 = vmatprep.mubr.bf16.mxu0 0
      %5646 = vmatmul.mubr.bf16.gmra.mxu0 %v5539
      %v5647 = vpop.f32.mrf.mxu0
      %v5648 = vadd.f32 0.0, %v5647
      %v5649 = vpop.f32.mrf.mxu0
      %v5650 = vpop.f32.mrf.mxu0
      %v5651 = vadd.f32 0.0, %v5650
      %v5652 = vpop.f32.mrf.mxu0
      %5653 = vmatprep.mubr.bf16.mxu0 0
      %5654 = vmatmul.mubr.bf16.gmra.mxu0 %v5542
      %v5655 = vpop.f32.mrf.mxu0
      %v5656 = vadd.f32 0.0, %v5655
      %v5657 = vpop.f32.mrf.mxu0
      %v5658 = vpop.f32.mrf.mxu0
      %v5659 = vadd.f32 0.0, %v5658
      %v5660 = vpop.f32.mrf.mxu0
      %5661 = vmatprep.mubr.bf16.mxu0 0
      %5662 = vmatmul.mubr.bf16.gmra.mxu0 %v5545
      %v5663 = vpop.f32.mrf.mxu0
      %v5664 = vadd.f32 0.0, %v5663
      %v5665 = vpop.f32.mrf.mxu0
      %v5666 = vpop.f32.mrf.mxu0
      %v5667 = vadd.f32 0.0, %v5666
      %v5668 = vpop.f32.mrf.mxu0
      %5669 = vmatprep.mubr.bf16.mxu0 0
      %5670 = vmatmul.mubr.bf16.gmra.mxu0 %v5548
      %v5671 = vpop.f32.mrf.mxu0
      %v5672 = vadd.f32 0.0, %v5671
      %v5673 = vpop.f32.mrf.mxu0
      %v5674 = vpop.f32.mrf.mxu0
      %v5675 = vadd.f32 0.0, %v5674
      %v5676 = vpop.f32.mrf.mxu0
      %5677 = vmatprep.mubr.bf16.mxu0 0
      %5678 = vmatmul.mubr.bf16.gmra.mxu0 %v5551
      %v5679 = vpop.f32.mrf.mxu0
      %v5680 = vadd.f32 0.0, %v5679
      %v5681 = vpop.f32.mrf.mxu0
      %v5682 = vpop.f32.mrf.mxu0
      %v5683 = vadd.f32 0.0, %v5682
      %v5684 = vpop.f32.mrf.mxu0
      %5685 = vmatprep.mubr.bf16.mxu0 0
      %5686 = vmatmul.mubr.bf16.gmra.mxu0 %v5554
      %v5687 = vpop.f32.mrf.mxu0
      %v5688 = vadd.f32 0.0, %v5687
      %v5689 = vpop.f32.mrf.mxu0
      %v5690 = vpop.f32.mrf.mxu0
      %v5691 = vadd.f32 0.0, %v5690
      %v5692 = vpop.f32.mrf.mxu0
      %5693 = vmatprep.mubr.bf16.mxu0 0
      %5694 = vmatmul.mubr.bf16.gmra.mxu0 %v5557
      %v5695 = vpop.f32.mrf.mxu0
      %v5696 = vadd.f32 0.0, %v5695
      %v5697 = vpop.f32.mrf.mxu0
      %v5698 = vpop.f32.mrf.mxu0
      %v5699 = vadd.f32 0.0, %v5698
      %v5700 = vpop.f32.mrf.mxu0
      %5701 = vmatprep.mubr.bf16.mxu0 0
      %5702 = vmatmul.mubr.bf16.gmra.mxu0 %v5560
      %v5703 = vpop.f32.mrf.mxu0
      %v5704 = vadd.f32 0.0, %v5703
      %v5705 = vpop.f32.mrf.mxu0
      %v5706 = vpop.f32.mrf.mxu0
      %v5707 = vadd.f32 0.0, %v5706
      %v5708 = vpop.f32.mrf.mxu0
      %5709 = vmatprep.mubr.bf16.mxu0 0
      %5710 = vmatmul.mubr.bf16.gmra.mxu0 %v5563
      %v5711 = vpop.f32.mrf.mxu0
      %v5712 = vadd.f32 0.0, %v5711
      %v5713 = vpop.f32.mrf.mxu0
      %v5714 = vpop.f32.mrf.mxu0
      %v5715 = vadd.f32 0.0, %v5714
      %v5716 = vpop.f32.mrf.mxu0
      %5717 = vmatprep.mubr.bf16.mxu0 0
      %5718 = vmatmul.mubr.bf16.gmra.mxu0 %v5566
      %v5719 = vpop.f32.mrf.mxu0
      %v5720 = vadd.f32 0.0, %v5719
      %v5721 = vpop.f32.mrf.mxu0
      %v5722 = vpop.f32.mrf.mxu0
      %v5723 = vadd.f32 0.0, %v5722
      %v5724 = vpop.f32.mrf.mxu0
      %5725 = vmatprep.mubr.bf16.mxu0 0
      %5726 = vmatmul.mubr.bf16.gmra.mxu0 %v5569
      %v5727 = vpop.f32.mrf.mxu0
      %v5728 = vadd.f32 0.0, %v5727
      %v5729 = vpop.f32.mrf.mxu0
      %v5730 = vpop.f32.mrf.mxu0
      %v5731 = vadd.f32 0.0, %v5730
      %v5732 = vpop.f32.mrf.mxu0
      %5733 = vmatprep.mubr.bf16.mxu0 0
      %5734 = vmatmul.mubr.bf16.gmra.mxu0 %v5572
      %v5735 = vpop.f32.mrf.mxu0
      %v5736 = vadd.f32 0.0, %v5735
      %v5737 = vpop.f32.mrf.mxu0
      %v5738 = vpop.f32.mrf.mxu0
      %v5739 = vadd.f32 0.0, %v5738
      %v5740 = vpop.f32.mrf.mxu0
      %5741 = vmatprep.mubr.bf16.mxu0 0
      %5742 = vmatmul.mubr.bf16.gmra.mxu0 %v5575
      %v5743 = vpop.f32.mrf.mxu0
      %v5744 = vadd.f32 0.0, %v5743
      %v5745 = vpop.f32.mrf.mxu0
      %v5746 = vpop.f32.mrf.mxu0
      %v5747 = vadd.f32 0.0, %v5746
      %v5748 = vpop.f32.mrf.mxu0
      %5749 = vmatprep.mubr.bf16.mxu0 0
      %5750 = vmatmul.mubr.bf16.gmra.mxu0 %v5578
      %v5751 = vpop.f32.mrf.mxu0
      %v5752 = vadd.f32 0.0, %v5751
      %v5753 = vpop.f32.mrf.mxu0
      %v5754 = vpop.f32.mrf.mxu0
      %v5755 = vadd.f32 0.0, %v5754
      %v5756 = vpop.f32.mrf.mxu0
      %5757 = vmatprep.mubr.bf16.mxu0 0
      %5758 = vmatmul.mubr.bf16.gmra.mxu0 %v5581
      %v5759 = vpop.f32.mrf.mxu0
      %v5760 = vadd.f32 0.0, %v5759
      %v5761 = vpop.f32.mrf.mxu0
      %v5762 = vpop.f32.mrf.mxu0
      %v5763 = vadd.f32 0.0, %v5762
      %v5764 = vpop.f32.mrf.mxu0
      %5765 = vmatprep.mubr.bf16.mxu0 0
      %5766 = vmatmul.mubr.bf16.gmra.mxu0 %v5584
      %v5767 = vpop.f32.mrf.mxu0
      %v5768 = vadd.f32 0.0, %v5767
      %v5769 = vpop.f32.mrf.mxu0
      %v5770 = vpop.f32.mrf.mxu0
      %v5771 = vadd.f32 0.0, %v5770
      %v5772 = vpop.f32.mrf.mxu0
      %5773 = vmatprep.mubr.bf16.mxu0 0
      %5774 = vmatmul.mubr.bf16.gmra.mxu0 %v5587
      %v5775 = vpop.f32.mrf.mxu0
      %v5776 = vadd.f32 0.0, %v5775
      %v5777 = vpop.f32.mrf.mxu0
      %v5778 = vpop.f32.mrf.mxu0
      %v5779 = vadd.f32 0.0, %v5778
      %v5780 = vpop.f32.mrf.mxu0
      %5781 = vmatprep.mubr.bf16.mxu0 0
      %5782 = vmatmul.mubr.bf16.gmra.mxu0 %v5590
      %v5783 = vpop.f32.mrf.mxu0
      %v5784 = vadd.f32 0.0, %v5783
      %v5785 = vpop.f32.mrf.mxu0
      %v5786 = vpop.f32.mrf.mxu0
      %v5787 = vadd.f32 0.0, %v5786
      %v5788 = vpop.f32.mrf.mxu0
      %5789 = vmatprep.mubr.bf16.mxu0 0
      %5790 = vmatmul.mubr.bf16.gmra.mxu0 %v5593
      %v5791 = vpop.f32.mrf.mxu0
      %v5792 = vadd.f32 0.0, %v5791
      %v5793 = vpop.f32.mrf.mxu0
      %v5794 = vpop.f32.mrf.mxu0
      %v5795 = vadd.f32 0.0, %v5794
      %v5796 = vpop.f32.mrf.mxu0
      %5797 = vmatprep.mubr.bf16.mxu0 0
      %5798 = vmatmul.mubr.bf16.gmra.mxu0 %v5596
      %v5799 = vpop.f32.mrf.mxu0
      %v5800 = vadd.f32 0.0, %v5799
      %v5801 = vpop.f32.mrf.mxu0
      %v5802 = vpop.f32.mrf.mxu0
      %v5803 = vadd.f32 0.0, %v5802
      %v5804 = vpop.f32.mrf.mxu0
      %5805 = vmatprep.mubr.bf16.mxu0 0
      %5806 = vmatmul.mubr.bf16.gmra.mxu0 %v5599
      %v5807 = vpop.f32.mrf.mxu0
      %v5808 = vadd.f32 0.0, %v5807
      %v5809 = vpop.f32.mrf.mxu0
      %v5810 = vpop.f32.mrf.mxu0
      %v5811 = vadd.f32 0.0, %v5810
      %v5812 = vpop.f32.mrf.mxu0
      %5813 = vmatprep.mubr.bf16.mxu0 0
      %5814 = vmatmul.mubr.bf16.gmra.mxu0 %v5602
      %v5815 = vpop.f32.mrf.mxu0
      %v5816 = vadd.f32 0.0, %v5815
      %v5817 = vpop.f32.mrf.mxu0
      %v5818 = vpop.f32.mrf.mxu0
      %v5819 = vadd.f32 0.0, %v5818
      %v5820 = vpop.f32.mrf.mxu0
      %5821 = vmatprep.mubr.bf16.mxu0 0
      %5822 = vmatmul.mubr.bf16.gmra.mxu0 %v5605
      %v5823 = vpop.f32.mrf.mxu0
      %v5824 = vadd.f32 0.0, %v5823
      %v5825 = vpop.f32.mrf.mxu0
      %v5826 = vpop.f32.mrf.mxu0
      %v5827 = vadd.f32 0.0, %v5826
      %v5828 = vpop.f32.mrf.mxu0
      %5829 = vmatprep.mubr.bf16.mxu0 0
      %5830 = vmatmul.mubr.bf16.gmra.mxu0 %v5608
      %v5831 = vpop.f32.mrf.mxu0
      %v5832 = vadd.f32 0.0, %v5831
      %v5833 = vpop.f32.mrf.mxu0
      %v5834 = vpop.f32.mrf.mxu0
      %v5835 = vadd.f32 0.0, %v5834
      %v5836 = vpop.f32.mrf.mxu0
      %5837 = vdwg.mxu0
      %v5838 = vadd.f32 %v5282, %v5648
      %v5839 = vadd.f32 %v5283, %v5651
      %v5840 = vadd.f32 %v5284, %v5656
      %v5841 = vadd.f32 %v5285, %v5659
      %v5842 = vadd.f32 %v5286, %v5664
      %v5843 = vadd.f32 %v5287, %v5667
      %v5844 = vadd.f32 %v5288, %v5672
      %v5845 = vadd.f32 %v5289, %v5675
      %v5846 = vadd.f32 %v5290, %v5680
      %v5847 = vadd.f32 %v5291, %v5683
      %v5848 = vadd.f32 %v5292, %v5688
      %v5849 = vadd.f32 %v5293, %v5691
      %v5850 = vadd.f32 %v5294, %v5696
      %v5851 = vadd.f32 %v5295, %v5699
      %v5852 = vadd.f32 %v5296, %v5704
      %v5853 = vadd.f32 %v5297, %v5707
      %v5854 = vadd.f32 %v5298, %v5712
      %v5855 = vadd.f32 %v5299, %v5715
      %v5856 = vadd.f32 %v5300, %v5720
      %v5857 = vadd.f32 %v5301, %v5723
      %v5858 = vadd.f32 %v5302, %v5728
      %v5859 = vadd.f32 %v5303, %v5731
      %v5860 = vadd.f32 %v5304, %v5736
      %v5861 = vadd.f32 %v5305, %v5739
      %v5862 = vadd.f32 %v5306, %v5744
      %v5863 = vadd.f32 %v5307, %v5747
      %v5864 = vadd.f32 %v5308, %v5752
      %v5865 = vadd.f32 %v5309, %v5755
      %v5866 = vadd.f32 %v5310, %v5760
      %v5867 = vadd.f32 %v5311, %v5763
      %v5868 = vadd.f32 %v5312, %v5768
      %v5869 = vadd.f32 %v5313, %v5771
      %v5870 = vadd.f32 %v5314, %v5776
      %v5871 = vadd.f32 %v5315, %v5779
      %v5872 = vadd.f32 %v5316, %v5784
      %v5873 = vadd.f32 %v5317, %v5787
      %v5874 = vadd.f32 %v5318, %v5792
      %v5875 = vadd.f32 %v5319, %v5795
      %v5876 = vadd.f32 %v5320, %v5800
      %v5877 = vadd.f32 %v5321, %v5803
      %v5878 = vadd.f32 %v5322, %v5808
      %v5879 = vadd.f32 %v5323, %v5811
      %v5880 = vadd.f32 %v5324, %v5816
      %v5881 = vadd.f32 %v5325, %v5819
      %v5882 = vadd.f32 %v5326, %v5824
      %v5883 = vadd.f32 %v5327, %v5827
      %v5884 = vadd.f32 %v5328, %v5832
      %v5885 = vadd.f32 %v5329, %v5835
      %v5886 = vrot.slane %v563, 7
      %v5887 = vrot.slane %v566, 7
      %v5888 = vsel %vm2562, %v5886, %v5887
      %v5889 = vrot.slane %v571, 7
      %v5890 = vsel %vm2562, %v5887, %v5889
      %v5891 = vrot.slane %v631, 7
      %v5892 = vrot.slane %v634, 7
      %v5893 = vsel %vm2562, %v5891, %v5892
      %v5894 = vrot.slane %v639, 7
      %v5895 = vsel %vm2562, %v5892, %v5894
      %v5896 = vrot.slane %v699, 7
      %v5897 = vrot.slane %v702, 7
      %v5898 = vsel %vm2562, %v5896, %v5897
      %v5899 = vrot.slane %v707, 7
      %v5900 = vsel %vm2562, %v5897, %v5899
      %v5901 = vrot.slane %v767, 7
      %v5902 = vrot.slane %v770, 7
      %v5903 = vsel %vm2562, %v5901, %v5902
      %v5904 = vrot.slane %v775, 7
      %v5905 = vsel %vm2562, %v5902, %v5904
      %v5906 = vrot.slane %v835, 7
      %v5907 = vrot.slane %v838, 7
      %v5908 = vsel %vm2562, %v5906, %v5907
      %v5909 = vrot.slane %v843, 7
      %v5910 = vsel %vm2562, %v5907, %v5909
      %v5911 = vrot.slane %v903, 7
      %v5912 = vrot.slane %v906, 7
      %v5913 = vsel %vm2562, %v5911, %v5912
      %v5914 = vrot.slane %v911, 7
      %v5915 = vsel %vm2562, %v5912, %v5914
      %v5916 = vrot.slane %v971, 7
      %v5917 = vrot.slane %v974, 7
      %v5918 = vsel %vm2562, %v5916, %v5917
      %v5919 = vrot.slane %v979, 7
      %v5920 = vsel %vm2562, %v5917, %v5919
      %v5921 = vrot.slane %v1039, 7
      %v5922 = vrot.slane %v1042, 7
      %v5923 = vsel %vm2562, %v5921, %v5922
      %v5924 = vrot.slane %v1047, 7
      %v5925 = vsel %vm2562, %v5922, %v5924
      %v5926 = vrot.slane %v1107, 7
      %v5927 = vrot.slane %v1110, 7
      %v5928 = vsel %vm2562, %v5926, %v5927
      %v5929 = vrot.slane %v1115, 7
      %v5930 = vsel %vm2562, %v5927, %v5929
      %v5931 = vrot.slane %v1175, 7
      %v5932 = vrot.slane %v1178, 7
      %v5933 = vsel %vm2562, %v5931, %v5932
      %v5934 = vrot.slane %v1183, 7
      %v5935 = vsel %vm2562, %v5932, %v5934
      %v5936 = vrot.slane %v1243, 7
      %v5937 = vrot.slane %v1246, 7
      %v5938 = vsel %vm2562, %v5936, %v5937
      %v5939 = vrot.slane %v1251, 7
      %v5940 = vsel %vm2562, %v5937, %v5939
      %v5941 = vrot.slane %v1311, 7
      %v5942 = vrot.slane %v1314, 7
      %v5943 = vsel %vm2562, %v5941, %v5942
      %v5944 = vrot.slane %v1319, 7
      %v5945 = vsel %vm2562, %v5942, %v5944
      %v5946 = vrot.slane %v1379, 7
      %v5947 = vrot.slane %v1382, 7
      %v5948 = vsel %vm2562, %v5946, %v5947
      %v5949 = vrot.slane %v1387, 7
      %v5950 = vsel %vm2562, %v5947, %v5949
      %v5951 = vrot.slane %v1447, 7
      %v5952 = vrot.slane %v1450, 7
      %v5953 = vsel %vm2562, %v5951, %v5952
      %v5954 = vrot.slane %v1455, 7
      %v5955 = vsel %vm2562, %v5952, %v5954
      %v5956 = vrot.slane %v1515, 7
      %v5957 = vrot.slane %v1518, 7
      %v5958 = vsel %vm2562, %v5956, %v5957
      %v5959 = vrot.slane %v1523, 7
      %v5960 = vsel %vm2562, %v5957, %v5959
      %v5961 = vrot.slane %v1583, 7
      %v5962 = vrot.slane %v1586, 7
      %v5963 = vsel %vm2562, %v5961, %v5962
      %v5964 = vrot.slane %v1591, 7
      %v5965 = vsel %vm2562, %v5962, %v5964
      %v5966 = vrot.slane %v1651, 7
      %v5967 = vrot.slane %v1654, 7
      %v5968 = vsel %vm2562, %v5966, %v5967
      %v5969 = vrot.slane %v1659, 7
      %v5970 = vsel %vm2562, %v5967, %v5969
      %v5971 = vrot.slane %v1719, 7
      %v5972 = vrot.slane %v1722, 7
      %v5973 = vsel %vm2562, %v5971, %v5972
      %v5974 = vrot.slane %v1727, 7
      %v5975 = vsel %vm2562, %v5972, %v5974
      %v5976 = vrot.slane %v1787, 7
      %v5977 = vrot.slane %v1790, 7
      %v5978 = vsel %vm2562, %v5976, %v5977
      %v5979 = vrot.slane %v1795, 7
      %v5980 = vsel %vm2562, %v5977, %v5979
      %v5981 = vrot.slane %v1855, 7
      %v5982 = vrot.slane %v1858, 7
      %v5983 = vsel %vm2562, %v5981, %v5982
      %v5984 = vrot.slane %v1863, 7
      %v5985 = vsel %vm2562, %v5982, %v5984
      %v5986 = vrot.slane %v1923, 7
      %v5987 = vrot.slane %v1926, 7
      %v5988 = vsel %vm2562, %v5986, %v5987
      %v5989 = vrot.slane %v1931, 7
      %v5990 = vsel %vm2562, %v5987, %v5989
      %v5991 = vrot.slane %v1991, 7
      %v5992 = vrot.slane %v1994, 7
      %v5993 = vsel %vm2562, %v5991, %v5992
      %v5994 = vrot.slane %v1999, 7
      %v5995 = vsel %vm2562, %v5992, %v5994
      %v5996 = vrot.slane %v2059, 7
      %v5997 = vrot.slane %v2062, 7
      %v5998 = vsel %vm2562, %v5996, %v5997
      %v5999 = vrot.slane %v2067, 7
      %v6000 = vsel %vm2562, %v5997, %v5999
      %v6001 = vrot.slane %v2127, 7
      %v6002 = vrot.slane %v2130, 7
      %v6003 = vsel %vm2562, %v6001, %v6002
      %v6004 = vrot.slane %v2135, 7
      %v6005 = vsel %vm2562, %v6002, %v6004
      %v6054 = vpack.c.bf16 %v5890, %v5888
      %v6055 = vpack.c.bf16 %v5895, %v5893
      %v6056 = vpack.c.bf16 %v5900, %v5898
      %v6057 = vpack.c.bf16 %v5905, %v5903
      %v6058 = vpack.c.bf16 %v5910, %v5908
      %v6059 = vpack.c.bf16 %v5915, %v5913
      %v6060 = vpack.c.bf16 %v5920, %v5918
      %v6061 = vpack.c.bf16 %v5925, %v5923
      %v6062 = vpack.c.bf16 %v5930, %v5928
      %v6063 = vpack.c.bf16 %v5935, %v5933
      %v6064 = vpack.c.bf16 %v5940, %v5938
      %v6065 = vpack.c.bf16 %v5945, %v5943
      %v6066 = vpack.c.bf16 %v5950, %v5948
      %v6067 = vpack.c.bf16 %v5955, %v5953
      %v6068 = vpack.c.bf16 %v5960, %v5958
      %v6069 = vpack.c.bf16 %v5965, %v5963
      %v6070 = vpack.c.bf16 %v5970, %v5968
      %v6071 = vpack.c.bf16 %v5975, %v5973
      %v6072 = vpack.c.bf16 %v5980, %v5978
      %v6073 = vpack.c.bf16 %v5985, %v5983
      %v6074 = vpack.c.bf16 %v5990, %v5988
      %v6075 = vpack.c.bf16 %v5995, %v5993
      %v6076 = vpack.c.bf16 %v6000, %v5998
      %v6077 = vpack.c.bf16 %v6005, %v6003
      %v6083 = vunpack.c.l.b16 %v2175
      %v6084 = vunpack.c.l.b16 %v2176
      %v6085 = vunpack.c.l.b16 %v2177
      %v6086 = vunpack.c.l.b16 %v2178
      %v6087 = vunpack.c.l.b16 %v2179
      %v6088 = vpack.c.b16 %v6084, %v6083
      %v6089 = vpack.c.b16 %v6086, %v6085
      %v6090 = vpack.c.b16 %v6087, %v6087
      %v6094 = vsel %vm2489, %v6054, 0
      %v6097 = vsel %vm2489, %v6055, 0
      %v6100 = vsel %vm2489, %v6056, 0
      %v6103 = vsel %vm2489, %v6057, 0
      %v6106 = vsel %vm2489, %v6058, 0
      %v6109 = vsel %vm2489, %v6059, 0
      %v6112 = vsel %vm2489, %v6060, 0
      %v6115 = vsel %vm2489, %v6061, 0
      %v6118 = vsel %vm2489, %v6062, 0
      %v6121 = vsel %vm2489, %v6063, 0
      %v6124 = vsel %vm2489, %v6064, 0
      %v6127 = vsel %vm2489, %v6065, 0
      %v6130 = vsel %vm2489, %v6066, 0
      %v6133 = vsel %vm2489, %v6067, 0
      %v6136 = vsel %vm2489, %v6068, 0
      %v6139 = vsel %vm2489, %v6069, 0
      %v6142 = vsel %vm2489, %v6070, 0
      %v6145 = vsel %vm2489, %v6071, 0
      %v6148 = vsel %vm2489, %v6072, 0
      %v6151 = vsel %vm2489, %v6073, 0
      %v6154 = vsel %vm2489, %v6074, 0
      %v6157 = vsel %vm2489, %v6075, 0
      %v6160 = vsel %vm2489, %v6076, 0
      %v6163 = vsel %vm2489, %v6077, 0
      %v6166 = vsel %vm2562, %v6090, 0
      %6168 = vmatprep.subr.bf16.mxu0 0
      %6169 = vmatpush1.bf16.msra.mxu0 0
      %6170 = vmatprep.subr.bf16.mxu0 0
      %6171 = vmatpush1.bf16.msra.mxu0 0
      %6172 = vmatprep.subr.bf16.mxu0 0
      %6173 = vmatpush1.bf16.msra.mxu0 0
      %6174 = vmatprep.subr.bf16.mxu0 0
      %6175 = vmatpush1.bf16.msra.mxu0 0
      %6176 = vmatprep.subr.bf16.mxu0 0
      %6177 = vmatpush1.bf16.msra.mxu0 0
      %6178 = vmatprep.subr.bf16.mxu0 0
      %6179 = vmatpush1.bf16.msra.mxu0 %v6166
      %6180 = vmatprep.subr.bf16.mxu0 0
      %6181 = vmatpush1.bf16.msra.mxu0 %v6089
      %6182 = vmatprep.subr.bf16.mxu0 0
      %6183 = vmatpush1.bf16.msra.mxu0 %v6088
      %6184 = vmatprep.subr.bf16.mxu0 0
      %6185 = vmatpush2.bf16.msra.mxu0 0
      %6186 = vmatprep.subr.bf16.mxu0 0
      %6187 = vmatpush2.bf16.msra.mxu0 0
      %6188 = vmatprep.subr.bf16.mxu0 0
      %6189 = vmatpush2.bf16.msra.mxu0 0
      %6190 = vmatprep.subr.bf16.mxu0 0
      %6191 = vmatpush2.bf16.msra.mxu0 0
      %6192 = vmatprep.subr.bf16.mxu0 0
      %6193 = vmatpush2.bf16.msra.mxu0 0
      %6194 = vmatprep.subr.bf16.mxu0 0
      %6195 = vmatpush2.bf16.msra.mxu0 0
      %6196 = vmatprep.subr.bf16.mxu0 0
      %6197 = vmatpush2.bf16.msra.mxu0 0
      %6198 = vmatprep.subr.bf16.mxu0 0
      %6199 = vmatpush2.bf16.msra.mxu0 0
      %6200 = vmatprep.mubr.bf16.mxu0 0
      %6201 = vmatmul.mubr.bf16.gmra.mxu0 %v6094
      %v6202 = vpop.f32.mrf.mxu0
      %v6203 = vadd.f32 0.0, %v6202
      %v6204 = vpop.f32.mrf.mxu0
      %v6205 = vpop.f32.mrf.mxu0
      %v6206 = vadd.f32 0.0, %v6205
      %v6207 = vpop.f32.mrf.mxu0
      %6208 = vmatprep.mubr.bf16.mxu0 0
      %6209 = vmatmul.mubr.bf16.gmra.mxu0 %v6097
      %v6210 = vpop.f32.mrf.mxu0
      %v6211 = vadd.f32 0.0, %v6210
      %v6212 = vpop.f32.mrf.mxu0
      %v6213 = vpop.f32.mrf.mxu0
      %v6214 = vadd.f32 0.0, %v6213
      %v6215 = vpop.f32.mrf.mxu0
      %6216 = vmatprep.mubr.bf16.mxu0 0
      %6217 = vmatmul.mubr.bf16.gmra.mxu0 %v6100
      %v6218 = vpop.f32.mrf.mxu0
      %v6219 = vadd.f32 0.0, %v6218
      %v6220 = vpop.f32.mrf.mxu0
      %v6221 = vpop.f32.mrf.mxu0
      %v6222 = vadd.f32 0.0, %v6221
      %v6223 = vpop.f32.mrf.mxu0
      %6224 = vmatprep.mubr.bf16.mxu0 0
      %6225 = vmatmul.mubr.bf16.gmra.mxu0 %v6103
      %v6226 = vpop.f32.mrf.mxu0
      %v6227 = vadd.f32 0.0, %v6226
      %v6228 = vpop.f32.mrf.mxu0
      %v6229 = vpop.f32.mrf.mxu0
      %v6230 = vadd.f32 0.0, %v6229
      %v6231 = vpop.f32.mrf.mxu0
      %6232 = vmatprep.mubr.bf16.mxu0 0
      %6233 = vmatmul.mubr.bf16.gmra.mxu0 %v6106
      %v6234 = vpop.f32.mrf.mxu0
      %v6235 = vadd.f32 0.0, %v6234
      %v6236 = vpop.f32.mrf.mxu0
      %v6237 = vpop.f32.mrf.mxu0
      %v6238 = vadd.f32 0.0, %v6237
      %v6239 = vpop.f32.mrf.mxu0
      %6240 = vmatprep.mubr.bf16.mxu0 0
      %6241 = vmatmul.mubr.bf16.gmra.mxu0 %v6109
      %v6242 = vpop.f32.mrf.mxu0
      %v6243 = vadd.f32 0.0, %v6242
      %v6244 = vpop.f32.mrf.mxu0
      %v6245 = vpop.f32.mrf.mxu0
      %v6246 = vadd.f32 0.0, %v6245
      %v6247 = vpop.f32.mrf.mxu0
      %6248 = vmatprep.mubr.bf16.mxu0 0
      %6249 = vmatmul.mubr.bf16.gmra.mxu0 %v6112
      %v6250 = vpop.f32.mrf.mxu0
      %v6251 = vadd.f32 0.0, %v6250
      %v6252 = vpop.f32.mrf.mxu0
      %v6253 = vpop.f32.mrf.mxu0
      %v6254 = vadd.f32 0.0, %v6253
      %v6255 = vpop.f32.mrf.mxu0
      %6256 = vmatprep.mubr.bf16.mxu0 0
      %6257 = vmatmul.mubr.bf16.gmra.mxu0 %v6115
      %v6258 = vpop.f32.mrf.mxu0
      %v6259 = vadd.f32 0.0, %v6258
      %v6260 = vpop.f32.mrf.mxu0
      %v6261 = vpop.f32.mrf.mxu0
      %v6262 = vadd.f32 0.0, %v6261
      %v6263 = vpop.f32.mrf.mxu0
      %6264 = vmatprep.mubr.bf16.mxu0 0
      %6265 = vmatmul.mubr.bf16.gmra.mxu0 %v6118
      %v6266 = vpop.f32.mrf.mxu0
      %v6267 = vadd.f32 0.0, %v6266
      %v6268 = vpop.f32.mrf.mxu0
      %v6269 = vpop.f32.mrf.mxu0
      %v6270 = vadd.f32 0.0, %v6269
      %v6271 = vpop.f32.mrf.mxu0
      %6272 = vmatprep.mubr.bf16.mxu0 0
      %6273 = vmatmul.mubr.bf16.gmra.mxu0 %v6121
      %v6274 = vpop.f32.mrf.mxu0
      %v6275 = vadd.f32 0.0, %v6274
      %v6276 = vpop.f32.mrf.mxu0
      %v6277 = vpop.f32.mrf.mxu0
      %v6278 = vadd.f32 0.0, %v6277
      %v6279 = vpop.f32.mrf.mxu0
      %6280 = vmatprep.mubr.bf16.mxu0 0
      %6281 = vmatmul.mubr.bf16.gmra.mxu0 %v6124
      %v6282 = vpop.f32.mrf.mxu0
      %v6283 = vadd.f32 0.0, %v6282
      %v6284 = vpop.f32.mrf.mxu0
      %v6285 = vpop.f32.mrf.mxu0
      %v6286 = vadd.f32 0.0, %v6285
      %v6287 = vpop.f32.mrf.mxu0
      %6288 = vmatprep.mubr.bf16.mxu0 0
      %6289 = vmatmul.mubr.bf16.gmra.mxu0 %v6127
      %v6290 = vpop.f32.mrf.mxu0
      %v6291 = vadd.f32 0.0, %v6290
      %v6292 = vpop.f32.mrf.mxu0
      %v6293 = vpop.f32.mrf.mxu0
      %v6294 = vadd.f32 0.0, %v6293
      %v6295 = vpop.f32.mrf.mxu0
      %6296 = vmatprep.mubr.bf16.mxu0 0
      %6297 = vmatmul.mubr.bf16.gmra.mxu0 %v6130
      %v6298 = vpop.f32.mrf.mxu0
      %v6299 = vadd.f32 0.0, %v6298
      %v6300 = vpop.f32.mrf.mxu0
      %v6301 = vpop.f32.mrf.mxu0
      %v6302 = vadd.f32 0.0, %v6301
      %v6303 = vpop.f32.mrf.mxu0
      %6304 = vmatprep.mubr.bf16.mxu0 0
      %6305 = vmatmul.mubr.bf16.gmra.mxu0 %v6133
      %v6306 = vpop.f32.mrf.mxu0
      %v6307 = vadd.f32 0.0, %v6306
      %v6308 = vpop.f32.mrf.mxu0
      %v6309 = vpop.f32.mrf.mxu0
      %v6310 = vadd.f32 0.0, %v6309
      %v6311 = vpop.f32.mrf.mxu0
      %6312 = vmatprep.mubr.bf16.mxu0 0
      %6313 = vmatmul.mubr.bf16.gmra.mxu0 %v6136
      %v6314 = vpop.f32.mrf.mxu0
      %v6315 = vadd.f32 0.0, %v6314
      %v6316 = vpop.f32.mrf.mxu0
      %v6317 = vpop.f32.mrf.mxu0
      %v6318 = vadd.f32 0.0, %v6317
      %v6319 = vpop.f32.mrf.mxu0
      %6320 = vmatprep.mubr.bf16.mxu0 0
      %6321 = vmatmul.mubr.bf16.gmra.mxu0 %v6139
      %v6322 = vpop.f32.mrf.mxu0
      %v6323 = vadd.f32 0.0, %v6322
      %v6324 = vpop.f32.mrf.mxu0
      %v6325 = vpop.f32.mrf.mxu0
      %v6326 = vadd.f32 0.0, %v6325
      %v6327 = vpop.f32.mrf.mxu0
      %6328 = vmatprep.mubr.bf16.mxu0 0
      %6329 = vmatmul.mubr.bf16.gmra.mxu0 %v6142
      %v6330 = vpop.f32.mrf.mxu0
      %v6331 = vadd.f32 0.0, %v6330
      %v6332 = vpop.f32.mrf.mxu0
      %v6333 = vpop.f32.mrf.mxu0
      %v6334 = vadd.f32 0.0, %v6333
      %v6335 = vpop.f32.mrf.mxu0
      %6336 = vmatprep.mubr.bf16.mxu0 0
      %6337 = vmatmul.mubr.bf16.gmra.mxu0 %v6145
      %v6338 = vpop.f32.mrf.mxu0
      %v6339 = vadd.f32 0.0, %v6338
      %v6340 = vpop.f32.mrf.mxu0
      %v6341 = vpop.f32.mrf.mxu0
      %v6342 = vadd.f32 0.0, %v6341
      %v6343 = vpop.f32.mrf.mxu0
      %6344 = vmatprep.mubr.bf16.mxu0 0
      %6345 = vmatmul.mubr.bf16.gmra.mxu0 %v6148
      %v6346 = vpop.f32.mrf.mxu0
      %v6347 = vadd.f32 0.0, %v6346
      %v6348 = vpop.f32.mrf.mxu0
      %v6349 = vpop.f32.mrf.mxu0
      %v6350 = vadd.f32 0.0, %v6349
      %v6351 = vpop.f32.mrf.mxu0
      %6352 = vmatprep.mubr.bf16.mxu0 0
      %6353 = vmatmul.mubr.bf16.gmra.mxu0 %v6151
      %v6354 = vpop.f32.mrf.mxu0
      %v6355 = vadd.f32 0.0, %v6354
      %v6356 = vpop.f32.mrf.mxu0
      %v6357 = vpop.f32.mrf.mxu0
      %v6358 = vadd.f32 0.0, %v6357
      %v6359 = vpop.f32.mrf.mxu0
      %6360 = vmatprep.mubr.bf16.mxu0 0
      %6361 = vmatmul.mubr.bf16.gmra.mxu0 %v6154
      %v6362 = vpop.f32.mrf.mxu0
      %v6363 = vadd.f32 0.0, %v6362
      %v6364 = vpop.f32.mrf.mxu0
      %v6365 = vpop.f32.mrf.mxu0
      %v6366 = vadd.f32 0.0, %v6365
      %v6367 = vpop.f32.mrf.mxu0
      %6368 = vmatprep.mubr.bf16.mxu0 0
      %6369 = vmatmul.mubr.bf16.gmra.mxu0 %v6157
      %v6370 = vpop.f32.mrf.mxu0
      %v6371 = vadd.f32 0.0, %v6370
      %v6372 = vpop.f32.mrf.mxu0
      %v6373 = vpop.f32.mrf.mxu0
      %v6374 = vadd.f32 0.0, %v6373
      %v6375 = vpop.f32.mrf.mxu0
      %6376 = vmatprep.mubr.bf16.mxu0 0
      %6377 = vmatmul.mubr.bf16.gmra.mxu0 %v6160
      %v6378 = vpop.f32.mrf.mxu0
      %v6379 = vadd.f32 0.0, %v6378
      %v6380 = vpop.f32.mrf.mxu0
      %v6381 = vpop.f32.mrf.mxu0
      %v6382 = vadd.f32 0.0, %v6381
      %v6383 = vpop.f32.mrf.mxu0
      %6384 = vmatprep.mubr.bf16.mxu0 0
      %6385 = vmatmul.mubr.bf16.gmra.mxu0 %v6163
      %v6386 = vpop.f32.mrf.mxu0
      %v6387 = vadd.f32 0.0, %v6386
      %v6388 = vpop.f32.mrf.mxu0
      %v6389 = vpop.f32.mrf.mxu0
      %v6390 = vadd.f32 0.0, %v6389
      %v6391 = vpop.f32.mrf.mxu0
      %6392 = vdwg.mxu0
      %v6393 = vadd.f32 %v5838, %v6203
      %v6394 = vadd.f32 %v5839, %v6206
      %v6395 = vadd.f32 %v5840, %v6211
      %v6396 = vadd.f32 %v5841, %v6214
      %v6397 = vadd.f32 %v5842, %v6219
      %v6398 = vadd.f32 %v5843, %v6222
      %v6399 = vadd.f32 %v5844, %v6227
      %v6400 = vadd.f32 %v5845, %v6230
      %v6401 = vadd.f32 %v5846, %v6235
      %v6402 = vadd.f32 %v5847, %v6238
      %v6403 = vadd.f32 %v5848, %v6243
      %v6404 = vadd.f32 %v5849, %v6246
      %v6405 = vadd.f32 %v5850, %v6251
      %v6406 = vadd.f32 %v5851, %v6254
      %v6407 = vadd.f32 %v5852, %v6259
      %v6408 = vadd.f32 %v5853, %v6262
      %v6409 = vadd.f32 %v5854, %v6267
      %v6410 = vadd.f32 %v5855, %v6270
      %v6411 = vadd.f32 %v5856, %v6275
      %v6412 = vadd.f32 %v5857, %v6278
      %v6413 = vadd.f32 %v5858, %v6283
      %v6414 = vadd.f32 %v5859, %v6286
      %v6415 = vadd.f32 %v5860, %v6291
      %v6416 = vadd.f32 %v5861, %v6294
      %v6417 = vadd.f32 %v5862, %v6299
      %v6418 = vadd.f32 %v5863, %v6302
      %v6419 = vadd.f32 %v5864, %v6307
      %v6420 = vadd.f32 %v5865, %v6310
      %v6421 = vadd.f32 %v5866, %v6315
      %v6422 = vadd.f32 %v5867, %v6318
      %v6423 = vadd.f32 %v5868, %v6323
      %v6424 = vadd.f32 %v5869, %v6326
      %v6425 = vadd.f32 %v5870, %v6331
      %v6426 = vadd.f32 %v5871, %v6334
      %v6427 = vadd.f32 %v5872, %v6339
      %v6428 = vadd.f32 %v5873, %v6342
      %v6429 = vadd.f32 %v5874, %v6347
      %v6430 = vadd.f32 %v5875, %v6350
      %v6431 = vadd.f32 %v5876, %v6355
      %v6432 = vadd.f32 %v5877, %v6358
      %v6433 = vadd.f32 %v5878, %v6363
      %v6434 = vadd.f32 %v5879, %v6366
      %v6435 = vadd.f32 %v5880, %v6371
      %v6436 = vadd.f32 %v5881, %v6374
      %v6437 = vadd.f32 %v5882, %v6379
      %v6438 = vadd.f32 %v5883, %v6382
      %v6439 = vadd.f32 %v5884, %v6387
      %v6440 = vadd.f32 %v5885, %v6390
      %v6441 = vpack.c.bf16 %v571, %v566
      %v6442 = vpack.c.bf16 %v639, %v634
      %v6443 = vpack.c.bf16 %v707, %v702
      %v6444 = vpack.c.bf16 %v775, %v770
      %v6445 = vpack.c.bf16 %v843, %v838
      %v6446 = vpack.c.bf16 %v911, %v906
      %v6447 = vpack.c.bf16 %v979, %v974
      %v6448 = vpack.c.bf16 %v1047, %v1042
      %v6449 = vpack.c.bf16 %v1115, %v1110
      %v6450 = vpack.c.bf16 %v1183, %v1178
      %v6451 = vpack.c.bf16 %v1251, %v1246
      %v6452 = vpack.c.bf16 %v1319, %v1314
      %v6453 = vpack.c.bf16 %v1387, %v1382
      %v6454 = vpack.c.bf16 %v1455, %v1450
      %v6455 = vpack.c.bf16 %v1523, %v1518
      %v6456 = vpack.c.bf16 %v1591, %v1586
      %v6457 = vpack.c.bf16 %v1659, %v1654
      %v6458 = vpack.c.bf16 %v1727, %v1722
      %v6459 = vpack.c.bf16 %v1795, %v1790
      %v6460 = vpack.c.bf16 %v1863, %v1858
      %v6461 = vpack.c.bf16 %v1931, %v1926
      %v6462 = vpack.c.bf16 %v1999, %v1994
      %v6463 = vpack.c.bf16 %v2067, %v2062
      %v6464 = vpack.c.bf16 %v2135, %v2130
      %v6470 = vunpack.c.l.b16 %v2180
      %v6471 = vunpack.c.l.b16 %v2181
      %v6472 = vunpack.c.l.b16 %v2182
      %v6473 = vunpack.c.l.b16 %v2183
      %v6474 = vunpack.c.l.b16 %v2184
      %v6475 = vpack.c.b16 %v6471, %v6470
      %v6476 = vpack.c.b16 %v6473, %v6472
      %v6477 = vpack.c.b16 %v6474, %v6474
      %v6481 = vsel %vm2489, %v6441, 0
      %v6484 = vsel %vm2489, %v6442, 0
      %v6487 = vsel %vm2489, %v6443, 0
      %v6490 = vsel %vm2489, %v6444, 0
      %v6493 = vsel %vm2489, %v6445, 0
      %v6496 = vsel %vm2489, %v6446, 0
      %v6499 = vsel %vm2489, %v6447, 0
      %v6502 = vsel %vm2489, %v6448, 0
      %v6505 = vsel %vm2489, %v6449, 0
      %v6508 = vsel %vm2489, %v6450, 0
      %v6511 = vsel %vm2489, %v6451, 0
      %v6514 = vsel %vm2489, %v6452, 0
      %v6517 = vsel %vm2489, %v6453, 0
      %v6520 = vsel %vm2489, %v6454, 0
      %v6523 = vsel %vm2489, %v6455, 0
      %v6526 = vsel %vm2489, %v6456, 0
      %v6529 = vsel %vm2489, %v6457, 0
      %v6532 = vsel %vm2489, %v6458, 0
      %v6535 = vsel %vm2489, %v6459, 0
      %v6538 = vsel %vm2489, %v6460, 0
      %v6541 = vsel %vm2489, %v6461, 0
      %v6544 = vsel %vm2489, %v6462, 0
      %v6547 = vsel %vm2489, %v6463, 0
      %v6550 = vsel %vm2489, %v6464, 0
      %v6553 = vsel %vm2562, %v6477, 0
      %6555 = vmatprep.subr.bf16.mxu0 0
      %6556 = vmatpush1.bf16.msra.mxu0 0
      %6557 = vmatprep.subr.bf16.mxu0 0
      %6558 = vmatpush1.bf16.msra.mxu0 0
      %6559 = vmatprep.subr.bf16.mxu0 0
      %6560 = vmatpush1.bf16.msra.mxu0 0
      %6561 = vmatprep.subr.bf16.mxu0 0
      %6562 = vmatpush1.bf16.msra.mxu0 0
      %6563 = vmatprep.subr.bf16.mxu0 0
      %6564 = vmatpush1.bf16.msra.mxu0 0
      %6565 = vmatprep.subr.bf16.mxu0 0
      %6566 = vmatpush1.bf16.msra.mxu0 %v6553
      %6567 = vmatprep.subr.bf16.mxu0 0
      %6568 = vmatpush1.bf16.msra.mxu0 %v6476
      %6569 = vmatprep.subr.bf16.mxu0 0
      %6570 = vmatpush1.bf16.msra.mxu0 %v6475
      %6571 = vmatprep.subr.bf16.mxu0 0
      %6572 = vmatpush2.bf16.msra.mxu0 0
      %6573 = vmatprep.subr.bf16.mxu0 0
      %6574 = vmatpush2.bf16.msra.mxu0 0
      %6575 = vmatprep.subr.bf16.mxu0 0
      %6576 = vmatpush2.bf16.msra.mxu0 0
      %6577 = vmatprep.subr.bf16.mxu0 0
      %6578 = vmatpush2.bf16.msra.mxu0 0
      %6579 = vmatprep.subr.bf16.mxu0 0
      %6580 = vmatpush2.bf16.msra.mxu0 0
      %6581 = vmatprep.subr.bf16.mxu0 0
      %6582 = vmatpush2.bf16.msra.mxu0 0
      %6583 = vmatprep.subr.bf16.mxu0 0
      %6584 = vmatpush2.bf16.msra.mxu0 0
      %6585 = vmatprep.subr.bf16.mxu0 0
      %6586 = vmatpush2.bf16.msra.mxu0 0
      %6587 = vmatprep.mubr.bf16.mxu0 0
      %6588 = vmatmul.mubr.bf16.gmra.mxu0 %v6481
      %v6589 = vpop.f32.mrf.mxu0
      %v6590 = vadd.f32 0.0, %v6589
      %v6591 = vpop.f32.mrf.mxu0
      %v6592 = vpop.f32.mrf.mxu0
      %v6593 = vadd.f32 0.0, %v6592
      %v6594 = vpop.f32.mrf.mxu0
      %6595 = vmatprep.mubr.bf16.mxu0 0
      %6596 = vmatmul.mubr.bf16.gmra.mxu0 %v6484
      %v6597 = vpop.f32.mrf.mxu0
      %v6598 = vadd.f32 0.0, %v6597
      %v6599 = vpop.f32.mrf.mxu0
      %v6600 = vpop.f32.mrf.mxu0
      %v6601 = vadd.f32 0.0, %v6600
      %v6602 = vpop.f32.mrf.mxu0
      %6603 = vmatprep.mubr.bf16.mxu0 0
      %6604 = vmatmul.mubr.bf16.gmra.mxu0 %v6487
      %v6605 = vpop.f32.mrf.mxu0
      %v6606 = vadd.f32 0.0, %v6605
      %v6607 = vpop.f32.mrf.mxu0
      %v6608 = vpop.f32.mrf.mxu0
      %v6609 = vadd.f32 0.0, %v6608
      %v6610 = vpop.f32.mrf.mxu0
      %6611 = vmatprep.mubr.bf16.mxu0 0
      %6612 = vmatmul.mubr.bf16.gmra.mxu0 %v6490
      %v6613 = vpop.f32.mrf.mxu0
      %v6614 = vadd.f32 0.0, %v6613
      %v6615 = vpop.f32.mrf.mxu0
      %v6616 = vpop.f32.mrf.mxu0
      %v6617 = vadd.f32 0.0, %v6616
      %v6618 = vpop.f32.mrf.mxu0
      %6619 = vmatprep.mubr.bf16.mxu0 0
      %6620 = vmatmul.mubr.bf16.gmra.mxu0 %v6493
      %v6621 = vpop.f32.mrf.mxu0
      %v6622 = vadd.f32 0.0, %v6621
      %v6623 = vpop.f32.mrf.mxu0
      %v6624 = vpop.f32.mrf.mxu0
      %v6625 = vadd.f32 0.0, %v6624
      %v6626 = vpop.f32.mrf.mxu0
      %6627 = vmatprep.mubr.bf16.mxu0 0
      %6628 = vmatmul.mubr.bf16.gmra.mxu0 %v6496
      %v6629 = vpop.f32.mrf.mxu0
      %v6630 = vadd.f32 0.0, %v6629
      %v6631 = vpop.f32.mrf.mxu0
      %v6632 = vpop.f32.mrf.mxu0
      %v6633 = vadd.f32 0.0, %v6632
      %v6634 = vpop.f32.mrf.mxu0
      %6635 = vmatprep.mubr.bf16.mxu0 0
      %6636 = vmatmul.mubr.bf16.gmra.mxu0 %v6499
      %v6637 = vpop.f32.mrf.mxu0
      %v6638 = vadd.f32 0.0, %v6637
      %v6639 = vpop.f32.mrf.mxu0
      %v6640 = vpop.f32.mrf.mxu0
      %v6641 = vadd.f32 0.0, %v6640
      %v6642 = vpop.f32.mrf.mxu0
      %6643 = vmatprep.mubr.bf16.mxu0 0
      %6644 = vmatmul.mubr.bf16.gmra.mxu0 %v6502
      %v6645 = vpop.f32.mrf.mxu0
      %v6646 = vadd.f32 0.0, %v6645
      %v6647 = vpop.f32.mrf.mxu0
      %v6648 = vpop.f32.mrf.mxu0
      %v6649 = vadd.f32 0.0, %v6648
      %v6650 = vpop.f32.mrf.mxu0
      %6651 = vmatprep.mubr.bf16.mxu0 0
      %6652 = vmatmul.mubr.bf16.gmra.mxu0 %v6505
      %v6653 = vpop.f32.mrf.mxu0
      %v6654 = vadd.f32 0.0, %v6653
      %v6655 = vpop.f32.mrf.mxu0
      %v6656 = vpop.f32.mrf.mxu0
      %v6657 = vadd.f32 0.0, %v6656
      %v6658 = vpop.f32.mrf.mxu0
      %6659 = vmatprep.mubr.bf16.mxu0 0
      %6660 = vmatmul.mubr.bf16.gmra.mxu0 %v6508
      %v6661 = vpop.f32.mrf.mxu0
      %v6662 = vadd.f32 0.0, %v6661
      %v6663 = vpop.f32.mrf.mxu0
      %v6664 = vpop.f32.mrf.mxu0
      %v6665 = vadd.f32 0.0, %v6664
      %v6666 = vpop.f32.mrf.mxu0
      %6667 = vmatprep.mubr.bf16.mxu0 0
      %6668 = vmatmul.mubr.bf16.gmra.mxu0 %v6511
      %v6669 = vpop.f32.mrf.mxu0
      %v6670 = vadd.f32 0.0, %v6669
      %v6671 = vpop.f32.mrf.mxu0
      %v6672 = vpop.f32.mrf.mxu0
      %v6673 = vadd.f32 0.0, %v6672
      %v6674 = vpop.f32.mrf.mxu0
      %6675 = vmatprep.mubr.bf16.mxu0 0
      %6676 = vmatmul.mubr.bf16.gmra.mxu0 %v6514
      %v6677 = vpop.f32.mrf.mxu0
      %v6678 = vadd.f32 0.0, %v6677
      %v6679 = vpop.f32.mrf.mxu0
      %v6680 = vpop.f32.mrf.mxu0
      %v6681 = vadd.f32 0.0, %v6680
      %v6682 = vpop.f32.mrf.mxu0
      %6683 = vmatprep.mubr.bf16.mxu0 0
      %6684 = vmatmul.mubr.bf16.gmra.mxu0 %v6517
      %v6685 = vpop.f32.mrf.mxu0
      %v6686 = vadd.f32 0.0, %v6685
      %v6687 = vpop.f32.mrf.mxu0
      %v6688 = vpop.f32.mrf.mxu0
      %v6689 = vadd.f32 0.0, %v6688
      %v6690 = vpop.f32.mrf.mxu0
      %6691 = vmatprep.mubr.bf16.mxu0 0
      %6692 = vmatmul.mubr.bf16.gmra.mxu0 %v6520
      %v6693 = vpop.f32.mrf.mxu0
      %v6694 = vadd.f32 0.0, %v6693
      %v6695 = vpop.f32.mrf.mxu0
      %v6696 = vpop.f32.mrf.mxu0
      %v6697 = vadd.f32 0.0, %v6696
      %v6698 = vpop.f32.mrf.mxu0
      %6699 = vmatprep.mubr.bf16.mxu0 0
      %6700 = vmatmul.mubr.bf16.gmra.mxu0 %v6523
      %v6701 = vpop.f32.mrf.mxu0
      %v6702 = vadd.f32 0.0, %v6701
      %v6703 = vpop.f32.mrf.mxu0
      %v6704 = vpop.f32.mrf.mxu0
      %v6705 = vadd.f32 0.0, %v6704
      %v6706 = vpop.f32.mrf.mxu0
      %6707 = vmatprep.mubr.bf16.mxu0 0
      %6708 = vmatmul.mubr.bf16.gmra.mxu0 %v6526
      %v6709 = vpop.f32.mrf.mxu0
      %v6710 = vadd.f32 0.0, %v6709
      %v6711 = vpop.f32.mrf.mxu0
      %v6712 = vpop.f32.mrf.mxu0
      %v6713 = vadd.f32 0.0, %v6712
      %v6714 = vpop.f32.mrf.mxu0
      %6715 = vmatprep.mubr.bf16.mxu0 0
      %6716 = vmatmul.mubr.bf16.gmra.mxu0 %v6529
      %v6717 = vpop.f32.mrf.mxu0
      %v6718 = vadd.f32 0.0, %v6717
      %v6719 = vpop.f32.mrf.mxu0
      %v6720 = vpop.f32.mrf.mxu0
      %v6721 = vadd.f32 0.0, %v6720
      %v6722 = vpop.f32.mrf.mxu0
      %6723 = vmatprep.mubr.bf16.mxu0 0
      %6724 = vmatmul.mubr.bf16.gmra.mxu0 %v6532
      %v6725 = vpop.f32.mrf.mxu0
      %v6726 = vadd.f32 0.0, %v6725
      %v6727 = vpop.f32.mrf.mxu0
      %v6728 = vpop.f32.mrf.mxu0
      %v6729 = vadd.f32 0.0, %v6728
      %v6730 = vpop.f32.mrf.mxu0
      %6731 = vmatprep.mubr.bf16.mxu0 0
      %6732 = vmatmul.mubr.bf16.gmra.mxu0 %v6535
      %v6733 = vpop.f32.mrf.mxu0
      %v6734 = vadd.f32 0.0, %v6733
      %v6735 = vpop.f32.mrf.mxu0
      %v6736 = vpop.f32.mrf.mxu0
      %v6737 = vadd.f32 0.0, %v6736
      %v6738 = vpop.f32.mrf.mxu0
      %6739 = vmatprep.mubr.bf16.mxu0 0
      %6740 = vmatmul.mubr.bf16.gmra.mxu0 %v6538
      %v6741 = vpop.f32.mrf.mxu0
      %v6742 = vadd.f32 0.0, %v6741
      %v6743 = vpop.f32.mrf.mxu0
      %v6744 = vpop.f32.mrf.mxu0
      %v6745 = vadd.f32 0.0, %v6744
      %v6746 = vpop.f32.mrf.mxu0
      %6747 = vmatprep.mubr.bf16.mxu0 0
      %6748 = vmatmul.mubr.bf16.gmra.mxu0 %v6541
      %v6749 = vpop.f32.mrf.mxu0
      %v6750 = vadd.f32 0.0, %v6749
      %v6751 = vpop.f32.mrf.mxu0
      %v6752 = vpop.f32.mrf.mxu0
      %v6753 = vadd.f32 0.0, %v6752
      %v6754 = vpop.f32.mrf.mxu0
      %6755 = vmatprep.mubr.bf16.mxu0 0
      %6756 = vmatmul.mubr.bf16.gmra.mxu0 %v6544
      %v6757 = vpop.f32.mrf.mxu0
      %v6758 = vadd.f32 0.0, %v6757
      %v6759 = vpop.f32.mrf.mxu0
      %v6760 = vpop.f32.mrf.mxu0
      %v6761 = vadd.f32 0.0, %v6760
      %v6762 = vpop.f32.mrf.mxu0
      %6763 = vmatprep.mubr.bf16.mxu0 0
      %6764 = vmatmul.mubr.bf16.gmra.mxu0 %v6547
      %v6765 = vpop.f32.mrf.mxu0
      %v6766 = vadd.f32 0.0, %v6765
      %v6767 = vpop.f32.mrf.mxu0
      %v6768 = vpop.f32.mrf.mxu0
      %v6769 = vadd.f32 0.0, %v6768
      %v6770 = vpop.f32.mrf.mxu0
      %6771 = vmatprep.mubr.bf16.mxu0 0
      %6772 = vmatmul.mubr.bf16.gmra.mxu0 %v6550
      %v6773 = vpop.f32.mrf.mxu0
      %v6774 = vadd.f32 0.0, %v6773
      %v6775 = vpop.f32.mrf.mxu0
      %v6776 = vpop.f32.mrf.mxu0
      %v6777 = vadd.f32 0.0, %v6776
      %v6778 = vpop.f32.mrf.mxu0
      %6779 = vdwg.mxu0
      %v6780 = vadd.f32 %v6393, %v6590
      %v6781 = vadd.f32 %v6394, %v6593
      %v6782 = vadd.f32 %v6395, %v6598
      %v6783 = vadd.f32 %v6396, %v6601
      %v6784 = vadd.f32 %v6397, %v6606
      %v6785 = vadd.f32 %v6398, %v6609
      %v6786 = vadd.f32 %v6399, %v6614
      %v6787 = vadd.f32 %v6400, %v6617
      %v6788 = vadd.f32 %v6401, %v6622
      %v6789 = vadd.f32 %v6402, %v6625
      %v6790 = vadd.f32 %v6403, %v6630
      %v6791 = vadd.f32 %v6404, %v6633
      %v6792 = vadd.f32 %v6405, %v6638
      %v6793 = vadd.f32 %v6406, %v6641
      %v6794 = vadd.f32 %v6407, %v6646
      %v6795 = vadd.f32 %v6408, %v6649
      %v6796 = vadd.f32 %v6409, %v6654
      %v6797 = vadd.f32 %v6410, %v6657
      %v6798 = vadd.f32 %v6411, %v6662
      %v6799 = vadd.f32 %v6412, %v6665
      %v6800 = vadd.f32 %v6413, %v6670
      %v6801 = vadd.f32 %v6414, %v6673
      %v6802 = vadd.f32 %v6415, %v6678
      %v6803 = vadd.f32 %v6416, %v6681
      %v6804 = vadd.f32 %v6417, %v6686
      %v6805 = vadd.f32 %v6418, %v6689
      %v6806 = vadd.f32 %v6419, %v6694
      %v6807 = vadd.f32 %v6420, %v6697
      %v6808 = vadd.f32 %v6421, %v6702
      %v6809 = vadd.f32 %v6422, %v6705
      %v6810 = vadd.f32 %v6423, %v6710
      %v6811 = vadd.f32 %v6424, %v6713
      %v6812 = vadd.f32 %v6425, %v6718
      %v6813 = vadd.f32 %v6426, %v6721
      %v6814 = vadd.f32 %v6427, %v6726
      %v6815 = vadd.f32 %v6428, %v6729
      %v6816 = vadd.f32 %v6429, %v6734
      %v6817 = vadd.f32 %v6430, %v6737
      %v6818 = vadd.f32 %v6431, %v6742
      %v6819 = vadd.f32 %v6432, %v6745
      %v6820 = vadd.f32 %v6433, %v6750
      %v6821 = vadd.f32 %v6434, %v6753
      %v6822 = vadd.f32 %v6435, %v6758
      %v6823 = vadd.f32 %v6436, %v6761
      %v6824 = vadd.f32 %v6437, %v6766
      %v6825 = vadd.f32 %v6438, %v6769
      %v6826 = vadd.f32 %v6439, %v6774
      %v6827 = vadd.f32 %v6440, %v6777
      %v6828 = vld [vmem:[%s6] sm:$0x1]
      %v6830 = vlaneseq
      %v6831 = vshrl.u32 %v6830, 7
      %v6832 = vsub.s32 0, %v6831
      %v6833 = vrot.slane %v6828, %v6832
      %v6835 = vadd.f32 %v6780, %v6833
      %v6836 = vadd.f32 %v6781, %v6833
      %v6837 = vadd.f32 %v6782, %v6833
      %v6838 = vadd.f32 %v6783, %v6833
      %v6839 = vadd.f32 %v6784, %v6833
      %v6840 = vadd.f32 %v6785, %v6833
      %v6841 = vadd.f32 %v6786, %v6833
      %v6842 = vadd.f32 %v6787, %v6833
      %v6843 = vadd.f32 %v6788, %v6833
      %v6844 = vadd.f32 %v6789, %v6833
      %v6845 = vadd.f32 %v6790, %v6833
      %v6846 = vadd.f32 %v6791, %v6833
      %v6847 = vadd.f32 %v6792, %v6833
      %v6848 = vadd.f32 %v6793, %v6833
      %v6849 = vadd.f32 %v6794, %v6833
      %v6850 = vadd.f32 %v6795, %v6833
      %v6851 = vadd.f32 %v6796, %v6833
      %v6852 = vadd.f32 %v6797, %v6833
      %v6853 = vadd.f32 %v6798, %v6833
      %v6854 = vadd.f32 %v6799, %v6833
      %v6855 = vadd.f32 %v6800, %v6833
      %v6856 = vadd.f32 %v6801, %v6833
      %v6857 = vadd.f32 %v6802, %v6833
      %v6858 = vadd.f32 %v6803, %v6833
      %v6859 = vadd.f32 %v6804, %v6833
      %v6860 = vadd.f32 %v6805, %v6833
      %v6861 = vadd.f32 %v6806, %v6833
      %v6862 = vadd.f32 %v6807, %v6833
      %v6863 = vadd.f32 %v6808, %v6833
      %v6864 = vadd.f32 %v6809, %v6833
      %v6865 = vadd.f32 %v6810, %v6833
      %v6866 = vadd.f32 %v6811, %v6833
      %v6867 = vadd.f32 %v6812, %v6833
      %v6868 = vadd.f32 %v6813, %v6833
      %v6869 = vadd.f32 %v6814, %v6833
      %v6870 = vadd.f32 %v6815, %v6833
      %v6871 = vadd.f32 %v6816, %v6833
      %v6872 = vadd.f32 %v6817, %v6833
      %v6873 = vadd.f32 %v6818, %v6833
      %v6874 = vadd.f32 %v6819, %v6833
      %v6875 = vadd.f32 %v6820, %v6833
      %v6876 = vadd.f32 %v6821, %v6833
      %v6877 = vadd.f32 %v6822, %v6833
      %v6878 = vadd.f32 %v6823, %v6833
      %v6879 = vadd.f32 %v6824, %v6833
      %v6880 = vadd.f32 %v6825, %v6833
      %v6881 = vadd.f32 %v6826, %v6833
      %v6882 = vadd.f32 %v6827, %v6833
      %v6883 = vmax.f32 %v6835, 0.0
      %v6884 = vmax.f32 %v6836, 0.0
      %v6885 = vmax.f32 %v6837, 0.0
      %v6886 = vmax.f32 %v6838, 0.0
      %v6887 = vmax.f32 %v6839, 0.0
      %v6888 = vmax.f32 %v6840, 0.0
      %v6889 = vmax.f32 %v6841, 0.0
      %v6890 = vmax.f32 %v6842, 0.0
      %v6891 = vmax.f32 %v6843, 0.0
      %v6892 = vmax.f32 %v6844, 0.0
      %v6893 = vmax.f32 %v6845, 0.0
      %v6894 = vmax.f32 %v6846, 0.0
      %v6895 = vmax.f32 %v6847, 0.0
      %v6896 = vmax.f32 %v6848, 0.0
      %v6897 = vmax.f32 %v6849, 0.0
      %v6898 = vmax.f32 %v6850, 0.0
      %v6899 = vmax.f32 %v6851, 0.0
      %v6900 = vmax.f32 %v6852, 0.0
      %v6901 = vmax.f32 %v6853, 0.0
      %v6902 = vmax.f32 %v6854, 0.0
      %v6903 = vmax.f32 %v6855, 0.0
      %v6904 = vmax.f32 %v6856, 0.0
      %v6905 = vmax.f32 %v6857, 0.0
      %v6906 = vmax.f32 %v6858, 0.0
      %v6907 = vmax.f32 %v6859, 0.0
      %v6908 = vmax.f32 %v6860, 0.0
      %v6909 = vmax.f32 %v6861, 0.0
      %v6910 = vmax.f32 %v6862, 0.0
      %v6911 = vmax.f32 %v6863, 0.0
      %v6912 = vmax.f32 %v6864, 0.0
      %v6913 = vmax.f32 %v6865, 0.0
      %v6914 = vmax.f32 %v6866, 0.0
      %v6915 = vmax.f32 %v6867, 0.0
      %v6916 = vmax.f32 %v6868, 0.0
      %v6917 = vmax.f32 %v6869, 0.0
      %v6918 = vmax.f32 %v6870, 0.0
      %v6919 = vmax.f32 %v6871, 0.0
      %v6920 = vmax.f32 %v6872, 0.0
      %v6921 = vmax.f32 %v6873, 0.0
      %v6922 = vmax.f32 %v6874, 0.0
      %v6923 = vmax.f32 %v6875, 0.0
      %v6924 = vmax.f32 %v6876, 0.0
      %v6925 = vmax.f32 %v6877, 0.0
      %v6926 = vmax.f32 %v6878, 0.0
      %v6927 = vmax.f32 %v6879, 0.0
      %v6928 = vmax.f32 %v6880, 0.0
      %v6929 = vmax.f32 %v6881, 0.0
      %v6930 = vmax.f32 %v6882, 0.0
      %v6931 = vpack.c.bf16 %v6884, %v6883
      %v6932 = vpack.c.bf16 %v6886, %v6885
      %v6933 = vpack.c.bf16 %v6888, %v6887
      %v6934 = vpack.c.bf16 %v6890, %v6889
      %v6935 = vpack.c.bf16 %v6892, %v6891
      %v6936 = vpack.c.bf16 %v6894, %v6893
      %v6937 = vpack.c.bf16 %v6896, %v6895
      %v6938 = vpack.c.bf16 %v6898, %v6897
      %v6939 = vpack.c.bf16 %v6900, %v6899
      %v6940 = vpack.c.bf16 %v6902, %v6901
      %v6941 = vpack.c.bf16 %v6904, %v6903
      %v6942 = vpack.c.bf16 %v6906, %v6905
      %v6943 = vpack.c.bf16 %v6908, %v6907
      %v6944 = vpack.c.bf16 %v6910, %v6909
      %v6945 = vpack.c.bf16 %v6912, %v6911
      %v6946 = vpack.c.bf16 %v6914, %v6913
      %v6947 = vpack.c.bf16 %v6916, %v6915
      %v6948 = vpack.c.bf16 %v6918, %v6917
      %v6949 = vpack.c.bf16 %v6920, %v6919
      %v6950 = vpack.c.bf16 %v6922, %v6921
      %v6951 = vpack.c.bf16 %v6924, %v6923
      %v6952 = vpack.c.bf16 %v6926, %v6925
      %v6953 = vpack.c.bf16 %v6928, %v6927
      %v6954 = vpack.c.bf16 %v6930, %v6929
      %v6955 = vld [vmem:[%s4] sm:$0xf]
      %v6956 = vld [vmem:[%s4 + $0x4] sm:$0xf]
      %v6957 = vld [vmem:[%s4 + $0x8] sm:$0xf]
      %v6958 = vld [vmem:[%s4 + $0xc] sm:$0xf]
      %v6959 = vld [vmem:[%s7] sm:$0x1]
      %v6961 = vlaneseq
      %v6962 = vshrl.u32 %v6961, 7
      %v6963 = vsub.s32 0, %v6962
      %v6964 = vrot.slane %v6959, %v6963
      %v6970 = vunpack.c.l.b16 %v6955
      %v6971 = vunpack.c.l.b16 %v6956
      %v6972 = vunpack.c.l.b16 %v6957
      %v6973 = vunpack.c.l.b16 %v6958
      %v6974 = vpack.c.b16 %v6971, %v6970
      %v6975 = vpack.c.b16 %v6973, %v6972
      %vm6978 = vcmask 261120
      %v6980 = vsel %vm6978, %v6931, 0
      %v6983 = vsel %vm6978, %v6932, 0
      %v6986 = vsel %vm6978, %v6933, 0
      %v6989 = vsel %vm6978, %v6934, 0
      %v6992 = vsel %vm6978, %v6935, 0
      %v6995 = vsel %vm6978, %v6936, 0
      %v6998 = vsel %vm6978, %v6937, 0
      %v7001 = vsel %vm6978, %v6938, 0
      %v7004 = vsel %vm6978, %v6939, 0
      %v7007 = vsel %vm6978, %v6940, 0
      %v7010 = vsel %vm6978, %v6941, 0
      %v7013 = vsel %vm6978, %v6942, 0
      %v7016 = vsel %vm6978, %v6943, 0
      %v7019 = vsel %vm6978, %v6944, 0
      %v7022 = vsel %vm6978, %v6945, 0
      %v7025 = vsel %vm6978, %v6946, 0
      %v7028 = vsel %vm6978, %v6947, 0
      %v7031 = vsel %vm6978, %v6948, 0
      %v7034 = vsel %vm6978, %v6949, 0
      %v7037 = vsel %vm6978, %v6950, 0
      %v7040 = vsel %vm6978, %v6951, 0
      %v7043 = vsel %vm6978, %v6952, 0
      %v7046 = vsel %vm6978, %v6953, 0
      %v7049 = vsel %vm6978, %v6954, 0
      %7051 = vmatprep.subr.bf16.mxu0 0
      %7052 = vmatpush1.bf16.msra.mxu0 0
      %7053 = vmatprep.subr.bf16.mxu0 0
      %7054 = vmatpush1.bf16.msra.mxu0 0
      %7055 = vmatprep.subr.bf16.mxu0 0
      %7056 = vmatpush1.bf16.msra.mxu0 0
      %7057 = vmatprep.subr.bf16.mxu0 0
      %7058 = vmatpush1.bf16.msra.mxu0 0
      %7059 = vmatprep.subr.bf16.mxu0 0
      %7060 = vmatpush1.bf16.msra.mxu0 0
      %7061 = vmatprep.subr.bf16.mxu0 0
      %7062 = vmatpush1.bf16.msra.mxu0 0
      %7063 = vmatprep.subr.bf16.mxu0 0
      %7064 = vmatpush1.bf16.msra.mxu0 %v6975
      %7065 = vmatprep.subr.bf16.mxu0 0
      %7066 = vmatpush1.bf16.msra.mxu0 %v6974
      %7067 = vmatprep.subr.bf16.mxu0 0
      %7068 = vmatpush2.bf16.msra.mxu0 0
      %7069 = vmatprep.subr.bf16.mxu0 0
      %7070 = vmatpush2.bf16.msra.mxu0 0
      %7071 = vmatprep.subr.bf16.mxu0 0
      %7072 = vmatpush2.bf16.msra.mxu0 0
      %7073 = vmatprep.subr.bf16.mxu0 0
      %7074 = vmatpush2.bf16.msra.mxu0 0
      %7075 = vmatprep.subr.bf16.mxu0 0
      %7076 = vmatpush2.bf16.msra.mxu0 0
      %7077 = vmatprep.subr.bf16.mxu0 0
      %7078 = vmatpush2.bf16.msra.mxu0 0
      %7079 = vmatprep.subr.bf16.mxu0 0
      %7080 = vmatpush2.bf16.msra.mxu0 0
      %7081 = vmatprep.subr.bf16.mxu0 0
      %7082 = vmatpush2.bf16.msra.mxu0 0
      %7083 = vmatprep.mubr.bf16.mxu0 0
      %7084 = vmatmul.mubr.bf16.gmra.mxu0 %v6980
      %v7085 = vpop.f32.mrf.mxu0
      %v7086 = vadd.f32 %v6964, %v7085
      %v7087 = vpop.f32.mrf.mxu0
      %v7088 = vpop.f32.mrf.mxu0
      %v7089 = vadd.f32 %v6964, %v7088
      %v7090 = vpop.f32.mrf.mxu0
      %7091 = vmatprep.mubr.bf16.mxu0 0
      %7092 = vmatmul.mubr.bf16.gmra.mxu0 %v6983
      %v7093 = vpop.f32.mrf.mxu0
      %v7094 = vadd.f32 %v6964, %v7093
      %v7095 = vpop.f32.mrf.mxu0
      %v7096 = vpop.f32.mrf.mxu0
      %v7097 = vadd.f32 %v6964, %v7096
      %v7098 = vpop.f32.mrf.mxu0
      %7099 = vmatprep.mubr.bf16.mxu0 0
      %7100 = vmatmul.mubr.bf16.gmra.mxu0 %v6986
      %v7101 = vpop.f32.mrf.mxu0
      %v7102 = vadd.f32 %v6964, %v7101
      %v7103 = vpop.f32.mrf.mxu0
      %v7104 = vpop.f32.mrf.mxu0
      %v7105 = vadd.f32 %v6964, %v7104
      %v7106 = vpop.f32.mrf.mxu0
      %7107 = vmatprep.mubr.bf16.mxu0 0
      %7108 = vmatmul.mubr.bf16.gmra.mxu0 %v6989
      %v7109 = vpop.f32.mrf.mxu0
      %v7110 = vadd.f32 %v6964, %v7109
      %v7111 = vpop.f32.mrf.mxu0
      %v7112 = vpop.f32.mrf.mxu0
      %v7113 = vadd.f32 %v6964, %v7112
      %v7114 = vpop.f32.mrf.mxu0
      %7115 = vmatprep.mubr.bf16.mxu0 0
      %7116 = vmatmul.mubr.bf16.gmra.mxu0 %v6992
      %v7117 = vpop.f32.mrf.mxu0
      %v7118 = vadd.f32 %v6964, %v7117
      %v7119 = vpop.f32.mrf.mxu0
      %v7120 = vpop.f32.mrf.mxu0
      %v7121 = vadd.f32 %v6964, %v7120
      %v7122 = vpop.f32.mrf.mxu0
      %7123 = vmatprep.mubr.bf16.mxu0 0
      %7124 = vmatmul.mubr.bf16.gmra.mxu0 %v6995
      %v7125 = vpop.f32.mrf.mxu0
      %v7126 = vadd.f32 %v6964, %v7125
      %v7127 = vpop.f32.mrf.mxu0
      %v7128 = vpop.f32.mrf.mxu0
      %v7129 = vadd.f32 %v6964, %v7128
      %v7130 = vpop.f32.mrf.mxu0
      %7131 = vmatprep.mubr.bf16.mxu0 0
      %7132 = vmatmul.mubr.bf16.gmra.mxu0 %v6998
      %v7133 = vpop.f32.mrf.mxu0
      %v7134 = vadd.f32 %v6964, %v7133
      %v7135 = vpop.f32.mrf.mxu0
      %v7136 = vpop.f32.mrf.mxu0
      %v7137 = vadd.f32 %v6964, %v7136
      %v7138 = vpop.f32.mrf.mxu0
      %7139 = vmatprep.mubr.bf16.mxu0 0
      %7140 = vmatmul.mubr.bf16.gmra.mxu0 %v7001
      %v7141 = vpop.f32.mrf.mxu0
      %v7142 = vadd.f32 %v6964, %v7141
      %v7143 = vpop.f32.mrf.mxu0
      %v7144 = vpop.f32.mrf.mxu0
      %v7145 = vadd.f32 %v6964, %v7144
      %v7146 = vpop.f32.mrf.mxu0
      %7147 = vmatprep.mubr.bf16.mxu0 0
      %7148 = vmatmul.mubr.bf16.gmra.mxu0 %v7004
      %v7149 = vpop.f32.mrf.mxu0
      %v7150 = vadd.f32 %v6964, %v7149
      %v7151 = vpop.f32.mrf.mxu0
      %v7152 = vpop.f32.mrf.mxu0
      %v7153 = vadd.f32 %v6964, %v7152
      %v7154 = vpop.f32.mrf.mxu0
      %7155 = vmatprep.mubr.bf16.mxu0 0
      %7156 = vmatmul.mubr.bf16.gmra.mxu0 %v7007
      %v7157 = vpop.f32.mrf.mxu0
      %v7158 = vadd.f32 %v6964, %v7157
      %v7159 = vpop.f32.mrf.mxu0
      %v7160 = vpop.f32.mrf.mxu0
      %v7161 = vadd.f32 %v6964, %v7160
      %v7162 = vpop.f32.mrf.mxu0
      %7163 = vmatprep.mubr.bf16.mxu0 0
      %7164 = vmatmul.mubr.bf16.gmra.mxu0 %v7010
      %v7165 = vpop.f32.mrf.mxu0
      %v7166 = vadd.f32 %v6964, %v7165
      %v7167 = vpop.f32.mrf.mxu0
      %v7168 = vpop.f32.mrf.mxu0
      %v7169 = vadd.f32 %v6964, %v7168
      %v7170 = vpop.f32.mrf.mxu0
      %7171 = vmatprep.mubr.bf16.mxu0 0
      %7172 = vmatmul.mubr.bf16.gmra.mxu0 %v7013
      %v7173 = vpop.f32.mrf.mxu0
      %v7174 = vadd.f32 %v6964, %v7173
      %v7175 = vpop.f32.mrf.mxu0
      %v7176 = vpop.f32.mrf.mxu0
      %v7177 = vadd.f32 %v6964, %v7176
      %v7178 = vpop.f32.mrf.mxu0
      %7179 = vmatprep.mubr.bf16.mxu0 0
      %7180 = vmatmul.mubr.bf16.gmra.mxu0 %v7016
      %v7181 = vpop.f32.mrf.mxu0
      %v7182 = vadd.f32 %v6964, %v7181
      %v7183 = vpop.f32.mrf.mxu0
      %v7184 = vpop.f32.mrf.mxu0
      %v7185 = vadd.f32 %v6964, %v7184
      %v7186 = vpop.f32.mrf.mxu0
      %7187 = vmatprep.mubr.bf16.mxu0 0
      %7188 = vmatmul.mubr.bf16.gmra.mxu0 %v7019
      %v7189 = vpop.f32.mrf.mxu0
      %v7190 = vadd.f32 %v6964, %v7189
      %v7191 = vpop.f32.mrf.mxu0
      %v7192 = vpop.f32.mrf.mxu0
      %v7193 = vadd.f32 %v6964, %v7192
      %v7194 = vpop.f32.mrf.mxu0
      %7195 = vmatprep.mubr.bf16.mxu0 0
      %7196 = vmatmul.mubr.bf16.gmra.mxu0 %v7022
      %v7197 = vpop.f32.mrf.mxu0
      %v7198 = vadd.f32 %v6964, %v7197
      %v7199 = vpop.f32.mrf.mxu0
      %v7200 = vpop.f32.mrf.mxu0
      %v7201 = vadd.f32 %v6964, %v7200
      %v7202 = vpop.f32.mrf.mxu0
      %7203 = vmatprep.mubr.bf16.mxu0 0
      %7204 = vmatmul.mubr.bf16.gmra.mxu0 %v7025
      %v7205 = vpop.f32.mrf.mxu0
      %v7206 = vadd.f32 %v6964, %v7205
      %v7207 = vpop.f32.mrf.mxu0
      %v7208 = vpop.f32.mrf.mxu0
      %v7209 = vadd.f32 %v6964, %v7208
      %v7210 = vpop.f32.mrf.mxu0
      %7211 = vmatprep.mubr.bf16.mxu0 0
      %7212 = vmatmul.mubr.bf16.gmra.mxu0 %v7028
      %v7213 = vpop.f32.mrf.mxu0
      %v7214 = vadd.f32 %v6964, %v7213
      %v7215 = vpop.f32.mrf.mxu0
      %v7216 = vpop.f32.mrf.mxu0
      %v7217 = vadd.f32 %v6964, %v7216
      %v7218 = vpop.f32.mrf.mxu0
      %7219 = vmatprep.mubr.bf16.mxu0 0
      %7220 = vmatmul.mubr.bf16.gmra.mxu0 %v7031
      %v7221 = vpop.f32.mrf.mxu0
      %v7222 = vadd.f32 %v6964, %v7221
      %v7223 = vpop.f32.mrf.mxu0
      %v7224 = vpop.f32.mrf.mxu0
      %v7225 = vadd.f32 %v6964, %v7224
      %v7226 = vpop.f32.mrf.mxu0
      %7227 = vmatprep.mubr.bf16.mxu0 0
      %7228 = vmatmul.mubr.bf16.gmra.mxu0 %v7034
      %v7229 = vpop.f32.mrf.mxu0
      %v7230 = vadd.f32 %v6964, %v7229
      %v7231 = vpop.f32.mrf.mxu0
      %v7232 = vpop.f32.mrf.mxu0
      %v7233 = vadd.f32 %v6964, %v7232
      %v7234 = vpop.f32.mrf.mxu0
      %7235 = vmatprep.mubr.bf16.mxu0 0
      %7236 = vmatmul.mubr.bf16.gmra.mxu0 %v7037
      %v7237 = vpop.f32.mrf.mxu0
      %v7238 = vadd.f32 %v6964, %v7237
      %v7239 = vpop.f32.mrf.mxu0
      %v7240 = vpop.f32.mrf.mxu0
      %v7241 = vadd.f32 %v6964, %v7240
      %v7242 = vpop.f32.mrf.mxu0
      %7243 = vmatprep.mubr.bf16.mxu0 0
      %7244 = vmatmul.mubr.bf16.gmra.mxu0 %v7040
      %v7245 = vpop.f32.mrf.mxu0
      %v7246 = vadd.f32 %v6964, %v7245
      %v7247 = vpop.f32.mrf.mxu0
      %v7248 = vpop.f32.mrf.mxu0
      %v7249 = vadd.f32 %v6964, %v7248
      %v7250 = vpop.f32.mrf.mxu0
      %7251 = vmatprep.mubr.bf16.mxu0 0
      %7252 = vmatmul.mubr.bf16.gmra.mxu0 %v7043
      %v7253 = vpop.f32.mrf.mxu0
      %v7254 = vadd.f32 %v6964, %v7253
      %v7255 = vpop.f32.mrf.mxu0
      %v7256 = vpop.f32.mrf.mxu0
      %v7257 = vadd.f32 %v6964, %v7256
      %v7258 = vpop.f32.mrf.mxu0
      %7259 = vmatprep.mubr.bf16.mxu0 0
      %7260 = vmatmul.mubr.bf16.gmra.mxu0 %v7046
      %v7261 = vpop.f32.mrf.mxu0
      %v7262 = vadd.f32 %v6964, %v7261
      %v7263 = vpop.f32.mrf.mxu0
      %v7264 = vpop.f32.mrf.mxu0
      %v7265 = vadd.f32 %v6964, %v7264
      %v7266 = vpop.f32.mrf.mxu0
      %7267 = vmatprep.mubr.bf16.mxu0 0
      %7268 = vmatmul.mubr.bf16.gmra.mxu0 %v7049
      %v7269 = vpop.f32.mrf.mxu0
      %v7270 = vadd.f32 %v6964, %v7269
      %v7271 = vpop.f32.mrf.mxu0
      %v7272 = vpop.f32.mrf.mxu0
      %v7273 = vadd.f32 %v6964, %v7272
      %v7274 = vpop.f32.mrf.mxu0
      %7275 = vdwg.mxu0
      %v7276 = vmax.f32 %v7086, 0.0
      %v7277 = vmax.f32 %v7089, 0.0
      %v7278 = vmax.f32 %v7094, 0.0
      %v7279 = vmax.f32 %v7097, 0.0
      %v7280 = vmax.f32 %v7102, 0.0
      %v7281 = vmax.f32 %v7105, 0.0
      %v7282 = vmax.f32 %v7110, 0.0
      %v7283 = vmax.f32 %v7113, 0.0
      %v7284 = vmax.f32 %v7118, 0.0
      %v7285 = vmax.f32 %v7121, 0.0
      %v7286 = vmax.f32 %v7126, 0.0
      %v7287 = vmax.f32 %v7129, 0.0
      %v7288 = vmax.f32 %v7134, 0.0
      %v7289 = vmax.f32 %v7137, 0.0
      %v7290 = vmax.f32 %v7142, 0.0
      %v7291 = vmax.f32 %v7145, 0.0
      %v7292 = vmax.f32 %v7150, 0.0
      %v7293 = vmax.f32 %v7153, 0.0
      %v7294 = vmax.f32 %v7158, 0.0
      %v7295 = vmax.f32 %v7161, 0.0
      %v7296 = vmax.f32 %v7166, 0.0
      %v7297 = vmax.f32 %v7169, 0.0
      %v7298 = vmax.f32 %v7174, 0.0
      %v7299 = vmax.f32 %v7177, 0.0
      %v7300 = vmax.f32 %v7182, 0.0
      %v7301 = vmax.f32 %v7185, 0.0
      %v7302 = vmax.f32 %v7190, 0.0
      %v7303 = vmax.f32 %v7193, 0.0
      %v7304 = vmax.f32 %v7198, 0.0
      %v7305 = vmax.f32 %v7201, 0.0
      %v7306 = vmax.f32 %v7206, 0.0
      %v7307 = vmax.f32 %v7209, 0.0
      %v7308 = vmax.f32 %v7214, 0.0
      %v7309 = vmax.f32 %v7217, 0.0
      %v7310 = vmax.f32 %v7222, 0.0
      %v7311 = vmax.f32 %v7225, 0.0
      %v7312 = vmax.f32 %v7230, 0.0
      %v7313 = vmax.f32 %v7233, 0.0
      %v7314 = vmax.f32 %v7238, 0.0
      %v7315 = vmax.f32 %v7241, 0.0
      %v7316 = vmax.f32 %v7246, 0.0
      %v7317 = vmax.f32 %v7249, 0.0
      %v7318 = vmax.f32 %v7254, 0.0
      %v7319 = vmax.f32 %v7257, 0.0
      %v7320 = vmax.f32 %v7262, 0.0
      %v7321 = vmax.f32 %v7265, 0.0
      %v7322 = vmax.f32 %v7270, 0.0
      %v7323 = vmax.f32 %v7273, 0.0
      %v7324 = vld [vmem:[%s378] sm:$0xff]
      %v7325 = vld [vmem:[%s378 + $0x8] sm:$0xff]
      %v7326 = vld [vmem:[%s378 + $0x10] sm:$0xff]
      %v7327 = vld [vmem:[%s378 + $0x18] sm:$0xff]
      %v7328 = vld [vmem:[%s378 + $0x20] sm:$0xff]
      %v7329 = vld [vmem:[%s378 + $0x28] sm:$0xff]
      %v7330 = vld [vmem:[%s378 + $0x30] sm:$0xff]
      %v7331 = vld [vmem:[%s378 + $0x38] sm:$0xff]
      %v7332 = vld [vmem:[%s378 + $0x40] sm:$0xff]
      %v7333 = vld [vmem:[%s378 + $0x48] sm:$0xff]
      %v7334 = vld [vmem:[%s378 + $0x50] sm:$0xff]
      %v7335 = vld [vmem:[%s378 + $0x58] sm:$0xff]
      %v7336 = vld [vmem:[%s378 + $0x60] sm:$0xff]
      %v7337 = vld [vmem:[%s378 + $0x68] sm:$0xff]
      %v7338 = vld [vmem:[%s378 + $0x70] sm:$0xff]
      %v7339 = vld [vmem:[%s378 + $0x78] sm:$0xff]
      %v7340 = vld [vmem:[%s378 + $0x80] sm:$0xff]
      %v7341 = vld [vmem:[%s378 + $0x88] sm:$0xff]
      %v7342 = vld [vmem:[%s378 + $0x90] sm:$0xff]
      %v7343 = vld [vmem:[%s378 + $0x98] sm:$0xff]
      %v7344 = vld [vmem:[%s378 + $0xa0] sm:$0xff]
      %v7345 = vld [vmem:[%s378 + $0xa8] sm:$0xff]
      %v7346 = vld [vmem:[%s378 + $0xb0] sm:$0xff]
      %v7347 = vld [vmem:[%s378 + $0xb8] sm:$0xff]
      %v7348 = vld [vmem:[%s378 + $0xc0] sm:$0xff]
      %v7349 = vld [vmem:[%s378 + $0xc8] sm:$0xff]
      %v7350 = vld [vmem:[%s378 + $0xd0] sm:$0xff]
      %v7351 = vld [vmem:[%s378 + $0xd8] sm:$0xff]
      %v7352 = vld [vmem:[%s378 + $0xe0] sm:$0xff]
      %v7353 = vld [vmem:[%s378 + $0xe8] sm:$0xff]
      %v7354 = vld [vmem:[%s378 + $0xf0] sm:$0xff]
      %v7355 = vld [vmem:[%s378 + $0xf8] sm:$0xff]
      %v7356 = vld [vmem:[%s378 + $0x100] sm:$0xff]
      %v7357 = vld [vmem:[%s378 + $0x108] sm:$0xff]
      %v7358 = vld [vmem:[%s378 + $0x110] sm:$0xff]
      %v7359 = vld [vmem:[%s378 + $0x118] sm:$0xff]
      %v7360 = vld [vmem:[%s378 + $0x120] sm:$0xff]
      %v7361 = vld [vmem:[%s378 + $0x128] sm:$0xff]
      %v7362 = vld [vmem:[%s378 + $0x130] sm:$0xff]
      %v7363 = vld [vmem:[%s378 + $0x138] sm:$0xff]
      %v7364 = vld [vmem:[%s378 + $0x140] sm:$0xff]
      %v7365 = vld [vmem:[%s378 + $0x148] sm:$0xff]
      %v7366 = vld [vmem:[%s378 + $0x150] sm:$0xff]
      %v7367 = vld [vmem:[%s378 + $0x158] sm:$0xff]
      %v7368 = vld [vmem:[%s378 + $0x160] sm:$0xff]
      %v7369 = vld [vmem:[%s378 + $0x168] sm:$0xff]
      %v7370 = vld [vmem:[%s378 + $0x170] sm:$0xff]
      %v7371 = vld [vmem:[%s378 + $0x178] sm:$0xff]
      %7373 = vset.pattern.permute.xlu0 0
      %7374 = vperm.xlu0 %7373, %v7324
      %v7375 = vpop.permute.xlu0 %7374
      %7378 = vset.pattern.permute.xlu0 0
      %7379 = vperm.xlu0 %7378, %v7325
      %v7380 = vpop.permute.xlu0 %7379
      %7383 = vset.pattern.permute.xlu0 0
      %7384 = vperm.xlu0 %7383, %v7326
      %v7385 = vpop.permute.xlu0 %7384
      %7388 = vset.pattern.permute.xlu0 0
      %7389 = vperm.xlu0 %7388, %v7327
      %v7390 = vpop.permute.xlu0 %7389
      %7393 = vset.pattern.permute.xlu0 0
      %7394 = vperm.xlu0 %7393, %v7328
      %v7395 = vpop.permute.xlu0 %7394
      %7398 = vset.pattern.permute.xlu0 0
      %7399 = vperm.xlu0 %7398, %v7329
      %v7400 = vpop.permute.xlu0 %7399
      %7403 = vset.pattern.permute.xlu0 0
      %7404 = vperm.xlu0 %7403, %v7330
      %v7405 = vpop.permute.xlu0 %7404
      %7408 = vset.pattern.permute.xlu0 0
      %7409 = vperm.xlu0 %7408, %v7331
      %v7410 = vpop.permute.xlu0 %7409
      %7413 = vset.pattern.permute.xlu0 0
      %7414 = vperm.xlu0 %7413, %v7332
      %v7415 = vpop.permute.xlu0 %7414
      %7418 = vset.pattern.permute.xlu0 0
      %7419 = vperm.xlu0 %7418, %v7333
      %v7420 = vpop.permute.xlu0 %7419
      %7423 = vset.pattern.permute.xlu0 0
      %7424 = vperm.xlu0 %7423, %v7334
      %v7425 = vpop.permute.xlu0 %7424
      %7428 = vset.pattern.permute.xlu0 0
      %7429 = vperm.xlu0 %7428, %v7335
      %v7430 = vpop.permute.xlu0 %7429
      %7433 = vset.pattern.permute.xlu0 0
      %7434 = vperm.xlu0 %7433, %v7336
      %v7435 = vpop.permute.xlu0 %7434
      %7438 = vset.pattern.permute.xlu0 0
      %7439 = vperm.xlu0 %7438, %v7337
      %v7440 = vpop.permute.xlu0 %7439
      %7443 = vset.pattern.permute.xlu0 0
      %7444 = vperm.xlu0 %7443, %v7338
      %v7445 = vpop.permute.xlu0 %7444
      %7448 = vset.pattern.permute.xlu0 0
      %7449 = vperm.xlu0 %7448, %v7339
      %v7450 = vpop.permute.xlu0 %7449
      %7453 = vset.pattern.permute.xlu0 0
      %7454 = vperm.xlu0 %7453, %v7340
      %v7455 = vpop.permute.xlu0 %7454
      %7458 = vset.pattern.permute.xlu0 0
      %7459 = vperm.xlu0 %7458, %v7341
      %v7460 = vpop.permute.xlu0 %7459
      %7463 = vset.pattern.permute.xlu0 0
      %7464 = vperm.xlu0 %7463, %v7342
      %v7465 = vpop.permute.xlu0 %7464
      %7468 = vset.pattern.permute.xlu0 0
      %7469 = vperm.xlu0 %7468, %v7343
      %v7470 = vpop.permute.xlu0 %7469
      %7473 = vset.pattern.permute.xlu0 0
      %7474 = vperm.xlu0 %7473, %v7344
      %v7475 = vpop.permute.xlu0 %7474
      %7478 = vset.pattern.permute.xlu0 0
      %7479 = vperm.xlu0 %7478, %v7345
      %v7480 = vpop.permute.xlu0 %7479
      %7483 = vset.pattern.permute.xlu0 0
      %7484 = vperm.xlu0 %7483, %v7346
      %v7485 = vpop.permute.xlu0 %7484
      %7488 = vset.pattern.permute.xlu0 0
      %7489 = vperm.xlu0 %7488, %v7347
      %v7490 = vpop.permute.xlu0 %7489
      %7493 = vset.pattern.permute.xlu0 0
      %7494 = vperm.xlu0 %7493, %v7348
      %v7495 = vpop.permute.xlu0 %7494
      %7498 = vset.pattern.permute.xlu0 0
      %7499 = vperm.xlu0 %7498, %v7349
      %v7500 = vpop.permute.xlu0 %7499
      %7503 = vset.pattern.permute.xlu0 0
      %7504 = vperm.xlu0 %7503, %v7350
      %v7505 = vpop.permute.xlu0 %7504
      %7508 = vset.pattern.permute.xlu0 0
      %7509 = vperm.xlu0 %7508, %v7351
      %v7510 = vpop.permute.xlu0 %7509
      %7513 = vset.pattern.permute.xlu0 0
      %7514 = vperm.xlu0 %7513, %v7352
      %v7515 = vpop.permute.xlu0 %7514
      %7518 = vset.pattern.permute.xlu0 0
      %7519 = vperm.xlu0 %7518, %v7353
      %v7520 = vpop.permute.xlu0 %7519
      %7523 = vset.pattern.permute.xlu0 0
      %7524 = vperm.xlu0 %7523, %v7354
      %v7525 = vpop.permute.xlu0 %7524
      %7528 = vset.pattern.permute.xlu0 0
      %7529 = vperm.xlu0 %7528, %v7355
      %v7530 = vpop.permute.xlu0 %7529
      %7533 = vset.pattern.permute.xlu0 0
      %7534 = vperm.xlu0 %7533, %v7356
      %v7535 = vpop.permute.xlu0 %7534
      %7538 = vset.pattern.permute.xlu0 0
      %7539 = vperm.xlu0 %7538, %v7357
      %v7540 = vpop.permute.xlu0 %7539
      %7543 = vset.pattern.permute.xlu0 0
      %7544 = vperm.xlu0 %7543, %v7358
      %v7545 = vpop.permute.xlu0 %7544
      %7548 = vset.pattern.permute.xlu0 0
      %7549 = vperm.xlu0 %7548, %v7359
      %v7550 = vpop.permute.xlu0 %7549
      %7553 = vset.pattern.permute.xlu0 0
      %7554 = vperm.xlu0 %7553, %v7360
      %v7555 = vpop.permute.xlu0 %7554
      %7558 = vset.pattern.permute.xlu0 0
      %7559 = vperm.xlu0 %7558, %v7361
      %v7560 = vpop.permute.xlu0 %7559
      %7563 = vset.pattern.permute.xlu0 0
      %7564 = vperm.xlu0 %7563, %v7362
      %v7565 = vpop.permute.xlu0 %7564
      %7568 = vset.pattern.permute.xlu0 0
      %7569 = vperm.xlu0 %7568, %v7363
      %v7570 = vpop.permute.xlu0 %7569
      %7573 = vset.pattern.permute.xlu0 0
      %7574 = vperm.xlu0 %7573, %v7364
      %v7575 = vpop.permute.xlu0 %7574
      %7578 = vset.pattern.permute.xlu0 0
      %7579 = vperm.xlu0 %7578, %v7365
      %v7580 = vpop.permute.xlu0 %7579
      %7583 = vset.pattern.permute.xlu0 0
      %7584 = vperm.xlu0 %7583, %v7366
      %v7585 = vpop.permute.xlu0 %7584
      %7588 = vset.pattern.permute.xlu0 0
      %7589 = vperm.xlu0 %7588, %v7367
      %v7590 = vpop.permute.xlu0 %7589
      %7593 = vset.pattern.permute.xlu0 0
      %7594 = vperm.xlu0 %7593, %v7368
      %v7595 = vpop.permute.xlu0 %7594
      %7598 = vset.pattern.permute.xlu0 0
      %7599 = vperm.xlu0 %7598, %v7369
      %v7600 = vpop.permute.xlu0 %7599
      %7603 = vset.pattern.permute.xlu0 0
      %7604 = vperm.xlu0 %7603, %v7370
      %v7605 = vpop.permute.xlu0 %7604
      %7608 = vset.pattern.permute.xlu0 0
      %7609 = vperm.xlu0 %7608, %v7371
      %v7610 = vpop.permute.xlu0 %7609
      %v7612 = vmul.f32 %v7276, %v7375
      %v7613 = vmul.f32 %v7277, %v7380
      %v7614 = vmul.f32 %v7278, %v7385
      %v7615 = vmul.f32 %v7279, %v7390
      %v7616 = vmul.f32 %v7280, %v7395
      %v7617 = vmul.f32 %v7281, %v7400
      %v7618 = vmul.f32 %v7282, %v7405
      %v7619 = vmul.f32 %v7283, %v7410
      %v7620 = vmul.f32 %v7284, %v7415
      %v7621 = vmul.f32 %v7285, %v7420
      %v7622 = vmul.f32 %v7286, %v7425
      %v7623 = vmul.f32 %v7287, %v7430
      %v7624 = vmul.f32 %v7288, %v7435
      %v7625 = vmul.f32 %v7289, %v7440
      %v7626 = vmul.f32 %v7290, %v7445
      %v7627 = vmul.f32 %v7291, %v7450
      %v7628 = vmul.f32 %v7292, %v7455
      %v7629 = vmul.f32 %v7293, %v7460
      %v7630 = vmul.f32 %v7294, %v7465
      %v7631 = vmul.f32 %v7295, %v7470
      %v7632 = vmul.f32 %v7296, %v7475
      %v7633 = vmul.f32 %v7297, %v7480
      %v7634 = vmul.f32 %v7298, %v7485
      %v7635 = vmul.f32 %v7299, %v7490
      %v7636 = vmul.f32 %v7300, %v7495
      %v7637 = vmul.f32 %v7301, %v7500
      %v7638 = vmul.f32 %v7302, %v7505
      %v7639 = vmul.f32 %v7303, %v7510
      %v7640 = vmul.f32 %v7304, %v7515
      %v7641 = vmul.f32 %v7305, %v7520
      %v7642 = vmul.f32 %v7306, %v7525
      %v7643 = vmul.f32 %v7307, %v7530
      %v7644 = vmul.f32 %v7308, %v7535
      %v7645 = vmul.f32 %v7309, %v7540
      %v7646 = vmul.f32 %v7310, %v7545
      %v7647 = vmul.f32 %v7311, %v7550
      %v7648 = vmul.f32 %v7312, %v7555
      %v7649 = vmul.f32 %v7313, %v7560
      %v7650 = vmul.f32 %v7314, %v7565
      %v7651 = vmul.f32 %v7315, %v7570
      %v7652 = vmul.f32 %v7316, %v7575
      %v7653 = vmul.f32 %v7317, %v7580
      %v7654 = vmul.f32 %v7318, %v7585
      %v7655 = vmul.f32 %v7319, %v7590
      %v7656 = vmul.f32 %v7320, %v7595
      %v7657 = vmul.f32 %v7321, %v7600
      %v7658 = vmul.f32 %v7322, %v7605
      %v7659 = vmul.f32 %v7323, %v7610
      %v7660 = vsel %vm6978, %v7612, -inf
      %v7661 = vsel %vm6978, %v7613, -inf
      %v7662 = vmax.f32 %v7660, %v7661
      %v7663 = vrot.slane %v7662, 4
      %v7664 = vmax.f32 %v7662, %v7663
      %v7665 = vrot.slane %v7664, 2
      %v7666 = vmax.f32 %v7664, %v7665
      %v7667 = vrot.slane %v7666, 1
      %v7668 = vmax.f32 %v7666, %v7667
      %v7669 = vsel %vm6978, %v7614, -inf
      %v7670 = vsel %vm6978, %v7615, -inf
      %v7671 = vmax.f32 %v7669, %v7670
      %v7672 = vrot.slane %v7671, 4
      %v7673 = vmax.f32 %v7671, %v7672
      %v7674 = vrot.slane %v7673, 2
      %v7675 = vmax.f32 %v7673, %v7674
      %v7676 = vrot.slane %v7675, 1
      %v7677 = vmax.f32 %v7675, %v7676
      %v7678 = vsel %vm6978, %v7616, -inf
      %v7679 = vsel %vm6978, %v7617, -inf
      %v7680 = vmax.f32 %v7678, %v7679
      %v7681 = vrot.slane %v7680, 4
      %v7682 = vmax.f32 %v7680, %v7681
      %v7683 = vrot.slane %v7682, 2
      %v7684 = vmax.f32 %v7682, %v7683
      %v7685 = vrot.slane %v7684, 1
      %v7686 = vmax.f32 %v7684, %v7685
      %v7687 = vsel %vm6978, %v7618, -inf
      %v7688 = vsel %vm6978, %v7619, -inf
      %v7689 = vmax.f32 %v7687, %v7688
      %v7690 = vrot.slane %v7689, 4
      %v7691 = vmax.f32 %v7689, %v7690
      %v7692 = vrot.slane %v7691, 2
      %v7693 = vmax.f32 %v7691, %v7692
      %v7694 = vrot.slane %v7693, 1
      %v7695 = vmax.f32 %v7693, %v7694
      %v7696 = vsel %vm6978, %v7620, -inf
      %v7697 = vsel %vm6978, %v7621, -inf
      %v7698 = vmax.f32 %v7696, %v7697
      %v7699 = vrot.slane %v7698, 4
      %v7700 = vmax.f32 %v7698, %v7699
      %v7701 = vrot.slane %v7700, 2
      %v7702 = vmax.f32 %v7700, %v7701
      %v7703 = vrot.slane %v7702, 1
      %v7704 = vmax.f32 %v7702, %v7703
      %v7705 = vsel %vm6978, %v7622, -inf
      %v7706 = vsel %vm6978, %v7623, -inf
      %v7707 = vmax.f32 %v7705, %v7706
      %v7708 = vrot.slane %v7707, 4
      %v7709 = vmax.f32 %v7707, %v7708
      %v7710 = vrot.slane %v7709, 2
      %v7711 = vmax.f32 %v7709, %v7710
      %v7712 = vrot.slane %v7711, 1
      %v7713 = vmax.f32 %v7711, %v7712
      %v7714 = vsel %vm6978, %v7624, -inf
      %v7715 = vsel %vm6978, %v7625, -inf
      %v7716 = vmax.f32 %v7714, %v7715
      %v7717 = vrot.slane %v7716, 4
      %v7718 = vmax.f32 %v7716, %v7717
      %v7719 = vrot.slane %v7718, 2
      %v7720 = vmax.f32 %v7718, %v7719
      %v7721 = vrot.slane %v7720, 1
      %v7722 = vmax.f32 %v7720, %v7721
      %v7723 = vsel %vm6978, %v7626, -inf
      %v7724 = vsel %vm6978, %v7627, -inf
      %v7725 = vmax.f32 %v7723, %v7724
      %v7726 = vrot.slane %v7725, 4
      %v7727 = vmax.f32 %v7725, %v7726
      %v7728 = vrot.slane %v7727, 2
      %v7729 = vmax.f32 %v7727, %v7728
      %v7730 = vrot.slane %v7729, 1
      %v7731 = vmax.f32 %v7729, %v7730
      %v7732 = vsel %vm6978, %v7628, -inf
      %v7733 = vsel %vm6978, %v7629, -inf
      %v7734 = vmax.f32 %v7732, %v7733
      %v7735 = vrot.slane %v7734, 4
      %v7736 = vmax.f32 %v7734, %v7735
      %v7737 = vrot.slane %v7736, 2
      %v7738 = vmax.f32 %v7736, %v7737
      %v7739 = vrot.slane %v7738, 1
      %v7740 = vmax.f32 %v7738, %v7739
      %v7741 = vsel %vm6978, %v7630, -inf
      %v7742 = vsel %vm6978, %v7631, -inf
      %v7743 = vmax.f32 %v7741, %v7742
      %v7744 = vrot.slane %v7743, 4
      %v7745 = vmax.f32 %v7743, %v7744
      %v7746 = vrot.slane %v7745, 2
      %v7747 = vmax.f32 %v7745, %v7746
      %v7748 = vrot.slane %v7747, 1
      %v7749 = vmax.f32 %v7747, %v7748
      %v7750 = vsel %vm6978, %v7632, -inf
      %v7751 = vsel %vm6978, %v7633, -inf
      %v7752 = vmax.f32 %v7750, %v7751
      %v7753 = vrot.slane %v7752, 4
      %v7754 = vmax.f32 %v7752, %v7753
      %v7755 = vrot.slane %v7754, 2
      %v7756 = vmax.f32 %v7754, %v7755
      %v7757 = vrot.slane %v7756, 1
      %v7758 = vmax.f32 %v7756, %v7757
      %v7759 = vsel %vm6978, %v7634, -inf
      %v7760 = vsel %vm6978, %v7635, -inf
      %v7761 = vmax.f32 %v7759, %v7760
      %v7762 = vrot.slane %v7761, 4
      %v7763 = vmax.f32 %v7761, %v7762
      %v7764 = vrot.slane %v7763, 2
      %v7765 = vmax.f32 %v7763, %v7764
      %v7766 = vrot.slane %v7765, 1
      %v7767 = vmax.f32 %v7765, %v7766
      %v7768 = vsel %vm6978, %v7636, -inf
      %v7769 = vsel %vm6978, %v7637, -inf
      %v7770 = vmax.f32 %v7768, %v7769
      %v7771 = vrot.slane %v7770, 4
      %v7772 = vmax.f32 %v7770, %v7771
      %v7773 = vrot.slane %v7772, 2
      %v7774 = vmax.f32 %v7772, %v7773
      %v7775 = vrot.slane %v7774, 1
      %v7776 = vmax.f32 %v7774, %v7775
      %v7777 = vsel %vm6978, %v7638, -inf
      %v7778 = vsel %vm6978, %v7639, -inf
      %v7779 = vmax.f32 %v7777, %v7778
      %v7780 = vrot.slane %v7779, 4
      %v7781 = vmax.f32 %v7779, %v7780
      %v7782 = vrot.slane %v7781, 2
      %v7783 = vmax.f32 %v7781, %v7782
      %v7784 = vrot.slane %v7783, 1
      %v7785 = vmax.f32 %v7783, %v7784
      %v7786 = vsel %vm6978, %v7640, -inf
      %v7787 = vsel %vm6978, %v7641, -inf
      %v7788 = vmax.f32 %v7786, %v7787
      %v7789 = vrot.slane %v7788, 4
      %v7790 = vmax.f32 %v7788, %v7789
      %v7791 = vrot.slane %v7790, 2
      %v7792 = vmax.f32 %v7790, %v7791
      %v7793 = vrot.slane %v7792, 1
      %v7794 = vmax.f32 %v7792, %v7793
      %v7795 = vsel %vm6978, %v7642, -inf
      %v7796 = vsel %vm6978, %v7643, -inf
      %v7797 = vmax.f32 %v7795, %v7796
      %v7798 = vrot.slane %v7797, 4
      %v7799 = vmax.f32 %v7797, %v7798
      %v7800 = vrot.slane %v7799, 2
      %v7801 = vmax.f32 %v7799, %v7800
      %v7802 = vrot.slane %v7801, 1
      %v7803 = vmax.f32 %v7801, %v7802
      %v7804 = vsel %vm6978, %v7644, -inf
      %v7805 = vsel %vm6978, %v7645, -inf
      %v7806 = vmax.f32 %v7804, %v7805
      %v7807 = vrot.slane %v7806, 4
      %v7808 = vmax.f32 %v7806, %v7807
      %v7809 = vrot.slane %v7808, 2
      %v7810 = vmax.f32 %v7808, %v7809
      %v7811 = vrot.slane %v7810, 1
      %v7812 = vmax.f32 %v7810, %v7811
      %v7813 = vsel %vm6978, %v7646, -inf
      %v7814 = vsel %vm6978, %v7647, -inf
      %v7815 = vmax.f32 %v7813, %v7814
      %v7816 = vrot.slane %v7815, 4
      %v7817 = vmax.f32 %v7815, %v7816
      %v7818 = vrot.slane %v7817, 2
      %v7819 = vmax.f32 %v7817, %v7818
      %v7820 = vrot.slane %v7819, 1
      %v7821 = vmax.f32 %v7819, %v7820
      %v7822 = vsel %vm6978, %v7648, -inf
      %v7823 = vsel %vm6978, %v7649, -inf
      %v7824 = vmax.f32 %v7822, %v7823
      %v7825 = vrot.slane %v7824, 4
      %v7826 = vmax.f32 %v7824, %v7825
      %v7827 = vrot.slane %v7826, 2
      %v7828 = vmax.f32 %v7826, %v7827
      %v7829 = vrot.slane %v7828, 1
      %v7830 = vmax.f32 %v7828, %v7829
      %v7831 = vsel %vm6978, %v7650, -inf
      %v7832 = vsel %vm6978, %v7651, -inf
      %v7833 = vmax.f32 %v7831, %v7832
      %v7834 = vrot.slane %v7833, 4
      %v7835 = vmax.f32 %v7833, %v7834
      %v7836 = vrot.slane %v7835, 2
      %v7837 = vmax.f32 %v7835, %v7836
      %v7838 = vrot.slane %v7837, 1
      %v7839 = vmax.f32 %v7837, %v7838
      %v7840 = vsel %vm6978, %v7652, -inf
      %v7841 = vsel %vm6978, %v7653, -inf
      %v7842 = vmax.f32 %v7840, %v7841
      %v7843 = vrot.slane %v7842, 4
      %v7844 = vmax.f32 %v7842, %v7843
      %v7845 = vrot.slane %v7844, 2
      %v7846 = vmax.f32 %v7844, %v7845
      %v7847 = vrot.slane %v7846, 1
      %v7848 = vmax.f32 %v7846, %v7847
      %v7849 = vsel %vm6978, %v7654, -inf
      %v7850 = vsel %vm6978, %v7655, -inf
      %v7851 = vmax.f32 %v7849, %v7850
      %v7852 = vrot.slane %v7851, 4
      %v7853 = vmax.f32 %v7851, %v7852
      %v7854 = vrot.slane %v7853, 2
      %v7855 = vmax.f32 %v7853, %v7854
      %v7856 = vrot.slane %v7855, 1
      %v7857 = vmax.f32 %v7855, %v7856
      %v7858 = vsel %vm6978, %v7656, -inf
      %v7859 = vsel %vm6978, %v7657, -inf
      %v7860 = vmax.f32 %v7858, %v7859
      %v7861 = vrot.slane %v7860, 4
      %v7862 = vmax.f32 %v7860, %v7861
      %v7863 = vrot.slane %v7862, 2
      %v7864 = vmax.f32 %v7862, %v7863
      %v7865 = vrot.slane %v7864, 1
      %v7866 = vmax.f32 %v7864, %v7865
      %v7867 = vsel %vm6978, %v7658, -inf
      %v7868 = vsel %vm6978, %v7659, -inf
      %v7869 = vmax.f32 %v7867, %v7868
      %v7870 = vrot.slane %v7869, 4
      %v7871 = vmax.f32 %v7869, %v7870
      %v7872 = vrot.slane %v7871, 2
      %v7873 = vmax.f32 %v7871, %v7872
      %v7874 = vrot.slane %v7873, 1
      %v7875 = vmax.f32 %v7873, %v7874
      %v7876 = vpack.c.bf16 %v7668, %v7668
      %v7877 = vpack.c.bf16 %v7677, %v7677
      %v7878 = vpack.c.bf16 %v7686, %v7686
      %v7879 = vpack.c.bf16 %v7695, %v7695
      %v7880 = vpack.c.bf16 %v7704, %v7704
      %v7881 = vpack.c.bf16 %v7713, %v7713
      %v7882 = vpack.c.bf16 %v7722, %v7722
      %v7883 = vpack.c.bf16 %v7731, %v7731
      %v7884 = vpack.c.bf16 %v7740, %v7740
      %v7885 = vpack.c.bf16 %v7749, %v7749
      %v7886 = vpack.c.bf16 %v7758, %v7758
      %v7887 = vpack.c.bf16 %v7767, %v7767
      %v7888 = vpack.c.bf16 %v7776, %v7776
      %v7889 = vpack.c.bf16 %v7785, %v7785
      %v7890 = vpack.c.bf16 %v7794, %v7794
      %v7891 = vpack.c.bf16 %v7803, %v7803
      %v7892 = vpack.c.bf16 %v7812, %v7812
      %v7893 = vpack.c.bf16 %v7821, %v7821
      %v7894 = vpack.c.bf16 %v7830, %v7830
      %v7895 = vpack.c.bf16 %v7839, %v7839
      %v7896 = vpack.c.bf16 %v7848, %v7848
      %v7897 = vpack.c.bf16 %v7857, %v7857
      %v7898 = vpack.c.bf16 %v7866, %v7866
      %v7899 = vpack.c.bf16 %v7875, %v7875
      %v7900 = vld [vmem:[%s5] sm:$0xf]
      %v7901 = vld [vmem:[%s5 + $0x4] sm:$0xf]
      %v7902 = vld [vmem:[%s5 + $0x8] sm:$0xf]
      %v7903 = vld [vmem:[%s5 + $0xc] sm:$0xf]
      %v7904 = vld [vmem:[%s8] sm:$0x1]
      %v7906 = vlaneseq
      %v7907 = vshrl.u32 %v7906, 7
      %v7908 = vsub.s32 0, %v7907
      %v7909 = vrot.slane %v7904, %v7908
      %v7935 = vunpack.c.l.b16 %v7876
      %v7936 = vunpack.c.l.b16 %v7877
      %v7937 = vunpack.c.l.b16 %v7878
      %v7938 = vunpack.c.l.b16 %v7879
      %v7939 = vunpack.c.l.b16 %v7880
      %v7940 = vunpack.c.l.b16 %v7881
      %v7941 = vunpack.c.l.b16 %v7882
      %v7942 = vunpack.c.l.b16 %v7883
      %v7943 = vunpack.c.l.b16 %v7884
      %v7944 = vunpack.c.l.b16 %v7885
      %v7945 = vunpack.c.l.b16 %v7886
      %v7946 = vunpack.c.l.b16 %v7887
      %v7947 = vunpack.c.l.b16 %v7888
      %v7948 = vunpack.c.l.b16 %v7889
      %v7949 = vunpack.c.l.b16 %v7890
      %v7950 = vunpack.c.l.b16 %v7891
      %v7951 = vunpack.c.l.b16 %v7892
      %v7952 = vunpack.c.l.b16 %v7893
      %v7953 = vunpack.c.l.b16 %v7894
      %v7954 = vunpack.c.l.b16 %v7895
      %v7955 = vunpack.c.l.b16 %v7896
      %v7956 = vunpack.c.l.b16 %v7897
      %v7957 = vunpack.c.l.b16 %v7898
      %v7958 = vunpack.c.l.b16 %v7899
      %vm7959 = vcmask 1041409
      %v7960 = vsel %vm7959, %v7936, %v7935
      %vm7961 = vcmask 1042434
      %v7962 = vsel %vm7961, %v7937, %v7960
      %vm7963 = vcmask 1043459
      %v7964 = vsel %vm7963, %v7938, %v7962
      %vm7965 = vcmask 1044484
      %v7966 = vsel %vm7965, %v7939, %v7964
      %vm7967 = vcmask 1045509
      %v7968 = vsel %vm7967, %v7940, %v7966
      %vm7969 = vcmask 1046534
      %v7970 = vsel %vm7969, %v7941, %v7968
      %vm7971 = vcmask 1047559
      %v7972 = vsel %vm7971, %v7942, %v7970
      %v7973 = vsel %vm7959, %v7944, %v7943
      %v7974 = vsel %vm7961, %v7945, %v7973
      %v7975 = vsel %vm7963, %v7946, %v7974
      %v7976 = vsel %vm7965, %v7947, %v7975
      %v7977 = vsel %vm7967, %v7948, %v7976
      %v7978 = vsel %vm7969, %v7949, %v7977
      %v7979 = vsel %vm7971, %v7950, %v7978
      %v7980 = vsel %vm7959, %v7952, %v7951
      %v7981 = vsel %vm7961, %v7953, %v7980
      %v7982 = vsel %vm7963, %v7954, %v7981
      %v7983 = vsel %vm7965, %v7955, %v7982
      %v7984 = vsel %vm7967, %v7956, %v7983
      %v7985 = vsel %vm7969, %v7957, %v7984
      %v7986 = vsel %vm7971, %v7958, %v7985
      %v7987 = vpack.c.b16 %v7979, %v7972
      %v7988 = vpack.c.b16 %v7986, %v7986
      %v7993 = vunpack.c.l.b16 %v7900
      %v7994 = vunpack.c.l.b16 %v7901
      %v7995 = vunpack.c.l.b16 %v7902
      %v7996 = vunpack.c.l.b16 %v7903
      %v7997 = vpack.c.b16 %v7994, %v7993
      %v7998 = vpack.c.b16 %v7996, %v7995
      %v8002 = vsel %vm6978, %v7987, 0
      %v8005 = vsel %vm6978, %v7988, 0
      %8007 = vmatprep.subr.bf16.mxu0 0
      %8008 = vmatpush1.bf16.msra.mxu0 0
      %8009 = vmatprep.subr.bf16.mxu0 0
      %8010 = vmatpush1.bf16.msra.mxu0 0
      %8011 = vmatprep.subr.bf16.mxu0 0
      %8012 = vmatpush1.bf16.msra.mxu0 0
      %8013 = vmatprep.subr.bf16.mxu0 0
      %8014 = vmatpush1.bf16.msra.mxu0 0
      %8015 = vmatprep.subr.bf16.mxu0 0
      %8016 = vmatpush1.bf16.msra.mxu0 0
      %8017 = vmatprep.subr.bf16.mxu0 0
      %8018 = vmatpush1.bf16.msra.mxu0 0
      %8019 = vmatprep.subr.bf16.mxu0 0
      %8020 = vmatpush1.bf16.msra.mxu0 %v7998
      %8021 = vmatprep.subr.bf16.mxu0 0
      %8022 = vmatpush1.bf16.msra.mxu0 %v7997
      %8023 = vmatprep.subr.bf16.mxu0 0
      %8024 = vmatpush2.bf16.msra.mxu0 0
      %8025 = vmatprep.subr.bf16.mxu0 0
      %8026 = vmatpush2.bf16.msra.mxu0 0
      %8027 = vmatprep.subr.bf16.mxu0 0
      %8028 = vmatpush2.bf16.msra.mxu0 0
      %8029 = vmatprep.subr.bf16.mxu0 0
      %8030 = vmatpush2.bf16.msra.mxu0 0
      %8031 = vmatprep.subr.bf16.mxu0 0
      %8032 = vmatpush2.bf16.msra.mxu0 0
      %8033 = vmatprep.subr.bf16.mxu0 0
      %8034 = vmatpush2.bf16.msra.mxu0 0
      %8035 = vmatprep.subr.bf16.mxu0 0
      %8036 = vmatpush2.bf16.msra.mxu0 0
      %8037 = vmatprep.subr.bf16.mxu0 0
      %8038 = vmatpush2.bf16.msra.mxu0 0
      %8039 = vmatprep.mubr.bf16.mxu0 0
      %8040 = vmatmul.mubr.bf16.gmra.mxu0 %v8002
      %v8041 = vpop.f32.mrf.mxu0
      %v8042 = vadd.f32 %v7909, %v8041
      %v8043 = vpop.f32.mrf.mxu0
      %v8044 = vpop.f32.mrf.mxu0
      %v8045 = vadd.f32 %v7909, %v8044
      %v8046 = vpop.f32.mrf.mxu0
      %8047 = vmatprep.mubr.bf16.mxu0 0
      %8048 = vmatmul.mubr.bf16.gmra.mxu0 %v8005
      %v8049 = vpop.f32.mrf.mxu0
      %v8050 = vadd.f32 %v7909, %v8049
      %v8051 = vpop.f32.mrf.mxu0
      %v8052 = vpop.f32.mrf.mxu0
      %v8053 = vpop.f32.mrf.mxu0
      %8054 = vdwg.mxu0
      %v8055 = vxor.u32 %v8042, 2147483648
      %v8056 = vxor.u32 %v8045, 2147483648
      %v8057 = vxor.u32 %v8050, 2147483648
      %v8058 = vmul.f32 %v8055, 1.442695
      %v8059 = vpow.pop %v8058
      %v8060 = vmul.f32 %v8056, 1.442695
      %v8061 = vpow.pop %v8060
      %v8062 = vmul.f32 %v8057, 1.442695
      %v8063 = vpow.pop %v8062
      %v8064 = vadd.f32 %v8059, 1.0
      %v8065 = vadd.f32 %v8061, 1.0
      %v8066 = vadd.f32 %v8063, 1.0
      %v8067 = vrcp.pop %v8064
      %v8068 = vmul.f32 1.0, %v8067
      %v8069 = vrcp.pop %v8065
      %v8070 = vmul.f32 1.0, %v8069
      %v8071 = vrcp.pop %v8066
      %v8072 = vmul.f32 1.0, %v8071
      %8076 = vrot.lane.b32.xlu0 %v8068, 126
      %v8077 = vpop.permute.xlu0 %8076
      %8078 = vrot.lane.b32.xlu0 %v8070, 126
      %v8079 = vpop.permute.xlu0 %8078
      %8080 = vrot.lane.b32.xlu0 %v8072, 126
      %v8081 = vpop.permute.xlu0 %8080
      %v8085 = vadd.f32 %v8068, %v8077
      %v8086 = vadd.f32 %v8070, %v8079
      %v8087 = vadd.f32 %v8072, %v8081
      %v8088 = vmul.f32 %v8085, 0.25
      %v8089 = vmul.f32 %v8086, 0.25
      %v8090 = vmul.f32 %v8087, 0.25
      %v8091 = vmax.f32 %v8088, 0.0
      %v8092 = vmax.f32 %v8089, 0.0
      %v8093 = vmax.f32 %v8090, 0.0
      %v8094 = vmin.f32 %v8091, 1.0
      %v8095 = vmin.f32 %v8092, 1.0
      %v8096 = vmin.f32 %v8093, 1.0
      %vm8097 = vcmask 15360
      %8098 = vst.msk [vmem:[%s384] sm:$0xff] %vm8097, %v8094
      %8099 = vst.msk [vmem:[%s384 + $0x8] sm:$0xff] %vm8097, %v8095
      %8100 = vst.msk [vmem:[%s384 + $0x10] sm:$0xff] %vm8097, %v8096
      %s8101 = smul.u32 3, %s20
      %p8102 = scmp.lt.s32.totalorder %s8101, 5
      %s8103 = scalar_select %p8102, %s8101, 5
      %s8104 = smul.addr %s8103, 8
      %s8105 = scalar_lea.vmem %s9, %s8104
      // Predicated region
      $region57: #{tpu_custom_call.1} parent=55 // pred_check
        %p8106 = pneg %p242
      $region58: #{tpu_custom_call.1} parent=55 // pred_check_branch
        %8108 = sbr.rel (%p8106) target = $region60
      $region59: #{tpu_custom_call.1} parent=55 // pred_region
        %s8109 = smul.u32 3, %s20
      $region60: #{tpu_custom_call.1} parent=55 // pred_fallthru
        _
    $region56: #{tpu_custom_call.1} parent=5 // pred_fallthru
      _
    %p8110 = scmp.le.s32.totalorder 2, %s15
    // Predicated region
    $region61: #{tpu_custom_call.1} parent=5 // pred_check
      %p8111 = pneg %p8110
    $region62: #{tpu_custom_call.1} parent=5 // pred_check_branch
      %8113 = sbr.rel (%p8111) target = $region64
    $region63: #{tpu_custom_call.1} parent=5 // pred_region
      %s8114 = ssub.s32 %s15, 2
      // Predicated region
      $region65: #{tpu_custom_call.1} parent=63 // pred_check
        %p8115 = pneg %p248
      $region66: #{tpu_custom_call.1} parent=63 // pred_check_branch
        %8117 = sbr.rel (%p8115) target = $region68
      $region67: #{tpu_custom_call.1} parent=63 // pred_region
        %s8118 = smul.u32 3, %s21
        %p8119 = scmp.lt.s32.totalorder %s8118, 5
        %s8120 = scalar_select %p8119, %s8118, 5
        %s8121 = smul.addr %s8120, 8
        %s8122 = scalar_lea.vmem %s9, %s8121
      $region68: #{tpu_custom_call.1} parent=63 // pred_fallthru
        _
    $region64: #{tpu_custom_call.1} parent=5 // pred_fallthru
      _
  $region6: #{tpu_custom_call.1} parent=0 // loop_footer
    %s19 = sadd.s32 1, %s15
  $region7: #{tpu_custom_call.1} parent=0 // loop_footer_branch
    %14 = sbr.rel target = $region3
  $region8: #{tpu_custom_call.1} parent=0 // loop_exit
    _

</llo_original>
